<compile_context>
chip_gen: v6e
topology: v6e:2x2x1
jax: 0.10.0
libtpu: 0.0.40
codegen_flags: <defaults>
</compile_context>

<pallas_src>
import math
import functools

import numpy as np
import jax
import jax.numpy as jnp
from jax import lax
from jax.experimental import pallas as pl
from jax.experimental.pallas import tpu as pltpu


_GN_TILE = 1024        # spatial rows per grid step in the standalone norm kernel
_FOLD_K_MAX = 128      # fold taps into the contraction when kd*kh*kw*Cin <= this

_vmem_limit_cache = None


def _vmem_limit_bytes():
    """Generation-aware scoped-VMEM cap: ~85% of physical, capped at 100 MiB."""
    global _vmem_limit_cache
    if _vmem_limit_cache is None:
        try:
            cap = int(pltpu.get_tpu_info().vmem_capacity_bytes)
            _vmem_limit_cache = max(32 << 20, min(int(cap * 0.85), 100 << 20))
        except Exception:
            _vmem_limit_cache = 48 << 20
    return _vmem_limit_cache


# ------------------------------ conv kernel --------------------------------

def _conv_plane_kernel(*refs, kd, kh, kw, ho, wo, cin, h_starts, w_starts,
                       has_prenorm, has_residual, emit_stats):
    """One grid step = one (sample n, output depth do, depth tap a)."""
    it = iter(refs)
    x_ref = next(it)
    w_ref = next(it)
    b_ref = next(it)
    sc_ref = next(it) if has_prenorm else None
    sf_ref = next(it) if has_prenorm else None
    r_ref = next(it) if has_residual else None
    o_ref = next(it)
    sum_ref = next(it) if emit_stats else None
    sq_ref = next(it) if emit_stats else None
    acc_ref = next(it)
    xs_ref = next(it) if has_prenorm else None

    do = pl.program_id(1)
    a = pl.program_id(2)

    @pl.when(a == 0)
    def _init_acc():
        acc_ref[...] = jnp.zeros_like(acc_ref)

    if emit_stats:
        @pl.when(jnp.logical_and(do == 0, a == 0))
        def _init_stats():
            sum_ref[...] = jnp.zeros_like(sum_ref)
            sq_ref[...] = jnp.zeros_like(sq_ref)

    if has_prenorm:
        # Fused GroupNorm affine + SiLU, applied ONCE per resident plane.
        xin = x_ref[0, 0].astype(jnp.float32)                 # (Hg, Wg, Cin)
        y = xin * sc_ref[...] + sf_ref[...]
        xs_ref[...] = (y * jax.nn.sigmoid(y)).astype(xs_ref.dtype)

    def _window(b, c):
        hs, ws = h_starts[b], w_starts[c]
        if has_prenorm:
            return xs_ref[hs:hs + ho, ws:ws + wo, :]
        return x_ref[0, 0, hs:hs + ho, ws:ws + wo, :]

    acc = acc_ref[...]                                         # (Ho*Wo, Cout) f32
    for b in range(kh):
        for c in range(kw):
            lhs = _window(b, c).reshape(ho * wo, cin)          # static contiguous slice
            tap = a * (kh * kw) + b * kw + c
            acc = acc + jnp.dot(lhs, w_ref[tap],
                                preferred_element_type=jnp.float32)
    acc_ref[...] = acc

    @pl.when(a == kd - 1)
    def _store():
        y = acc_ref[...] + b_ref[...]                          # (Ho*Wo, Cout) f32
        if has_residual:
            y = y + r_ref[0, 0].astype(jnp.float32)            # fused residual add
        o_ref[0, 0] = y.astype(o_ref.dtype)
        if emit_stats:
            # GroupNorm partial sums fused into the epilogue (no extra HBM pass).
            sum_ref[0] += jnp.sum(y, axis=0, keepdims=True)
            sq_ref[0] += jnp.sum(y * y, axis=0, keepdims=True)


def _regroup_strided_axis(x, axis, stride, k):
    """Reorder a strided conv axis by residue class (slices+concat, no gather)
    so that every tap window is a contiguous length-`out` slice."""
    if stride == 1:
        return x, tuple(range(k))
    size = x.shape[axis]
    parts = [lax.slice_in_dim(x, r, size, stride=stride, axis=axis)
             for r in range(stride)]
    offs = np.cumsum([0] + [p.shape[axis] for p in parts[:-1]])
    xr = jnp.concatenate(parts, axis=axis)
    starts = tuple(int(offs[t % stride] + t // stride) for t in range(k))
    return xr, starts


def same_pad_conv3d(x, w, b, stride, prenorm=None, residual=None, emit_stats=False):
    """SamePadConv3d (replicate pad) as one fused Pallas kernel.

    x: (N, D, H, W, Cin) bf16; w: (kd, kh, kw, Cin, Cout); b: (Cout,)
    prenorm: optional (scale, shift), each (N, 1, Cin) f32 (GroupNorm affine+SiLU).
    residual: optional (N, Do, Ho, Wo, Cout) tensor added in the epilogue.
    emit_stats: also return per-(sample, channel) sum / sumsq of the output.
    """
    N, D, H, W, Cin = x.shape
    kd, kh, kw, _, Cout = w.shape
    sd, sh, sw = stride

    pads = []
    for k, s in zip((kd, kh, kw), (sd, sh, sw)):
        p = k - s
        pads.append((p // 2 + p % 2, p // 2))                  # (ceil, floor) like F.pad
    xp = jnp.pad(x, ((0, 0), pads[0], pads[1], pads[2], (0, 0)), mode="edge")
    Dp, Hp, Wp = xp.shape[1:4]
    Do = (Dp - kd) // sd + 1
    Ho = (Hp - kh) // sh + 1
    Wo = (Wp - kw) // sw + 1

    # Small-Cin stem: fold ALL taps into the MXU contraction (K: Cin -> k^3*Cin)
    # and re-run as a 1x1x1 conv (one big-K matmul per plane).
    if kd * kh * kw > 1 and prenorm is None and Cin * kd * kh * kw <= _FOLD_K_MAX:
        slabs = []
        for a in range(kd):
            for bb in range(kh):
                for c in range(kw):
                    slabs.append(xp[:,
                                    a:a + (Do - 1) * sd + 1:sd,
                                    bb:bb + (Ho - 1) * sh + 1:sh,
                                    c:c + (Wo - 1) * sw + 1:sw, :])
        patches = jnp.concatenate(slabs, axis=-1)              # (N, Do, Ho, Wo, K)
        wf = w.reshape(1, 1, 1, kd * kh * kw * Cin, Cout)
        return same_pad_conv3d(patches, wf, b, (1, 1, 1),
                               residual=residual, emit_stats=emit_stats)

    # One-time residue-class regrouping of strided axes (slices+concat).
    xg, h_starts = _regroup_strided_axis(xp, 2, sh, kh)
    xg, w_starts = _regroup_strided_axis(xg, 3, sw, kw)
    Hg, Wg = xg.shape[2], xg.shape[3]
    xg = xg.astype(jnp.bfloat16)

    w_flat = w.reshape(kd * kh * kw, Cin, Cout).astype(jnp.bfloat16)
    b2 = b.reshape(1, Cout).astype(jnp.float32)
    M = Ho * Wo

    in_specs = [
        # One padded input plane; D tap offset + stride live in the index_map.
        pl.BlockSpec((1, 1, Hg, Wg, Cin),
                     lambda n, do, a: (n, do * sd + a, 0, 0, 0)),
        # Full conv weights, constant index_map -> fetched once, VMEM resident.
        pl.BlockSpec((kd * kh * kw, Cin, Cout), lambda n, do, a: (0, 0, 0)),
        pl.BlockSpec((1, Cout), lambda n, do, a: (0, 0)),
    ]
    args = [xg, w_flat, b2]
    if prenorm is not None:
        scale, shift = prenorm
        in_specs += [pl.BlockSpec((1, 1, Cin), lambda n, do, a: (n, 0, 0)),
                     pl.BlockSpec((1, 1, Cin), lambda n, do, a: (n, 0, 0))]
        args += [scale.astype(jnp.float32), shift.astype(jnp.float32)]
    if residual is not None:
        in_specs.append(pl.BlockSpec((1, 1, M, Cout),
                                     lambda n, do, a: (n, do, 0, 0)))
        args.append(residual.reshape(N, Do, M, Cout).astype(jnp.bfloat16))

    # Lane-dense-ish output: (N, Do, Ho*Wo, Cout); reshaped back for free after.
    out_shape = [jax.ShapeDtypeStruct((N, Do, M, Cout), jnp.bfloat16)]
    out_specs = [pl.BlockSpec((1, 1, M, Cout), lambda n, do, a: (n, do, 0, 0))]
    if emit_stats:
        out_shape += [jax.ShapeDtypeStruct((N, 1, Cout), jnp.float32)] * 2
        out_specs += [pl.BlockSpec((1, 1, Cout), lambda n, do, a: (n, 0, 0))] * 2

    scratch = [pltpu.VMEM((M, Cout), jnp.float32)]
    if prenorm is not None:
        scratch.append(pltpu.VMEM((Hg, Wg, Cin), jnp.bfloat16))

    kernel = functools.partial(
        _conv_plane_kernel, kd=kd, kh=kh, kw=kw, ho=Ho, wo=Wo, cin=Cin,
        h_starts=h_starts, w_starts=w_starts,
        has_prenorm=prenorm is not None, has_residual=residual is not None,
        emit_stats=emit_stats)

    n_taps = kd * kh * kw
    flops = 2 * N * Do * M * n_taps * Cin * Cout
    trans = N * Do * kd * Hg * Wg * Cin if prenorm is not None else 0
    bytes_accessed = (N * Do * kd * Hg * Wg * Cin * 2
                      + n_taps * Cin * Cout * 2
                      + N * Do * M * Cout * 2
                      + (N * Do * M * Cout * 2 if residual is not None else 0))

    # The stats outputs are accumulated across the `do` axis, so that axis must
    # stay "arbitrary" (not megacore-sharded) whenever stats are emitted.
    dims = ("parallel", "arbitrary" if emit_stats else "parallel", "arbitrary")

    results = pl.pallas_call(
        kernel,
        grid=(N, Do, kd),
        in_specs=in_specs,
        out_specs=tuple(out_specs),
        out_shape=tuple(out_shape),
        scratch_shapes=scratch,
        compiler_params=pltpu.CompilerParams(
            dimension_semantics=dims,
            vmem_limit_bytes=_vmem_limit_bytes()),
        cost_estimate=pl.CostEstimate(flops=flops, transcendentals=trans,
                                      bytes_accessed=bytes_accessed),
    )(*args)

    out = results[0].reshape(N, Do, Ho, Wo, Cout)
    if emit_stats:
        return out, results[1], results[2]
    return out


# ------------------------------ GroupNorm ----------------------------------

def groupnorm_scale_shift(sums, sqs, count, gamma, beta, num_groups, eps=1e-6):
    """Fold the conv-fused per-channel (sum, sumsq) into per-(sample, channel)
    GroupNorm scale/shift.  The tiny C->G reduction + rsqrt stays in plain JAX."""
    N, _, C = sums.shape
    G, Cg = num_groups, C // num_groups
    denom = count * Cg
    g_sum = sums.reshape(N, G, Cg).sum(-1)
    g_sq = sqs.reshape(N, G, Cg).sum(-1)
    mean = g_sum / denom
    var = jnp.maximum(g_sq / denom - mean * mean, 0.0)   # clamp one-pass cancellation
    inv = lax.rsqrt(var + eps)
    inv_c = jnp.repeat(inv, Cg, axis=1)                  # (N, C)
    mean_c = jnp.repeat(mean, Cg, axis=1)
    scale = inv_c * gamma[None, :]
    shift = beta[None, :] - mean_c * scale
    return scale.reshape(N, 1, C), shift.reshape(N, 1, C)


def _norm_silu_kernel(x_ref, sc_ref, sf_ref, o_ref):
    x = x_ref[0].astype(jnp.float32)
    y = x * sc_ref[0] + sf_ref[0]
    o_ref[0] = (y * jax.nn.sigmoid(y)).astype(o_ref.dtype)


def norm_silu(x, scale, shift, out_dtype=jnp.float32):
    """Standalone tiled (scale * x + shift) + SiLU for the final block."""
    N, D, H, W, C = x.shape
    S = D * H * W
    x2 = x.reshape(N, S, C)
    ts = S if S <= _GN_TILE else _GN_TILE
    Sp = pl.cdiv(S, ts) * ts
    if Sp != S:
        x2 = jnp.pad(x2, ((0, 0), (0, Sp - S), (0, 0)))
    out = pl.pallas_call(
        _norm_silu_kernel,
        out_shape=jax.ShapeDtypeStruct((N, Sp, C), out_dtype),
        grid=(N, Sp // ts),
        in_specs=[pl.BlockSpec((1, ts, C), lambda n, s: (n, s, 0)),
                  pl.BlockSpec((1, 1, C), lambda n, s: (n, 0, 0)),
                  pl.BlockSpec((1, 1, C), lambda n, s: (n, 0, 0))],
        out_specs=pl.BlockSpec((1, ts, C), lambda n, s: (n, s, 0)),
        compiler_params=pltpu.CompilerParams(
            dimension_semantics=("parallel", "parallel"),
            vmem_limit_bytes=_vmem_limit_bytes()),
    )(x2, scale.astype(jnp.float32), shift.astype(jnp.float32))
    return out[:, :S].reshape(N, D, H, W, C)


# --------------------------- parameters & forward ---------------------------

def _conv_init(key, kd, kh, kw, cin, cout):
    kw_, kb_ = jax.random.split(key)
    fan_in = cin * kd * kh * kw
    bound = 1.0 / math.sqrt(fan_in)
    w = jax.random.uniform(kw_, (kd, kh, kw, cin, cout), jnp.float32, -bound, bound)
    b = jax.random.uniform(kb_, (cout,), jnp.float32, -bound, bound)
    return w, b


def init_encoder_params(key, n_hiddens, downsample, image_channel, num_groups):
    n_times = np.array([int(math.log2(d)) for d in downsample])
    max_ds = int(n_times.max())
    keys = iter(jax.random.split(key, 8 * max_ds + 8))
    params = {"conv_first": _conv_init(next(keys), 3, 3, 3, image_channel, n_hiddens)}
    blocks = []
    out_ch = n_hiddens
    for i in range(max_ds):
        in_ch = n_hiddens * 2 ** i
        out_ch = n_hiddens * 2 ** (i + 1)
        assert out_ch % num_groups == 0
        blk = {
            "down": _conv_init(next(keys), 4, 4, 4, in_ch, out_ch),
            "norm1_g": 1.0 + 0.1 * jax.random.normal(next(keys), (out_ch,), jnp.float32),
            "norm1_b": 0.1 * jax.random.normal(next(keys), (out_ch,), jnp.float32),
            "conv1": _conv_init(next(keys), 3, 3, 3, out_ch, out_ch),
            "norm2_g": 1.0 + 0.1 * jax.random.normal(next(keys), (out_ch,), jnp.float32),
            "norm2_b": 0.1 * jax.random.normal(next(keys), (out_ch,), jnp.float32),
            "conv2": _conv_init(next(keys), 3, 3, 3, out_ch, out_ch),
        }
        blocks.append(blk)
    params["blocks"] = blocks
    params["final_g"] = 1.0 + 0.1 * jax.random.normal(next(keys), (out_ch,), jnp.float32)
    params["final_b"] = 0.1 * jax.random.normal(next(keys), (out_ch,), jnp.float32)
    return params


def encoder_forward(x_ncdhw, params, num_groups, downsample):
    # NCDHW (PyTorch) -> NDHWC; activations travel as bf16 between kernels
    # (f32 accumulation / normalization math everywhere).
    h = jnp.transpose(x_ncdhw, (0, 2, 3, 4, 1)).astype(jnp.bfloat16)

    w, b = params["conv_first"]
    h = same_pad_conv3d(h, w, b, (1, 1, 1))

    n_times = np.array([int(math.log2(d)) for d in downsample])
    blocks = params["blocks"]
    final_sums = final_sqs = None
    final_count = 1.0
    for bi, blk in enumerate(blocks):
        last = bi == len(blocks) - 1
        stride = tuple(2 if d > 0 else 1 for d in n_times)     # static per block
        n_times = n_times - 1

        wd, bd = blk["down"]
        h, s1, q1 = same_pad_conv3d(h, wd, bd, stride, emit_stats=True)
        x0 = h
        _, Do, Ho, Wo, _ = h.shape
        count = float(Do * Ho * Wo)

        # ResBlock (in_channels == out_channels -> identity shortcut).
        sc1, sf1 = groupnorm_scale_shift(s1, q1, count,
                                         blk["norm1_g"], blk["norm1_b"], num_groups)
        w1, b1 = blk["conv1"]
        h, s2, q2 = same_pad_conv3d(h, w1, b1, (1, 1, 1),
                                    prenorm=(sc1, sf1), emit_stats=True)
        # TODO(synk): ResBlock declares nn.Dropout(0.0) but never calls it in forward -> no-op.
        sc2, sf2 = groupnorm_scale_shift(s2, q2, count,
                                         blk["norm2_g"], blk["norm2_b"], num_groups)
        w2, b2 = blk["conv2"]
        if last:
            h, final_sums, final_sqs = same_pad_conv3d(
                h, w2, b2, (1, 1, 1), prenorm=(sc2, sf2),
                residual=x0, emit_stats=True)
            final_count = count
        else:
            h = same_pad_conv3d(h, w2, b2, (1, 1, 1),
                                prenorm=(sc2, sf2), residual=x0)

    scf, sff = groupnorm_scale_shift(final_sums, final_sqs, final_count,
                                     params["final_g"], params["final_b"], num_groups)
    h = norm_silu(h, scf, sff, out_dtype=jnp.float32)
    return jnp.transpose(h, (0, 4, 1, 2, 3))                  # back to NCDHW


if __name__ == "__main__":
    key = jax.random.PRNGKey(0)
    kx, kp = jax.random.split(key)

    n_hiddens = 16
    num_groups = 8           # must divide all normalized channel counts
    downsample = [2, 2, 2]   # -> one down block, stride (2, 2, 2)
    image_channel = 3

    # PyTorch-style NCDHW input
    x = jax.random.normal(kx, (2, image_channel, 4, 8, 8), jnp.float32)
    params = init_encoder_params(kp, n_hiddens, downsample, image_channel, num_groups)

    fwd = jax.jit(functools.partial(encoder_forward,
                                    num_groups=num_groups, downsample=downsample))
    out = jax.block_until_ready(fwd(x, params))

    assert out.shape == (2, 2 * n_hiddens, 2, 4, 4), out.shape
    assert bool(jnp.all(jnp.isfinite(out)))
    print("KERNEL_OK")
</pallas_src>

<mosaic_0001>
module attributes {stable_mosaic.version = 11 : i64} {
  func.func @_conv_plane_kernel(%arg0: i32, %arg1: i32, %arg2: i32, %arg3: memref<1x1x8x8x81xbf16, #tpu.memory_space<vmem>>, %arg4: memref<1x81x16xbf16, #tpu.memory_space<vmem>>, %arg5: memref<1x16xf32, #tpu.memory_space<vmem>>, %arg6: memref<1x1x64x16xbf16, #tpu.memory_space<vmem>>, %arg7: memref<64x16xf32, #tpu.memory_space<vmem>>) attributes {dimension_semantics = [#tpu.dimension_semantics<parallel>, #tpu.dimension_semantics<parallel>, #tpu.dimension_semantics<arbitrary>], iteration_bounds = array<i64: 2, 4, 1>, scalar_prefetch = 0 : i64, scratch_operands = 1 : i64, tpu.core_type = #tpu.core_type<tc>, window_params = [{transform_indices = @transform_0, window_bounds = array<i64: 1, 1, 8, 8, 81>}, {pipeline_mode = #tpu.pipeline_mode<synchronous>, transform_indices = @transform_1, window_bounds = array<i64: 1, 81, 16>}, {pipeline_mode = #tpu.pipeline_mode<synchronous>, transform_indices = @transform_2, window_bounds = array<i64: 1, 16>}, {transform_indices = @transform_3, window_bounds = array<i64: 1, 1, 64, 16>}]} {
    %c0_i32 = arith.constant 0 : i32
    %0 = arith.cmpi eq, %arg2, %c0_i32 : i32
    %1 = arith.extui %0 : i1 to i32
    %c0_i32_0 = arith.constant 0 : i32
    %2 = arith.cmpi ne, %1, %c0_i32_0 : i32
    scf.if %2 {
      %cst_15 = arith.constant 0.000000e+00 : f32
      %19 = vector.broadcast %cst_15 : f32 to vector<64x16xf32>
      %c0_16 = arith.constant 0 : index
      %c0_17 = arith.constant 0 : index
      %20 = vector.load %arg7[%c0_16, %c0_17] : memref<64x16xf32, #tpu.memory_space<vmem>>, vector<64x16xf32>
      tpu.vector_store %arg7[%c0_16, %c0_17], %19 {strides = array<i32>} : memref<64x16xf32, #tpu.memory_space<vmem>>, vector<64x16xf32>,
    } else {
    }
    %c0 = arith.constant 0 : index
    %c0_1 = arith.constant 0 : index
    %3 = vector.load %arg7[%c0, %c0_1] : memref<64x16xf32, #tpu.memory_space<vmem>>, vector<64x16xf32>
    %c0_2 = arith.constant 0 : index
    %c0_3 = arith.constant 0 : index
    %c0_4 = arith.constant 0 : index
    %c0_5 = arith.constant 0 : index
    %c0_6 = arith.constant 0 : index
    %4 = vector.load %arg3[%c0_2, %c0_3, %c0_4, %c0_5, %c0_6] : memref<1x1x8x8x81xbf16, #tpu.memory_space<vmem>>, vector<1x1x8x8x81xbf16>
    %5 = vector.shape_cast %4 : vector<1x1x8x8x81xbf16> to vector<8x8x81xbf16>
    %6 = vector.shape_cast %5 : vector<8x8x81xbf16> to vector<64x81xbf16>
    %c1_i32 = arith.constant 1 : i32
    %7 = arith.muli %arg2, %c1_i32 : i32
    %c0_i32_7 = arith.constant 0 : i32
    %8 = arith.addi %7, %c0_i32_7 : i32
    %c0_i32_8 = arith.constant 0 : i32
    %9 = arith.addi %8, %c0_i32_8 : i32
    %10 = arith.index_cast %9 : i32 to index
    %c0_9 = arith.constant 0 : index
    %c0_10 = arith.constant 0 : index
    %11 = vector.load %arg4[%10, %c0_9, %c0_10] : memref<1x81x16xbf16, #tpu.memory_space<vmem>>, vector<1x81x16xbf16>
    %12 = vector.shape_cast %11 : vector<1x81x16xbf16> to vector<81x16xbf16>
    %cst = arith.constant dense<0.000000e+00> : vector<64x16xf32>
    %13 = tpu.matmul %6, %12, %cst {dimension_numbers = #tpu.dot_dimension_numbers<[1], [0], [0], [1], [0, 0, 1, 1], [], []>} : vector<64x81xbf16>, vector<81x16xbf16>, vector<64x16xf32> -> vector<64x16xf32>
    %14 = arith.addf %3, %13 : vector<64x16xf32>
    %c0_11 = arith.constant 0 : index
    %c0_12 = arith.constant 0 : index
    %15 = vector.load %arg7[%c0_11, %c0_12] : memref<64x16xf32, #tpu.memory_space<vmem>>, vector<64x16xf32>
    tpu.vector_store %arg7[%c0_11, %c0_12], %14 {strides = array<i32>} : memref<64x16xf32, #tpu.memory_space<vmem>>, vector<64x16xf32>,
    %c0_i32_13 = arith.constant 0 : i32
    %16 = arith.cmpi eq, %arg2, %c0_i32_13 : i32
    %17 = arith.extui %16 : i1 to i32
    %c0_i32_14 = arith.constant 0 : i32
    %18 = arith.cmpi ne, %17, %c0_i32_14 : i32
    scf.if %18 {
      %c0_15 = arith.constant 0 : index
      %c0_16 = arith.constant 0 : index
      %19 = vector.load %arg7[%c0_15, %c0_16] : memref<64x16xf32, #tpu.memory_space<vmem>>, vector<64x16xf32>
      %c0_17 = arith.constant 0 : index
      %c0_18 = arith.constant 0 : index
      %20 = vector.load %arg5[%c0_17, %c0_18] : memref<1x16xf32, #tpu.memory_space<vmem>>, vector<1x16xf32>
      %21 = vector.broadcast %20 : vector<1x16xf32> to vector<64x16xf32>
      %22 = arith.addf %19, %21 : vector<64x16xf32>
      %23 = arith.truncf %22 : vector<64x16xf32> to vector<64x16xbf16>
      %c0_19 = arith.constant 0 : index
      %c0_20 = arith.constant 0 : index
      %c0_21 = arith.constant 0 : index
      %c0_22 = arith.constant 0 : index
      %24 = vector.load %arg6[%c0_19, %c0_20, %c0_21, %c0_22] : memref<1x1x64x16xbf16, #tpu.memory_space<vmem>>, vector<1x1x64x16xbf16>
      %25 = vector.shape_cast %24 : vector<1x1x64x16xbf16> to vector<64x16xbf16>
      %26 = vector.shape_cast %23 : vector<64x16xbf16> to vector<1x1x64x16xbf16>
      tpu.vector_store %arg6[%c0_19, %c0_20, %c0_21, %c0_22], %26 {strides = array<i32>} : memref<1x1x64x16xbf16, #tpu.memory_space<vmem>>, vector<1x1x64x16xbf16>,
    } else {
    }
    return
  }
  func.func @transform_0(%arg0: i32, %arg1: i32, %arg2: i32) -> (i32, i32, i32, i32, i32) {
    %c1_i32 = arith.constant 1 : i32
    %0 = arith.muli %arg1, %c1_i32 : i32
    %1 = arith.addi %0, %arg2 : i32
    %c0_i32 = arith.constant 0 : i32
    %c0_i32_0 = arith.constant 0 : i32
    %c0_i32_1 = arith.constant 0 : i32
    %c0_i32_2 = arith.constant 0 : i32
    return %arg0, %1, %c0_i32, %c0_i32_0, %c0_i32_1 : i32, i32, i32, i32, i32
  }
  func.func @transform_1(%arg0: i32, %arg1: i32, %arg2: i32) -> (i32, i32, i32) {
    %c0_i32 = arith.constant 0 : i32
    %c0_i32_0 = arith.constant 0 : i32
    %c0_i32_1 = arith.constant 0 : i32
    %c0_i32_2 = arith.constant 0 : i32
    return %c0_i32, %c0_i32_0, %c0_i32_1 : i32, i32, i32
  }
  func.func @transform_2(%arg0: i32, %arg1: i32, %arg2: i32) -> (i32, i32) {
    %c0_i32 = arith.constant 0 : i32
    %c0_i32_0 = arith.constant 0 : i32
    %c0_i32_1 = arith.constant 0 : i32
    return %c0_i32, %c0_i32_0 : i32, i32
  }
  func.func @transform_3(%arg0: i32, %arg1: i32, %arg2: i32) -> (i32, i32, i32, i32) {
    %c0_i32 = arith.constant 0 : i32
    %c0_i32_0 = arith.constant 0 : i32
    %c0_i32_1 = arith.constant 0 : i32
    return %arg0, %arg1, %c0_i32, %c0_i32_0 : i32, i32, i32, i32
  }
}

module attributes {stable_mosaic.version = 11 : i64} {
  func.func @_conv_plane_kernel(%arg0: i32, %arg1: i32, %arg2: i32, %arg3: memref<1x1x10x10x16xbf16, #tpu.memory_space<vmem>>, %arg4: memref<64x16x32xbf16, #tpu.memory_space<vmem>>, %arg5: memref<1x32xf32, #tpu.memory_space<vmem>>, %arg6: memref<1x1x16x32xbf16, #tpu.memory_space<vmem>>, %arg7: memref<1x1x32xf32, #tpu.memory_space<vmem>>, %arg8: memref<1x1x32xf32, #tpu.memory_space<vmem>>, %arg9: memref<16x32xf32, #tpu.memory_space<vmem>>) attributes {dimension_semantics = [#tpu.dimension_semantics<parallel>, #tpu.dimension_semantics<arbitrary>, #tpu.dimension_semantics<arbitrary>], iteration_bounds = array<i64: 2, 2, 4>, scalar_prefetch = 0 : i64, scratch_operands = 1 : i64, tpu.core_type = #tpu.core_type<tc>, window_params = [{transform_indices = @transform_0, window_bounds = array<i64: 1, 1, 10, 10, 16>}, {pipeline_mode = #tpu.pipeline_mode<synchronous>, transform_indices = @transform_1, window_bounds = array<i64: 64, 16, 32>}, {pipeline_mode = #tpu.pipeline_mode<synchronous>, transform_indices = @transform_2, window_bounds = array<i64: 1, 32>}, {transform_indices = @transform_3, window_bounds = array<i64: 1, 1, 16, 32>}, {transform_indices = @transform_4, window_bounds = array<i64: 1, 1, 32>}, {transform_indices = @transform_5, window_bounds = array<i64: 1, 1, 32>}]} {
    %c0_i32 = arith.constant 0 : i32
    %0 = arith.cmpi eq, %arg2, %c0_i32 : i32
    %1 = arith.extui %0 : i1 to i32
    %c0_i32_0 = arith.constant 0 : i32
    %2 = arith.cmpi ne, %1, %c0_i32_0 : i32
    scf.if %2 {
      %cst_174 = arith.constant 0.000000e+00 : f32
      %189 = vector.broadcast %cst_174 : f32 to vector<16x32xf32>
      %c0_175 = arith.constant 0 : index
      %c0_176 = arith.constant 0 : index
      %190 = vector.load %arg9[%c0_175, %c0_176] : memref<16x32xf32, #tpu.memory_space<vmem>>, vector<16x32xf32>
      tpu.vector_store %arg9[%c0_175, %c0_176], %189 {strides = array<i32>} : memref<16x32xf32, #tpu.memory_space<vmem>>, vector<16x32xf32>,
    } else {
    }
    %c0_i32_1 = arith.constant 0 : i32
    %3 = arith.cmpi eq, %arg1, %c0_i32_1 : i32
    %c0_i32_2 = arith.constant 0 : i32
    %4 = arith.cmpi eq, %arg2, %c0_i32_2 : i32
    %5 = arith.andi %3, %4 : i1
    %6 = arith.extui %5 : i1 to i32
    %c0_i32_3 = arith.constant 0 : i32
    %7 = arith.cmpi ne, %6, %c0_i32_3 : i32
    scf.if %7 {
      %cst_174 = arith.constant 0.000000e+00 : f32
      %189 = vector.broadcast %cst_174 : f32 to vector<1x1x32xf32>
      %c0_175 = arith.constant 0 : index
      %c0_176 = arith.constant 0 : index
      %c0_177 = arith.constant 0 : index
      %190 = vector.load %arg7[%c0_175, %c0_176, %c0_177] : memref<1x1x32xf32, #tpu.memory_space<vmem>>, vector<1x1x32xf32>
      tpu.vector_store %arg7[%c0_175, %c0_176, %c0_177], %189 {strides = array<i32>} : memref<1x1x32xf32, #tpu.memory_space<vmem>>, vector<1x1x32xf32>,
      %cst_178 = arith.constant 0.000000e+00 : f32
      %191 = vector.broadcast %cst_178 : f32 to vector<1x1x32xf32>
      %c0_179 = arith.constant 0 : index
      %c0_180 = arith.constant 0 : index
      %c0_181 = arith.constant 0 : index
      %192 = vector.load %arg8[%c0_179, %c0_180, %c0_181] : memref<1x1x32xf32, #tpu.memory_space<vmem>>, vector<1x1x32xf32>
      tpu.vector_store %arg8[%c0_179, %c0_180, %c0_181], %191 {strides = array<i32>} : memref<1x1x32xf32, #tpu.memory_space<vmem>>, vector<1x1x32xf32>,
    } else {
    }
    %c0 = arith.constant 0 : index
    %c0_4 = arith.constant 0 : index
    %8 = vector.load %arg9[%c0, %c0_4] : memref<16x32xf32, #tpu.memory_space<vmem>>, vector<16x32xf32>
    %c0_5 = arith.constant 0 : index
    %c0_6 = arith.constant 0 : index
    %c0_7 = arith.constant 0 : index
    %c0_8 = arith.constant 0 : index
    %c0_9 = arith.constant 0 : index
    %9 = vector.load %arg3[%c0_5, %c0_6, %c0_7, %c0_8, %c0_9] : memref<1x1x10x10x16xbf16, #tpu.memory_space<vmem>>, vector<1x1x4x4x16xbf16>
    %10 = vector.shape_cast %9 : vector<1x1x4x4x16xbf16> to vector<4x4x16xbf16>
    %11 = vector.shape_cast %10 : vector<4x4x16xbf16> to vector<16x16xbf16>
    %c16_i32 = arith.constant 16 : i32
    %12 = arith.muli %arg2, %c16_i32 : i32
    %c0_i32_10 = arith.constant 0 : i32
    %13 = arith.addi %12, %c0_i32_10 : i32
    %c0_i32_11 = arith.constant 0 : i32
    %14 = arith.addi %13, %c0_i32_11 : i32
    %15 = arith.index_cast %14 : i32 to index
    %c0_12 = arith.constant 0 : index
    %c0_13 = arith.constant 0 : index
    %16 = vector.load %arg4[%15, %c0_12, %c0_13] : memref<64x16x32xbf16, #tpu.memory_space<vmem>>, vector<1x16x32xbf16>
    %17 = vector.shape_cast %16 : vector<1x16x32xbf16> to vector<16x32xbf16>
    %cst = arith.constant dense<0.000000e+00> : vector<16x32xf32>
    %18 = tpu.matmul %11, %17, %cst {dimension_numbers = #tpu.dot_dimension_numbers<[1], [0], [0], [1], [0, 0, 1, 1], [], []>} : vector<16x16xbf16>, vector<16x32xbf16>, vector<16x32xf32> -> vector<16x32xf32>
    %19 = arith.addf %8, %18 : vector<16x32xf32>
    %c0_14 = arith.constant 0 : index
    %c0_15 = arith.constant 0 : index
    %c0_16 = arith.constant 0 : index
    %c5 = arith.constant 5 : index
    %c0_17 = arith.constant 0 : index
    %20 = vector.load %arg3[%c0_14, %c0_15, %c0_16, %c5, %c0_17] : memref<1x1x10x10x16xbf16, #tpu.memory_space<vmem>>, vector<1x1x4x4x16xbf16>
    %21 = vector.shape_cast %20 : vector<1x1x4x4x16xbf16> to vector<4x4x16xbf16>
    %22 = vector.shape_cast %21 : vector<4x4x16xbf16> to vector<16x16xbf16>
    %c16_i32_18 = arith.constant 16 : i32
    %23 = arith.muli %arg2, %c16_i32_18 : i32
    %c0_i32_19 = arith.constant 0 : i32
    %24 = arith.addi %23, %c0_i32_19 : i32
    %c1_i32 = arith.constant 1 : i32
    %25 = arith.addi %24, %c1_i32 : i32
    %26 = arith.index_cast %25 : i32 to index
    %c0_20 = arith.constant 0 : index
    %c0_21 = arith.constant 0 : index
    %27 = vector.load %arg4[%26, %c0_20, %c0_21] : memref<64x16x32xbf16, #tpu.memory_space<vmem>>, vector<1x16x32xbf16>
    %28 = vector.shape_cast %27 : vector<1x16x32xbf16> to vector<16x32xbf16>
    %cst_22 = arith.constant dense<0.000000e+00> : vector<16x32xf32>
    %29 = tpu.matmul %22, %28, %cst_22 {dimension_numbers = #tpu.dot_dimension_numbers<[1], [0], [0], [1], [0, 0, 1, 1], [], []>} : vector<16x16xbf16>, vector<16x32xbf16>, vector<16x32xf32> -> vector<16x32xf32>
    %30 = arith.addf %19, %29 : vector<16x32xf32>
    %c0_23 = arith.constant 0 : index
    %c0_24 = arith.constant 0 : index
    %c0_25 = arith.constant 0 : index
    %c1 = arith.constant 1 : index
    %c0_26 = arith.constant 0 : index
    %31 = vector.load %arg3[%c0_23, %c0_24, %c0_25, %c1, %c0_26] : memref<1x1x10x10x16xbf16, #tpu.memory_space<vmem>>, vector<1x1x4x4x16xbf16>
    %32 = vector.shape_cast %31 : vector<1x1x4x4x16xbf16> to vector<4x4x16xbf16>
    %33 = vector.shape_cast %32 : vector<4x4x16xbf16> to vector<16x16xbf16>
    %c16_i32_27 = arith.constant 16 : i32
    %34 = arith.muli %arg2, %c16_i32_27 : i32
    %c0_i32_28 = arith.constant 0 : i32
    %35 = arith.addi %34, %c0_i32_28 : i32
    %c2_i32 = arith.constant 2 : i32
    %36 = arith.addi %35, %c2_i32 : i32
    %37 = arith.index_cast %36 : i32 to index
    %c0_29 = arith.constant 0 : index
    %c0_30 = arith.constant 0 : index
    %38 = vector.load %arg4[%37, %c0_29, %c0_30] : memref<64x16x32xbf16, #tpu.memory_space<vmem>>, vector<1x16x32xbf16>
    %39 = vector.shape_cast %38 : vector<1x16x32xbf16> to vector<16x32xbf16>
    %cst_31 = arith.constant dense<0.000000e+00> : vector<16x32xf32>
    %40 = tpu.matmul %33, %39, %cst_31 {dimension_numbers = #tpu.dot_dimension_numbers<[1], [0], [0], [1], [0, 0, 1, 1], [], []>} : vector<16x16xbf16>, vector<16x32xbf16>, vector<16x32xf32> -> vector<16x32xf32>
    %41 = arith.addf %30, %40 : vector<16x32xf32>
    %c0_32 = arith.constant 0 : index
    %c0_33 = arith.constant 0 : index
    %c0_34 = arith.constant 0 : index
    %c6 = arith.constant 6 : index
    %c0_35 = arith.constant 0 : index
    %42 = vector.load %arg3[%c0_32, %c0_33, %c0_34, %c6, %c0_35] : memref<1x1x10x10x16xbf16, #tpu.memory_space<vmem>>, vector<1x1x4x4x16xbf16>
    %43 = vector.shape_cast %42 : vector<1x1x4x4x16xbf16> to vector<4x4x16xbf16>
    %44 = vector.shape_cast %43 : vector<4x4x16xbf16> to vector<16x16xbf16>
    %c16_i32_36 = arith.constant 16 : i32
    %45 = arith.muli %arg2, %c16_i32_36 : i32
    %c0_i32_37 = arith.constant 0 : i32
    %46 = arith.addi %45, %c0_i32_37 : i32
    %c3_i32 = arith.constant 3 : i32
    %47 = arith.addi %46, %c3_i32 : i32
    %48 = arith.index_cast %47 : i32 to index
    %c0_38 = arith.constant 0 : index
    %c0_39 = arith.constant 0 : index
    %49 = vector.load %arg4[%48, %c0_38, %c0_39] : memref<64x16x32xbf16, #tpu.memory_space<vmem>>, vector<1x16x32xbf16>
    %50 = vector.shape_cast %49 : vector<1x16x32xbf16> to vector<16x32xbf16>
    %cst_40 = arith.constant dense<0.000000e+00> : vector<16x32xf32>
    %51 = tpu.matmul %44, %50, %cst_40 {dimension_numbers = #tpu.dot_dimension_numbers<[1], [0], [0], [1], [0, 0, 1, 1], [], []>} : vector<16x16xbf16>, vector<16x32xbf16>, vector<16x32xf32> -> vector<16x32xf32>
    %52 = arith.addf %41, %51 : vector<16x32xf32>
    %c0_41 = arith.constant 0 : index
    %c0_42 = arith.constant 0 : index
    %c5_43 = arith.constant 5 : index
    %c0_44 = arith.constant 0 : index
    %c0_45 = arith.constant 0 : index
    %53 = vector.load %arg3[%c0_41, %c0_42, %c5_43, %c0_44, %c0_45] : memref<1x1x10x10x16xbf16, #tpu.memory_space<vmem>>, vector<1x1x4x4x16xbf16>
    %54 = vector.shape_cast %53 : vector<1x1x4x4x16xbf16> to vector<4x4x16xbf16>
    %55 = vector.shape_cast %54 : vector<4x4x16xbf16> to vector<16x16xbf16>
    %c16_i32_46 = arith.constant 16 : i32
    %56 = arith.muli %arg2, %c16_i32_46 : i32
    %c4_i32 = arith.constant 4 : i32
    %57 = arith.addi %56, %c4_i32 : i32
    %c0_i32_47 = arith.constant 0 : i32
    %58 = arith.addi %57, %c0_i32_47 : i32
    %59 = arith.index_cast %58 : i32 to index
    %c0_48 = arith.constant 0 : index
    %c0_49 = arith.constant 0 : index
    %60 = vector.load %arg4[%59, %c0_48, %c0_49] : memref<64x16x32xbf16, #tpu.memory_space<vmem>>, vector<1x16x32xbf16>
    %61 = vector.shape_cast %60 : vector<1x16x32xbf16> to vector<16x32xbf16>
    %cst_50 = arith.constant dense<0.000000e+00> : vector<16x32xf32>
    %62 = tpu.matmul %55, %61, %cst_50 {dimension_numbers = #tpu.dot_dimension_numbers<[1], [0], [0], [1], [0, 0, 1, 1], [], []>} : vector<16x16xbf16>, vector<16x32xbf16>, vector<16x32xf32> -> vector<16x32xf32>
    %63 = arith.addf %52, %62 : vector<16x32xf32>
    %c0_51 = arith.constant 0 : index
    %c0_52 = arith.constant 0 : index
    %c5_53 = arith.constant 5 : index
    %c5_54 = arith.constant 5 : index
    %c0_55 = arith.constant 0 : index
    %64 = vector.load %arg3[%c0_51, %c0_52, %c5_53, %c5_54, %c0_55] : memref<1x1x10x10x16xbf16, #tpu.memory_space<vmem>>, vector<1x1x4x4x16xbf16>
    %65 = vector.shape_cast %64 : vector<1x1x4x4x16xbf16> to vector<4x4x16xbf16>
    %66 = vector.shape_cast %65 : vector<4x4x16xbf16> to vector<16x16xbf16>
    %c16_i32_56 = arith.constant 16 : i32
    %67 = arith.muli %arg2, %c16_i32_56 : i32
    %c4_i32_57 = arith.constant 4 : i32
    %68 = arith.addi %67, %c4_i32_57 : i32
    %c1_i32_58 = arith.constant 1 : i32
    %69 = arith.addi %68, %c1_i32_58 : i32
    %70 = arith.index_cast %69 : i32 to index
    %c0_59 = arith.constant 0 : index
    %c0_60 = arith.constant 0 : index
    %71 = vector.load %arg4[%70, %c0_59, %c0_60] : memref<64x16x32xbf16, #tpu.memory_space<vmem>>, vector<1x16x32xbf16>
    %72 = vector.shape_cast %71 : vector<1x16x32xbf16> to vector<16x32xbf16>
    %cst_61 = arith.constant dense<0.000000e+00> : vector<16x32xf32>
    %73 = tpu.matmul %66, %72, %cst_61 {dimension_numbers = #tpu.dot_dimension_numbers<[1], [0], [0], [1], [0, 0, 1, 1], [], []>} : vector<16x16xbf16>, vector<16x32xbf16>, vector<16x32xf32> -> vector<16x32xf32>
    %74 = arith.addf %63, %73 : vector<16x32xf32>
    %c0_62 = arith.constant 0 : index
    %c0_63 = arith.constant 0 : index
    %c5_64 = arith.constant 5 : index
    %c1_65 = arith.constant 1 : index
    %c0_66 = arith.constant 0 : index
    %75 = vector.load %arg3[%c0_62, %c0_63, %c5_64, %c1_65, %c0_66] : memref<1x1x10x10x16xbf16, #tpu.memory_space<vmem>>, vector<1x1x4x4x16xbf16>
    %76 = vector.shape_cast %75 : vector<1x1x4x4x16xbf16> to vector<4x4x16xbf16>
    %77 = vector.shape_cast %76 : vector<4x4x16xbf16> to vector<16x16xbf16>
    %c16_i32_67 = arith.constant 16 : i32
    %78 = arith.muli %arg2, %c16_i32_67 : i32
    %c4_i32_68 = arith.constant 4 : i32
    %79 = arith.addi %78, %c4_i32_68 : i32
    %c2_i32_69 = arith.constant 2 : i32
    %80 = arith.addi %79, %c2_i32_69 : i32
    %81 = arith.index_cast %80 : i32 to index
    %c0_70 = arith.constant 0 : index
    %c0_71 = arith.constant 0 : index
    %82 = vector.load %arg4[%81, %c0_70, %c0_71] : memref<64x16x32xbf16, #tpu.memory_space<vmem>>, vector<1x16x32xbf16>
    %83 = vector.shape_cast %82 : vector<1x16x32xbf16> to vector<16x32xbf16>
    %cst_72 = arith.constant dense<0.000000e+00> : vector<16x32xf32>
    %84 = tpu.matmul %77, %83, %cst_72 {dimension_numbers = #tpu.dot_dimension_numbers<[1], [0], [0], [1], [0, 0, 1, 1], [], []>} : vector<16x16xbf16>, vector<16x32xbf16>, vector<16x32xf32> -> vector<16x32xf32>
    %85 = arith.addf %74, %84 : vector<16x32xf32>
    %c0_73 = arith.constant 0 : index
    %c0_74 = arith.constant 0 : index
    %c5_75 = arith.constant 5 : index
    %c6_76 = arith.constant 6 : index
    %c0_77 = arith.constant 0 : index
    %86 = vector.load %arg3[%c0_73, %c0_74, %c5_75, %c6_76, %c0_77] : memref<1x1x10x10x16xbf16, #tpu.memory_space<vmem>>, vector<1x1x4x4x16xbf16>
    %87 = vector.shape_cast %86 : vector<1x1x4x4x16xbf16> to vector<4x4x16xbf16>
    %88 = vector.shape_cast %87 : vector<4x4x16xbf16> to vector<16x16xbf16>
    %c16_i32_78 = arith.constant 16 : i32
    %89 = arith.muli %arg2, %c16_i32_78 : i32
    %c4_i32_79 = arith.constant 4 : i32
    %90 = arith.addi %89, %c4_i32_79 : i32
    %c3_i32_80 = arith.constant 3 : i32
    %91 = arith.addi %90, %c3_i32_80 : i32
    %92 = arith.index_cast %91 : i32 to index
    %c0_81 = arith.constant 0 : index
    %c0_82 = arith.constant 0 : index
    %93 = vector.load %arg4[%92, %c0_81, %c0_82] : memref<64x16x32xbf16, #tpu.memory_space<vmem>>, vector<1x16x32xbf16>
    %94 = vector.shape_cast %93 : vector<1x16x32xbf16> to vector<16x32xbf16>
    %cst_83 = arith.constant dense<0.000000e+00> : vector<16x32xf32>
    %95 = tpu.matmul %88, %94, %cst_83 {dimension_numbers = #tpu.dot_dimension_numbers<[1], [0], [0], [1], [0, 0, 1, 1], [], []>} : vector<16x16xbf16>, vector<16x32xbf16>, vector<16x32xf32> -> vector<16x32xf32>
    %96 = arith.addf %85, %95 : vector<16x32xf32>
    %c0_84 = arith.constant 0 : index
    %c0_85 = arith.constant 0 : index
    %c1_86 = arith.constant 1 : index
    %c0_87 = arith.constant 0 : index
    %c0_88 = arith.constant 0 : index
    %97 = vector.load %arg3[%c0_84, %c0_85, %c1_86, %c0_87, %c0_88] : memref<1x1x10x10x16xbf16, #tpu.memory_space<vmem>>, vector<1x1x4x4x16xbf16>
    %98 = vector.shape_cast %97 : vector<1x1x4x4x16xbf16> to vector<4x4x16xbf16>
    %99 = vector.shape_cast %98 : vector<4x4x16xbf16> to vector<16x16xbf16>
    %c16_i32_89 = arith.constant 16 : i32
    %100 = arith.muli %arg2, %c16_i32_89 : i32
    %c8_i32 = arith.constant 8 : i32
    %101 = arith.addi %100, %c8_i32 : i32
    %c0_i32_90 = arith.constant 0 : i32
    %102 = arith.addi %101, %c0_i32_90 : i32
    %103 = arith.index_cast %102 : i32 to index
    %c0_91 = arith.constant 0 : index
    %c0_92 = arith.constant 0 : index
    %104 = vector.load %arg4[%103, %c0_91, %c0_92] : memref<64x16x32xbf16, #tpu.memory_space<vmem>>, vector<1x16x32xbf16>
    %105 = vector.shape_cast %104 : vector<1x16x32xbf16> to vector<16x32xbf16>
    %cst_93 = arith.constant dense<0.000000e+00> : vector<16x32xf32>
    %106 = tpu.matmul %99, %105, %cst_93 {dimension_numbers = #tpu.dot_dimension_numbers<[1], [0], [0], [1], [0, 0, 1, 1], [], []>} : vector<16x16xbf16>, vector<16x32xbf16>, vector<16x32xf32> -> vector<16x32xf32>
    %107 = arith.addf %96, %106 : vector<16x32xf32>
    %c0_94 = arith.constant 0 : index
    %c0_95 = arith.constant 0 : index
    %c1_96 = arith.constant 1 : index
    %c5_97 = arith.constant 5 : index
    %c0_98 = arith.constant 0 : index
    %108 = vector.load %arg3[%c0_94, %c0_95, %c1_96, %c5_97, %c0_98] : memref<1x1x10x10x16xbf16, #tpu.memory_space<vmem>>, vector<1x1x4x4x16xbf16>
    %109 = vector.shape_cast %108 : vector<1x1x4x4x16xbf16> to vector<4x4x16xbf16>
    %110 = vector.shape_cast %109 : vector<4x4x16xbf16> to vector<16x16xbf16>
    %c16_i32_99 = arith.constant 16 : i32
    %111 = arith.muli %arg2, %c16_i32_99 : i32
    %c8_i32_100 = arith.constant 8 : i32
    %112 = arith.addi %111, %c8_i32_100 : i32
    %c1_i32_101 = arith.constant 1 : i32
    %113 = arith.addi %112, %c1_i32_101 : i32
    %114 = arith.index_cast %113 : i32 to index
    %c0_102 = arith.constant 0 : index
    %c0_103 = arith.constant 0 : index
    %115 = vector.load %arg4[%114, %c0_102, %c0_103] : memref<64x16x32xbf16, #tpu.memory_space<vmem>>, vector<1x16x32xbf16>
    %116 = vector.shape_cast %115 : vector<1x16x32xbf16> to vector<16x32xbf16>
    %cst_104 = arith.constant dense<0.000000e+00> : vector<16x32xf32>
    %117 = tpu.matmul %110, %116, %cst_104 {dimension_numbers = #tpu.dot_dimension_numbers<[1], [0], [0], [1], [0, 0, 1, 1], [], []>} : vector<16x16xbf16>, vector<16x32xbf16>, vector<16x32xf32> -> vector<16x32xf32>
    %118 = arith.addf %107, %117 : vector<16x32xf32>
    %c0_105 = arith.constant 0 : index
    %c0_106 = arith.constant 0 : index
    %c1_107 = arith.constant 1 : index
    %c1_108 = arith.constant 1 : index
    %c0_109 = arith.constant 0 : index
    %119 = vector.load %arg3[%c0_105, %c0_106, %c1_107, %c1_108, %c0_109] : memref<1x1x10x10x16xbf16, #tpu.memory_space<vmem>>, vector<1x1x4x4x16xbf16>
    %120 = vector.shape_cast %119 : vector<1x1x4x4x16xbf16> to vector<4x4x16xbf16>
    %121 = vector.shape_cast %120 : vector<4x4x16xbf16> to vector<16x16xbf16>
    %c16_i32_110 = arith.constant 16 : i32
    %122 = arith.muli %arg2, %c16_i32_110 : i32
    %c8_i32_111 = arith.constant 8 : i32
    %123 = arith.addi %122, %c8_i32_111 : i32
    %c2_i32_112 = arith.constant 2 : i32
    %124 = arith.addi %123, %c2_i32_112 : i32
    %125 = arith.index_cast %124 : i32 to index
    %c0_113 = arith.constant 0 : index
    %c0_114 = arith.constant 0 : index
    %126 = vector.load %arg4[%125, %c0_113, %c0_114] : memref<64x16x32xbf16, #tpu.memory_space<vmem>>, vector<1x16x32xbf16>
    %127 = vector.shape_cast %126 : vector<1x16x32xbf16> to vector<16x32xbf16>
    %cst_115 = arith.constant dense<0.000000e+00> : vector<16x32xf32>
    %128 = tpu.matmul %121, %127, %cst_115 {dimension_numbers = #tpu.dot_dimension_numbers<[1], [0], [0], [1], [0, 0, 1, 1], [], []>} : vector<16x16xbf16>, vector<16x32xbf16>, vector<16x32xf32> -> vector<16x32xf32>
    %129 = arith.addf %118, %128 : vector<16x32xf32>
    %c0_116 = arith.constant 0 : index
    %c0_117 = arith.constant 0 : index
    %c1_118 = arith.constant 1 : index
    %c6_119 = arith.constant 6 : index
    %c0_120 = arith.constant 0 : index
    %130 = vector.load %arg3[%c0_116, %c0_117, %c1_118, %c6_119, %c0_120] : memref<1x1x10x10x16xbf16, #tpu.memory_space<vmem>>, vector<1x1x4x4x16xbf16>
    %131 = vector.shape_cast %130 : vector<1x1x4x4x16xbf16> to vector<4x4x16xbf16>
    %132 = vector.shape_cast %131 : vector<4x4x16xbf16> to vector<16x16xbf16>
    %c16_i32_121 = arith.constant 16 : i32
    %133 = arith.muli %arg2, %c16_i32_121 : i32
    %c8_i32_122 = arith.constant 8 : i32
    %134 = arith.addi %133, %c8_i32_122 : i32
    %c3_i32_123 = arith.constant 3 : i32
    %135 = arith.addi %134, %c3_i32_123 : i32
    %136 = arith.index_cast %135 : i32 to index
    %c0_124 = arith.constant 0 : index
    %c0_125 = arith.constant 0 : index
    %137 = vector.load %arg4[%136, %c0_124, %c0_125] : memref<64x16x32xbf16, #tpu.memory_space<vmem>>, vector<1x16x32xbf16>
    %138 = vector.shape_cast %137 : vector<1x16x32xbf16> to vector<16x32xbf16>
    %cst_126 = arith.constant dense<0.000000e+00> : vector<16x32xf32>
    %139 = tpu.matmul %132, %138, %cst_126 {dimension_numbers = #tpu.dot_dimension_numbers<[1], [0], [0], [1], [0, 0, 1, 1], [], []>} : vector<16x16xbf16>, vector<16x32xbf16>, vector<16x32xf32> -> vector<16x32xf32>
    %140 = arith.addf %129, %139 : vector<16x32xf32>
    %c0_127 = arith.constant 0 : index
    %c0_128 = arith.constant 0 : index
    %c6_129 = arith.constant 6 : index
    %c0_130 = arith.constant 0 : index
    %c0_131 = arith.constant 0 : index
    %141 = vector.load %arg3[%c0_127, %c0_128, %c6_129, %c0_130, %c0_131] : memref<1x1x10x10x16xbf16, #tpu.memory_space<vmem>>, vector<1x1x4x4x16xbf16>
    %142 = vector.shape_cast %141 : vector<1x1x4x4x16xbf16> to vector<4x4x16xbf16>
    %143 = vector.shape_cast %142 : vector<4x4x16xbf16> to vector<16x16xbf16>
    %c16_i32_132 = arith.constant 16 : i32
    %144 = arith.muli %arg2, %c16_i32_132 : i32
    %c12_i32 = arith.constant 12 : i32
    %145 = arith.addi %144, %c12_i32 : i32
    %c0_i32_133 = arith.constant 0 : i32
    %146 = arith.addi %145, %c0_i32_133 : i32
    %147 = arith.index_cast %146 : i32 to index
    %c0_134 = arith.constant 0 : index
    %c0_135 = arith.constant 0 : index
    %148 = vector.load %arg4[%147, %c0_134, %c0_135] : memref<64x16x32xbf16, #tpu.memory_space<vmem>>, vector<1x16x32xbf16>
    %149 = vector.shape_cast %148 : vector<1x16x32xbf16> to vector<16x32xbf16>
    %cst_136 = arith.constant dense<0.000000e+00> : vector<16x32xf32>
    %150 = tpu.matmul %143, %149, %cst_136 {dimension_numbers = #tpu.dot_dimension_numbers<[1], [0], [0], [1], [0, 0, 1, 1], [], []>} : vector<16x16xbf16>, vector<16x32xbf16>, vector<16x32xf32> -> vector<16x32xf32>
    %151 = arith.addf %140, %150 : vector<16x32xf32>
    %c0_137 = arith.constant 0 : index
    %c0_138 = arith.constant 0 : index
    %c6_139 = arith.constant 6 : index
    %c5_140 = arith.constant 5 : index
    %c0_141 = arith.constant 0 : index
    %152 = vector.load %arg3[%c0_137, %c0_138, %c6_139, %c5_140, %c0_141] : memref<1x1x10x10x16xbf16, #tpu.memory_space<vmem>>, vector<1x1x4x4x16xbf16>
    %153 = vector.shape_cast %152 : vector<1x1x4x4x16xbf16> to vector<4x4x16xbf16>
    %154 = vector.shape_cast %153 : vector<4x4x16xbf16> to vector<16x16xbf16>
    %c16_i32_142 = arith.constant 16 : i32
    %155 = arith.muli %arg2, %c16_i32_142 : i32
    %c12_i32_143 = arith.constant 12 : i32
    %156 = arith.addi %155, %c12_i32_143 : i32
    %c1_i32_144 = arith.constant 1 : i32
    %157 = arith.addi %156, %c1_i32_144 : i32
    %158 = arith.index_cast %157 : i32 to index
    %c0_145 = arith.constant 0 : index
    %c0_146 = arith.constant 0 : index
    %159 = vector.load %arg4[%158, %c0_145, %c0_146] : memref<64x16x32xbf16, #tpu.memory_space<vmem>>, vector<1x16x32xbf16>
    %160 = vector.shape_cast %159 : vector<1x16x32xbf16> to vector<16x32xbf16>
    %cst_147 = arith.constant dense<0.000000e+00> : vector<16x32xf32>
    %161 = tpu.matmul %154, %160, %cst_147 {dimension_numbers = #tpu.dot_dimension_numbers<[1], [0], [0], [1], [0, 0, 1, 1], [], []>} : vector<16x16xbf16>, vector<16x32xbf16>, vector<16x32xf32> -> vector<16x32xf32>
    %162 = arith.addf %151, %161 : vector<16x32xf32>
    %c0_148 = arith.constant 0 : index
    %c0_149 = arith.constant 0 : index
    %c6_150 = arith.constant 6 : index
    %c1_151 = arith.constant 1 : index
    %c0_152 = arith.constant 0 : index
    %163 = vector.load %arg3[%c0_148, %c0_149, %c6_150, %c1_151, %c0_152] : memref<1x1x10x10x16xbf16, #tpu.memory_space<vmem>>, vector<1x1x4x4x16xbf16>
    %164 = vector.shape_cast %163 : vector<1x1x4x4x16xbf16> to vector<4x4x16xbf16>
    %165 = vector.shape_cast %164 : vector<4x4x16xbf16> to vector<16x16xbf16>
    %c16_i32_153 = arith.constant 16 : i32
    %166 = arith.muli %arg2, %c16_i32_153 : i32
    %c12_i32_154 = arith.constant 12 : i32
    %167 = arith.addi %166, %c12_i32_154 : i32
    %c2_i32_155 = arith.constant 2 : i32
    %168 = arith.addi %167, %c2_i32_155 : i32
    %169 = arith.index_cast %168 : i32 to index
    %c0_156 = arith.constant 0 : index
    %c0_157 = arith.constant 0 : index
    %170 = vector.load %arg4[%169, %c0_156, %c0_157] : memref<64x16x32xbf16, #tpu.memory_space<vmem>>, vector<1x16x32xbf16>
    %171 = vector.shape_cast %170 : vector<1x16x32xbf16> to vector<16x32xbf16>
    %cst_158 = arith.constant dense<0.000000e+00> : vector<16x32xf32>
    %172 = tpu.matmul %165, %171, %cst_158 {dimension_numbers = #tpu.dot_dimension_numbers<[1], [0], [0], [1], [0, 0, 1, 1], [], []>} : vector<16x16xbf16>, vector<16x32xbf16>, vector<16x32xf32> -> vector<16x32xf32>
    %173 = arith.addf %162, %172 : vector<16x32xf32>
    %c0_159 = arith.constant 0 : index
    %c0_160 = arith.constant 0 : index
    %c6_161 = arith.constant 6 : index
    %c6_162 = arith.constant 6 : index
    %c0_163 = arith.constant 0 : index
    %174 = vector.load %arg3[%c0_159, %c0_160, %c6_161, %c6_162, %c0_163] : memref<1x1x10x10x16xbf16, #tpu.memory_space<vmem>>, vector<1x1x4x4x16xbf16>
    %175 = vector.shape_cast %174 : vector<1x1x4x4x16xbf16> to vector<4x4x16xbf16>
    %176 = vector.shape_cast %175 : vector<4x4x16xbf16> to vector<16x16xbf16>
    %c16_i32_164 = arith.constant 16 : i32
    %177 = arith.muli %arg2, %c16_i32_164 : i32
    %c12_i32_165 = arith.constant 12 : i32
    %178 = arith.addi %177, %c12_i32_165 : i32
    %c3_i32_166 = arith.constant 3 : i32
    %179 = arith.addi %178, %c3_i32_166 : i32
    %180 = arith.index_cast %179 : i32 to index
    %c0_167 = arith.constant 0 : index
    %c0_168 = arith.constant 0 : index
    %181 = vector.load %arg4[%180, %c0_167, %c0_168] : memref<64x16x32xbf16, #tpu.memory_space<vmem>>, vector<1x16x32xbf16>
    %182 = vector.shape_cast %181 : vector<1x16x32xbf16> to vector<16x32xbf16>
    %cst_169 = arith.constant dense<0.000000e+00> : vector<16x32xf32>
    %183 = tpu.matmul %176, %182, %cst_169 {dimension_numbers = #tpu.dot_dimension_numbers<[1], [0], [0], [1], [0, 0, 1, 1], [], []>} : vector<16x16xbf16>, vector<16x32xbf16>, vector<16x32xf32> -> vector<16x32xf32>
    %184 = arith.addf %173, %183 : vector<16x32xf32>
    %c0_170 = arith.constant 0 : index
    %c0_171 = arith.constant 0 : index
    %185 = vector.load %arg9[%c0_170, %c0_171] : memref<16x32xf32, #tpu.memory_space<vmem>>, vector<16x32xf32>
    tpu.vector_store %arg9[%c0_170, %c0_171], %184 {strides = array<i32>} : memref<16x32xf32, #tpu.memory_space<vmem>>, vector<16x32xf32>,
    %c3_i32_172 = arith.constant 3 : i32
    %186 = arith.cmpi eq, %arg2, %c3_i32_172 : i32
    %187 = arith.extui %186 : i1 to i32
    %c0_i32_173 = arith.constant 0 : i32
    %188 = arith.cmpi ne, %187, %c0_i32_173 : i32
    scf.if %188 {
      %c0_174 = arith.constant 0 : index
      %c0_175 = arith.constant 0 : index
      %189 = vector.load %arg9[%c0_174, %c0_175] : memref<16x32xf32, #tpu.memory_space<vmem>>, vector<16x32xf32>
      %c0_176 = arith.constant 0 : index
      %c0_177 = arith.constant 0 : index
      %190 = vector.load %arg5[%c0_176, %c0_177] : memref<1x32xf32, #tpu.memory_space<vmem>>, vector<1x32xf32>
      %191 = vector.broadcast %190 : vector<1x32xf32> to vector<16x32xf32>
      %192 = arith.addf %189, %191 : vector<16x32xf32>
      %193 = arith.truncf %192 : vector<16x32xf32> to vector<16x32xbf16>
      %c0_178 = arith.constant 0 : index
      %c0_179 = arith.constant 0 : index
      %c0_180 = arith.constant 0 : index
      %c0_181 = arith.constant 0 : index
      %194 = vector.load %arg6[%c0_178, %c0_179, %c0_180, %c0_181] : memref<1x1x16x32xbf16, #tpu.memory_space<vmem>>, vector<1x1x16x32xbf16>
      %195 = vector.shape_cast %194 : vector<1x1x16x32xbf16> to vector<16x32xbf16>
      %196 = vector.shape_cast %193 : vector<16x32xbf16> to vector<1x1x16x32xbf16>
      tpu.vector_store %arg6[%c0_178, %c0_179, %c0_180, %c0_181], %196 {strides = array<i32>} : memref<1x1x16x32xbf16, #tpu.memory_space<vmem>>, vector<1x1x16x32xbf16>,
      %c0_182 = arith.constant 0 : index
      %c0_183 = arith.constant 0 : index
      %c0_184 = arith.constant 0 : index
      %197 = vector.load %arg7[%c0_182, %c0_183, %c0_184] : memref<1x1x32xf32, #tpu.memory_space<vmem>>, vector<1x1x32xf32>
      %198 = vector.shape_cast %197 : vector<1x1x32xf32> to vector<1x32xf32>
      %cst_185 = arith.constant dense<0.000000e+00> : vector<32xf32>
      %199 = vector.multi_reduction <add>, %192, %cst_185 [0] : vector<16x32xf32> to vector<32xf32>
      %200 = vector.shape_cast %199 : vector<32xf32> to vector<1x32xf32>
      %201 = arith.addf %198, %200 : vector<1x32xf32>
      %c0_186 = arith.constant 0 : index
      %c0_187 = arith.constant 0 : index
      %c0_188 = arith.constant 0 : index
      %202 = vector.load %arg7[%c0_186, %c0_187, %c0_188] : memref<1x1x32xf32, #tpu.memory_space<vmem>>, vector<1x1x32xf32>
      %203 = vector.shape_cast %202 : vector<1x1x32xf32> to vector<1x32xf32>
      %204 = vector.shape_cast %201 : vector<1x32xf32> to vector<1x1x32xf32>
      tpu.vector_store %arg7[%c0_186, %c0_187, %c0_188], %204 {strides = array<i32>} : memref<1x1x32xf32, #tpu.memory_space<vmem>>, vector<1x1x32xf32>,
      %c0_189 = arith.constant 0 : index
      %c0_190 = arith.constant 0 : index
      %c0_191 = arith.constant 0 : index
      %205 = vector.load %arg8[%c0_189, %c0_190, %c0_191] : memref<1x1x32xf32, #tpu.memory_space<vmem>>, vector<1x1x32xf32>
      %206 = vector.shape_cast %205 : vector<1x1x32xf32> to vector<1x32xf32>
      %207 = arith.mulf %192, %192 : vector<16x32xf32>
      %cst_192 = arith.constant dense<0.000000e+00> : vector<32xf32>
      %208 = vector.multi_reduction <add>, %207, %cst_192 [0] : vector<16x32xf32> to vector<32xf32>
      %209 = vector.shape_cast %208 : vector<32xf32> to vector<1x32xf32>
      %210 = arith.addf %206, %209 : vector<1x32xf32>
      %c0_193 = arith.constant 0 : index
      %c0_194 = arith.constant 0 : index
      %c0_195 = arith.constant 0 : index
      %211 = vector.load %arg8[%c0_193, %c0_194, %c0_195] : memref<1x1x32xf32, #tpu.memory_space<vmem>>, vector<1x1x32xf32>
      %212 = vector.shape_cast %211 : vector<1x1x32xf32> to vector<1x32xf32>
      %213 = vector.shape_cast %210 : vector<1x32xf32> to vector<1x1x32xf32>
      tpu.vector_store %arg8[%c0_193, %c0_194, %c0_195], %213 {strides = array<i32>} : memref<1x1x32xf32, #tpu.memory_space<vmem>>, vector<1x1x32xf32>,
    } else {
    }
    return
  }
  func.func @transform_0(%arg0: i32, %arg1: i32, %arg2: i32) -> (i32, i32, i32, i32, i32) {
    %c2_i32 = arith.constant 2 : i32
    %0 = arith.muli %arg1, %c2_i32 : i32
    %1 = arith.addi %0, %arg2 : i32
    %c0_i32 = arith.constant 0 : i32
    %c0_i32_0 = arith.constant 0 : i32
    %c0_i32_1 = arith.constant 0 : i32
    %c0_i32_2 = arith.constant 0 : i32
    return %arg0, %1, %c0_i32, %c0_i32_0, %c0_i32_1 : i32, i32, i32, i32, i32
  }
  func.func @transform_1(%arg0: i32, %arg1: i32, %arg2: i32) -> (i32, i32, i32) {
    %c0_i32 = arith.constant 0 : i32
    %c0_i32_0 = arith.constant 0 : i32
    %c0_i32_1 = arith.constant 0 : i32
    %c0_i32_2 = arith.constant 0 : i32
    return %c0_i32, %c0_i32_0, %c0_i32_1 : i32, i32, i32
  }
  func.func @transform_2(%arg0: i32, %arg1: i32, %arg2: i32) -> (i32, i32) {
    %c0_i32 = arith.constant 0 : i32
    %c0_i32_0 = arith.constant 0 : i32
    %c0_i32_1 = arith.constant 0 : i32
    return %c0_i32, %c0_i32_0 : i32, i32
  }
  func.func @transform_3(%arg0: i32, %arg1: i32, %arg2: i32) -> (i32, i32, i32, i32) {
    %c0_i32 = arith.constant 0 : i32
    %c0_i32_0 = arith.constant 0 : i32
    %c0_i32_1 = arith.constant 0 : i32
    return %arg0, %arg1, %c0_i32, %c0_i32_0 : i32, i32, i32, i32
  }
  func.func @transform_4(%arg0: i32, %arg1: i32, %arg2: i32) -> (i32, i32, i32) {
    %c0_i32 = arith.constant 0 : i32
    %c0_i32_0 = arith.constant 0 : i32
    %c0_i32_1 = arith.constant 0 : i32
    return %arg0, %c0_i32, %c0_i32_0 : i32, i32, i32
  }
  func.func @transform_5(%arg0: i32, %arg1: i32, %arg2: i32) -> (i32, i32, i32) {
    %c0_i32 = arith.constant 0 : i32
    %c0_i32_0 = arith.constant 0 : i32
    %c0_i32_1 = arith.constant 0 : i32
    return %arg0, %c0_i32, %c0_i32_0 : i32, i32, i32
  }
}

module attributes {stable_mosaic.version = 11 : i64} {
  func.func @_conv_plane_kernel(%arg0: i32, %arg1: i32, %arg2: i32, %arg3: memref<1x1x6x6x32xbf16, #tpu.memory_space<vmem>>, %arg4: memref<27x32x32xbf16, #tpu.memory_space<vmem>>, %arg5: memref<1x32xf32, #tpu.memory_space<vmem>>, %arg6: memref<1x1x32xf32, #tpu.memory_space<vmem>>, %arg7: memref<1x1x32xf32, #tpu.memory_space<vmem>>, %arg8: memref<1x1x16x32xbf16, #tpu.memory_space<vmem>>, %arg9: memref<1x1x16x32xbf16, #tpu.memory_space<vmem>>, %arg10: memref<1x1x32xf32, #tpu.memory_space<vmem>>, %arg11: memref<1x1x32xf32, #tpu.memory_space<vmem>>, %arg12: memref<16x32xf32, #tpu.memory_space<vmem>>, %arg13: memref<6x6x32xbf16, #tpu.memory_space<vmem>>) attributes {dimension_semantics = [#tpu.dimension_semantics<parallel>, #tpu.dimension_semantics<arbitrary>, #tpu.dimension_semantics<arbitrary>], iteration_bounds = array<i64: 2, 2, 3>, scalar_prefetch = 0 : i64, scratch_operands = 2 : i64, tpu.core_type = #tpu.core_type<tc>, window_params = [{transform_indices = @transform_0, window_bounds = array<i64: 1, 1, 6, 6, 32>}, {pipeline_mode = #tpu.pipeline_mode<synchronous>, transform_indices = @transform_1, window_bounds = array<i64: 27, 32, 32>}, {pipeline_mode = #tpu.pipeline_mode<synchronous>, transform_indices = @transform_2, window_bounds = array<i64: 1, 32>}, {transform_indices = @transform_3, window_bounds = array<i64: 1, 1, 32>}, {transform_indices = @transform_4, window_bounds = array<i64: 1, 1, 32>}, {transform_indices = @transform_5, window_bounds = array<i64: 1, 1, 16, 32>}, {transform_indices = @transform_6, window_bounds = array<i64: 1, 1, 16, 32>}, {transform_indices = @transform_7, window_bounds = array<i64: 1, 1, 32>}, {transform_indices = @transform_8, window_bounds = array<i64: 1, 1, 32>}]} {
    %c0_i32 = arith.constant 0 : i32
    %0 = arith.cmpi eq, %arg2, %c0_i32 : i32
    %1 = arith.extui %0 : i1 to i32
    %c0_i32_0 = arith.constant 0 : i32
    %2 = arith.cmpi ne, %1, %c0_i32_0 : i32
    scf.if %2 {
      %cst_97 = arith.constant 0.000000e+00 : f32
      %120 = vector.broadcast %cst_97 : f32 to vector<16x32xf32>
      %c0_98 = arith.constant 0 : index
      %c0_99 = arith.constant 0 : index
      %121 = vector.load %arg12[%c0_98, %c0_99] : memref<16x32xf32, #tpu.memory_space<vmem>>, vector<16x32xf32>
      tpu.vector_store %arg12[%c0_98, %c0_99], %120 {strides = array<i32>} : memref<16x32xf32, #tpu.memory_space<vmem>>, vector<16x32xf32>,
    } else {
    }
    %c0_i32_1 = arith.constant 0 : i32
    %3 = arith.cmpi eq, %arg1, %c0_i32_1 : i32
    %c0_i32_2 = arith.constant 0 : i32
    %4 = arith.cmpi eq, %arg2, %c0_i32_2 : i32
    %5 = arith.andi %3, %4 : i1
    %6 = arith.extui %5 : i1 to i32
    %c0_i32_3 = arith.constant 0 : i32
    %7 = arith.cmpi ne, %6, %c0_i32_3 : i32
    scf.if %7 {
      %cst_97 = arith.constant 0.000000e+00 : f32
      %120 = vector.broadcast %cst_97 : f32 to vector<1x1x32xf32>
      %c0_98 = arith.constant 0 : index
      %c0_99 = arith.constant 0 : index
      %c0_100 = arith.constant 0 : index
      %121 = vector.load %arg10[%c0_98, %c0_99, %c0_100] : memref<1x1x32xf32, #tpu.memory_space<vmem>>, vector<1x1x32xf32>
      tpu.vector_store %arg10[%c0_98, %c0_99, %c0_100], %120 {strides = array<i32>} : memref<1x1x32xf32, #tpu.memory_space<vmem>>, vector<1x1x32xf32>,
      %cst_101 = arith.constant 0.000000e+00 : f32
      %122 = vector.broadcast %cst_101 : f32 to vector<1x1x32xf32>
      %c0_102 = arith.constant 0 : index
      %c0_103 = arith.constant 0 : index
      %c0_104 = arith.constant 0 : index
      %123 = vector.load %arg11[%c0_102, %c0_103, %c0_104] : memref<1x1x32xf32, #tpu.memory_space<vmem>>, vector<1x1x32xf32>
      tpu.vector_store %arg11[%c0_102, %c0_103, %c0_104], %122 {strides = array<i32>} : memref<1x1x32xf32, #tpu.memory_space<vmem>>, vector<1x1x32xf32>,
    } else {
    }
    %c0 = arith.constant 0 : index
    %c0_4 = arith.constant 0 : index
    %c0_5 = arith.constant 0 : index
    %c0_6 = arith.constant 0 : index
    %c0_7 = arith.constant 0 : index
    %8 = vector.load %arg3[%c0, %c0_4, %c0_5, %c0_6, %c0_7] : memref<1x1x6x6x32xbf16, #tpu.memory_space<vmem>>, vector<1x1x6x6x32xbf16>
    %9 = vector.shape_cast %8 : vector<1x1x6x6x32xbf16> to vector<6x6x32xbf16>
    %10 = arith.extf %9 : vector<6x6x32xbf16> to vector<6x6x32xf32>
    %c0_8 = arith.constant 0 : index
    %c0_9 = arith.constant 0 : index
    %c0_10 = arith.constant 0 : index
    %11 = vector.load %arg6[%c0_8, %c0_9, %c0_10] : memref<1x1x32xf32, #tpu.memory_space<vmem>>, vector<1x1x32xf32>
    %12 = vector.broadcast %11 : vector<1x1x32xf32> to vector<6x6x32xf32>
    %13 = arith.mulf %10, %12 : vector<6x6x32xf32>
    %c0_11 = arith.constant 0 : index
    %c0_12 = arith.constant 0 : index
    %c0_13 = arith.constant 0 : index
    %14 = vector.load %arg7[%c0_11, %c0_12, %c0_13] : memref<1x1x32xf32, #tpu.memory_space<vmem>>, vector<1x1x32xf32>
    %15 = vector.broadcast %14 : vector<1x1x32xf32> to vector<6x6x32xf32>
    %16 = arith.addf %13, %15 : vector<6x6x32xf32>
    %17 = arith.negf %16 : vector<6x6x32xf32>
    %18 = math.exp %17 : vector<6x6x32xf32>
    %cst = arith.constant 1.000000e+00 : f32
    %19 = vector.broadcast %cst : f32 to vector<6x6x32xf32>
    %20 = arith.addf %19, %18 : vector<6x6x32xf32>
    %21 = arith.divf %19, %20 : vector<6x6x32xf32>
    %22 = arith.mulf %16, %21 : vector<6x6x32xf32>
    %23 = arith.truncf %22 : vector<6x6x32xf32> to vector<6x6x32xbf16>
    %c0_14 = arith.constant 0 : index
    %c0_15 = arith.constant 0 : index
    %c0_16 = arith.constant 0 : index
    %24 = vector.load %arg13[%c0_14, %c0_15, %c0_16] : memref<6x6x32xbf16, #tpu.memory_space<vmem>>, vector<6x6x32xbf16>
    tpu.vector_store %arg13[%c0_14, %c0_15, %c0_16], %23 {strides = array<i32>} : memref<6x6x32xbf16, #tpu.memory_space<vmem>>, vector<6x6x32xbf16>,
    %c0_17 = arith.constant 0 : index
    %c0_18 = arith.constant 0 : index
    %25 = vector.load %arg12[%c0_17, %c0_18] : memref<16x32xf32, #tpu.memory_space<vmem>>, vector<16x32xf32>
    %c0_19 = arith.constant 0 : index
    %c0_20 = arith.constant 0 : index
    %c0_21 = arith.constant 0 : index
    %26 = vector.load %arg13[%c0_19, %c0_20, %c0_21] : memref<6x6x32xbf16, #tpu.memory_space<vmem>>, vector<4x4x32xbf16>
    %27 = vector.shape_cast %26 : vector<4x4x32xbf16> to vector<16x32xbf16>
    %c9_i32 = arith.constant 9 : i32
    %28 = arith.muli %arg2, %c9_i32 : i32
    %c0_i32_22 = arith.constant 0 : i32
    %29 = arith.addi %28, %c0_i32_22 : i32
    %c0_i32_23 = arith.constant 0 : i32
    %30 = arith.addi %29, %c0_i32_23 : i32
    %31 = arith.index_cast %30 : i32 to index
    %c0_24 = arith.constant 0 : index
    %c0_25 = arith.constant 0 : index
    %32 = vector.load %arg4[%31, %c0_24, %c0_25] : memref<27x32x32xbf16, #tpu.memory_space<vmem>>, vector<1x32x32xbf16>
    %33 = vector.shape_cast %32 : vector<1x32x32xbf16> to vector<32x32xbf16>
    %cst_26 = arith.constant dense<0.000000e+00> : vector<16x32xf32>
    %34 = tpu.matmul %27, %33, %cst_26 {dimension_numbers = #tpu.dot_dimension_numbers<[1], [0], [0], [1], [0, 0, 1, 1], [], []>} : vector<16x32xbf16>, vector<32x32xbf16>, vector<16x32xf32> -> vector<16x32xf32>
    %35 = arith.addf %25, %34 : vector<16x32xf32>
    %c0_27 = arith.constant 0 : index
    %c1 = arith.constant 1 : index
    %c0_28 = arith.constant 0 : index
    %36 = vector.load %arg13[%c0_27, %c1, %c0_28] : memref<6x6x32xbf16, #tpu.memory_space<vmem>>, vector<4x4x32xbf16>
    %37 = vector.shape_cast %36 : vector<4x4x32xbf16> to vector<16x32xbf16>
    %c9_i32_29 = arith.constant 9 : i32
    %38 = arith.muli %arg2, %c9_i32_29 : i32
    %c0_i32_30 = arith.constant 0 : i32
    %39 = arith.addi %38, %c0_i32_30 : i32
    %c1_i32 = arith.constant 1 : i32
    %40 = arith.addi %39, %c1_i32 : i32
    %41 = arith.index_cast %40 : i32 to index
    %c0_31 = arith.constant 0 : index
    %c0_32 = arith.constant 0 : index
    %42 = vector.load %arg4[%41, %c0_31, %c0_32] : memref<27x32x32xbf16, #tpu.memory_space<vmem>>, vector<1x32x32xbf16>
    %43 = vector.shape_cast %42 : vector<1x32x32xbf16> to vector<32x32xbf16>
    %cst_33 = arith.constant dense<0.000000e+00> : vector<16x32xf32>
    %44 = tpu.matmul %37, %43, %cst_33 {dimension_numbers = #tpu.dot_dimension_numbers<[1], [0], [0], [1], [0, 0, 1, 1], [], []>} : vector<16x32xbf16>, vector<32x32xbf16>, vector<16x32xf32> -> vector<16x32xf32>
    %45 = arith.addf %35, %44 : vector<16x32xf32>
    %c0_34 = arith.constant 0 : index
    %c2 = arith.constant 2 : index
    %c0_35 = arith.constant 0 : index
    %46 = vector.load %arg13[%c0_34, %c2, %c0_35] : memref<6x6x32xbf16, #tpu.memory_space<vmem>>, vector<4x4x32xbf16>
    %47 = vector.shape_cast %46 : vector<4x4x32xbf16> to vector<16x32xbf16>
    %c9_i32_36 = arith.constant 9 : i32
    %48 = arith.muli %arg2, %c9_i32_36 : i32
    %c0_i32_37 = arith.constant 0 : i32
    %49 = arith.addi %48, %c0_i32_37 : i32
    %c2_i32 = arith.constant 2 : i32
    %50 = arith.addi %49, %c2_i32 : i32
    %51 = arith.index_cast %50 : i32 to index
    %c0_38 = arith.constant 0 : index
    %c0_39 = arith.constant 0 : index
    %52 = vector.load %arg4[%51, %c0_38, %c0_39] : memref<27x32x32xbf16, #tpu.memory_space<vmem>>, vector<1x32x32xbf16>
    %53 = vector.shape_cast %52 : vector<1x32x32xbf16> to vector<32x32xbf16>
    %cst_40 = arith.constant dense<0.000000e+00> : vector<16x32xf32>
    %54 = tpu.matmul %47, %53, %cst_40 {dimension_numbers = #tpu.dot_dimension_numbers<[1], [0], [0], [1], [0, 0, 1, 1], [], []>} : vector<16x32xbf16>, vector<32x32xbf16>, vector<16x32xf32> -> vector<16x32xf32>
    %55 = arith.addf %45, %54 : vector<16x32xf32>
    %c1_41 = arith.constant 1 : index
    %c0_42 = arith.constant 0 : index
    %c0_43 = arith.constant 0 : index
    %56 = vector.load %arg13[%c1_41, %c0_42, %c0_43] : memref<6x6x32xbf16, #tpu.memory_space<vmem>>, vector<4x4x32xbf16>
    %57 = vector.shape_cast %56 : vector<4x4x32xbf16> to vector<16x32xbf16>
    %c9_i32_44 = arith.constant 9 : i32
    %58 = arith.muli %arg2, %c9_i32_44 : i32
    %c3_i32 = arith.constant 3 : i32
    %59 = arith.addi %58, %c3_i32 : i32
    %c0_i32_45 = arith.constant 0 : i32
    %60 = arith.addi %59, %c0_i32_45 : i32
    %61 = arith.index_cast %60 : i32 to index
    %c0_46 = arith.constant 0 : index
    %c0_47 = arith.constant 0 : index
    %62 = vector.load %arg4[%61, %c0_46, %c0_47] : memref<27x32x32xbf16, #tpu.memory_space<vmem>>, vector<1x32x32xbf16>
    %63 = vector.shape_cast %62 : vector<1x32x32xbf16> to vector<32x32xbf16>
    %cst_48 = arith.constant dense<0.000000e+00> : vector<16x32xf32>
    %64 = tpu.matmul %57, %63, %cst_48 {dimension_numbers = #tpu.dot_dimension_numbers<[1], [0], [0], [1], [0, 0, 1, 1], [], []>} : vector<16x32xbf16>, vector<32x32xbf16>, vector<16x32xf32> -> vector<16x32xf32>
    %65 = arith.addf %55, %64 : vector<16x32xf32>
    %c1_49 = arith.constant 1 : index
    %c1_50 = arith.constant 1 : index
    %c0_51 = arith.constant 0 : index
    %66 = vector.load %arg13[%c1_49, %c1_50, %c0_51] : memref<6x6x32xbf16, #tpu.memory_space<vmem>>, vector<4x4x32xbf16>
    %67 = vector.shape_cast %66 : vector<4x4x32xbf16> to vector<16x32xbf16>
    %c9_i32_52 = arith.constant 9 : i32
    %68 = arith.muli %arg2, %c9_i32_52 : i32
    %c3_i32_53 = arith.constant 3 : i32
    %69 = arith.addi %68, %c3_i32_53 : i32
    %c1_i32_54 = arith.constant 1 : i32
    %70 = arith.addi %69, %c1_i32_54 : i32
    %71 = arith.index_cast %70 : i32 to index
    %c0_55 = arith.constant 0 : index
    %c0_56 = arith.constant 0 : index
    %72 = vector.load %arg4[%71, %c0_55, %c0_56] : memref<27x32x32xbf16, #tpu.memory_space<vmem>>, vector<1x32x32xbf16>
    %73 = vector.shape_cast %72 : vector<1x32x32xbf16> to vector<32x32xbf16>
    %cst_57 = arith.constant dense<0.000000e+00> : vector<16x32xf32>
    %74 = tpu.matmul %67, %73, %cst_57 {dimension_numbers = #tpu.dot_dimension_numbers<[1], [0], [0], [1], [0, 0, 1, 1], [], []>} : vector<16x32xbf16>, vector<32x32xbf16>, vector<16x32xf32> -> vector<16x32xf32>
    %75 = arith.addf %65, %74 : vector<16x32xf32>
    %c1_58 = arith.constant 1 : index
    %c2_59 = arith.constant 2 : index
    %c0_60 = arith.constant 0 : index
    %76 = vector.load %arg13[%c1_58, %c2_59, %c0_60] : memref<6x6x32xbf16, #tpu.memory_space<vmem>>, vector<4x4x32xbf16>
    %77 = vector.shape_cast %76 : vector<4x4x32xbf16> to vector<16x32xbf16>
    %c9_i32_61 = arith.constant 9 : i32
    %78 = arith.muli %arg2, %c9_i32_61 : i32
    %c3_i32_62 = arith.constant 3 : i32
    %79 = arith.addi %78, %c3_i32_62 : i32
    %c2_i32_63 = arith.constant 2 : i32
    %80 = arith.addi %79, %c2_i32_63 : i32
    %81 = arith.index_cast %80 : i32 to index
    %c0_64 = arith.constant 0 : index
    %c0_65 = arith.constant 0 : index
    %82 = vector.load %arg4[%81, %c0_64, %c0_65] : memref<27x32x32xbf16, #tpu.memory_space<vmem>>, vector<1x32x32xbf16>
    %83 = vector.shape_cast %82 : vector<1x32x32xbf16> to vector<32x32xbf16>
    %cst_66 = arith.constant dense<0.000000e+00> : vector<16x32xf32>
    %84 = tpu.matmul %77, %83, %cst_66 {dimension_numbers = #tpu.dot_dimension_numbers<[1], [0], [0], [1], [0, 0, 1, 1], [], []>} : vector<16x32xbf16>, vector<32x32xbf16>, vector<16x32xf32> -> vector<16x32xf32>
    %85 = arith.addf %75, %84 : vector<16x32xf32>
    %c2_67 = arith.constant 2 : index
    %c0_68 = arith.constant 0 : index
    %c0_69 = arith.constant 0 : index
    %86 = vector.load %arg13[%c2_67, %c0_68, %c0_69] : memref<6x6x32xbf16, #tpu.memory_space<vmem>>, vector<4x4x32xbf16>
    %87 = vector.shape_cast %86 : vector<4x4x32xbf16> to vector<16x32xbf16>
    %c9_i32_70 = arith.constant 9 : i32
    %88 = arith.muli %arg2, %c9_i32_70 : i32
    %c6_i32 = arith.constant 6 : i32
    %89 = arith.addi %88, %c6_i32 : i32
    %c0_i32_71 = arith.constant 0 : i32
    %90 = arith.addi %89, %c0_i32_71 : i32
    %91 = arith.index_cast %90 : i32 to index
    %c0_72 = arith.constant 0 : index
    %c0_73 = arith.constant 0 : index
    %92 = vector.load %arg4[%91, %c0_72, %c0_73] : memref<27x32x32xbf16, #tpu.memory_space<vmem>>, vector<1x32x32xbf16>
    %93 = vector.shape_cast %92 : vector<1x32x32xbf16> to vector<32x32xbf16>
    %cst_74 = arith.constant dense<0.000000e+00> : vector<16x32xf32>
    %94 = tpu.matmul %87, %93, %cst_74 {dimension_numbers = #tpu.dot_dimension_numbers<[1], [0], [0], [1], [0, 0, 1, 1], [], []>} : vector<16x32xbf16>, vector<32x32xbf16>, vector<16x32xf32> -> vector<16x32xf32>
    %95 = arith.addf %85, %94 : vector<16x32xf32>
    %c2_75 = arith.constant 2 : index
    %c1_76 = arith.constant 1 : index
    %c0_77 = arith.constant 0 : index
    %96 = vector.load %arg13[%c2_75, %c1_76, %c0_77] : memref<6x6x32xbf16, #tpu.memory_space<vmem>>, vector<4x4x32xbf16>
    %97 = vector.shape_cast %96 : vector<4x4x32xbf16> to vector<16x32xbf16>
    %c9_i32_78 = arith.constant 9 : i32
    %98 = arith.muli %arg2, %c9_i32_78 : i32
    %c6_i32_79 = arith.constant 6 : i32
    %99 = arith.addi %98, %c6_i32_79 : i32
    %c1_i32_80 = arith.constant 1 : i32
    %100 = arith.addi %99, %c1_i32_80 : i32
    %101 = arith.index_cast %100 : i32 to index
    %c0_81 = arith.constant 0 : index
    %c0_82 = arith.constant 0 : index
    %102 = vector.load %arg4[%101, %c0_81, %c0_82] : memref<27x32x32xbf16, #tpu.memory_space<vmem>>, vector<1x32x32xbf16>
    %103 = vector.shape_cast %102 : vector<1x32x32xbf16> to vector<32x32xbf16>
    %cst_83 = arith.constant dense<0.000000e+00> : vector<16x32xf32>
    %104 = tpu.matmul %97, %103, %cst_83 {dimension_numbers = #tpu.dot_dimension_numbers<[1], [0], [0], [1], [0, 0, 1, 1], [], []>} : vector<16x32xbf16>, vector<32x32xbf16>, vector<16x32xf32> -> vector<16x32xf32>
    %105 = arith.addf %95, %104 : vector<16x32xf32>
    %c2_84 = arith.constant 2 : index
    %c2_85 = arith.constant 2 : index
    %c0_86 = arith.constant 0 : index
    %106 = vector.load %arg13[%c2_84, %c2_85, %c0_86] : memref<6x6x32xbf16, #tpu.memory_space<vmem>>, vector<4x4x32xbf16>
    %107 = vector.shape_cast %106 : vector<4x4x32xbf16> to vector<16x32xbf16>
    %c9_i32_87 = arith.constant 9 : i32
    %108 = arith.muli %arg2, %c9_i32_87 : i32
    %c6_i32_88 = arith.constant 6 : i32
    %109 = arith.addi %108, %c6_i32_88 : i32
    %c2_i32_89 = arith.constant 2 : i32
    %110 = arith.addi %109, %c2_i32_89 : i32
    %111 = arith.index_cast %110 : i32 to index
    %c0_90 = arith.constant 0 : index
    %c0_91 = arith.constant 0 : index
    %112 = vector.load %arg4[%111, %c0_90, %c0_91] : memref<27x32x32xbf16, #tpu.memory_space<vmem>>, vector<1x32x32xbf16>
    %113 = vector.shape_cast %112 : vector<1x32x32xbf16> to vector<32x32xbf16>
    %cst_92 = arith.constant dense<0.000000e+00> : vector<16x32xf32>
    %114 = tpu.matmul %107, %113, %cst_92 {dimension_numbers = #tpu.dot_dimension_numbers<[1], [0], [0], [1], [0, 0, 1, 1], [], []>} : vector<16x32xbf16>, vector<32x32xbf16>, vector<16x32xf32> -> vector<16x32xf32>
    %115 = arith.addf %105, %114 : vector<16x32xf32>
    %c0_93 = arith.constant 0 : index
    %c0_94 = arith.constant 0 : index
    %116 = vector.load %arg12[%c0_93, %c0_94] : memref<16x32xf32, #tpu.memory_space<vmem>>, vector<16x32xf32>
    tpu.vector_store %arg12[%c0_93, %c0_94], %115 {strides = array<i32>} : memref<16x32xf32, #tpu.memory_space<vmem>>, vector<16x32xf32>,
    %c2_i32_95 = arith.constant 2 : i32
    %117 = arith.cmpi eq, %arg2, %c2_i32_95 : i32
    %118 = arith.extui %117 : i1 to i32
    %c0_i32_96 = arith.constant 0 : i32
    %119 = arith.cmpi ne, %118, %c0_i32_96 : i32
    scf.if %119 {
      %c0_97 = arith.constant 0 : index
      %c0_98 = arith.constant 0 : index
      %120 = vector.load %arg12[%c0_97, %c0_98] : memref<16x32xf32, #tpu.memory_space<vmem>>, vector<16x32xf32>
      %c0_99 = arith.constant 0 : index
      %c0_100 = arith.constant 0 : index
      %121 = vector.load %arg5[%c0_99, %c0_100] : memref<1x32xf32, #tpu.memory_space<vmem>>, vector<1x32xf32>
      %122 = vector.broadcast %121 : vector<1x32xf32> to vector<16x32xf32>
      %123 = arith.addf %120, %122 : vector<16x32xf32>
      %c0_101 = arith.constant 0 : index
      %c0_102 = arith.constant 0 : index
      %c0_103 = arith.constant 0 : index
      %c0_104 = arith.constant 0 : index
      %124 = vector.load %arg8[%c0_101, %c0_102, %c0_103, %c0_104] : memref<1x1x16x32xbf16, #tpu.memory_space<vmem>>, vector<1x1x16x32xbf16>
      %125 = vector.shape_cast %124 : vector<1x1x16x32xbf16> to vector<16x32xbf16>
      %126 = arith.extf %125 : vector<16x32xbf16> to vector<16x32xf32>
      %127 = arith.addf %123, %126 : vector<16x32xf32>
      %128 = arith.truncf %127 : vector<16x32xf32> to vector<16x32xbf16>
      %c0_105 = arith.constant 0 : index
      %c0_106 = arith.constant 0 : index
      %c0_107 = arith.constant 0 : index
      %c0_108 = arith.constant 0 : index
      %129 = vector.load %arg9[%c0_105, %c0_106, %c0_107, %c0_108] : memref<1x1x16x32xbf16, #tpu.memory_space<vmem>>, vector<1x1x16x32xbf16>
      %130 = vector.shape_cast %129 : vector<1x1x16x32xbf16> to vector<16x32xbf16>
      %131 = vector.shape_cast %128 : vector<16x32xbf16> to vector<1x1x16x32xbf16>
      tpu.vector_store %arg9[%c0_105, %c0_106, %c0_107, %c0_108], %131 {strides = array<i32>} : memref<1x1x16x32xbf16, #tpu.memory_space<vmem>>, vector<1x1x16x32xbf16>,
      %c0_109 = arith.constant 0 : index
      %c0_110 = arith.constant 0 : index
      %c0_111 = arith.constant 0 : index
      %132 = vector.load %arg10[%c0_109, %c0_110, %c0_111] : memref<1x1x32xf32, #tpu.memory_space<vmem>>, vector<1x1x32xf32>
      %133 = vector.shape_cast %132 : vector<1x1x32xf32> to vector<1x32xf32>
      %cst_112 = arith.constant dense<0.000000e+00> : vector<32xf32>
      %134 = vector.multi_reduction <add>, %127, %cst_112 [0] : vector<16x32xf32> to vector<32xf32>
      %135 = vector.shape_cast %134 : vector<32xf32> to vector<1x32xf32>
      %136 = arith.addf %133, %135 : vector<1x32xf32>
      %c0_113 = arith.constant 0 : index
      %c0_114 = arith.constant 0 : index
      %c0_115 = arith.constant 0 : index
      %137 = vector.load %arg10[%c0_113, %c0_114, %c0_115] : memref<1x1x32xf32, #tpu.memory_space<vmem>>, vector<1x1x32xf32>
      %138 = vector.shape_cast %137 : vector<1x1x32xf32> to vector<1x32xf32>
      %139 = vector.shape_cast %136 : vector<1x32xf32> to vector<1x1x32xf32>
      tpu.vector_store %arg10[%c0_113, %c0_114, %c0_115], %139 {strides = array<i32>} : memref<1x1x32xf32, #tpu.memory_space<vmem>>, vector<1x1x32xf32>,
      %c0_116 = arith.constant 0 : index
      %c0_117 = arith.constant 0 : index
      %c0_118 = arith.constant 0 : index
      %140 = vector.load %arg11[%c0_116, %c0_117, %c0_118] : memref<1x1x32xf32, #tpu.memory_space<vmem>>, vector<1x1x32xf32>
      %141 = vector.shape_cast %140 : vector<1x1x32xf32> to vector<1x32xf32>
      %142 = arith.mulf %127, %127 : vector<16x32xf32>
      %cst_119 = arith.constant dense<0.000000e+00> : vector<32xf32>
      %143 = vector.multi_reduction <add>, %142, %cst_119 [0] : vector<16x32xf32> to vector<32xf32>
      %144 = vector.shape_cast %143 : vector<32xf32> to vector<1x32xf32>
      %145 = arith.addf %141, %144 : vector<1x32xf32>
      %c0_120 = arith.constant 0 : index
      %c0_121 = arith.constant 0 : index
      %c0_122 = arith.constant 0 : index
      %146 = vector.load %arg11[%c0_120, %c0_121, %c0_122] : memref<1x1x32xf32, #tpu.memory_space<vmem>>, vector<1x1x32xf32>
      %147 = vector.shape_cast %146 : vector<1x1x32xf32> to vector<1x32xf32>
      %148 = vector.shape_cast %145 : vector<1x32xf32> to vector<1x1x32xf32>
      tpu.vector_store %arg11[%c0_120, %c0_121, %c0_122], %148 {strides = array<i32>} : memref<1x1x32xf32, #tpu.memory_space<vmem>>, vector<1x1x32xf32>,
    } else {
    }
    return
  }
  func.func @transform_0(%arg0: i32, %arg1: i32, %arg2: i32) -> (i32, i32, i32, i32, i32) {
    %c1_i32 = arith.constant 1 : i32
    %0 = arith.muli %arg1, %c1_i32 : i32
    %1 = arith.addi %0, %arg2 : i32
    %c0_i32 = arith.constant 0 : i32
    %c0_i32_0 = arith.constant 0 : i32
    %c0_i32_1 = arith.constant 0 : i32
    %c0_i32_2 = arith.constant 0 : i32
    return %arg0, %1, %c0_i32, %c0_i32_0, %c0_i32_1 : i32, i32, i32, i32, i32
  }
  func.func @transform_1(%arg0: i32, %arg1: i32, %arg2: i32) -> (i32, i32, i32) {
    %c0_i32 = arith.constant 0 : i32
    %c0_i32_0 = arith.constant 0 : i32
    %c0_i32_1 = arith.constant 0 : i32
    %c0_i32_2 = arith.constant 0 : i32
    return %c0_i32, %c0_i32_0, %c0_i32_1 : i32, i32, i32
  }
  func.func @transform_2(%arg0: i32, %arg1: i32, %arg2: i32) -> (i32, i32) {
    %c0_i32 = arith.constant 0 : i32
    %c0_i32_0 = arith.constant 0 : i32
    %c0_i32_1 = arith.constant 0 : i32
    return %c0_i32, %c0_i32_0 : i32, i32
  }
  func.func @transform_3(%arg0: i32, %arg1: i32, %arg2: i32) -> (i32, i32, i32) {
    %c0_i32 = arith.constant 0 : i32
    %c0_i32_0 = arith.constant 0 : i32
    %c0_i32_1 = arith.constant 0 : i32
    return %arg0, %c0_i32, %c0_i32_0 : i32, i32, i32
  }
  func.func @transform_4(%arg0: i32, %arg1: i32, %arg2: i32) -> (i32, i32, i32) {
    %c0_i32 = arith.constant 0 : i32
    %c0_i32_0 = arith.constant 0 : i32
    %c0_i32_1 = arith.constant 0 : i32
    return %arg0, %c0_i32, %c0_i32_0 : i32, i32, i32
  }
  func.func @transform_5(%arg0: i32, %arg1: i32, %arg2: i32) -> (i32, i32, i32, i32) {
    %c0_i32 = arith.constant 0 : i32
    %c0_i32_0 = arith.constant 0 : i32
    %c0_i32_1 = arith.constant 0 : i32
    return %arg0, %arg1, %c0_i32, %c0_i32_0 : i32, i32, i32, i32
  }
  func.func @transform_6(%arg0: i32, %arg1: i32, %arg2: i32) -> (i32, i32, i32, i32) {
    %c0_i32 = arith.constant 0 : i32
    %c0_i32_0 = arith.constant 0 : i32
    %c0_i32_1 = arith.constant 0 : i32
    return %arg0, %arg1, %c0_i32, %c0_i32_0 : i32, i32, i32, i32
  }
  func.func @transform_7(%arg0: i32, %arg1: i32, %arg2: i32) -> (i32, i32, i32) {
    %c0_i32 = arith.constant 0 : i32
    %c0_i32_0 = arith.constant 0 : i32
    %c0_i32_1 = arith.constant 0 : i32
    return %arg0, %c0_i32, %c0_i32_0 : i32, i32, i32
  }
  func.func @transform_8(%arg0: i32, %arg1: i32, %arg2: i32) -> (i32, i32, i32) {
    %c0_i32 = arith.constant 0 : i32
    %c0_i32_0 = arith.constant 0 : i32
    %c0_i32_1 = arith.constant 0 : i32
    return %arg0, %c0_i32, %c0_i32_0 : i32, i32, i32
  }
}

module attributes {stable_mosaic.version = 11 : i64} {
  func.func @_conv_plane_kernel(%arg0: i32, %arg1: i32, %arg2: i32, %arg3: memref<1x1x6x6x32xbf16, #tpu.memory_space<vmem>>, %arg4: memref<27x32x32xbf16, #tpu.memory_space<vmem>>, %arg5: memref<1x32xf32, #tpu.memory_space<vmem>>, %arg6: memref<1x1x32xf32, #tpu.memory_space<vmem>>, %arg7: memref<1x1x32xf32, #tpu.memory_space<vmem>>, %arg8: memref<1x1x16x32xbf16, #tpu.memory_space<vmem>>, %arg9: memref<1x1x32xf32, #tpu.memory_space<vmem>>, %arg10: memref<1x1x32xf32, #tpu.memory_space<vmem>>, %arg11: memref<16x32xf32, #tpu.memory_space<vmem>>, %arg12: memref<6x6x32xbf16, #tpu.memory_space<vmem>>) attributes {dimension_semantics = [#tpu.dimension_semantics<parallel>, #tpu.dimension_semantics<arbitrary>, #tpu.dimension_semantics<arbitrary>], iteration_bounds = array<i64: 2, 2, 3>, scalar_prefetch = 0 : i64, scratch_operands = 2 : i64, tpu.core_type = #tpu.core_type<tc>, window_params = [{transform_indices = @transform_0, window_bounds = array<i64: 1, 1, 6, 6, 32>}, {pipeline_mode = #tpu.pipeline_mode<synchronous>, transform_indices = @transform_1, window_bounds = array<i64: 27, 32, 32>}, {pipeline_mode = #tpu.pipeline_mode<synchronous>, transform_indices = @transform_2, window_bounds = array<i64: 1, 32>}, {transform_indices = @transform_3, window_bounds = array<i64: 1, 1, 32>}, {transform_indices = @transform_4, window_bounds = array<i64: 1, 1, 32>}, {transform_indices = @transform_5, window_bounds = array<i64: 1, 1, 16, 32>}, {transform_indices = @transform_6, window_bounds = array<i64: 1, 1, 32>}, {transform_indices = @transform_7, window_bounds = array<i64: 1, 1, 32>}]} {
    %c0_i32 = arith.constant 0 : i32
    %0 = arith.cmpi eq, %arg2, %c0_i32 : i32
    %1 = arith.extui %0 : i1 to i32
    %c0_i32_0 = arith.constant 0 : i32
    %2 = arith.cmpi ne, %1, %c0_i32_0 : i32
    scf.if %2 {
      %cst_97 = arith.constant 0.000000e+00 : f32
      %120 = vector.broadcast %cst_97 : f32 to vector<16x32xf32>
      %c0_98 = arith.constant 0 : index
      %c0_99 = arith.constant 0 : index
      %121 = vector.load %arg11[%c0_98, %c0_99] : memref<16x32xf32, #tpu.memory_space<vmem>>, vector<16x32xf32>
      tpu.vector_store %arg11[%c0_98, %c0_99], %120 {strides = array<i32>} : memref<16x32xf32, #tpu.memory_space<vmem>>, vector<16x32xf32>,
    } else {
    }
    %c0_i32_1 = arith.constant 0 : i32
    %3 = arith.cmpi eq, %arg1, %c0_i32_1 : i32
    %c0_i32_2 = arith.constant 0 : i32
    %4 = arith.cmpi eq, %arg2, %c0_i32_2 : i32
    %5 = arith.andi %3, %4 : i1
    %6 = arith.extui %5 : i1 to i32
    %c0_i32_3 = arith.constant 0 : i32
    %7 = arith.cmpi ne, %6, %c0_i32_3 : i32
    scf.if %7 {
      %cst_97 = arith.constant 0.000000e+00 : f32
      %120 = vector.broadcast %cst_97 : f32 to vector<1x1x32xf32>
      %c0_98 = arith.constant 0 : index
      %c0_99 = arith.constant 0 : index
      %c0_100 = arith.constant 0 : index
      %121 = vector.load %arg9[%c0_98, %c0_99, %c0_100] : memref<1x1x32xf32, #tpu.memory_space<vmem>>, vector<1x1x32xf32>
      tpu.vector_store %arg9[%c0_98, %c0_99, %c0_100], %120 {strides = array<i32>} : memref<1x1x32xf32, #tpu.memory_space<vmem>>, vector<1x1x32xf32>,
      %cst_101 = arith.constant 0.000000e+00 : f32
      %122 = vector.broadcast %cst_101 : f32 to vector<1x1x32xf32>
      %c0_102 = arith.constant 0 : index
      %c0_103 = arith.constant 0 : index
      %c0_104 = arith.constant 0 : index
      %123 = vector.load %arg10[%c0_102, %c0_103, %c0_104] : memref<1x1x32xf32, #tpu.memory_space<vmem>>, vector<1x1x32xf32>
      tpu.vector_store %arg10[%c0_102, %c0_103, %c0_104], %122 {strides = array<i32>} : memref<1x1x32xf32, #tpu.memory_space<vmem>>, vector<1x1x32xf32>,
    } else {
    }
    %c0 = arith.constant 0 : index
    %c0_4 = arith.constant 0 : index
    %c0_5 = arith.constant 0 : index
    %c0_6 = arith.constant 0 : index
    %c0_7 = arith.constant 0 : index
    %8 = vector.load %arg3[%c0, %c0_4, %c0_5, %c0_6, %c0_7] : memref<1x1x6x6x32xbf16, #tpu.memory_space<vmem>>, vector<1x1x6x6x32xbf16>
    %9 = vector.shape_cast %8 : vector<1x1x6x6x32xbf16> to vector<6x6x32xbf16>
    %10 = arith.extf %9 : vector<6x6x32xbf16> to vector<6x6x32xf32>
    %c0_8 = arith.constant 0 : index
    %c0_9 = arith.constant 0 : index
    %c0_10 = arith.constant 0 : index
    %11 = vector.load %arg6[%c0_8, %c0_9, %c0_10] : memref<1x1x32xf32, #tpu.memory_space<vmem>>, vector<1x1x32xf32>
    %12 = vector.broadcast %11 : vector<1x1x32xf32> to vector<6x6x32xf32>
    %13 = arith.mulf %10, %12 : vector<6x6x32xf32>
    %c0_11 = arith.constant 0 : index
    %c0_12 = arith.constant 0 : index
    %c0_13 = arith.constant 0 : index
    %14 = vector.load %arg7[%c0_11, %c0_12, %c0_13] : memref<1x1x32xf32, #tpu.memory_space<vmem>>, vector<1x1x32xf32>
    %15 = vector.broadcast %14 : vector<1x1x32xf32> to vector<6x6x32xf32>
    %16 = arith.addf %13, %15 : vector<6x6x32xf32>
    %17 = arith.negf %16 : vector<6x6x32xf32>
    %18 = math.exp %17 : vector<6x6x32xf32>
    %cst = arith.constant 1.000000e+00 : f32
    %19 = vector.broadcast %cst : f32 to vector<6x6x32xf32>
    %20 = arith.addf %19, %18 : vector<6x6x32xf32>
    %21 = arith.divf %19, %20 : vector<6x6x32xf32>
    %22 = arith.mulf %16, %21 : vector<6x6x32xf32>
    %23 = arith.truncf %22 : vector<6x6x32xf32> to vector<6x6x32xbf16>
    %c0_14 = arith.constant 0 : index
    %c0_15 = arith.constant 0 : index
    %c0_16 = arith.constant 0 : index
    %24 = vector.load %arg12[%c0_14, %c0_15, %c0_16] : memref<6x6x32xbf16, #tpu.memory_space<vmem>>, vector<6x6x32xbf16>
    tpu.vector_store %arg12[%c0_14, %c0_15, %c0_16], %23 {strides = array<i32>} : memref<6x6x32xbf16, #tpu.memory_space<vmem>>, vector<6x6x32xbf16>,
    %c0_17 = arith.constant 0 : index
    %c0_18 = arith.constant 0 : index
    %25 = vector.load %arg11[%c0_17, %c0_18] : memref<16x32xf32, #tpu.memory_space<vmem>>, vector<16x32xf32>
    %c0_19 = arith.constant 0 : index
    %c0_20 = arith.constant 0 : index
    %c0_21 = arith.constant 0 : index
    %26 = vector.load %arg12[%c0_19, %c0_20, %c0_21] : memref<6x6x32xbf16, #tpu.memory_space<vmem>>, vector<4x4x32xbf16>
    %27 = vector.shape_cast %26 : vector<4x4x32xbf16> to vector<16x32xbf16>
    %c9_i32 = arith.constant 9 : i32
    %28 = arith.muli %arg2, %c9_i32 : i32
    %c0_i32_22 = arith.constant 0 : i32
    %29 = arith.addi %28, %c0_i32_22 : i32
    %c0_i32_23 = arith.constant 0 : i32
    %30 = arith.addi %29, %c0_i32_23 : i32
    %31 = arith.index_cast %30 : i32 to index
    %c0_24 = arith.constant 0 : index
    %c0_25 = arith.constant 0 : index
    %32 = vector.load %arg4[%31, %c0_24, %c0_25] : memref<27x32x32xbf16, #tpu.memory_space<vmem>>, vector<1x32x32xbf16>
    %33 = vector.shape_cast %32 : vector<1x32x32xbf16> to vector<32x32xbf16>
    %cst_26 = arith.constant dense<0.000000e+00> : vector<16x32xf32>
    %34 = tpu.matmul %27, %33, %cst_26 {dimension_numbers = #tpu.dot_dimension_numbers<[1], [0], [0], [1], [0, 0, 1, 1], [], []>} : vector<16x32xbf16>, vector<32x32xbf16>, vector<16x32xf32> -> vector<16x32xf32>
    %35 = arith.addf %25, %34 : vector<16x32xf32>
    %c0_27 = arith.constant 0 : index
    %c1 = arith.constant 1 : index
    %c0_28 = arith.constant 0 : index
    %36 = vector.load %arg12[%c0_27, %c1, %c0_28] : memref<6x6x32xbf16, #tpu.memory_space<vmem>>, vector<4x4x32xbf16>
    %37 = vector.shape_cast %36 : vector<4x4x32xbf16> to vector<16x32xbf16>
    %c9_i32_29 = arith.constant 9 : i32
    %38 = arith.muli %arg2, %c9_i32_29 : i32
    %c0_i32_30 = arith.constant 0 : i32
    %39 = arith.addi %38, %c0_i32_30 : i32
    %c1_i32 = arith.constant 1 : i32
    %40 = arith.addi %39, %c1_i32 : i32
    %41 = arith.index_cast %40 : i32 to index
    %c0_31 = arith.constant 0 : index
    %c0_32 = arith.constant 0 : index
    %42 = vector.load %arg4[%41, %c0_31, %c0_32] : memref<27x32x32xbf16, #tpu.memory_space<vmem>>, vector<1x32x32xbf16>
    %43 = vector.shape_cast %42 : vector<1x32x32xbf16> to vector<32x32xbf16>
    %cst_33 = arith.constant dense<0.000000e+00> : vector<16x32xf32>
    %44 = tpu.matmul %37, %43, %cst_33 {dimension_numbers = #tpu.dot_dimension_numbers<[1], [0], [0], [1], [0, 0, 1, 1], [], []>} : vector<16x32xbf16>, vector<32x32xbf16>, vector<16x32xf32> -> vector<16x32xf32>
    %45 = arith.addf %35, %44 : vector<16x32xf32>
    %c0_34 = arith.constant 0 : index
    %c2 = arith.constant 2 : index
    %c0_35 = arith.constant 0 : index
    %46 = vector.load %arg12[%c0_34, %c2, %c0_35] : memref<6x6x32xbf16, #tpu.memory_space<vmem>>, vector<4x4x32xbf16>
    %47 = vector.shape_cast %46 : vector<4x4x32xbf16> to vector<16x32xbf16>
    %c9_i32_36 = arith.constant 9 : i32
    %48 = arith.muli %arg2, %c9_i32_36 : i32
    %c0_i32_37 = arith.constant 0 : i32
    %49 = arith.addi %48, %c0_i32_37 : i32
    %c2_i32 = arith.constant 2 : i32
    %50 = arith.addi %49, %c2_i32 : i32
    %51 = arith.index_cast %50 : i32 to index
    %c0_38 = arith.constant 0 : index
    %c0_39 = arith.constant 0 : index
    %52 = vector.load %arg4[%51, %c0_38, %c0_39] : memref<27x32x32xbf16, #tpu.memory_space<vmem>>, vector<1x32x32xbf16>
    %53 = vector.shape_cast %52 : vector<1x32x32xbf16> to vector<32x32xbf16>
    %cst_40 = arith.constant dense<0.000000e+00> : vector<16x32xf32>
    %54 = tpu.matmul %47, %53, %cst_40 {dimension_numbers = #tpu.dot_dimension_numbers<[1], [0], [0], [1], [0, 0, 1, 1], [], []>} : vector<16x32xbf16>, vector<32x32xbf16>, vector<16x32xf32> -> vector<16x32xf32>
    %55 = arith.addf %45, %54 : vector<16x32xf32>
    %c1_41 = arith.constant 1 : index
    %c0_42 = arith.constant 0 : index
    %c0_43 = arith.constant 0 : index
    %56 = vector.load %arg12[%c1_41, %c0_42, %c0_43] : memref<6x6x32xbf16, #tpu.memory_space<vmem>>, vector<4x4x32xbf16>
    %57 = vector.shape_cast %56 : vector<4x4x32xbf16> to vector<16x32xbf16>
    %c9_i32_44 = arith.constant 9 : i32
    %58 = arith.muli %arg2, %c9_i32_44 : i32
    %c3_i32 = arith.constant 3 : i32
    %59 = arith.addi %58, %c3_i32 : i32
    %c0_i32_45 = arith.constant 0 : i32
    %60 = arith.addi %59, %c0_i32_45 : i32
    %61 = arith.index_cast %60 : i32 to index
    %c0_46 = arith.constant 0 : index
    %c0_47 = arith.constant 0 : index
    %62 = vector.load %arg4[%61, %c0_46, %c0_47] : memref<27x32x32xbf16, #tpu.memory_space<vmem>>, vector<1x32x32xbf16>
    %63 = vector.shape_cast %62 : vector<1x32x32xbf16> to vector<32x32xbf16>
    %cst_48 = arith.constant dense<0.000000e+00> : vector<16x32xf32>
    %64 = tpu.matmul %57, %63, %cst_48 {dimension_numbers = #tpu.dot_dimension_numbers<[1], [0], [0], [1], [0, 0, 1, 1], [], []>} : vector<16x32xbf16>, vector<32x32xbf16>, vector<16x32xf32> -> vector<16x32xf32>
    %65 = arith.addf %55, %64 : vector<16x32xf32>
    %c1_49 = arith.constant 1 : index
    %c1_50 = arith.constant 1 : index
    %c0_51 = arith.constant 0 : index
    %66 = vector.load %arg12[%c1_49, %c1_50, %c0_51] : memref<6x6x32xbf16, #tpu.memory_space<vmem>>, vector<4x4x32xbf16>
    %67 = vector.shape_cast %66 : vector<4x4x32xbf16> to vector<16x32xbf16>
    %c9_i32_52 = arith.constant 9 : i32
    %68 = arith.muli %arg2, %c9_i32_52 : i32
    %c3_i32_53 = arith.constant 3 : i32
    %69 = arith.addi %68, %c3_i32_53 : i32
    %c1_i32_54 = arith.constant 1 : i32
    %70 = arith.addi %69, %c1_i32_54 : i32
    %71 = arith.index_cast %70 : i32 to index
    %c0_55 = arith.constant 0 : index
    %c0_56 = arith.constant 0 : index
    %72 = vector.load %arg4[%71, %c0_55, %c0_56] : memref<27x32x32xbf16, #tpu.memory_space<vmem>>, vector<1x32x32xbf16>
    %73 = vector.shape_cast %72 : vector<1x32x32xbf16> to vector<32x32xbf16>
    %cst_57 = arith.constant dense<0.000000e+00> : vector<16x32xf32>
    %74 = tpu.matmul %67, %73, %cst_57 {dimension_numbers = #tpu.dot_dimension_numbers<[1], [0], [0], [1], [0, 0, 1, 1], [], []>} : vector<16x32xbf16>, vector<32x32xbf16>, vector<16x32xf32> -> vector<16x32xf32>
    %75 = arith.addf %65, %74 : vector<16x32xf32>
    %c1_58 = arith.constant 1 : index
    %c2_59 = arith.constant 2 : index
    %c0_60 = arith.constant 0 : index
    %76 = vector.load %arg12[%c1_58, %c2_59, %c0_60] : memref<6x6x32xbf16, #tpu.memory_space<vmem>>, vector<4x4x32xbf16>
    %77 = vector.shape_cast %76 : vector<4x4x32xbf16> to vector<16x32xbf16>
    %c9_i32_61 = arith.constant 9 : i32
    %78 = arith.muli %arg2, %c9_i32_61 : i32
    %c3_i32_62 = arith.constant 3 : i32
    %79 = arith.addi %78, %c3_i32_62 : i32
    %c2_i32_63 = arith.constant 2 : i32
    %80 = arith.addi %79, %c2_i32_63 : i32
    %81 = arith.index_cast %80 : i32 to index
    %c0_64 = arith.constant 0 : index
    %c0_65 = arith.constant 0 : index
    %82 = vector.load %arg4[%81, %c0_64, %c0_65] : memref<27x32x32xbf16, #tpu.memory_space<vmem>>, vector<1x32x32xbf16>
    %83 = vector.shape_cast %82 : vector<1x32x32xbf16> to vector<32x32xbf16>
    %cst_66 = arith.constant dense<0.000000e+00> : vector<16x32xf32>
    %84 = tpu.matmul %77, %83, %cst_66 {dimension_numbers = #tpu.dot_dimension_numbers<[1], [0], [0], [1], [0, 0, 1, 1], [], []>} : vector<16x32xbf16>, vector<32x32xbf16>, vector<16x32xf32> -> vector<16x32xf32>
    %85 = arith.addf %75, %84 : vector<16x32xf32>
    %c2_67 = arith.constant 2 : index
    %c0_68 = arith.constant 0 : index
    %c0_69 = arith.constant 0 : index
    %86 = vector.load %arg12[%c2_67, %c0_68, %c0_69] : memref<6x6x32xbf16, #tpu.memory_space<vmem>>, vector<4x4x32xbf16>
    %87 = vector.shape_cast %86 : vector<4x4x32xbf16> to vector<16x32xbf16>
    %c9_i32_70 = arith.constant 9 : i32
    %88 = arith.muli %arg2, %c9_i32_70 : i32
    %c6_i32 = arith.constant 6 : i32
    %89 = arith.addi %88, %c6_i32 : i32
    %c0_i32_71 = arith.constant 0 : i32
    %90 = arith.addi %89, %c0_i32_71 : i32
    %91 = arith.index_cast %90 : i32 to index
    %c0_72 = arith.constant 0 : index
    %c0_73 = arith.constant 0 : index
    %92 = vector.load %arg4[%91, %c0_72, %c0_73] : memref<27x32x32xbf16, #tpu.memory_space<vmem>>, vector<1x32x32xbf16>
    %93 = vector.shape_cast %92 : vector<1x32x32xbf16> to vector<32x32xbf16>
    %cst_74 = arith.constant dense<0.000000e+00> : vector<16x32xf32>
    %94 = tpu.matmul %87, %93, %cst_74 {dimension_numbers = #tpu.dot_dimension_numbers<[1], [0], [0], [1], [0, 0, 1, 1], [], []>} : vector<16x32xbf16>, vector<32x32xbf16>, vector<16x32xf32> -> vector<16x32xf32>
    %95 = arith.addf %85, %94 : vector<16x32xf32>
    %c2_75 = arith.constant 2 : index
    %c1_76 = arith.constant 1 : index
    %c0_77 = arith.constant 0 : index
    %96 = vector.load %arg12[%c2_75, %c1_76, %c0_77] : memref<6x6x32xbf16, #tpu.memory_space<vmem>>, vector<4x4x32xbf16>
    %97 = vector.shape_cast %96 : vector<4x4x32xbf16> to vector<16x32xbf16>
    %c9_i32_78 = arith.constant 9 : i32
    %98 = arith.muli %arg2, %c9_i32_78 : i32
    %c6_i32_79 = arith.constant 6 : i32
    %99 = arith.addi %98, %c6_i32_79 : i32
    %c1_i32_80 = arith.constant 1 : i32
    %100 = arith.addi %99, %c1_i32_80 : i32
    %101 = arith.index_cast %100 : i32 to index
    %c0_81 = arith.constant 0 : index
    %c0_82 = arith.constant 0 : index
    %102 = vector.load %arg4[%101, %c0_81, %c0_82] : memref<27x32x32xbf16, #tpu.memory_space<vmem>>, vector<1x32x32xbf16>
    %103 = vector.shape_cast %102 : vector<1x32x32xbf16> to vector<32x32xbf16>
    %cst_83 = arith.constant dense<0.000000e+00> : vector<16x32xf32>
    %104 = tpu.matmul %97, %103, %cst_83 {dimension_numbers = #tpu.dot_dimension_numbers<[1], [0], [0], [1], [0, 0, 1, 1], [], []>} : vector<16x32xbf16>, vector<32x32xbf16>, vector<16x32xf32> -> vector<16x32xf32>
    %105 = arith.addf %95, %104 : vector<16x32xf32>
    %c2_84 = arith.constant 2 : index
    %c2_85 = arith.constant 2 : index
    %c0_86 = arith.constant 0 : index
    %106 = vector.load %arg12[%c2_84, %c2_85, %c0_86] : memref<6x6x32xbf16, #tpu.memory_space<vmem>>, vector<4x4x32xbf16>
    %107 = vector.shape_cast %106 : vector<4x4x32xbf16> to vector<16x32xbf16>
    %c9_i32_87 = arith.constant 9 : i32
    %108 = arith.muli %arg2, %c9_i32_87 : i32
    %c6_i32_88 = arith.constant 6 : i32
    %109 = arith.addi %108, %c6_i32_88 : i32
    %c2_i32_89 = arith.constant 2 : i32
    %110 = arith.addi %109, %c2_i32_89 : i32
    %111 = arith.index_cast %110 : i32 to index
    %c0_90 = arith.constant 0 : index
    %c0_91 = arith.constant 0 : index
    %112 = vector.load %arg4[%111, %c0_90, %c0_91] : memref<27x32x32xbf16, #tpu.memory_space<vmem>>, vector<1x32x32xbf16>
    %113 = vector.shape_cast %112 : vector<1x32x32xbf16> to vector<32x32xbf16>
    %cst_92 = arith.constant dense<0.000000e+00> : vector<16x32xf32>
    %114 = tpu.matmul %107, %113, %cst_92 {dimension_numbers = #tpu.dot_dimension_numbers<[1], [0], [0], [1], [0, 0, 1, 1], [], []>} : vector<16x32xbf16>, vector<32x32xbf16>, vector<16x32xf32> -> vector<16x32xf32>
    %115 = arith.addf %105, %114 : vector<16x32xf32>
    %c0_93 = arith.constant 0 : index
    %c0_94 = arith.constant 0 : index
    %116 = vector.load %arg11[%c0_93, %c0_94] : memref<16x32xf32, #tpu.memory_space<vmem>>, vector<16x32xf32>
    tpu.vector_store %arg11[%c0_93, %c0_94], %115 {strides = array<i32>} : memref<16x32xf32, #tpu.memory_space<vmem>>, vector<16x32xf32>,
    %c2_i32_95 = arith.constant 2 : i32
    %117 = arith.cmpi eq, %arg2, %c2_i32_95 : i32
    %118 = arith.extui %117 : i1 to i32
    %c0_i32_96 = arith.constant 0 : i32
    %119 = arith.cmpi ne, %118, %c0_i32_96 : i32
    scf.if %119 {
      %c0_97 = arith.constant 0 : index
      %c0_98 = arith.constant 0 : index
      %120 = vector.load %arg11[%c0_97, %c0_98] : memref<16x32xf32, #tpu.memory_space<vmem>>, vector<16x32xf32>
      %c0_99 = arith.constant 0 : index
      %c0_100 = arith.constant 0 : index
      %121 = vector.load %arg5[%c0_99, %c0_100] : memref<1x32xf32, #tpu.memory_space<vmem>>, vector<1x32xf32>
      %122 = vector.broadcast %121 : vector<1x32xf32> to vector<16x32xf32>
      %123 = arith.addf %120, %122 : vector<16x32xf32>
      %124 = arith.truncf %123 : vector<16x32xf32> to vector<16x32xbf16>
      %c0_101 = arith.constant 0 : index
      %c0_102 = arith.constant 0 : index
      %c0_103 = arith.constant 0 : index
      %c0_104 = arith.constant 0 : index
      %125 = vector.load %arg8[%c0_101, %c0_102, %c0_103, %c0_104] : memref<1x1x16x32xbf16, #tpu.memory_space<vmem>>, vector<1x1x16x32xbf16>
      %126 = vector.shape_cast %125 : vector<1x1x16x32xbf16> to vector<16x32xbf16>
      %127 = vector.shape_cast %124 : vector<16x32xbf16> to vector<1x1x16x32xbf16>
      tpu.vector_store %arg8[%c0_101, %c0_102, %c0_103, %c0_104], %127 {strides = array<i32>} : memref<1x1x16x32xbf16, #tpu.memory_space<vmem>>, vector<1x1x16x32xbf16>,
      %c0_105 = arith.constant 0 : index
      %c0_106 = arith.constant 0 : index
      %c0_107 = arith.constant 0 : index
      %128 = vector.load %arg9[%c0_105, %c0_106, %c0_107] : memref<1x1x32xf32, #tpu.memory_space<vmem>>, vector<1x1x32xf32>
      %129 = vector.shape_cast %128 : vector<1x1x32xf32> to vector<1x32xf32>
      %cst_108 = arith.constant dense<0.000000e+00> : vector<32xf32>
      %130 = vector.multi_reduction <add>, %123, %cst_108 [0] : vector<16x32xf32> to vector<32xf32>
      %131 = vector.shape_cast %130 : vector<32xf32> to vector<1x32xf32>
      %132 = arith.addf %129, %131 : vector<1x32xf32>
      %c0_109 = arith.constant 0 : index
      %c0_110 = arith.constant 0 : index
      %c0_111 = arith.constant 0 : index
      %133 = vector.load %arg9[%c0_109, %c0_110, %c0_111] : memref<1x1x32xf32, #tpu.memory_space<vmem>>, vector<1x1x32xf32>
      %134 = vector.shape_cast %133 : vector<1x1x32xf32> to vector<1x32xf32>
      %135 = vector.shape_cast %132 : vector<1x32xf32> to vector<1x1x32xf32>
      tpu.vector_store %arg9[%c0_109, %c0_110, %c0_111], %135 {strides = array<i32>} : memref<1x1x32xf32, #tpu.memory_space<vmem>>, vector<1x1x32xf32>,
      %c0_112 = arith.constant 0 : index
      %c0_113 = arith.constant 0 : index
      %c0_114 = arith.constant 0 : index
      %136 = vector.load %arg10[%c0_112, %c0_113, %c0_114] : memref<1x1x32xf32, #tpu.memory_space<vmem>>, vector<1x1x32xf32>
      %137 = vector.shape_cast %136 : vector<1x1x32xf32> to vector<1x32xf32>
      %138 = arith.mulf %123, %123 : vector<16x32xf32>
      %cst_115 = arith.constant dense<0.000000e+00> : vector<32xf32>
      %139 = vector.multi_reduction <add>, %138, %cst_115 [0] : vector<16x32xf32> to vector<32xf32>
      %140 = vector.shape_cast %139 : vector<32xf32> to vector<1x32xf32>
      %141 = arith.addf %137, %140 : vector<1x32xf32>
      %c0_116 = arith.constant 0 : index
      %c0_117 = arith.constant 0 : index
      %c0_118 = arith.constant 0 : index
      %142 = vector.load %arg10[%c0_116, %c0_117, %c0_118] : memref<1x1x32xf32, #tpu.memory_space<vmem>>, vector<1x1x32xf32>
      %143 = vector.shape_cast %142 : vector<1x1x32xf32> to vector<1x32xf32>
      %144 = vector.shape_cast %141 : vector<1x32xf32> to vector<1x1x32xf32>
      tpu.vector_store %arg10[%c0_116, %c0_117, %c0_118], %144 {strides = array<i32>} : memref<1x1x32xf32, #tpu.memory_space<vmem>>, vector<1x1x32xf32>,
    } else {
    }
    return
  }
  func.func @transform_0(%arg0: i32, %arg1: i32, %arg2: i32) -> (i32, i32, i32, i32, i32) {
    %c1_i32 = arith.constant 1 : i32
    %0 = arith.muli %arg1, %c1_i32 : i32
    %1 = arith.addi %0, %arg2 : i32
    %c0_i32 = arith.constant 0 : i32
    %c0_i32_0 = arith.constant 0 : i32
    %c0_i32_1 = arith.constant 0 : i32
    %c0_i32_2 = arith.constant 0 : i32
    return %arg0, %1, %c0_i32, %c0_i32_0, %c0_i32_1 : i32, i32, i32, i32, i32
  }
  func.func @transform_1(%arg0: i32, %arg1: i32, %arg2: i32) -> (i32, i32, i32) {
    %c0_i32 = arith.constant 0 : i32
    %c0_i32_0 = arith.constant 0 : i32
    %c0_i32_1 = arith.constant 0 : i32
    %c0_i32_2 = arith.constant 0 : i32
    return %c0_i32, %c0_i32_0, %c0_i32_1 : i32, i32, i32
  }
  func.func @transform_2(%arg0: i32, %arg1: i32, %arg2: i32) -> (i32, i32) {
    %c0_i32 = arith.constant 0 : i32
    %c0_i32_0 = arith.constant 0 : i32
    %c0_i32_1 = arith.constant 0 : i32
    return %c0_i32, %c0_i32_0 : i32, i32
  }
  func.func @transform_3(%arg0: i32, %arg1: i32, %arg2: i32) -> (i32, i32, i32) {
    %c0_i32 = arith.constant 0 : i32
    %c0_i32_0 = arith.constant 0 : i32
    %c0_i32_1 = arith.constant 0 : i32
    return %arg0, %c0_i32, %c0_i32_0 : i32, i32, i32
  }
  func.func @transform_4(%arg0: i32, %arg1: i32, %arg2: i32) -> (i32, i32, i32) {
    %c0_i32 = arith.constant 0 : i32
    %c0_i32_0 = arith.constant 0 : i32
    %c0_i32_1 = arith.constant 0 : i32
    return %arg0, %c0_i32, %c0_i32_0 : i32, i32, i32
  }
  func.func @transform_5(%arg0: i32, %arg1: i32, %arg2: i32) -> (i32, i32, i32, i32) {
    %c0_i32 = arith.constant 0 : i32
    %c0_i32_0 = arith.constant 0 : i32
    %c0_i32_1 = arith.constant 0 : i32
    return %arg0, %arg1, %c0_i32, %c0_i32_0 : i32, i32, i32, i32
  }
  func.func @transform_6(%arg0: i32, %arg1: i32, %arg2: i32) -> (i32, i32, i32) {
    %c0_i32 = arith.constant 0 : i32
    %c0_i32_0 = arith.constant 0 : i32
    %c0_i32_1 = arith.constant 0 : i32
    return %arg0, %c0_i32, %c0_i32_0 : i32, i32, i32
  }
  func.func @transform_7(%arg0: i32, %arg1: i32, %arg2: i32) -> (i32, i32, i32) {
    %c0_i32 = arith.constant 0 : i32
    %c0_i32_0 = arith.constant 0 : i32
    %c0_i32_1 = arith.constant 0 : i32
    return %arg0, %c0_i32, %c0_i32_0 : i32, i32, i32
  }
}

module attributes {stable_mosaic.version = 11 : i64} {
  func.func @_norm_silu_kernel(%arg0: i32, %arg1: i32, %arg2: memref<1x32x32xbf16, #tpu.memory_space<vmem>>, %arg3: memref<1x1x32xf32, #tpu.memory_space<vmem>>, %arg4: memref<1x1x32xf32, #tpu.memory_space<vmem>>, %arg5: memref<1x32x32xf32, #tpu.memory_space<vmem>>) attributes {dimension_semantics = [#tpu.dimension_semantics<parallel>, #tpu.dimension_semantics<parallel>], iteration_bounds = array<i64: 2, 1>, scalar_prefetch = 0 : i64, scratch_operands = 0 : i64, tpu.core_type = #tpu.core_type<tc>, window_params = [{transform_indices = @transform_0, window_bounds = array<i64: 1, 32, 32>}, {transform_indices = @transform_1, window_bounds = array<i64: 1, 1, 32>}, {transform_indices = @transform_2, window_bounds = array<i64: 1, 1, 32>}, {transform_indices = @transform_3, window_bounds = array<i64: 1, 32, 32>}]} {
    %c0 = arith.constant 0 : index
    %c0_0 = arith.constant 0 : index
    %c0_1 = arith.constant 0 : index
    %0 = vector.load %arg2[%c0, %c0_0, %c0_1] : memref<1x32x32xbf16, #tpu.memory_space<vmem>>, vector<1x32x32xbf16>
    %1 = vector.shape_cast %0 : vector<1x32x32xbf16> to vector<32x32xbf16>
    %2 = arith.extf %1 : vector<32x32xbf16> to vector<32x32xf32>
    %c0_2 = arith.constant 0 : index
    %c0_3 = arith.constant 0 : index
    %c0_4 = arith.constant 0 : index
    %3 = vector.load %arg3[%c0_2, %c0_3, %c0_4] : memref<1x1x32xf32, #tpu.memory_space<vmem>>, vector<1x1x32xf32>
    %4 = vector.shape_cast %3 : vector<1x1x32xf32> to vector<1x32xf32>
    %5 = vector.broadcast %4 : vector<1x32xf32> to vector<32x32xf32>
    %6 = arith.mulf %2, %5 : vector<32x32xf32>
    %c0_5 = arith.constant 0 : index
    %c0_6 = arith.constant 0 : index
    %c0_7 = arith.constant 0 : index
    %7 = vector.load %arg4[%c0_5, %c0_6, %c0_7] : memref<1x1x32xf32, #tpu.memory_space<vmem>>, vector<1x1x32xf32>
    %8 = vector.shape_cast %7 : vector<1x1x32xf32> to vector<1x32xf32>
    %9 = vector.broadcast %8 : vector<1x32xf32> to vector<32x32xf32>
    %10 = arith.addf %6, %9 : vector<32x32xf32>
    %11 = arith.negf %10 : vector<32x32xf32>
    %12 = math.exp %11 : vector<32x32xf32>
    %cst = arith.constant 1.000000e+00 : f32
    %13 = vector.broadcast %cst : f32 to vector<32x32xf32>
    %14 = arith.addf %13, %12 : vector<32x32xf32>
    %15 = arith.divf %13, %14 : vector<32x32xf32>
    %16 = arith.mulf %10, %15 : vector<32x32xf32>
    %c0_8 = arith.constant 0 : index
    %c0_9 = arith.constant 0 : index
    %c0_10 = arith.constant 0 : index
    %17 = vector.load %arg5[%c0_8, %c0_9, %c0_10] : memref<1x32x32xf32, #tpu.memory_space<vmem>>, vector<1x32x32xf32>
    %18 = vector.shape_cast %17 : vector<1x32x32xf32> to vector<32x32xf32>
    %19 = vector.shape_cast %16 : vector<32x32xf32> to vector<1x32x32xf32>
    tpu.vector_store %arg5[%c0_8, %c0_9, %c0_10], %19 {strides = array<i32>} : memref<1x32x32xf32, #tpu.memory_space<vmem>>, vector<1x32x32xf32>,
    return
  }
  func.func @transform_0(%arg0: i32, %arg1: i32) -> (i32, i32, i32) {
    %c0_i32 = arith.constant 0 : i32
    %c0_i32_0 = arith.constant 0 : i32
    return %arg0, %arg1, %c0_i32 : i32, i32, i32
  }
  func.func @transform_1(%arg0: i32, %arg1: i32) -> (i32, i32, i32) {
    %c0_i32 = arith.constant 0 : i32
    %c0_i32_0 = arith.constant 0 : i32
    %c0_i32_1 = arith.constant 0 : i32
    return %arg0, %c0_i32, %c0_i32_0 : i32, i32, i32
  }
  func.func @transform_2(%arg0: i32, %arg1: i32) -> (i32, i32, i32) {
    %c0_i32 = arith.constant 0 : i32
    %c0_i32_0 = arith.constant 0 : i32
    %c0_i32_1 = arith.constant 0 : i32
    return %arg0, %c0_i32, %c0_i32_0 : i32, i32, i32
  }
  func.func @transform_3(%arg0: i32, %arg1: i32) -> (i32, i32, i32) {
    %c0_i32 = arith.constant 0 : i32
    %c0_i32_0 = arith.constant 0 : i32
    return %arg0, %arg1, %c0_i32 : i32, i32, i32
  }
}

</mosaic_0001>

<llo_original>
// kernel: encoder_forward.5
$region0: #{encoder_forward.5}
  #allocation0 [shape = 'u32[]', space=smem, size = 0x4, offset = 0x4, fixed_abs, tag = 'smem constant byte address 0x4 - core index']
  #allocation1 [shape = 'u32[144,128]{1,0:T(1,128)}', space=vmem, size = 0x12000, scoped, tag = 'internal scratch']
  #allocation2 [shape = 'f32[64,16]{1,0:T(8,128)}', space=vmem, size = 0x8000, scoped, tag = 'scratch operand']
  %s0 = inlined_call_operand.vmem [shape: bf16[2,4,8,8,81], index: 0, kind: input, shape index: {}]
  %s1 = inlined_call_operand.vmem [shape: bf16[1,81,16], index: 1, kind: input, shape index: {}]
  %s2 = inlined_call_operand.vmem [shape: f32[1,16], index: 2, kind: input, shape index: {}]
  %s3 = inlined_call_operand.vmem [shape: bf16[2,4,64,16], index: 3, kind: output, shape index: {}]
  %s4 = sld [smem:[#allocation0]]
  $region53: #{encoder_forward.5} parent=0
    _
  %s6 = ssub.s32 1, %s4
  %s7 = scalar_select 0, %s6, %s4
  loop: start=0, step=1, limit=10
  $region2: #{encoder_forward.5} parent=0 // loop_pre_header
    _
  $region3: #{encoder_forward.5} parent=0 // loop_header
    %s9 = sphi 0, %s13
    %p10 = scmp.ge.s32.totalorder %s9, 10
    %s16 = sphi 0, %s35
    %s17 = sphi 0, %s31
    %s18 = sphi 0, %s27
    %s19 = sphi 0, %s16
    %s20 = sphi 0, %s17
    %s21 = sphi 0, %s18
    %s22 = sphi 0, %s19
    %s23 = sphi 0, %s20
    %s24 = sphi 0, %s21
    %s42 = sphi 0, %s44
    %s45 = sphi 0, %s42
    %s46 = sphi 0, %s45
    %s62 = sphi 0, %s46
    %s66 = sphi 0, %s66
    %s68 = sphi 0, %s66
    %s69 = sphi 0, %s68
    %s83 = sphi 0, %s69
    %s87 = sphi 0, %s87
    %s89 = sphi 0, %s87
    %s90 = sphi 0, %s89
    %s104 = sphi 0, %s90
    %s112 = sphi 0, %s114
    %s115 = sphi 0, %s112
    %s116 = sphi 0, %s115
    %s132 = sphi 0, %s116
  $region4: #{encoder_forward.5} parent=0 // loop_header_branch
    %12 = sbr.rel (%p10) target = $region8
  $region5: #{encoder_forward.5} parent=0 // loop_body
    %s14 = ssub.s32 %s9, 1
    %s15 = ssub.s32 %s9, 2
    %s25 = sadd.s32 1, %s18
    %p26 = scmp.ge.s32.totalorder %s25, 1
    %s27 = scalar_select %p26, 0, %s25
    %s28 = sadd.s32 1, %s17
    %s29 = scalar_select %p26, %s28, %s17
    %p30 = scmp.ge.s32.totalorder %s29, 4
    %s31 = scalar_select %p30, 0, %s29
    %s32 = sadd.s32 1, %s16
    %s33 = scalar_select %p30, %s32, %s16
    %p34 = scmp.ge.s32.totalorder %s33, 2
    %s35 = scalar_select %p34, 0, %s33
    %s36 = sadd.s32 %s17, %s18
    %s37 = sadd.s32 %s31, %s27
    %s38 = ssub.s32 %s16, %s35
    %s39 = ssub.s32 %s36, %s37
    %s40 = sor.u32 %s38, %s39
    %p41 = scmp.eq.s32.totalorder %s40, 0
    %s43 = sadd.s32 %s42, 1
    %s44 = scalar_select %p41, %s42, %s43
    %p47 = pneg %p41
    %p48 = scmp.eq.s32.totalorder %s9, 7
    %p49 = por %p47, %p48
    %p50 = scmp.ne.s32.totalorder %s42, %s45
    %p51 = scmp.eq.s32.totalorder %s9, 0
    %p52 = por %p50, %p51
    %p53 = scmp.ne.s32.totalorder %s42, %s45
    %p54 = scmp.eq.s32.totalorder %s14, 7
    %p55 = por %p53, %p54
    %p56 = scmp.ne.s32.totalorder %s45, %s46
    %p57 = scmp.eq.s32.totalorder %s14, 0
    %p58 = por %p56, %p57
    %p59 = scmp.ne.s32.totalorder %s45, %s46
    %p60 = scmp.eq.s32.totalorder %s15, 7
    %p61 = por %p59, %p60
    %p63 = scmp.ne.s32.totalorder %s46, %s62
    %p64 = scmp.eq.s32.totalorder %s15, 0
    %p65 = por %p63, %p64
    %s67 = sadd.s32 %s66, 1
    %p70 = scmp.eq.s32.totalorder %s9, 7
    %p71 = scmp.ne.s32.totalorder %s66, %s68
    %p72 = scmp.eq.s32.totalorder %s9, 0
    %p73 = por %p71, %p72
    %p74 = scmp.ne.s32.totalorder %s66, %s68
    %p75 = scmp.eq.s32.totalorder %s14, 7
    %p76 = por %p74, %p75
    %p77 = scmp.ne.s32.totalorder %s68, %s69
    %p78 = scmp.eq.s32.totalorder %s14, 0
    %p79 = por %p77, %p78
    %p80 = scmp.ne.s32.totalorder %s68, %s69
    %p81 = scmp.eq.s32.totalorder %s15, 7
    %p82 = por %p80, %p81
    %p84 = scmp.ne.s32.totalorder %s69, %s83
    %p85 = scmp.eq.s32.totalorder %s15, 0
    %p86 = por %p84, %p85
    %s88 = sadd.s32 %s87, 1
    %p91 = scmp.eq.s32.totalorder %s9, 7
    %p92 = scmp.ne.s32.totalorder %s87, %s89
    %p93 = scmp.eq.s32.totalorder %s9, 0
    %p94 = por %p92, %p93
    %p95 = scmp.ne.s32.totalorder %s87, %s89
    %p96 = scmp.eq.s32.totalorder %s14, 7
    %p97 = por %p95, %p96
    %p98 = scmp.ne.s32.totalorder %s89, %s90
    %p99 = scmp.eq.s32.totalorder %s14, 0
    %p100 = por %p98, %p99
    %p101 = scmp.ne.s32.totalorder %s89, %s90
    %p102 = scmp.eq.s32.totalorder %s15, 7
    %p103 = por %p101, %p102
    %p105 = scmp.ne.s32.totalorder %s90, %s104
    %p106 = scmp.eq.s32.totalorder %s15, 0
    %p107 = por %p105, %p106
    %s108 = ssub.s32 %s16, %s35
    %s109 = ssub.s32 %s17, %s31
    %s110 = sor.u32 %s108, %s109
    %p111 = scmp.eq.s32.totalorder %s110, 0
    %s113 = sadd.s32 %s112, 1
    %s114 = scalar_select %p111, %s112, %s113
    %p117 = pneg %p111
    %p118 = scmp.eq.s32.totalorder %s9, 7
    %p119 = por %p117, %p118
    %p120 = scmp.ne.s32.totalorder %s112, %s115
    %p121 = scmp.eq.s32.totalorder %s9, 0
    %p122 = por %p120, %p121
    %p123 = scmp.ne.s32.totalorder %s112, %s115
    %p124 = scmp.eq.s32.totalorder %s14, 7
    %p125 = por %p123, %p124
    %p126 = scmp.ne.s32.totalorder %s115, %s116
    %p127 = scmp.eq.s32.totalorder %s14, 0
    %p128 = por %p126, %p127
    %p129 = scmp.ne.s32.totalorder %s115, %s116
    %p130 = scmp.eq.s32.totalorder %s15, 7
    %p131 = por %p129, %p130
    %p133 = scmp.ne.s32.totalorder %s116, %s132
    %p134 = scmp.eq.s32.totalorder %s15, 0
    %p135 = por %p133, %p134
    %p136 = scmp.le.s32.totalorder 1, %s9
    %p137 = scmp.lt.s32.totalorder %s9, 9
    %p138 = pnand %p136, %p137
    %p139 = pneg %p138
    // Predicated region
    $region9: #{encoder_forward.5} parent=5 // pred_check
      _
    $region10: #{encoder_forward.5} parent=5 // pred_check_branch
      %141 = sbr.rel (%p138) target = $region12
    $region11: #{encoder_forward.5} parent=5 // pred_region
      %s142 = ssub.s32 %s9, 1
      // Predicated region
      $region13: #{encoder_forward.5} parent=11 // pred_check
        %p143 = pneg %p79
      $region14: #{encoder_forward.5} parent=11 // pred_check_branch
        %145 = sbr.rel (%p143) target = $region16
      $region15: #{encoder_forward.5} parent=11 // pred_region
        _
      $region16: #{encoder_forward.5} parent=11 // pred_fallthru
        _
      // Predicated region
      $region17: #{encoder_forward.5} parent=11 // pred_check
        %p146 = pneg %p100
      $region18: #{encoder_forward.5} parent=11 // pred_check_branch
        %148 = sbr.rel (%p146) target = $region20
      $region19: #{encoder_forward.5} parent=11 // pred_region
        _
      $region20: #{encoder_forward.5} parent=11 // pred_fallthru
        _
    $region12: #{encoder_forward.5} parent=5 // pred_fallthru
      _
    %p149 = scmp.lt.s32.totalorder %s9, 8
    // Predicated region
    $region21: #{encoder_forward.5} parent=5 // pred_check
      %p150 = pneg %p149
    $region22: #{encoder_forward.5} parent=5 // pred_check_branch
      %152 = sbr.rel (%p150) target = $region24
    $region23: #{encoder_forward.5} parent=5 // pred_region
      // Predicated region
      $region25: #{encoder_forward.5} parent=23 // pred_check
        %p153 = pneg %p52
      $region26: #{encoder_forward.5} parent=23 // pred_check_branch
        %155 = sbr.rel (%p153) target = $region28
      $region27: #{encoder_forward.5} parent=23 // pred_region
        %s156 = sadd.s32 %s17, %s18
        %p157 = scmp.lt.s32.totalorder %s16, 1
        %s158 = scalar_select %p157, %s16, 1
        %p159 = scmp.lt.s32.totalorder %s156, 3
        %s160 = scalar_select %p159, %s156, 3
        %s161 = smul.addr %s160, 8
        %s162 = smul.addr %s158, 32
        %s163 = sadd.s32 %s161, %s162
        %s164 = smul.addr %s163, 4
        %s165 = scalar_lea.vmem %s0, %s164
        %s166 = sadd.s32 %s17, %s18
      $region28: #{encoder_forward.5} parent=23 // pred_fallthru
        _
    $region24: #{encoder_forward.5} parent=5 // pred_fallthru
      _
    %p167 = scmp.le.s32.totalorder 1, %s9
    %p168 = scmp.lt.s32.totalorder %s9, 9
    %p169 = pnand %p167, %p168
    %p170 = pneg %p169
    // Predicated region
    $region29: #{encoder_forward.5} parent=5 // pred_check
      _
    $region30: #{encoder_forward.5} parent=5 // pred_check_branch
      %172 = sbr.rel (%p169) target = $region32
    $region31: #{encoder_forward.5} parent=5 // pred_region
      %s173 = ssub.s32 %s9, 1
      %s174 = sadd.s32 %s20, %s21
      %p175 = scmp.lt.s32.totalorder %s19, 1
      %s176 = scalar_select %p175, %s19, 1
      %p177 = scmp.lt.s32.totalorder %s174, 3
      %s178 = scalar_select %p177, %s174, 3
      %s179 = smul.addr %s178, 8
      %s180 = smul.addr %s176, 32
      %s181 = sadd.s32 %s179, %s180
      %s182 = smul.addr %s181, 4
      %s183 = scalar_lea.vmem %s0, %s182
      %p184 = pneg %p58
      %p185 = pneg %p55
      %p186 = pneg %p79
      %p187 = pneg %p76
      %p188 = pneg %p100
      %p189 = pneg %p97
      %p190 = pneg %p128
      %p191 = pneg %p125
      %p192 = scmp.lt.s32.totalorder %s19, 1
      %s193 = scalar_select %p192, %s19, 1
      %p194 = scmp.lt.s32.totalorder %s20, 3
      %s195 = scalar_select %p194, %s20, 3
      %s196 = smul.addr %s195, 8
      %s197 = smul.addr %s193, 32
      %s198 = sadd.s32 %s196, %s197
      %s199 = smul.addr %s198, 4
      %s200 = scalar_lea.vmem %s3, %s199
      %s201 = sadd.s32 %s20, %s21
      %p202 = scmp.lt.s32.totalorder %s19, 1
      %s203 = scalar_select %p202, %s19, 1
      %p204 = scmp.lt.s32.totalorder %s201, 3
      %s205 = scalar_select %p204, %s201, 3
      %s206 = smul.addr %s205, 8
      %s207 = smul.addr %s203, 32
      %s208 = sadd.s32 %s206, %s207
      %s209 = smul.addr %s208, 4
      %s210 = scalar_lea.vmem %s0, %s209
      %s211 = sadd.s32 %s20, %s21
      %p212 = scmp.lt.s32.totalorder %s19, 1
      %s213 = scalar_select %p212, %s19, 1
      %p214 = scmp.lt.s32.totalorder %s20, 3
      %s215 = scalar_select %p214, %s20, 3
      %s216 = smul.addr %s215, 8
      %s217 = smul.addr %s213, 32
      %s218 = sadd.s32 %s216, %s217
      %s219 = smul.addr %s218, 4
      %s220 = scalar_lea.vmem %s3, %s219
      %p222 = scmp.eq.s32.totalorder %s21, 0
      // Predicated region
      $region33: #{encoder_forward.5} parent=31 // pred_check
        %p223 = pneg %p222
      $region34: #{encoder_forward.5} parent=31 // pred_check_branch
        %225 = sbr.rel (%p223) target = $region36
      $region35: #{encoder_forward.5} parent=31 // pred_region
        %vm226 = vcmask 130048
        %227 = vst.msk [vmem:[#allocation2] sm:$0xff] %vm226, 0.0
        %228 = vst.msk [vmem:[#allocation2 + $0x8] sm:$0xff] %vm226, 0.0
        %229 = vst.msk [vmem:[#allocation2 + $0x10] sm:$0xff] %vm226, 0.0
        %230 = vst.msk [vmem:[#allocation2 + $0x18] sm:$0xff] %vm226, 0.0
        %231 = vst.msk [vmem:[#allocation2 + $0x20] sm:$0xff] %vm226, 0.0
        %232 = vst.msk [vmem:[#allocation2 + $0x28] sm:$0xff] %vm226, 0.0
        %233 = vst.msk [vmem:[#allocation2 + $0x30] sm:$0xff] %vm226, 0.0
        %234 = vst.msk [vmem:[#allocation2 + $0x38] sm:$0xff] %vm226, 0.0
      $region36: #{encoder_forward.5} parent=31 // pred_fallthru
        _
      %v235 = vld [vmem:[#allocation2] sm:$0xff]
      %v236 = vld [vmem:[#allocation2 + $0x8] sm:$0xff]
      %v237 = vld [vmem:[#allocation2 + $0x10] sm:$0xff]
      %v238 = vld [vmem:[#allocation2 + $0x18] sm:$0xff]
      %v239 = vld [vmem:[#allocation2 + $0x20] sm:$0xff]
      %v240 = vld [vmem:[#allocation2 + $0x28] sm:$0xff]
      %v241 = vld [vmem:[#allocation2 + $0x30] sm:$0xff]
      %v242 = vld [vmem:[#allocation2 + $0x38] sm:$0xff]
      %v243 = vld [vmem:[%s210] sm:$0xf]
      %v244 = vld [vmem:[%s210 + $0x4] sm:$0xf]
      %v245 = vld [vmem:[%s210 + $0x8] sm:$0xf]
      %v246 = vld [vmem:[%s210 + $0xc] sm:$0xf]
      %v247 = vld [vmem:[%s210 + $0x10] sm:$0xf]
      %v248 = vld [vmem:[%s210 + $0x14] sm:$0xf]
      %v249 = vld [vmem:[%s210 + $0x18] sm:$0xf]
      %v250 = vld [vmem:[%s210 + $0x1c] sm:$0xf]
      %s251 = smul.u32 %s21, 11
      %s252 = smul.addr %s251, 4
      %s253 = scalar_lea.vmem %s1, %s252
      %v254 = vld [vmem:[%s253] sm:$0xf]
      %v255 = vld [vmem:[%s253 + $0x4] sm:$0xf]
      %v256 = vld [vmem:[%s253 + $0x8] sm:$0xf]
      %v257 = vld [vmem:[%s253 + $0xc] sm:$0xf]
      %v258 = vld [vmem:[%s253 + $0x10] sm:$0xf]
      %v259 = vld [vmem:[%s253 + $0x14] sm:$0xf]
      %v260 = vld [vmem:[%s253 + $0x18] sm:$0xf]
      %v261 = vld [vmem:[%s253 + $0x1c] sm:$0xf]
      %v262 = vld [vmem:[%s253 + $0x20] sm:$0xf]
      %v263 = vld [vmem:[%s253 + $0x24] sm:$0xf]
      %v264 = vld [vmem:[%s253 + $0x28] sm:$0x1]
      %v273 = vunpack.c.l.b16 %v243
      %v274 = vunpack.c.l.b16 %v244
      %v275 = vunpack.c.l.b16 %v245
      %v276 = vunpack.c.l.b16 %v246
      %v277 = vunpack.c.l.b16 %v247
      %v278 = vunpack.c.l.b16 %v248
      %v279 = vunpack.c.l.b16 %v249
      %v280 = vunpack.c.l.b16 %v250
      %v281 = vpack.c.b16 %v274, %v273
      %v282 = vpack.c.b16 %v276, %v275
      %v283 = vpack.c.b16 %v278, %v277
      %v284 = vpack.c.b16 %v280, %v279
      %v296 = vunpack.c.l.b16 %v254
      %v297 = vunpack.c.l.b16 %v255
      %v298 = vunpack.c.l.b16 %v256
      %v299 = vunpack.c.l.b16 %v257
      %v300 = vunpack.c.l.b16 %v258
      %v301 = vunpack.c.l.b16 %v259
      %v302 = vunpack.c.l.b16 %v260
      %v303 = vunpack.c.l.b16 %v261
      %v304 = vunpack.c.l.b16 %v262
      %v305 = vunpack.c.l.b16 %v263
      %v306 = vunpack.c.l.b16 %v264
      %v307 = vpack.c.b16 %v297, %v296
      %v308 = vpack.c.b16 %v299, %v298
      %v309 = vpack.c.b16 %v301, %v300
      %v310 = vpack.c.b16 %v303, %v302
      %v311 = vpack.c.b16 %v305, %v304
      %v312 = vpack.c.b16 %v306, %v306
      %vm318 = vcmask 662528
      %v320 = vsel %vm318, %v281, 0
      %v323 = vsel %vm318, %v282, 0
      %v326 = vsel %vm318, %v283, 0
      %v329 = vsel %vm318, %v284, 0
      %vm331 = vcmask 1040384
      %v332 = vsel 0, 4294967295, 65535
      %v333 = vsel %vm331, %v332, 0
      %v335 = vand.u32 %v312, %v333
      %337 = vmatprep.subr.bf16.mxu0 0
      %338 = vmatpush1.bf16.msra.mxu0 0
      %339 = vmatprep.subr.bf16.mxu0 0
      %340 = vmatpush1.bf16.msra.mxu0 0
      %341 = vmatprep.subr.bf16.mxu0 0
      %342 = vmatpush1.bf16.msra.mxu0 %v335
      %343 = vmatprep.subr.bf16.mxu0 0
      %344 = vmatpush1.bf16.msra.mxu0 %v311
      %345 = vmatprep.subr.bf16.mxu0 0
      %346 = vmatpush1.bf16.msra.mxu0 %v310
      %347 = vmatprep.subr.bf16.mxu0 0
      %348 = vmatpush1.bf16.msra.mxu0 %v309
      %349 = vmatprep.subr.bf16.mxu0 0
      %350 = vmatpush1.bf16.msra.mxu0 %v308
      %351 = vmatprep.subr.bf16.mxu0 0
      %352 = vmatpush1.bf16.msra.mxu0 %v307
      %353 = vmatprep.subr.bf16.mxu0 0
      %354 = vmatpush2.bf16.msra.mxu0 0
      %355 = vmatprep.subr.bf16.mxu0 0
      %356 = vmatpush2.bf16.msra.mxu0 0
      %357 = vmatprep.subr.bf16.mxu0 0
      %358 = vmatpush2.bf16.msra.mxu0 0
      %359 = vmatprep.subr.bf16.mxu0 0
      %360 = vmatpush2.bf16.msra.mxu0 0
      %361 = vmatprep.subr.bf16.mxu0 0
      %362 = vmatpush2.bf16.msra.mxu0 0
      %363 = vmatprep.subr.bf16.mxu0 0
      %364 = vmatpush2.bf16.msra.mxu0 0
      %365 = vmatprep.subr.bf16.mxu0 0
      %366 = vmatpush2.bf16.msra.mxu0 0
      %367 = vmatprep.subr.bf16.mxu0 0
      %368 = vmatpush2.bf16.msra.mxu0 0
      %369 = vmatprep.mubr.bf16.mxu0 0
      %370 = vmatmul.mubr.bf16.gmra.mxu0 %v320
      %v371 = vpop.f32.mrf.mxu0
      %v372 = vadd.f32 0.0, %v371
      %v373 = vpop.f32.mrf.mxu0
      %v374 = vpop.f32.mrf.mxu0
      %v375 = vadd.f32 0.0, %v374
      %v376 = vpop.f32.mrf.mxu0
      %377 = vmatprep.mubr.bf16.mxu0 0
      %378 = vmatmul.mubr.bf16.gmra.mxu0 %v323
      %v379 = vpop.f32.mrf.mxu0
      %v380 = vadd.f32 0.0, %v379
      %v381 = vpop.f32.mrf.mxu0
      %v382 = vpop.f32.mrf.mxu0
      %v383 = vadd.f32 0.0, %v382
      %v384 = vpop.f32.mrf.mxu0
      %385 = vmatprep.mubr.bf16.mxu0 0
      %386 = vmatmul.mubr.bf16.gmra.mxu0 %v326
      %v387 = vpop.f32.mrf.mxu0
      %v388 = vadd.f32 0.0, %v387
      %v389 = vpop.f32.mrf.mxu0
      %v390 = vpop.f32.mrf.mxu0
      %v391 = vadd.f32 0.0, %v390
      %v392 = vpop.f32.mrf.mxu0
      %393 = vmatprep.mubr.bf16.mxu0 0
      %394 = vmatmul.mubr.bf16.gmra.mxu0 %v329
      %v395 = vpop.f32.mrf.mxu0
      %v396 = vadd.f32 0.0, %v395
      %v397 = vpop.f32.mrf.mxu0
      %v398 = vpop.f32.mrf.mxu0
      %v399 = vadd.f32 0.0, %v398
      %v400 = vpop.f32.mrf.mxu0
      %401 = vdwg.mxu0
      %v402 = vadd.f32 %v235, %v372
      %v403 = vadd.f32 %v236, %v375
      %v404 = vadd.f32 %v237, %v380
      %v405 = vadd.f32 %v238, %v383
      %v406 = vadd.f32 %v239, %v388
      %v407 = vadd.f32 %v240, %v391
      %v408 = vadd.f32 %v241, %v396
      %v409 = vadd.f32 %v242, %v399
      %vm410 = vcmask 130048
      %411 = vst.msk [vmem:[#allocation2] sm:$0xff] %vm410, %v402
      %412 = vst.msk [vmem:[#allocation2 + $0x8] sm:$0xff] %vm410, %v403
      %413 = vst.msk [vmem:[#allocation2 + $0x10] sm:$0xff] %vm410, %v404
      %414 = vst.msk [vmem:[#allocation2 + $0x18] sm:$0xff] %vm410, %v405
      %415 = vst.msk [vmem:[#allocation2 + $0x20] sm:$0xff] %vm410, %v406
      %416 = vst.msk [vmem:[#allocation2 + $0x28] sm:$0xff] %vm410, %v407
      %417 = vst.msk [vmem:[#allocation2 + $0x30] sm:$0xff] %vm410, %v408
      %418 = vst.msk [vmem:[#allocation2 + $0x38] sm:$0xff] %vm410, %v409
      // Predicated region
      $region37: #{encoder_forward.5} parent=31 // pred_check
        %p419 = pneg %p222
      $region38: #{encoder_forward.5} parent=31 // pred_check_branch
        %421 = sbr.rel (%p419) target = $region40
      $region39: #{encoder_forward.5} parent=31 // pred_region
        %v422 = vld [vmem:[#allocation2] sm:$0xff]
        %v423 = vld [vmem:[#allocation2 + $0x8] sm:$0xff]
        %v424 = vld [vmem:[#allocation2 + $0x10] sm:$0xff]
        %v425 = vld [vmem:[#allocation2 + $0x18] sm:$0xff]
        %v426 = vld [vmem:[#allocation2 + $0x20] sm:$0xff]
        %v427 = vld [vmem:[#allocation2 + $0x28] sm:$0xff]
        %v428 = vld [vmem:[#allocation2 + $0x30] sm:$0xff]
        %v429 = vld [vmem:[#allocation2 + $0x38] sm:$0xff]
        %v430 = vld [vmem:[%s2] sm:$0x1]
        %v432 = vlaneseq
        %v433 = vshrl.u32 %v432, 7
        %v434 = vsub.s32 0, %v433
        %v435 = vrot.slane %v430, %v434
        %v437 = vadd.f32 %v422, %v435
        %v438 = vadd.f32 %v423, %v435
        %v439 = vadd.f32 %v424, %v435
        %v440 = vadd.f32 %v425, %v435
        %v441 = vadd.f32 %v426, %v435
        %v442 = vadd.f32 %v427, %v435
        %v443 = vadd.f32 %v428, %v435
        %v444 = vadd.f32 %v429, %v435
        %v445 = vpack.c.bf16 %v438, %v437
        %v446 = vpack.c.bf16 %v440, %v439
        %v447 = vpack.c.bf16 %v442, %v441
        %v448 = vpack.c.bf16 %v444, %v443
        %v453 = vunpack.c.l.b16 %v445
        %v454 = vunpack.c.h.b16 %v445
        %v455 = vunpack.c.l.b16 %v446
        %v456 = vunpack.c.h.b16 %v446
        %v457 = vunpack.c.l.b16 %v447
        %v458 = vunpack.c.h.b16 %v447
        %v459 = vunpack.c.l.b16 %v448
        %v460 = vunpack.c.h.b16 %v448
        %v461 = vpack.c.b16 %v453, %v453
        %v462 = vpack.c.b16 %v454, %v454
        %v463 = vpack.c.b16 %v455, %v455
        %v464 = vpack.c.b16 %v456, %v456
        %v465 = vpack.c.b16 %v457, %v457
        %v466 = vpack.c.b16 %v458, %v458
        %v467 = vpack.c.b16 %v459, %v459
        %v468 = vpack.c.b16 %v460, %v460
        %vm477 = vcmask 125952
        %478 = vst.msk [vmem:[%s220] sm:$0xf] %vm477, %v461
        %479 = vst.msk [vmem:[%s220 + $0x4] sm:$0xf] %vm477, %v462
        %480 = vst.msk [vmem:[%s220 + $0x8] sm:$0xf] %vm477, %v463
        %481 = vst.msk [vmem:[%s220 + $0xc] sm:$0xf] %vm477, %v464
        %482 = vst.msk [vmem:[%s220 + $0x10] sm:$0xf] %vm477, %v465
        %483 = vst.msk [vmem:[%s220 + $0x14] sm:$0xf] %vm477, %v466
        %484 = vst.msk [vmem:[%s220 + $0x18] sm:$0xf] %vm477, %v467
        %485 = vst.msk [vmem:[%s220 + $0x1c] sm:$0xf] %vm477, %v468
      $region40: #{encoder_forward.5} parent=31 // pred_fallthru
        _
      %p486 = scmp.lt.s32.totalorder %s19, 1
      %s487 = scalar_select %p486, %s19, 1
      %p488 = scmp.lt.s32.totalorder %s20, 3
      %s489 = scalar_select %p488, %s20, 3
      %s490 = smul.addr %s489, 8
      %s491 = smul.addr %s487, 32
      %s492 = sadd.s32 %s490, %s491
      %s493 = smul.addr %s492, 4
      %s494 = scalar_lea.vmem %s3, %s493
      // Predicated region
      $region41: #{encoder_forward.5} parent=31 // pred_check
        %p495 = pneg %p125
      $region42: #{encoder_forward.5} parent=31 // pred_check_branch
        %497 = sbr.rel (%p495) target = $region44
      $region43: #{encoder_forward.5} parent=31 // pred_region
        _
      $region44: #{encoder_forward.5} parent=31 // pred_fallthru
        _
    $region32: #{encoder_forward.5} parent=5 // pred_fallthru
      _
    %p498 = scmp.le.s32.totalorder 2, %s9
    // Predicated region
    $region45: #{encoder_forward.5} parent=5 // pred_check
      %p499 = pneg %p498
    $region46: #{encoder_forward.5} parent=5 // pred_check_branch
      %501 = sbr.rel (%p499) target = $region48
    $region47: #{encoder_forward.5} parent=5 // pred_region
      %s502 = ssub.s32 %s9, 2
      // Predicated region
      $region49: #{encoder_forward.5} parent=47 // pred_check
        %p503 = pneg %p131
      $region50: #{encoder_forward.5} parent=47 // pred_check_branch
        %505 = sbr.rel (%p503) target = $region52
      $region51: #{encoder_forward.5} parent=47 // pred_region
        %p506 = scmp.lt.s32.totalorder %s22, 1
        %s507 = scalar_select %p506, %s22, 1
        %p508 = scmp.lt.s32.totalorder %s23, 3
        %s509 = scalar_select %p508, %s23, 3
        %s510 = smul.addr %s509, 8
        %s511 = smul.addr %s507, 32
        %s512 = sadd.s32 %s510, %s511
        %s513 = smul.addr %s512, 4
        %s514 = scalar_lea.vmem %s3, %s513
      $region52: #{encoder_forward.5} parent=47 // pred_fallthru
        _
    $region48: #{encoder_forward.5} parent=5 // pred_fallthru
      _
  $region6: #{encoder_forward.5} parent=0 // loop_footer
    %s13 = sadd.s32 1, %s9
  $region7: #{encoder_forward.5} parent=0 // loop_footer_branch
    %8 = sbr.rel target = $region3
  $region8: #{encoder_forward.5} parent=0 // loop_exit
    _

// kernel: encoder_forward.6
$region0: #{encoder_forward.6}
  #allocation0 [shape = 'u32[]', space=smem, size = 0x4, offset = 0x4, fixed_abs, tag = 'smem constant byte address 0x4 - core index']
  #allocation1 [shape = 'u32[144,128]{1,0:T(1,128)}', space=vmem, size = 0x12000, scoped, tag = 'internal scratch']
  #allocation2 [shape = 'f32[16,32]{1,0:T(8,128)}', space=vmem, size = 0x2000, scoped, tag = 'scratch operand']
  %s0 = inlined_call_operand.vmem [shape: bf16[2,6,10,10,16], index: 0, kind: input, shape index: {}]
  %s1 = inlined_call_operand.vmem [shape: bf16[64,16,32], index: 1, kind: input, shape index: {}]
  %s2 = inlined_call_operand.vmem [shape: f32[1,32], index: 2, kind: input, shape index: {}]
  %s3 = inlined_call_operand.vmem [shape: bf16[2,2,16,32], index: 3, kind: output, shape index: {0}]
  %s4 = inlined_call_operand.vmem [shape: f32[2,1,32], index: 4, kind: output, shape index: {1}]
  %s5 = inlined_call_operand.vmem [shape: f32[2,1,32], index: 5, kind: output, shape index: {2}]
  %6 = xla_tuple %s3, %s4, %s5
  %s7 = sld [smem:[#allocation0]]
  $region73: #{encoder_forward.6} parent=0
    _
  %s9 = ssub.s32 1, %s7
  %s10 = scalar_select 0, %s9, %s7
  loop: start=0, step=1, limit=18
  $region2: #{encoder_forward.6} parent=0 // loop_pre_header
    _
  $region3: #{encoder_forward.6} parent=0 // loop_header
    %s12 = sphi 0, %s16
    %p13 = scmp.ge.s32.totalorder %s12, 18
    %s19 = sphi 0, %s38
    %s20 = sphi 0, %s34
    %s21 = sphi 0, %s30
    %s22 = sphi 0, %s19
    %s23 = sphi 0, %s20
    %s24 = sphi 0, %s21
    %s25 = sphi 0, %s22
    %s26 = sphi 0, %s23
    %s27 = sphi 0, %s24
    %s47 = sphi 0, %s49
    %s50 = sphi 0, %s47
    %s51 = sphi 0, %s50
    %s67 = sphi 0, %s51
    %s71 = sphi 0, %s71
    %s73 = sphi 0, %s71
    %s74 = sphi 0, %s73
    %s88 = sphi 0, %s74
    %s92 = sphi 0, %s92
    %s94 = sphi 0, %s92
    %s95 = sphi 0, %s94
    %s109 = sphi 0, %s95
    %s117 = sphi 0, %s119
    %s120 = sphi 0, %s117
    %s121 = sphi 0, %s120
    %s137 = sphi 0, %s121
    %s143 = sphi 0, %s145
    %s146 = sphi 0, %s143
    %s147 = sphi 0, %s146
    %s163 = sphi 0, %s147
    %s169 = sphi 0, %s171
    %s172 = sphi 0, %s169
    %s173 = sphi 0, %s172
    %s189 = sphi 0, %s173
  $region4: #{encoder_forward.6} parent=0 // loop_header_branch
    %15 = sbr.rel (%p13) target = $region8
  $region5: #{encoder_forward.6} parent=0 // loop_body
    %s17 = ssub.s32 %s12, 1
    %s18 = ssub.s32 %s12, 2
    %s28 = sadd.s32 1, %s21
    %p29 = scmp.ge.s32.totalorder %s28, 4
    %s30 = scalar_select %p29, 0, %s28
    %s31 = sadd.s32 1, %s20
    %s32 = scalar_select %p29, %s31, %s20
    %p33 = scmp.ge.s32.totalorder %s32, 2
    %s34 = scalar_select %p33, 0, %s32
    %s35 = sadd.s32 1, %s19
    %s36 = scalar_select %p33, %s35, %s19
    %p37 = scmp.ge.s32.totalorder %s36, 2
    %s38 = scalar_select %p37, 0, %s36
    %s39 = smul.u32 %s20, 2
    %s40 = sadd.s32 %s39, %s21
    %s41 = smul.u32 %s34, 2
    %s42 = sadd.s32 %s41, %s30
    %s43 = ssub.s32 %s19, %s38
    %s44 = ssub.s32 %s40, %s42
    %s45 = sor.u32 %s43, %s44
    %p46 = scmp.eq.s32.totalorder %s45, 0
    %s48 = sadd.s32 %s47, 1
    %s49 = scalar_select %p46, %s47, %s48
    %p52 = pneg %p46
    %p53 = scmp.eq.s32.totalorder %s12, 15
    %p54 = por %p52, %p53
    %p55 = scmp.ne.s32.totalorder %s47, %s50
    %p56 = scmp.eq.s32.totalorder %s12, 0
    %p57 = por %p55, %p56
    %p58 = scmp.ne.s32.totalorder %s47, %s50
    %p59 = scmp.eq.s32.totalorder %s17, 15
    %p60 = por %p58, %p59
    %p61 = scmp.ne.s32.totalorder %s50, %s51
    %p62 = scmp.eq.s32.totalorder %s17, 0
    %p63 = por %p61, %p62
    %p64 = scmp.ne.s32.totalorder %s50, %s51
    %p65 = scmp.eq.s32.totalorder %s18, 15
    %p66 = por %p64, %p65
    %p68 = scmp.ne.s32.totalorder %s51, %s67
    %p69 = scmp.eq.s32.totalorder %s18, 0
    %p70 = por %p68, %p69
    %s72 = sadd.s32 %s71, 1
    %p75 = scmp.eq.s32.totalorder %s12, 15
    %p76 = scmp.ne.s32.totalorder %s71, %s73
    %p77 = scmp.eq.s32.totalorder %s12, 0
    %p78 = por %p76, %p77
    %p79 = scmp.ne.s32.totalorder %s71, %s73
    %p80 = scmp.eq.s32.totalorder %s17, 15
    %p81 = por %p79, %p80
    %p82 = scmp.ne.s32.totalorder %s73, %s74
    %p83 = scmp.eq.s32.totalorder %s17, 0
    %p84 = por %p82, %p83
    %p85 = scmp.ne.s32.totalorder %s73, %s74
    %p86 = scmp.eq.s32.totalorder %s18, 15
    %p87 = por %p85, %p86
    %p89 = scmp.ne.s32.totalorder %s74, %s88
    %p90 = scmp.eq.s32.totalorder %s18, 0
    %p91 = por %p89, %p90
    %s93 = sadd.s32 %s92, 1
    %p96 = scmp.eq.s32.totalorder %s12, 15
    %p97 = scmp.ne.s32.totalorder %s92, %s94
    %p98 = scmp.eq.s32.totalorder %s12, 0
    %p99 = por %p97, %p98
    %p100 = scmp.ne.s32.totalorder %s92, %s94
    %p101 = scmp.eq.s32.totalorder %s17, 15
    %p102 = por %p100, %p101
    %p103 = scmp.ne.s32.totalorder %s94, %s95
    %p104 = scmp.eq.s32.totalorder %s17, 0
    %p105 = por %p103, %p104
    %p106 = scmp.ne.s32.totalorder %s94, %s95
    %p107 = scmp.eq.s32.totalorder %s18, 15
    %p108 = por %p106, %p107
    %p110 = scmp.ne.s32.totalorder %s95, %s109
    %p111 = scmp.eq.s32.totalorder %s18, 0
    %p112 = por %p110, %p111
    %s113 = ssub.s32 %s19, %s38
    %s114 = ssub.s32 %s20, %s34
    %s115 = sor.u32 %s113, %s114
    %p116 = scmp.eq.s32.totalorder %s115, 0
    %s118 = sadd.s32 %s117, 1
    %s119 = scalar_select %p116, %s117, %s118
    %p122 = pneg %p116
    %p123 = scmp.eq.s32.totalorder %s12, 15
    %p124 = por %p122, %p123
    %p125 = scmp.ne.s32.totalorder %s117, %s120
    %p126 = scmp.eq.s32.totalorder %s12, 0
    %p127 = por %p125, %p126
    %p128 = scmp.ne.s32.totalorder %s117, %s120
    %p129 = scmp.eq.s32.totalorder %s17, 15
    %p130 = por %p128, %p129
    %p131 = scmp.ne.s32.totalorder %s120, %s121
    %p132 = scmp.eq.s32.totalorder %s17, 0
    %p133 = por %p131, %p132
    %p134 = scmp.ne.s32.totalorder %s120, %s121
    %p135 = scmp.eq.s32.totalorder %s18, 15
    %p136 = por %p134, %p135
    %p138 = scmp.ne.s32.totalorder %s121, %s137
    %p139 = scmp.eq.s32.totalorder %s18, 0
    %p140 = por %p138, %p139
    %s141 = ssub.s32 %s19, %s38
    %p142 = scmp.eq.s32.totalorder %s141, 0
    %s144 = sadd.s32 %s143, 1
    %s145 = scalar_select %p142, %s143, %s144
    %p148 = pneg %p142
    %p149 = scmp.eq.s32.totalorder %s12, 15
    %p150 = por %p148, %p149
    %p151 = scmp.ne.s32.totalorder %s143, %s146
    %p152 = scmp.eq.s32.totalorder %s12, 0
    %p153 = por %p151, %p152
    %p154 = scmp.ne.s32.totalorder %s143, %s146
    %p155 = scmp.eq.s32.totalorder %s17, 15
    %p156 = por %p154, %p155
    %p157 = scmp.ne.s32.totalorder %s146, %s147
    %p158 = scmp.eq.s32.totalorder %s17, 0
    %p159 = por %p157, %p158
    %p160 = scmp.ne.s32.totalorder %s146, %s147
    %p161 = scmp.eq.s32.totalorder %s18, 15
    %p162 = por %p160, %p161
    %p164 = scmp.ne.s32.totalorder %s147, %s163
    %p165 = scmp.eq.s32.totalorder %s18, 0
    %p166 = por %p164, %p165
    %s167 = ssub.s32 %s19, %s38
    %p168 = scmp.eq.s32.totalorder %s167, 0
    %s170 = sadd.s32 %s169, 1
    %s171 = scalar_select %p168, %s169, %s170
    %p174 = pneg %p168
    %p175 = scmp.eq.s32.totalorder %s12, 15
    %p176 = por %p174, %p175
    %p177 = scmp.ne.s32.totalorder %s169, %s172
    %p178 = scmp.eq.s32.totalorder %s12, 0
    %p179 = por %p177, %p178
    %p180 = scmp.ne.s32.totalorder %s169, %s172
    %p181 = scmp.eq.s32.totalorder %s17, 15
    %p182 = por %p180, %p181
    %p183 = scmp.ne.s32.totalorder %s172, %s173
    %p184 = scmp.eq.s32.totalorder %s17, 0
    %p185 = por %p183, %p184
    %p186 = scmp.ne.s32.totalorder %s172, %s173
    %p187 = scmp.eq.s32.totalorder %s18, 15
    %p188 = por %p186, %p187
    %p190 = scmp.ne.s32.totalorder %s173, %s189
    %p191 = scmp.eq.s32.totalorder %s18, 0
    %p192 = por %p190, %p191
    %p193 = scmp.le.s32.totalorder 1, %s12
    %p194 = scmp.lt.s32.totalorder %s12, 17
    %p195 = pnand %p193, %p194
    %p196 = pneg %p195
    // Predicated region
    $region9: #{encoder_forward.6} parent=5 // pred_check
      _
    $region10: #{encoder_forward.6} parent=5 // pred_check_branch
      %198 = sbr.rel (%p195) target = $region12
    $region11: #{encoder_forward.6} parent=5 // pred_region
      %s199 = ssub.s32 %s12, 1
      // Predicated region
      $region13: #{encoder_forward.6} parent=11 // pred_check
        %p200 = pneg %p84
      $region14: #{encoder_forward.6} parent=11 // pred_check_branch
        %202 = sbr.rel (%p200) target = $region16
      $region15: #{encoder_forward.6} parent=11 // pred_region
        _
      $region16: #{encoder_forward.6} parent=11 // pred_fallthru
        _
      // Predicated region
      $region17: #{encoder_forward.6} parent=11 // pred_check
        %p203 = pneg %p105
      $region18: #{encoder_forward.6} parent=11 // pred_check_branch
        %205 = sbr.rel (%p203) target = $region20
      $region19: #{encoder_forward.6} parent=11 // pred_region
        _
      $region20: #{encoder_forward.6} parent=11 // pred_fallthru
        _
    $region12: #{encoder_forward.6} parent=5 // pred_fallthru
      _
    %p206 = scmp.lt.s32.totalorder %s12, 16
    // Predicated region
    $region21: #{encoder_forward.6} parent=5 // pred_check
      %p207 = pneg %p206
    $region22: #{encoder_forward.6} parent=5 // pred_check_branch
      %209 = sbr.rel (%p207) target = $region24
    $region23: #{encoder_forward.6} parent=5 // pred_region
      // Predicated region
      $region25: #{encoder_forward.6} parent=23 // pred_check
        %p210 = pneg %p57
      $region26: #{encoder_forward.6} parent=23 // pred_check_branch
        %212 = sbr.rel (%p210) target = $region28
      $region27: #{encoder_forward.6} parent=23 // pred_region
        %s213 = smul.u32 %s20, 2
        %s214 = sadd.s32 %s213, %s21
        %p215 = scmp.lt.s32.totalorder %s19, 1
        %s216 = scalar_select %p215, %s19, 1
        %p217 = scmp.lt.s32.totalorder %s214, 5
        %s218 = scalar_select %p217, %s214, 5
        %s219 = smul.addr %s218, 20
        %s220 = smul.addr %s216, 120
        %s221 = sadd.s32 %s219, %s220
        %s222 = smul.addr %s221, 4
        %s223 = scalar_lea.vmem %s0, %s222
        %s224 = smul.u32 %s20, 2
        %s225 = sadd.s32 %s224, %s21
      $region28: #{encoder_forward.6} parent=23 // pred_fallthru
        _
    $region24: #{encoder_forward.6} parent=5 // pred_fallthru
      _
    %p226 = scmp.le.s32.totalorder 1, %s12
    %p227 = scmp.lt.s32.totalorder %s12, 17
    %p228 = pnand %p226, %p227
    %p229 = pneg %p228
    // Predicated region
    $region29: #{encoder_forward.6} parent=5 // pred_check
      _
    $region30: #{encoder_forward.6} parent=5 // pred_check_branch
      %231 = sbr.rel (%p228) target = $region32
    $region31: #{encoder_forward.6} parent=5 // pred_region
      %s232 = ssub.s32 %s12, 1
      %s233 = smul.u32 %s23, 2
      %s234 = sadd.s32 %s233, %s24
      %p235 = scmp.lt.s32.totalorder %s22, 1
      %s236 = scalar_select %p235, %s22, 1
      %p237 = scmp.lt.s32.totalorder %s234, 5
      %s238 = scalar_select %p237, %s234, 5
      %s239 = smul.addr %s238, 20
      %s240 = smul.addr %s236, 120
      %s241 = sadd.s32 %s239, %s240
      %s242 = smul.addr %s241, 4
      %s243 = scalar_lea.vmem %s0, %s242
      %p244 = pneg %p63
      %p245 = pneg %p60
      %p246 = pneg %p84
      %p247 = pneg %p81
      %p248 = pneg %p105
      %p249 = pneg %p102
      %p250 = pneg %p133
      %p251 = pneg %p130
      %p252 = scmp.lt.s32.totalorder %s22, 1
      %s253 = scalar_select %p252, %s22, 1
      %p254 = scmp.lt.s32.totalorder %s23, 1
      %s255 = scalar_select %p254, %s23, 1
      %s256 = smul.addr %s255, 2
      %s257 = smul.addr %s253, 4
      %s258 = sadd.s32 %s256, %s257
      %s259 = smul.addr %s258, 4
      %s260 = scalar_lea.vmem %s3, %s259
      %p261 = pneg %p159
      %p262 = pneg %p156
      %p263 = scmp.lt.s32.totalorder %s22, 1
      %s264 = scalar_select %p263, %s22, 1
      %s265 = scalar_lea.vmem %s4, %s264
      %p266 = pneg %p185
      %p267 = pneg %p182
      %p268 = scmp.lt.s32.totalorder %s22, 1
      %s269 = scalar_select %p268, %s22, 1
      %s270 = scalar_lea.vmem %s5, %s269
      %s271 = smul.u32 %s23, 2
      %s272 = sadd.s32 %s271, %s24
      %p273 = scmp.lt.s32.totalorder %s22, 1
      %s274 = scalar_select %p273, %s22, 1
      %p275 = scmp.lt.s32.totalorder %s272, 5
      %s276 = scalar_select %p275, %s272, 5
      %s277 = smul.addr %s276, 20
      %s278 = smul.addr %s274, 120
      %s279 = sadd.s32 %s277, %s278
      %s280 = smul.addr %s279, 4
      %s281 = scalar_lea.vmem %s0, %s280
      %s282 = smul.u32 %s23, 2
      %s283 = sadd.s32 %s282, %s24
      %p284 = scmp.lt.s32.totalorder %s22, 1
      %s285 = scalar_select %p284, %s22, 1
      %p286 = scmp.lt.s32.totalorder %s23, 1
      %s287 = scalar_select %p286, %s23, 1
      %s288 = smul.addr %s287, 2
      %s289 = smul.addr %s285, 4
      %s290 = sadd.s32 %s288, %s289
      %s291 = smul.addr %s290, 4
      %s292 = scalar_lea.vmem %s3, %s291
      %p293 = scmp.lt.s32.totalorder %s22, 1
      %s294 = scalar_select %p293, %s22, 1
      %s295 = scalar_lea.vmem %s4, %s294
      %p296 = scmp.lt.s32.totalorder %s22, 1
      %s297 = scalar_select %p296, %s22, 1
      %s298 = scalar_lea.vmem %s5, %s297
      %p300 = scmp.eq.s32.totalorder %s24, 0
      // Predicated region
      $region33: #{encoder_forward.6} parent=31 // pred_check
        %p301 = pneg %p300
      $region34: #{encoder_forward.6} parent=31 // pred_check_branch
        %303 = sbr.rel (%p301) target = $region36
      $region35: #{encoder_forward.6} parent=31 // pred_region
        %vm304 = vcmask 261120
        %305 = vst.msk [vmem:[#allocation2] sm:$0xff] %vm304, 0.0
        %306 = vst.msk [vmem:[#allocation2 + $0x8] sm:$0xff] %vm304, 0.0
      $region36: #{encoder_forward.6} parent=31 // pred_fallthru
        _
      %p307 = scmp.eq.s32.totalorder %s23, 0
      %p308 = pnand %p307, %p300
      %p309 = pneg %p308
      // Predicated region
      $region37: #{encoder_forward.6} parent=31 // pred_check
        _
      $region38: #{encoder_forward.6} parent=31 // pred_check_branch
        %311 = sbr.rel (%p308) target = $region40
      $region39: #{encoder_forward.6} parent=31 // pred_region
        %vm312 = vcmask 253952
        %313 = vst.msk [vmem:[%s295] sm:$0x1] %vm312, 0.0
        %314 = vst.msk [vmem:[%s298] sm:$0x1] %vm312, 0.0
      $region40: #{encoder_forward.6} parent=31 // pred_fallthru
        _
      %v315 = vld [vmem:[#allocation2] sm:$0xff]
      %v316 = vld [vmem:[#allocation2 + $0x8] sm:$0xff]
      %v317 = vld [vmem:[%s281] sm:$0x3]
      %v318 = vld [vmem:[%s281 + $0x8] sm:$0x3]
      %v319 = vld [vmem:[%s281 + $0x10] sm:$0x3]
      %v320 = vld [vmem:[%s281 + $0x18] sm:$0x3]
      %s321 = smul.u32 %s24, 16
      %s322 = smul.u32 %s321, 2
      %s323 = smul.addr %s322, 4
      %s324 = scalar_lea.vmem %s1, %s323
      %v325 = vld [vmem:[%s324] sm:$0xf]
      %v326 = vld [vmem:[%s324 + $0x4] sm:$0xf]
      %v331 = vcombine.low %v317, %v318
      %v332 = vcombine.low %v319, %v320
      %v334 = vunpack.c.l.s4 1983009808
      %v335 = vunpack.c.0.s8 %v334
      %v336 = vlaneseq
      %v337 = vshrl.u32 %v336, 7
      %v338 = vsub.s32 %v335, %v337
      %v339 = vrot.slane %v331, %v338
      %v341 = vunpack.c.l.s4 1983009808
      %v342 = vunpack.c.0.s8 %v341
      %v343 = vlaneseq
      %v344 = vshrl.u32 %v343, 7
      %v345 = vsub.s32 %v342, %v344
      %v346 = vrot.slane %v332, %v345
      %v347 = vcombine.low %v339, %v346
      %v350 = vunpack.c.l.b16 %v325
      %v351 = vunpack.c.l.b16 %v326
      %v352 = vpack.c.b16 %v351, %v350
      %vm354 = vcmask 130048
      %v356 = vsel %vm354, %v347, 0
      %358 = vmatprep.subr.bf16.mxu0 0
      %359 = vmatpush1.bf16.msra.mxu0 0
      %360 = vmatprep.subr.bf16.mxu0 0
      %361 = vmatpush1.bf16.msra.mxu0 0
      %362 = vmatprep.subr.bf16.mxu0 0
      %363 = vmatpush1.bf16.msra.mxu0 0
      %364 = vmatprep.subr.bf16.mxu0 0
      %365 = vmatpush1.bf16.msra.mxu0 0
      %366 = vmatprep.subr.bf16.mxu0 0
      %367 = vmatpush1.bf16.msra.mxu0 0
      %368 = vmatprep.subr.bf16.mxu0 0
      %369 = vmatpush1.bf16.msra.mxu0 0
      %370 = vmatprep.subr.bf16.mxu0 0
      %371 = vmatpush1.bf16.msra.mxu0 0
      %372 = vmatprep.subr.bf16.mxu0 0
      %373 = vmatpush1.bf16.msra.mxu0 %v352
      %374 = vmatprep.subr.bf16.mxu0 0
      %375 = vmatpush2.bf16.msra.mxu0 0
      %376 = vmatprep.subr.bf16.mxu0 0
      %377 = vmatpush2.bf16.msra.mxu0 0
      %378 = vmatprep.subr.bf16.mxu0 0
      %379 = vmatpush2.bf16.msra.mxu0 0
      %380 = vmatprep.subr.bf16.mxu0 0
      %381 = vmatpush2.bf16.msra.mxu0 0
      %382 = vmatprep.subr.bf16.mxu0 0
      %383 = vmatpush2.bf16.msra.mxu0 0
      %384 = vmatprep.subr.bf16.mxu0 0
      %385 = vmatpush2.bf16.msra.mxu0 0
      %386 = vmatprep.subr.bf16.mxu0 0
      %387 = vmatpush2.bf16.msra.mxu0 0
      %388 = vmatprep.subr.bf16.mxu0 0
      %389 = vmatpush2.bf16.msra.mxu0 0
      %390 = vmatprep.mubr.bf16.mxu0 0
      %391 = vmatmul.mubr.bf16.gmra.mxu0 %v356
      %v392 = vpop.f32.mrf.mxu0
      %v393 = vadd.f32 0.0, %v392
      %v394 = vpop.f32.mrf.mxu0
      %v395 = vpop.f32.mrf.mxu0
      %v396 = vadd.f32 0.0, %v395
      %v397 = vpop.f32.mrf.mxu0
      %398 = vdwg.mxu0
      %v399 = vadd.f32 %v315, %v393
      %v400 = vadd.f32 %v316, %v396
      %v401 = vld [vmem:[%s281] sm:$0xc]
      %v402 = vld [vmem:[%s281 + $0x4] sm:$0x1]
      %v403 = vld [vmem:[%s281 + $0x8] sm:$0xc]
      %v404 = vld [vmem:[%s281 + $0xc] sm:$0x1]
      %v405 = vld [vmem:[%s281 + $0x10] sm:$0xc]
      %v406 = vld [vmem:[%s281 + $0x14] sm:$0x1]
      %v407 = vld [vmem:[%s281 + $0x18] sm:$0xc]
      %v408 = vld [vmem:[%s281 + $0x1c] sm:$0x1]
      %v418 = vunpack.c.l.s4 1983009808
      %v419 = vunpack.c.0.s8 %v418
      %v420 = vlaneseq
      %v421 = vshrl.u32 %v420, 7
      %v422 = vsub.s32 %v419, %v421
      %v423 = vrot.slane %v401, %v422
      %v424 = vcombine.high %v423, %v423
      %v426 = vunpack.c.l.s4 1983009808
      %v427 = vunpack.c.0.s8 %v426
      %v428 = vlaneseq
      %v429 = vshrl.u32 %v428, 7
      %v430 = vsub.s32 %v427, %v429
      %v431 = vrot.slane %v402, %v430
      %v433 = vunpack.c.l.s4 1983009808
      %v434 = vunpack.c.0.s8 %v433
      %v435 = vlaneseq
      %v436 = vshrl.u32 %v435, 7
      %v437 = vsub.s32 %v434, %v436
      %v438 = vrot.slane %v403, %v437
      %v439 = vcombine.high %v438, %v438
      %v441 = vunpack.c.l.s4 1983009808
      %v442 = vunpack.c.0.s8 %v441
      %v443 = vlaneseq
      %v444 = vshrl.u32 %v443, 7
      %v445 = vsub.s32 %v442, %v444
      %v446 = vrot.slane %v404, %v445
      %v448 = vunpack.c.l.s4 1983009808
      %v449 = vunpack.c.0.s8 %v448
      %v450 = vlaneseq
      %v451 = vshrl.u32 %v450, 7
      %v452 = vsub.s32 %v449, %v451
      %v453 = vrot.slane %v405, %v452
      %v454 = vcombine.high %v453, %v453
      %v456 = vunpack.c.l.s4 1983009808
      %v457 = vunpack.c.0.s8 %v456
      %v458 = vlaneseq
      %v459 = vshrl.u32 %v458, 7
      %v460 = vsub.s32 %v457, %v459
      %v461 = vrot.slane %v406, %v460
      %v463 = vunpack.c.l.s4 1983009808
      %v464 = vunpack.c.0.s8 %v463
      %v465 = vlaneseq
      %v466 = vshrl.u32 %v465, 7
      %v467 = vsub.s32 %v464, %v466
      %v468 = vrot.slane %v407, %v467
      %v469 = vcombine.high %v468, %v468
      %v471 = vunpack.c.l.s4 1983009808
      %v472 = vunpack.c.0.s8 %v471
      %v473 = vlaneseq
      %v474 = vshrl.u32 %v473, 7
      %v475 = vsub.s32 %v472, %v474
      %v476 = vrot.slane %v408, %v475
      %vm477 = vsmask.f32 1280
      %vm478 = vsmask.f32 3336
      %vm479 = vmor %vm477, %vm478
      %vm480 = vsmask.f32 5392
      %vm481 = vmor %vm479, %vm480
      %vm482 = vsmask.f32 7448
      %vm483 = vmor %vm481, %vm482
      %v485 = vshrl.u32 %v424, 16
      %v487 = vrot.slane %v485, 6
      %v488 = vshll.u32 %v424, 16
      %v490 = vrot.slane %v488, 7
      %v491 = vor.u32 %v487, %v490
      %v492 = vrot.slane %v491, 2
      %v494 = vshll.u32 %v431, 16
      %v496 = vrot.slane %v494, 7
      %v497 = vsel %vm483, %v492, %v496
      %v499 = vshrl.u32 %v439, 16
      %v501 = vrot.slane %v499, 6
      %v502 = vshll.u32 %v439, 16
      %v504 = vrot.slane %v502, 7
      %v505 = vor.u32 %v501, %v504
      %v506 = vrot.slane %v505, 2
      %v508 = vshll.u32 %v446, 16
      %v510 = vrot.slane %v508, 7
      %v511 = vsel %vm483, %v506, %v510
      %v513 = vshrl.u32 %v454, 16
      %v515 = vrot.slane %v513, 6
      %v516 = vshll.u32 %v454, 16
      %v518 = vrot.slane %v516, 7
      %v519 = vor.u32 %v515, %v518
      %v520 = vrot.slane %v519, 2
      %v522 = vshll.u32 %v461, 16
      %v524 = vrot.slane %v522, 7
      %v525 = vsel %vm483, %v520, %v524
      %v527 = vshrl.u32 %v469, 16
      %v529 = vrot.slane %v527, 6
      %v530 = vshll.u32 %v469, 16
      %v532 = vrot.slane %v530, 7
      %v533 = vor.u32 %v529, %v532
      %v534 = vrot.slane %v533, 2
      %v536 = vshll.u32 %v476, 16
      %v538 = vrot.slane %v536, 7
      %v539 = vsel %vm483, %v534, %v538
      %s540 = sadd.s32 %s321, 1
      %s541 = smul.u32 %s540, 2
      %s542 = smul.addr %s541, 4
      %s543 = scalar_lea.vmem %s1, %s542
      %v544 = vld [vmem:[%s543] sm:$0xf]
      %v545 = vld [vmem:[%s543 + $0x4] sm:$0xf]
      %v546 = vcombine.low %v497, %v511
      %v547 = vcombine.low %v525, %v539
      %v549 = vunpack.c.l.s4 1983009808
      %v550 = vunpack.c.0.s8 %v549
      %v551 = vlaneseq
      %v552 = vshrl.u32 %v551, 7
      %v553 = vsub.s32 %v550, %v552
      %v554 = vrot.slane %v546, %v553
      %v556 = vunpack.c.l.s4 1983009808
      %v557 = vunpack.c.0.s8 %v556
      %v558 = vlaneseq
      %v559 = vshrl.u32 %v558, 7
      %v560 = vsub.s32 %v557, %v559
      %v561 = vrot.slane %v547, %v560
      %v562 = vcombine.low %v554, %v561
      %v565 = vunpack.c.l.b16 %v544
      %v566 = vunpack.c.l.b16 %v545
      %v567 = vpack.c.b16 %v566, %v565
      %v570 = vsel %vm354, %v562, 0
      %572 = vmatprep.subr.bf16.mxu0 0
      %573 = vmatpush1.bf16.msra.mxu0 0
      %574 = vmatprep.subr.bf16.mxu0 0
      %575 = vmatpush1.bf16.msra.mxu0 0
      %576 = vmatprep.subr.bf16.mxu0 0
      %577 = vmatpush1.bf16.msra.mxu0 0
      %578 = vmatprep.subr.bf16.mxu0 0
      %579 = vmatpush1.bf16.msra.mxu0 0
      %580 = vmatprep.subr.bf16.mxu0 0
      %581 = vmatpush1.bf16.msra.mxu0 0
      %582 = vmatprep.subr.bf16.mxu0 0
      %583 = vmatpush1.bf16.msra.mxu0 0
      %584 = vmatprep.subr.bf16.mxu0 0
      %585 = vmatpush1.bf16.msra.mxu0 0
      %586 = vmatprep.subr.bf16.mxu0 0
      %587 = vmatpush1.bf16.msra.mxu0 %v567
      %588 = vmatprep.subr.bf16.mxu0 0
      %589 = vmatpush2.bf16.msra.mxu0 0
      %590 = vmatprep.subr.bf16.mxu0 0
      %591 = vmatpush2.bf16.msra.mxu0 0
      %592 = vmatprep.subr.bf16.mxu0 0
      %593 = vmatpush2.bf16.msra.mxu0 0
      %594 = vmatprep.subr.bf16.mxu0 0
      %595 = vmatpush2.bf16.msra.mxu0 0
      %596 = vmatprep.subr.bf16.mxu0 0
      %597 = vmatpush2.bf16.msra.mxu0 0
      %598 = vmatprep.subr.bf16.mxu0 0
      %599 = vmatpush2.bf16.msra.mxu0 0
      %600 = vmatprep.subr.bf16.mxu0 0
      %601 = vmatpush2.bf16.msra.mxu0 0
      %602 = vmatprep.subr.bf16.mxu0 0
      %603 = vmatpush2.bf16.msra.mxu0 0
      %604 = vmatprep.mubr.bf16.mxu0 0
      %605 = vmatmul.mubr.bf16.gmra.mxu0 %v570
      %v606 = vpop.f32.mrf.mxu0
      %v607 = vadd.f32 0.0, %v606
      %v608 = vpop.f32.mrf.mxu0
      %v609 = vpop.f32.mrf.mxu0
      %v610 = vadd.f32 0.0, %v609
      %v611 = vpop.f32.mrf.mxu0
      %612 = vdwg.mxu0
      %v613 = vadd.f32 %v399, %v607
      %v614 = vadd.f32 %v400, %v610
      %v615 = vld [vmem:[%s281] sm:$0x7]
      %v616 = vld [vmem:[%s281 + $0x8] sm:$0x7]
      %v617 = vld [vmem:[%s281 + $0x10] sm:$0x7]
      %v618 = vld [vmem:[%s281 + $0x18] sm:$0x7]
      %v624 = vunpack.c.l.s4 1983009808
      %v625 = vunpack.c.0.s8 %v624
      %v626 = vlaneseq
      %v627 = vshrl.u32 %v626, 7
      %v628 = vsub.s32 %v625, %v627
      %v629 = vrot.slane %v615, %v628
      %v630 = vcombine.high %v629, %v629
      %v632 = vunpack.c.l.s4 1983009808
      %v633 = vunpack.c.0.s8 %v632
      %v634 = vlaneseq
      %v635 = vshrl.u32 %v634, 7
      %v636 = vsub.s32 %v633, %v635
      %v637 = vrot.slane %v616, %v636
      %v638 = vcombine.high %v637, %v637
      %v640 = vunpack.c.l.s4 1983009808
      %v641 = vunpack.c.0.s8 %v640
      %v642 = vlaneseq
      %v643 = vshrl.u32 %v642, 7
      %v644 = vsub.s32 %v641, %v643
      %v645 = vrot.slane %v617, %v644
      %v646 = vcombine.high %v645, %v645
      %v648 = vunpack.c.l.s4 1983009808
      %v649 = vunpack.c.0.s8 %v648
      %v650 = vlaneseq
      %v651 = vshrl.u32 %v650, 7
      %v652 = vsub.s32 %v649, %v651
      %v653 = vrot.slane %v618, %v652
      %v654 = vcombine.high %v653, %v653
      %v656 = vshrl.u32 %v629, 16
      %v658 = vrot.slane %v656, 6
      %v659 = vshll.u32 %v629, 16
      %v661 = vrot.slane %v659, 7
      %v662 = vor.u32 %v658, %v661
      %v663 = vrot.slane %v662, 2
      %v665 = vshll.u32 %v630, 16
      %v667 = vrot.slane %v665, 7
      %v668 = vsel %vm483, %v663, %v667
      %v670 = vshrl.u32 %v637, 16
      %v672 = vrot.slane %v670, 6
      %v673 = vshll.u32 %v637, 16
      %v675 = vrot.slane %v673, 7
      %v676 = vor.u32 %v672, %v675
      %v677 = vrot.slane %v676, 2
      %v679 = vshll.u32 %v638, 16
      %v681 = vrot.slane %v679, 7
      %v682 = vsel %vm483, %v677, %v681
      %v684 = vshrl.u32 %v645, 16
      %v686 = vrot.slane %v684, 6
      %v687 = vshll.u32 %v645, 16
      %v689 = vrot.slane %v687, 7
      %v690 = vor.u32 %v686, %v689
      %v691 = vrot.slane %v690, 2
      %v693 = vshll.u32 %v646, 16
      %v695 = vrot.slane %v693, 7
      %v696 = vsel %vm483, %v691, %v695
      %v698 = vshrl.u32 %v653, 16
      %v700 = vrot.slane %v698, 6
      %v701 = vshll.u32 %v653, 16
      %v703 = vrot.slane %v701, 7
      %v704 = vor.u32 %v700, %v703
      %v705 = vrot.slane %v704, 2
      %v707 = vshll.u32 %v654, 16
      %v709 = vrot.slane %v707, 7
      %v710 = vsel %vm483, %v705, %v709
      %s711 = sadd.s32 %s321, 2
      %s712 = smul.u32 %s711, 2
      %s713 = smul.addr %s712, 4
      %s714 = scalar_lea.vmem %s1, %s713
      %v715 = vld [vmem:[%s714] sm:$0xf]
      %v716 = vld [vmem:[%s714 + $0x4] sm:$0xf]
      %v717 = vcombine.low %v668, %v682
      %v718 = vcombine.low %v696, %v710
      %v720 = vunpack.c.l.s4 1983009808
      %v721 = vunpack.c.0.s8 %v720
      %v722 = vlaneseq
      %v723 = vshrl.u32 %v722, 7
      %v724 = vsub.s32 %v721, %v723
      %v725 = vrot.slane %v717, %v724
      %v727 = vunpack.c.l.s4 1983009808
      %v728 = vunpack.c.0.s8 %v727
      %v729 = vlaneseq
      %v730 = vshrl.u32 %v729, 7
      %v731 = vsub.s32 %v728, %v730
      %v732 = vrot.slane %v718, %v731
      %v733 = vcombine.low %v725, %v732
      %v736 = vunpack.c.l.b16 %v715
      %v737 = vunpack.c.l.b16 %v716
      %v738 = vpack.c.b16 %v737, %v736
      %v741 = vsel %vm354, %v733, 0
      %743 = vmatprep.subr.bf16.mxu0 0
      %744 = vmatpush1.bf16.msra.mxu0 0
      %745 = vmatprep.subr.bf16.mxu0 0
      %746 = vmatpush1.bf16.msra.mxu0 0
      %747 = vmatprep.subr.bf16.mxu0 0
      %748 = vmatpush1.bf16.msra.mxu0 0
      %749 = vmatprep.subr.bf16.mxu0 0
      %750 = vmatpush1.bf16.msra.mxu0 0
      %751 = vmatprep.subr.bf16.mxu0 0
      %752 = vmatpush1.bf16.msra.mxu0 0
      %753 = vmatprep.subr.bf16.mxu0 0
      %754 = vmatpush1.bf16.msra.mxu0 0
      %755 = vmatprep.subr.bf16.mxu0 0
      %756 = vmatpush1.bf16.msra.mxu0 0
      %757 = vmatprep.subr.bf16.mxu0 0
      %758 = vmatpush1.bf16.msra.mxu0 %v738
      %759 = vmatprep.subr.bf16.mxu0 0
      %760 = vmatpush2.bf16.msra.mxu0 0
      %761 = vmatprep.subr.bf16.mxu0 0
      %762 = vmatpush2.bf16.msra.mxu0 0
      %763 = vmatprep.subr.bf16.mxu0 0
      %764 = vmatpush2.bf16.msra.mxu0 0
      %765 = vmatprep.subr.bf16.mxu0 0
      %766 = vmatpush2.bf16.msra.mxu0 0
      %767 = vmatprep.subr.bf16.mxu0 0
      %768 = vmatpush2.bf16.msra.mxu0 0
      %769 = vmatprep.subr.bf16.mxu0 0
      %770 = vmatpush2.bf16.msra.mxu0 0
      %771 = vmatprep.subr.bf16.mxu0 0
      %772 = vmatpush2.bf16.msra.mxu0 0
      %773 = vmatprep.subr.bf16.mxu0 0
      %774 = vmatpush2.bf16.msra.mxu0 0
      %775 = vmatprep.mubr.bf16.mxu0 0
      %776 = vmatmul.mubr.bf16.gmra.mxu0 %v741
      %v777 = vpop.f32.mrf.mxu0
      %v778 = vadd.f32 0.0, %v777
      %v779 = vpop.f32.mrf.mxu0
      %v780 = vpop.f32.mrf.mxu0
      %v781 = vadd.f32 0.0, %v780
      %v782 = vpop.f32.mrf.mxu0
      %783 = vdwg.mxu0
      %v784 = vadd.f32 %v613, %v778
      %v785 = vadd.f32 %v614, %v781
      %v786 = vld [vmem:[%s281] sm:$0x8]
      %v787 = vld [vmem:[%s281 + $0x4] sm:$0x1]
      %v788 = vld [vmem:[%s281 + $0x8] sm:$0x8]
      %v789 = vld [vmem:[%s281 + $0xc] sm:$0x1]
      %v790 = vld [vmem:[%s281 + $0x10] sm:$0x8]
      %v791 = vld [vmem:[%s281 + $0x14] sm:$0x1]
      %v792 = vld [vmem:[%s281 + $0x18] sm:$0x8]
      %v793 = vld [vmem:[%s281 + $0x1c] sm:$0x1]
      %v803 = vunpack.c.l.s4 1983009808
      %v804 = vunpack.c.0.s8 %v803
      %v805 = vlaneseq
      %v806 = vshrl.u32 %v805, 7
      %v807 = vsub.s32 %v804, %v806
      %v808 = vrot.slane %v786, %v807
      %v809 = vcombine.high %v808, %v808
      %v811 = vunpack.c.l.s4 1983009808
      %v812 = vunpack.c.0.s8 %v811
      %v813 = vlaneseq
      %v814 = vshrl.u32 %v813, 7
      %v815 = vsub.s32 %v812, %v814
      %v816 = vrot.slane %v787, %v815
      %v818 = vunpack.c.l.s4 1983009808
      %v819 = vunpack.c.0.s8 %v818
      %v820 = vlaneseq
      %v821 = vshrl.u32 %v820, 7
      %v822 = vsub.s32 %v819, %v821
      %v823 = vrot.slane %v788, %v822
      %v824 = vcombine.high %v823, %v823
      %v826 = vunpack.c.l.s4 1983009808
      %v827 = vunpack.c.0.s8 %v826
      %v828 = vlaneseq
      %v829 = vshrl.u32 %v828, 7
      %v830 = vsub.s32 %v827, %v829
      %v831 = vrot.slane %v789, %v830
      %v833 = vunpack.c.l.s4 1983009808
      %v834 = vunpack.c.0.s8 %v833
      %v835 = vlaneseq
      %v836 = vshrl.u32 %v835, 7
      %v837 = vsub.s32 %v834, %v836
      %v838 = vrot.slane %v790, %v837
      %v839 = vcombine.high %v838, %v838
      %v841 = vunpack.c.l.s4 1983009808
      %v842 = vunpack.c.0.s8 %v841
      %v843 = vlaneseq
      %v844 = vshrl.u32 %v843, 7
      %v845 = vsub.s32 %v842, %v844
      %v846 = vrot.slane %v791, %v845
      %v848 = vunpack.c.l.s4 1983009808
      %v849 = vunpack.c.0.s8 %v848
      %v850 = vlaneseq
      %v851 = vshrl.u32 %v850, 7
      %v852 = vsub.s32 %v849, %v851
      %v853 = vrot.slane %v792, %v852
      %v854 = vcombine.high %v853, %v853
      %v856 = vunpack.c.l.s4 1983009808
      %v857 = vunpack.c.0.s8 %v856
      %v858 = vlaneseq
      %v859 = vshrl.u32 %v858, 7
      %v860 = vsub.s32 %v857, %v859
      %v861 = vrot.slane %v793, %v860
      %vm862 = vcmask 1040384
      %vm863 = vcmask 1042434
      %vm864 = vmor %vm862, %vm863
      %vm865 = vcmask 1044484
      %vm866 = vmor %vm864, %vm865
      %vm867 = vcmask 1046534
      %vm868 = vmor %vm866, %vm867
      %v869 = vrot.slane %v809, 7
      %v870 = vrot.slane %v869, 2
      %v871 = vrot.slane %v816, 7
      %v872 = vsel %vm868, %v870, %v871
      %v873 = vrot.slane %v824, 7
      %v874 = vrot.slane %v873, 2
      %v875 = vrot.slane %v831, 7
      %v876 = vsel %vm868, %v874, %v875
      %v877 = vrot.slane %v839, 7
      %v878 = vrot.slane %v877, 2
      %v879 = vrot.slane %v846, 7
      %v880 = vsel %vm868, %v878, %v879
      %v881 = vrot.slane %v854, 7
      %v882 = vrot.slane %v881, 2
      %v883 = vrot.slane %v861, 7
      %v884 = vsel %vm868, %v882, %v883
      %s885 = sadd.s32 %s321, 3
      %s886 = smul.u32 %s885, 2
      %s887 = smul.addr %s886, 4
      %s888 = scalar_lea.vmem %s1, %s887
      %v889 = vld [vmem:[%s888] sm:$0xf]
      %v890 = vld [vmem:[%s888 + $0x4] sm:$0xf]
      %v891 = vcombine.low %v872, %v876
      %v892 = vcombine.low %v880, %v884
      %v894 = vunpack.c.l.s4 1983009808
      %v895 = vunpack.c.0.s8 %v894
      %v896 = vlaneseq
      %v897 = vshrl.u32 %v896, 7
      %v898 = vsub.s32 %v895, %v897
      %v899 = vrot.slane %v891, %v898
      %v901 = vunpack.c.l.s4 1983009808
      %v902 = vunpack.c.0.s8 %v901
      %v903 = vlaneseq
      %v904 = vshrl.u32 %v903, 7
      %v905 = vsub.s32 %v902, %v904
      %v906 = vrot.slane %v892, %v905
      %v907 = vcombine.low %v899, %v906
      %v910 = vunpack.c.l.b16 %v889
      %v911 = vunpack.c.l.b16 %v890
      %v912 = vpack.c.b16 %v911, %v910
      %v915 = vsel %vm354, %v907, 0
      %917 = vmatprep.subr.bf16.mxu0 0
      %918 = vmatpush1.bf16.msra.mxu0 0
      %919 = vmatprep.subr.bf16.mxu0 0
      %920 = vmatpush1.bf16.msra.mxu0 0
      %921 = vmatprep.subr.bf16.mxu0 0
      %922 = vmatpush1.bf16.msra.mxu0 0
      %923 = vmatprep.subr.bf16.mxu0 0
      %924 = vmatpush1.bf16.msra.mxu0 0
      %925 = vmatprep.subr.bf16.mxu0 0
      %926 = vmatpush1.bf16.msra.mxu0 0
      %927 = vmatprep.subr.bf16.mxu0 0
      %928 = vmatpush1.bf16.msra.mxu0 0
      %929 = vmatprep.subr.bf16.mxu0 0
      %930 = vmatpush1.bf16.msra.mxu0 0
      %931 = vmatprep.subr.bf16.mxu0 0
      %932 = vmatpush1.bf16.msra.mxu0 %v912
      %933 = vmatprep.subr.bf16.mxu0 0
      %934 = vmatpush2.bf16.msra.mxu0 0
      %935 = vmatprep.subr.bf16.mxu0 0
      %936 = vmatpush2.bf16.msra.mxu0 0
      %937 = vmatprep.subr.bf16.mxu0 0
      %938 = vmatpush2.bf16.msra.mxu0 0
      %939 = vmatprep.subr.bf16.mxu0 0
      %940 = vmatpush2.bf16.msra.mxu0 0
      %941 = vmatprep.subr.bf16.mxu0 0
      %942 = vmatpush2.bf16.msra.mxu0 0
      %943 = vmatprep.subr.bf16.mxu0 0
      %944 = vmatpush2.bf16.msra.mxu0 0
      %945 = vmatprep.subr.bf16.mxu0 0
      %946 = vmatpush2.bf16.msra.mxu0 0
      %947 = vmatprep.subr.bf16.mxu0 0
      %948 = vmatpush2.bf16.msra.mxu0 0
      %949 = vmatprep.mubr.bf16.mxu0 0
      %950 = vmatmul.mubr.bf16.gmra.mxu0 %v915
      %v951 = vpop.f32.mrf.mxu0
      %v952 = vadd.f32 0.0, %v951
      %v953 = vpop.f32.mrf.mxu0
      %v954 = vpop.f32.mrf.mxu0
      %v955 = vadd.f32 0.0, %v954
      %v956 = vpop.f32.mrf.mxu0
      %957 = vdwg.mxu0
      %v958 = vadd.f32 %v784, %v952
      %v959 = vadd.f32 %v785, %v955
      %s960 = scalar_lea.vmem %s281, 40
      %v961 = vld [vmem:[%s960] sm:$0x3]
      %v962 = vld [vmem:[%s960 + $0x8] sm:$0x3]
      %v963 = vld [vmem:[%s960 + $0x10] sm:$0x3]
      %v964 = vld [vmem:[%s960 + $0x18] sm:$0x3]
      %s965 = sadd.s32 %s321, 4
      %s966 = smul.u32 %s965, 2
      %s967 = smul.addr %s966, 4
      %s968 = scalar_lea.vmem %s1, %s967
      %v969 = vld [vmem:[%s968] sm:$0xf]
      %v970 = vld [vmem:[%s968 + $0x4] sm:$0xf]
      %v975 = vcombine.low %v961, %v962
      %v976 = vcombine.low %v963, %v964
      %v978 = vunpack.c.l.s4 1983009808
      %v979 = vunpack.c.0.s8 %v978
      %v980 = vlaneseq
      %v981 = vshrl.u32 %v980, 7
      %v982 = vsub.s32 %v979, %v981
      %v983 = vrot.slane %v975, %v982
      %v985 = vunpack.c.l.s4 1983009808
      %v986 = vunpack.c.0.s8 %v985
      %v987 = vlaneseq
      %v988 = vshrl.u32 %v987, 7
      %v989 = vsub.s32 %v986, %v988
      %v990 = vrot.slane %v976, %v989
      %v991 = vcombine.low %v983, %v990
      %v994 = vunpack.c.l.b16 %v969
      %v995 = vunpack.c.l.b16 %v970
      %v996 = vpack.c.b16 %v995, %v994
      %v999 = vsel %vm354, %v991, 0
      %1001 = vmatprep.subr.bf16.mxu0 0
      %1002 = vmatpush1.bf16.msra.mxu0 0
      %1003 = vmatprep.subr.bf16.mxu0 0
      %1004 = vmatpush1.bf16.msra.mxu0 0
      %1005 = vmatprep.subr.bf16.mxu0 0
      %1006 = vmatpush1.bf16.msra.mxu0 0
      %1007 = vmatprep.subr.bf16.mxu0 0
      %1008 = vmatpush1.bf16.msra.mxu0 0
      %1009 = vmatprep.subr.bf16.mxu0 0
      %1010 = vmatpush1.bf16.msra.mxu0 0
      %1011 = vmatprep.subr.bf16.mxu0 0
      %1012 = vmatpush1.bf16.msra.mxu0 0
      %1013 = vmatprep.subr.bf16.mxu0 0
      %1014 = vmatpush1.bf16.msra.mxu0 0
      %1015 = vmatprep.subr.bf16.mxu0 0
      %1016 = vmatpush1.bf16.msra.mxu0 %v996
      %1017 = vmatprep.subr.bf16.mxu0 0
      %1018 = vmatpush2.bf16.msra.mxu0 0
      %1019 = vmatprep.subr.bf16.mxu0 0
      %1020 = vmatpush2.bf16.msra.mxu0 0
      %1021 = vmatprep.subr.bf16.mxu0 0
      %1022 = vmatpush2.bf16.msra.mxu0 0
      %1023 = vmatprep.subr.bf16.mxu0 0
      %1024 = vmatpush2.bf16.msra.mxu0 0
      %1025 = vmatprep.subr.bf16.mxu0 0
      %1026 = vmatpush2.bf16.msra.mxu0 0
      %1027 = vmatprep.subr.bf16.mxu0 0
      %1028 = vmatpush2.bf16.msra.mxu0 0
      %1029 = vmatprep.subr.bf16.mxu0 0
      %1030 = vmatpush2.bf16.msra.mxu0 0
      %1031 = vmatprep.subr.bf16.mxu0 0
      %1032 = vmatpush2.bf16.msra.mxu0 0
      %1033 = vmatprep.mubr.bf16.mxu0 0
      %1034 = vmatmul.mubr.bf16.gmra.mxu0 %v999
      %v1035 = vpop.f32.mrf.mxu0
      %v1036 = vadd.f32 0.0, %v1035
      %v1037 = vpop.f32.mrf.mxu0
      %v1038 = vpop.f32.mrf.mxu0
      %v1039 = vadd.f32 0.0, %v1038
      %v1040 = vpop.f32.mrf.mxu0
      %1041 = vdwg.mxu0
      %v1042 = vadd.f32 %v958, %v1036
      %v1043 = vadd.f32 %v959, %v1039
      %v1044 = vld [vmem:[%s960] sm:$0xc]
      %v1045 = vld [vmem:[%s960 + $0x4] sm:$0x1]
      %v1046 = vld [vmem:[%s960 + $0x8] sm:$0xc]
      %v1047 = vld [vmem:[%s960 + $0xc] sm:$0x1]
      %v1048 = vld [vmem:[%s960 + $0x10] sm:$0xc]
      %v1049 = vld [vmem:[%s960 + $0x14] sm:$0x1]
      %v1050 = vld [vmem:[%s960 + $0x18] sm:$0xc]
      %v1051 = vld [vmem:[%s960 + $0x1c] sm:$0x1]
      %v1061 = vunpack.c.l.s4 1983009808
      %v1062 = vunpack.c.0.s8 %v1061
      %v1063 = vlaneseq
      %v1064 = vshrl.u32 %v1063, 7
      %v1065 = vsub.s32 %v1062, %v1064
      %v1066 = vrot.slane %v1044, %v1065
      %v1067 = vcombine.high %v1066, %v1066
      %v1069 = vunpack.c.l.s4 1983009808
      %v1070 = vunpack.c.0.s8 %v1069
      %v1071 = vlaneseq
      %v1072 = vshrl.u32 %v1071, 7
      %v1073 = vsub.s32 %v1070, %v1072
      %v1074 = vrot.slane %v1045, %v1073
      %v1076 = vunpack.c.l.s4 1983009808
      %v1077 = vunpack.c.0.s8 %v1076
      %v1078 = vlaneseq
      %v1079 = vshrl.u32 %v1078, 7
      %v1080 = vsub.s32 %v1077, %v1079
      %v1081 = vrot.slane %v1046, %v1080
      %v1082 = vcombine.high %v1081, %v1081
      %v1084 = vunpack.c.l.s4 1983009808
      %v1085 = vunpack.c.0.s8 %v1084
      %v1086 = vlaneseq
      %v1087 = vshrl.u32 %v1086, 7
      %v1088 = vsub.s32 %v1085, %v1087
      %v1089 = vrot.slane %v1047, %v1088
      %v1091 = vunpack.c.l.s4 1983009808
      %v1092 = vunpack.c.0.s8 %v1091
      %v1093 = vlaneseq
      %v1094 = vshrl.u32 %v1093, 7
      %v1095 = vsub.s32 %v1092, %v1094
      %v1096 = vrot.slane %v1048, %v1095
      %v1097 = vcombine.high %v1096, %v1096
      %v1099 = vunpack.c.l.s4 1983009808
      %v1100 = vunpack.c.0.s8 %v1099
      %v1101 = vlaneseq
      %v1102 = vshrl.u32 %v1101, 7
      %v1103 = vsub.s32 %v1100, %v1102
      %v1104 = vrot.slane %v1049, %v1103
      %v1106 = vunpack.c.l.s4 1983009808
      %v1107 = vunpack.c.0.s8 %v1106
      %v1108 = vlaneseq
      %v1109 = vshrl.u32 %v1108, 7
      %v1110 = vsub.s32 %v1107, %v1109
      %v1111 = vrot.slane %v1050, %v1110
      %v1112 = vcombine.high %v1111, %v1111
      %v1114 = vunpack.c.l.s4 1983009808
      %v1115 = vunpack.c.0.s8 %v1114
      %v1116 = vlaneseq
      %v1117 = vshrl.u32 %v1116, 7
      %v1118 = vsub.s32 %v1115, %v1117
      %v1119 = vrot.slane %v1051, %v1118
      %v1121 = vshrl.u32 %v1067, 16
      %v1123 = vrot.slane %v1121, 6
      %v1124 = vshll.u32 %v1067, 16
      %v1126 = vrot.slane %v1124, 7
      %v1127 = vor.u32 %v1123, %v1126
      %v1128 = vrot.slane %v1127, 2
      %v1130 = vshll.u32 %v1074, 16
      %v1132 = vrot.slane %v1130, 7
      %v1133 = vsel %vm483, %v1128, %v1132
      %v1135 = vshrl.u32 %v1082, 16
      %v1137 = vrot.slane %v1135, 6
      %v1138 = vshll.u32 %v1082, 16
      %v1140 = vrot.slane %v1138, 7
      %v1141 = vor.u32 %v1137, %v1140
      %v1142 = vrot.slane %v1141, 2
      %v1144 = vshll.u32 %v1089, 16
      %v1146 = vrot.slane %v1144, 7
      %v1147 = vsel %vm483, %v1142, %v1146
      %v1149 = vshrl.u32 %v1097, 16
      %v1151 = vrot.slane %v1149, 6
      %v1152 = vshll.u32 %v1097, 16
      %v1154 = vrot.slane %v1152, 7
      %v1155 = vor.u32 %v1151, %v1154
      %v1156 = vrot.slane %v1155, 2
      %v1158 = vshll.u32 %v1104, 16
      %v1160 = vrot.slane %v1158, 7
      %v1161 = vsel %vm483, %v1156, %v1160
      %v1163 = vshrl.u32 %v1112, 16
      %v1165 = vrot.slane %v1163, 6
      %v1166 = vshll.u32 %v1112, 16
      %v1168 = vrot.slane %v1166, 7
      %v1169 = vor.u32 %v1165, %v1168
      %v1170 = vrot.slane %v1169, 2
      %v1172 = vshll.u32 %v1119, 16
      %v1174 = vrot.slane %v1172, 7
      %v1175 = vsel %vm483, %v1170, %v1174
      %s1176 = sadd.s32 %s321, 5
      %s1177 = smul.u32 %s1176, 2
      %s1178 = smul.addr %s1177, 4
      %s1179 = scalar_lea.vmem %s1, %s1178
      %v1180 = vld [vmem:[%s1179] sm:$0xf]
      %v1181 = vld [vmem:[%s1179 + $0x4] sm:$0xf]
      %v1182 = vcombine.low %v1133, %v1147
      %v1183 = vcombine.low %v1161, %v1175
      %v1185 = vunpack.c.l.s4 1983009808
      %v1186 = vunpack.c.0.s8 %v1185
      %v1187 = vlaneseq
      %v1188 = vshrl.u32 %v1187, 7
      %v1189 = vsub.s32 %v1186, %v1188
      %v1190 = vrot.slane %v1182, %v1189
      %v1192 = vunpack.c.l.s4 1983009808
      %v1193 = vunpack.c.0.s8 %v1192
      %v1194 = vlaneseq
      %v1195 = vshrl.u32 %v1194, 7
      %v1196 = vsub.s32 %v1193, %v1195
      %v1197 = vrot.slane %v1183, %v1196
      %v1198 = vcombine.low %v1190, %v1197
      %v1201 = vunpack.c.l.b16 %v1180
      %v1202 = vunpack.c.l.b16 %v1181
      %v1203 = vpack.c.b16 %v1202, %v1201
      %v1206 = vsel %vm354, %v1198, 0
      %1208 = vmatprep.subr.bf16.mxu0 0
      %1209 = vmatpush1.bf16.msra.mxu0 0
      %1210 = vmatprep.subr.bf16.mxu0 0
      %1211 = vmatpush1.bf16.msra.mxu0 0
      %1212 = vmatprep.subr.bf16.mxu0 0
      %1213 = vmatpush1.bf16.msra.mxu0 0
      %1214 = vmatprep.subr.bf16.mxu0 0
      %1215 = vmatpush1.bf16.msra.mxu0 0
      %1216 = vmatprep.subr.bf16.mxu0 0
      %1217 = vmatpush1.bf16.msra.mxu0 0
      %1218 = vmatprep.subr.bf16.mxu0 0
      %1219 = vmatpush1.bf16.msra.mxu0 0
      %1220 = vmatprep.subr.bf16.mxu0 0
      %1221 = vmatpush1.bf16.msra.mxu0 0
      %1222 = vmatprep.subr.bf16.mxu0 0
      %1223 = vmatpush1.bf16.msra.mxu0 %v1203
      %1224 = vmatprep.subr.bf16.mxu0 0
      %1225 = vmatpush2.bf16.msra.mxu0 0
      %1226 = vmatprep.subr.bf16.mxu0 0
      %1227 = vmatpush2.bf16.msra.mxu0 0
      %1228 = vmatprep.subr.bf16.mxu0 0
      %1229 = vmatpush2.bf16.msra.mxu0 0
      %1230 = vmatprep.subr.bf16.mxu0 0
      %1231 = vmatpush2.bf16.msra.mxu0 0
      %1232 = vmatprep.subr.bf16.mxu0 0
      %1233 = vmatpush2.bf16.msra.mxu0 0
      %1234 = vmatprep.subr.bf16.mxu0 0
      %1235 = vmatpush2.bf16.msra.mxu0 0
      %1236 = vmatprep.subr.bf16.mxu0 0
      %1237 = vmatpush2.bf16.msra.mxu0 0
      %1238 = vmatprep.subr.bf16.mxu0 0
      %1239 = vmatpush2.bf16.msra.mxu0 0
      %1240 = vmatprep.mubr.bf16.mxu0 0
      %1241 = vmatmul.mubr.bf16.gmra.mxu0 %v1206
      %v1242 = vpop.f32.mrf.mxu0
      %v1243 = vadd.f32 0.0, %v1242
      %v1244 = vpop.f32.mrf.mxu0
      %v1245 = vpop.f32.mrf.mxu0
      %v1246 = vadd.f32 0.0, %v1245
      %v1247 = vpop.f32.mrf.mxu0
      %1248 = vdwg.mxu0
      %v1249 = vadd.f32 %v1042, %v1243
      %v1250 = vadd.f32 %v1043, %v1246
      %v1251 = vld [vmem:[%s960] sm:$0x7]
      %v1252 = vld [vmem:[%s960 + $0x8] sm:$0x7]
      %v1253 = vld [vmem:[%s960 + $0x10] sm:$0x7]
      %v1254 = vld [vmem:[%s960 + $0x18] sm:$0x7]
      %v1260 = vunpack.c.l.s4 1983009808
      %v1261 = vunpack.c.0.s8 %v1260
      %v1262 = vlaneseq
      %v1263 = vshrl.u32 %v1262, 7
      %v1264 = vsub.s32 %v1261, %v1263
      %v1265 = vrot.slane %v1251, %v1264
      %v1266 = vcombine.high %v1265, %v1265
      %v1268 = vunpack.c.l.s4 1983009808
      %v1269 = vunpack.c.0.s8 %v1268
      %v1270 = vlaneseq
      %v1271 = vshrl.u32 %v1270, 7
      %v1272 = vsub.s32 %v1269, %v1271
      %v1273 = vrot.slane %v1252, %v1272
      %v1274 = vcombine.high %v1273, %v1273
      %v1276 = vunpack.c.l.s4 1983009808
      %v1277 = vunpack.c.0.s8 %v1276
      %v1278 = vlaneseq
      %v1279 = vshrl.u32 %v1278, 7
      %v1280 = vsub.s32 %v1277, %v1279
      %v1281 = vrot.slane %v1253, %v1280
      %v1282 = vcombine.high %v1281, %v1281
      %v1284 = vunpack.c.l.s4 1983009808
      %v1285 = vunpack.c.0.s8 %v1284
      %v1286 = vlaneseq
      %v1287 = vshrl.u32 %v1286, 7
      %v1288 = vsub.s32 %v1285, %v1287
      %v1289 = vrot.slane %v1254, %v1288
      %v1290 = vcombine.high %v1289, %v1289
      %v1292 = vshrl.u32 %v1265, 16
      %v1294 = vrot.slane %v1292, 6
      %v1295 = vshll.u32 %v1265, 16
      %v1297 = vrot.slane %v1295, 7
      %v1298 = vor.u32 %v1294, %v1297
      %v1299 = vrot.slane %v1298, 2
      %v1301 = vshll.u32 %v1266, 16
      %v1303 = vrot.slane %v1301, 7
      %v1304 = vsel %vm483, %v1299, %v1303
      %v1306 = vshrl.u32 %v1273, 16
      %v1308 = vrot.slane %v1306, 6
      %v1309 = vshll.u32 %v1273, 16
      %v1311 = vrot.slane %v1309, 7
      %v1312 = vor.u32 %v1308, %v1311
      %v1313 = vrot.slane %v1312, 2
      %v1315 = vshll.u32 %v1274, 16
      %v1317 = vrot.slane %v1315, 7
      %v1318 = vsel %vm483, %v1313, %v1317
      %v1320 = vshrl.u32 %v1281, 16
      %v1322 = vrot.slane %v1320, 6
      %v1323 = vshll.u32 %v1281, 16
      %v1325 = vrot.slane %v1323, 7
      %v1326 = vor.u32 %v1322, %v1325
      %v1327 = vrot.slane %v1326, 2
      %v1329 = vshll.u32 %v1282, 16
      %v1331 = vrot.slane %v1329, 7
      %v1332 = vsel %vm483, %v1327, %v1331
      %v1334 = vshrl.u32 %v1289, 16
      %v1336 = vrot.slane %v1334, 6
      %v1337 = vshll.u32 %v1289, 16
      %v1339 = vrot.slane %v1337, 7
      %v1340 = vor.u32 %v1336, %v1339
      %v1341 = vrot.slane %v1340, 2
      %v1343 = vshll.u32 %v1290, 16
      %v1345 = vrot.slane %v1343, 7
      %v1346 = vsel %vm483, %v1341, %v1345
      %s1347 = sadd.s32 %s321, 6
      %s1348 = smul.u32 %s1347, 2
      %s1349 = smul.addr %s1348, 4
      %s1350 = scalar_lea.vmem %s1, %s1349
      %v1351 = vld [vmem:[%s1350] sm:$0xf]
      %v1352 = vld [vmem:[%s1350 + $0x4] sm:$0xf]
      %v1353 = vcombine.low %v1304, %v1318
      %v1354 = vcombine.low %v1332, %v1346
      %v1356 = vunpack.c.l.s4 1983009808
      %v1357 = vunpack.c.0.s8 %v1356
      %v1358 = vlaneseq
      %v1359 = vshrl.u32 %v1358, 7
      %v1360 = vsub.s32 %v1357, %v1359
      %v1361 = vrot.slane %v1353, %v1360
      %v1363 = vunpack.c.l.s4 1983009808
      %v1364 = vunpack.c.0.s8 %v1363
      %v1365 = vlaneseq
      %v1366 = vshrl.u32 %v1365, 7
      %v1367 = vsub.s32 %v1364, %v1366
      %v1368 = vrot.slane %v1354, %v1367
      %v1369 = vcombine.low %v1361, %v1368
      %v1372 = vunpack.c.l.b16 %v1351
      %v1373 = vunpack.c.l.b16 %v1352
      %v1374 = vpack.c.b16 %v1373, %v1372
      %v1377 = vsel %vm354, %v1369, 0
      %1379 = vmatprep.subr.bf16.mxu0 0
      %1380 = vmatpush1.bf16.msra.mxu0 0
      %1381 = vmatprep.subr.bf16.mxu0 0
      %1382 = vmatpush1.bf16.msra.mxu0 0
      %1383 = vmatprep.subr.bf16.mxu0 0
      %1384 = vmatpush1.bf16.msra.mxu0 0
      %1385 = vmatprep.subr.bf16.mxu0 0
      %1386 = vmatpush1.bf16.msra.mxu0 0
      %1387 = vmatprep.subr.bf16.mxu0 0
      %1388 = vmatpush1.bf16.msra.mxu0 0
      %1389 = vmatprep.subr.bf16.mxu0 0
      %1390 = vmatpush1.bf16.msra.mxu0 0
      %1391 = vmatprep.subr.bf16.mxu0 0
      %1392 = vmatpush1.bf16.msra.mxu0 0
      %1393 = vmatprep.subr.bf16.mxu0 0
      %1394 = vmatpush1.bf16.msra.mxu0 %v1374
      %1395 = vmatprep.subr.bf16.mxu0 0
      %1396 = vmatpush2.bf16.msra.mxu0 0
      %1397 = vmatprep.subr.bf16.mxu0 0
      %1398 = vmatpush2.bf16.msra.mxu0 0
      %1399 = vmatprep.subr.bf16.mxu0 0
      %1400 = vmatpush2.bf16.msra.mxu0 0
      %1401 = vmatprep.subr.bf16.mxu0 0
      %1402 = vmatpush2.bf16.msra.mxu0 0
      %1403 = vmatprep.subr.bf16.mxu0 0
      %1404 = vmatpush2.bf16.msra.mxu0 0
      %1405 = vmatprep.subr.bf16.mxu0 0
      %1406 = vmatpush2.bf16.msra.mxu0 0
      %1407 = vmatprep.subr.bf16.mxu0 0
      %1408 = vmatpush2.bf16.msra.mxu0 0
      %1409 = vmatprep.subr.bf16.mxu0 0
      %1410 = vmatpush2.bf16.msra.mxu0 0
      %1411 = vmatprep.mubr.bf16.mxu0 0
      %1412 = vmatmul.mubr.bf16.gmra.mxu0 %v1377
      %v1413 = vpop.f32.mrf.mxu0
      %v1414 = vadd.f32 0.0, %v1413
      %v1415 = vpop.f32.mrf.mxu0
      %v1416 = vpop.f32.mrf.mxu0
      %v1417 = vadd.f32 0.0, %v1416
      %v1418 = vpop.f32.mrf.mxu0
      %1419 = vdwg.mxu0
      %v1420 = vadd.f32 %v1249, %v1414
      %v1421 = vadd.f32 %v1250, %v1417
      %v1422 = vld [vmem:[%s960] sm:$0x8]
      %v1423 = vld [vmem:[%s960 + $0x4] sm:$0x1]
      %v1424 = vld [vmem:[%s960 + $0x8] sm:$0x8]
      %v1425 = vld [vmem:[%s960 + $0xc] sm:$0x1]
      %v1426 = vld [vmem:[%s960 + $0x10] sm:$0x8]
      %v1427 = vld [vmem:[%s960 + $0x14] sm:$0x1]
      %v1428 = vld [vmem:[%s960 + $0x18] sm:$0x8]
      %v1429 = vld [vmem:[%s960 + $0x1c] sm:$0x1]
      %v1439 = vunpack.c.l.s4 1983009808
      %v1440 = vunpack.c.0.s8 %v1439
      %v1441 = vlaneseq
      %v1442 = vshrl.u32 %v1441, 7
      %v1443 = vsub.s32 %v1440, %v1442
      %v1444 = vrot.slane %v1422, %v1443
      %v1445 = vcombine.high %v1444, %v1444
      %v1447 = vunpack.c.l.s4 1983009808
      %v1448 = vunpack.c.0.s8 %v1447
      %v1449 = vlaneseq
      %v1450 = vshrl.u32 %v1449, 7
      %v1451 = vsub.s32 %v1448, %v1450
      %v1452 = vrot.slane %v1423, %v1451
      %v1454 = vunpack.c.l.s4 1983009808
      %v1455 = vunpack.c.0.s8 %v1454
      %v1456 = vlaneseq
      %v1457 = vshrl.u32 %v1456, 7
      %v1458 = vsub.s32 %v1455, %v1457
      %v1459 = vrot.slane %v1424, %v1458
      %v1460 = vcombine.high %v1459, %v1459
      %v1462 = vunpack.c.l.s4 1983009808
      %v1463 = vunpack.c.0.s8 %v1462
      %v1464 = vlaneseq
      %v1465 = vshrl.u32 %v1464, 7
      %v1466 = vsub.s32 %v1463, %v1465
      %v1467 = vrot.slane %v1425, %v1466
      %v1469 = vunpack.c.l.s4 1983009808
      %v1470 = vunpack.c.0.s8 %v1469
      %v1471 = vlaneseq
      %v1472 = vshrl.u32 %v1471, 7
      %v1473 = vsub.s32 %v1470, %v1472
      %v1474 = vrot.slane %v1426, %v1473
      %v1475 = vcombine.high %v1474, %v1474
      %v1477 = vunpack.c.l.s4 1983009808
      %v1478 = vunpack.c.0.s8 %v1477
      %v1479 = vlaneseq
      %v1480 = vshrl.u32 %v1479, 7
      %v1481 = vsub.s32 %v1478, %v1480
      %v1482 = vrot.slane %v1427, %v1481
      %v1484 = vunpack.c.l.s4 1983009808
      %v1485 = vunpack.c.0.s8 %v1484
      %v1486 = vlaneseq
      %v1487 = vshrl.u32 %v1486, 7
      %v1488 = vsub.s32 %v1485, %v1487
      %v1489 = vrot.slane %v1428, %v1488
      %v1490 = vcombine.high %v1489, %v1489
      %v1492 = vunpack.c.l.s4 1983009808
      %v1493 = vunpack.c.0.s8 %v1492
      %v1494 = vlaneseq
      %v1495 = vshrl.u32 %v1494, 7
      %v1496 = vsub.s32 %v1493, %v1495
      %v1497 = vrot.slane %v1429, %v1496
      %v1498 = vrot.slane %v1445, 7
      %v1499 = vrot.slane %v1498, 2
      %v1500 = vrot.slane %v1452, 7
      %v1501 = vsel %vm868, %v1499, %v1500
      %v1502 = vrot.slane %v1460, 7
      %v1503 = vrot.slane %v1502, 2
      %v1504 = vrot.slane %v1467, 7
      %v1505 = vsel %vm868, %v1503, %v1504
      %v1506 = vrot.slane %v1475, 7
      %v1507 = vrot.slane %v1506, 2
      %v1508 = vrot.slane %v1482, 7
      %v1509 = vsel %vm868, %v1507, %v1508
      %v1510 = vrot.slane %v1490, 7
      %v1511 = vrot.slane %v1510, 2
      %v1512 = vrot.slane %v1497, 7
      %v1513 = vsel %vm868, %v1511, %v1512
      %s1514 = sadd.s32 %s321, 7
      %s1515 = smul.u32 %s1514, 2
      %s1516 = smul.addr %s1515, 4
      %s1517 = scalar_lea.vmem %s1, %s1516
      %v1518 = vld [vmem:[%s1517] sm:$0xf]
      %v1519 = vld [vmem:[%s1517 + $0x4] sm:$0xf]
      %v1520 = vcombine.low %v1501, %v1505
      %v1521 = vcombine.low %v1509, %v1513
      %v1523 = vunpack.c.l.s4 1983009808
      %v1524 = vunpack.c.0.s8 %v1523
      %v1525 = vlaneseq
      %v1526 = vshrl.u32 %v1525, 7
      %v1527 = vsub.s32 %v1524, %v1526
      %v1528 = vrot.slane %v1520, %v1527
      %v1530 = vunpack.c.l.s4 1983009808
      %v1531 = vunpack.c.0.s8 %v1530
      %v1532 = vlaneseq
      %v1533 = vshrl.u32 %v1532, 7
      %v1534 = vsub.s32 %v1531, %v1533
      %v1535 = vrot.slane %v1521, %v1534
      %v1536 = vcombine.low %v1528, %v1535
      %v1539 = vunpack.c.l.b16 %v1518
      %v1540 = vunpack.c.l.b16 %v1519
      %v1541 = vpack.c.b16 %v1540, %v1539
      %v1544 = vsel %vm354, %v1536, 0
      %1546 = vmatprep.subr.bf16.mxu0 0
      %1547 = vmatpush1.bf16.msra.mxu0 0
      %1548 = vmatprep.subr.bf16.mxu0 0
      %1549 = vmatpush1.bf16.msra.mxu0 0
      %1550 = vmatprep.subr.bf16.mxu0 0
      %1551 = vmatpush1.bf16.msra.mxu0 0
      %1552 = vmatprep.subr.bf16.mxu0 0
      %1553 = vmatpush1.bf16.msra.mxu0 0
      %1554 = vmatprep.subr.bf16.mxu0 0
      %1555 = vmatpush1.bf16.msra.mxu0 0
      %1556 = vmatprep.subr.bf16.mxu0 0
      %1557 = vmatpush1.bf16.msra.mxu0 0
      %1558 = vmatprep.subr.bf16.mxu0 0
      %1559 = vmatpush1.bf16.msra.mxu0 0
      %1560 = vmatprep.subr.bf16.mxu0 0
      %1561 = vmatpush1.bf16.msra.mxu0 %v1541
      %1562 = vmatprep.subr.bf16.mxu0 0
      %1563 = vmatpush2.bf16.msra.mxu0 0
      %1564 = vmatprep.subr.bf16.mxu0 0
      %1565 = vmatpush2.bf16.msra.mxu0 0
      %1566 = vmatprep.subr.bf16.mxu0 0
      %1567 = vmatpush2.bf16.msra.mxu0 0
      %1568 = vmatprep.subr.bf16.mxu0 0
      %1569 = vmatpush2.bf16.msra.mxu0 0
      %1570 = vmatprep.subr.bf16.mxu0 0
      %1571 = vmatpush2.bf16.msra.mxu0 0
      %1572 = vmatprep.subr.bf16.mxu0 0
      %1573 = vmatpush2.bf16.msra.mxu0 0
      %1574 = vmatprep.subr.bf16.mxu0 0
      %1575 = vmatpush2.bf16.msra.mxu0 0
      %1576 = vmatprep.subr.bf16.mxu0 0
      %1577 = vmatpush2.bf16.msra.mxu0 0
      %1578 = vmatprep.mubr.bf16.mxu0 0
      %1579 = vmatmul.mubr.bf16.gmra.mxu0 %v1544
      %v1580 = vpop.f32.mrf.mxu0
      %v1581 = vadd.f32 0.0, %v1580
      %v1582 = vpop.f32.mrf.mxu0
      %v1583 = vpop.f32.mrf.mxu0
      %v1584 = vadd.f32 0.0, %v1583
      %v1585 = vpop.f32.mrf.mxu0
      %1586 = vdwg.mxu0
      %v1587 = vadd.f32 %v1420, %v1581
      %v1588 = vadd.f32 %v1421, %v1584
      %s1589 = scalar_lea.vmem %s281, 8
      %v1590 = vld [vmem:[%s1589] sm:$0x3]
      %v1591 = vld [vmem:[%s1589 + $0x8] sm:$0x3]
      %v1592 = vld [vmem:[%s1589 + $0x10] sm:$0x3]
      %v1593 = vld [vmem:[%s1589 + $0x18] sm:$0x3]
      %s1594 = sadd.s32 %s321, 8
      %s1595 = smul.u32 %s1594, 2
      %s1596 = smul.addr %s1595, 4
      %s1597 = scalar_lea.vmem %s1, %s1596
      %v1598 = vld [vmem:[%s1597] sm:$0xf]
      %v1599 = vld [vmem:[%s1597 + $0x4] sm:$0xf]
      %v1604 = vcombine.low %v1590, %v1591
      %v1605 = vcombine.low %v1592, %v1593
      %v1607 = vunpack.c.l.s4 1983009808
      %v1608 = vunpack.c.0.s8 %v1607
      %v1609 = vlaneseq
      %v1610 = vshrl.u32 %v1609, 7
      %v1611 = vsub.s32 %v1608, %v1610
      %v1612 = vrot.slane %v1604, %v1611
      %v1614 = vunpack.c.l.s4 1983009808
      %v1615 = vunpack.c.0.s8 %v1614
      %v1616 = vlaneseq
      %v1617 = vshrl.u32 %v1616, 7
      %v1618 = vsub.s32 %v1615, %v1617
      %v1619 = vrot.slane %v1605, %v1618
      %v1620 = vcombine.low %v1612, %v1619
      %v1623 = vunpack.c.l.b16 %v1598
      %v1624 = vunpack.c.l.b16 %v1599
      %v1625 = vpack.c.b16 %v1624, %v1623
      %v1628 = vsel %vm354, %v1620, 0
      %1630 = vmatprep.subr.bf16.mxu0 0
      %1631 = vmatpush1.bf16.msra.mxu0 0
      %1632 = vmatprep.subr.bf16.mxu0 0
      %1633 = vmatpush1.bf16.msra.mxu0 0
      %1634 = vmatprep.subr.bf16.mxu0 0
      %1635 = vmatpush1.bf16.msra.mxu0 0
      %1636 = vmatprep.subr.bf16.mxu0 0
      %1637 = vmatpush1.bf16.msra.mxu0 0
      %1638 = vmatprep.subr.bf16.mxu0 0
      %1639 = vmatpush1.bf16.msra.mxu0 0
      %1640 = vmatprep.subr.bf16.mxu0 0
      %1641 = vmatpush1.bf16.msra.mxu0 0
      %1642 = vmatprep.subr.bf16.mxu0 0
      %1643 = vmatpush1.bf16.msra.mxu0 0
      %1644 = vmatprep.subr.bf16.mxu0 0
      %1645 = vmatpush1.bf16.msra.mxu0 %v1625
      %1646 = vmatprep.subr.bf16.mxu0 0
      %1647 = vmatpush2.bf16.msra.mxu0 0
      %1648 = vmatprep.subr.bf16.mxu0 0
      %1649 = vmatpush2.bf16.msra.mxu0 0
      %1650 = vmatprep.subr.bf16.mxu0 0
      %1651 = vmatpush2.bf16.msra.mxu0 0
      %1652 = vmatprep.subr.bf16.mxu0 0
      %1653 = vmatpush2.bf16.msra.mxu0 0
      %1654 = vmatprep.subr.bf16.mxu0 0
      %1655 = vmatpush2.bf16.msra.mxu0 0
      %1656 = vmatprep.subr.bf16.mxu0 0
      %1657 = vmatpush2.bf16.msra.mxu0 0
      %1658 = vmatprep.subr.bf16.mxu0 0
      %1659 = vmatpush2.bf16.msra.mxu0 0
      %1660 = vmatprep.subr.bf16.mxu0 0
      %1661 = vmatpush2.bf16.msra.mxu0 0
      %1662 = vmatprep.mubr.bf16.mxu0 0
      %1663 = vmatmul.mubr.bf16.gmra.mxu0 %v1628
      %v1664 = vpop.f32.mrf.mxu0
      %v1665 = vadd.f32 0.0, %v1664
      %v1666 = vpop.f32.mrf.mxu0
      %v1667 = vpop.f32.mrf.mxu0
      %v1668 = vadd.f32 0.0, %v1667
      %v1669 = vpop.f32.mrf.mxu0
      %1670 = vdwg.mxu0
      %v1671 = vadd.f32 %v1587, %v1665
      %v1672 = vadd.f32 %v1588, %v1668
      %v1673 = vld [vmem:[%s1589] sm:$0xc]
      %v1674 = vld [vmem:[%s1589 + $0x4] sm:$0x1]
      %v1675 = vld [vmem:[%s1589 + $0x8] sm:$0xc]
      %v1676 = vld [vmem:[%s1589 + $0xc] sm:$0x1]
      %v1677 = vld [vmem:[%s1589 + $0x10] sm:$0xc]
      %v1678 = vld [vmem:[%s1589 + $0x14] sm:$0x1]
      %v1679 = vld [vmem:[%s1589 + $0x18] sm:$0xc]
      %v1680 = vld [vmem:[%s1589 + $0x1c] sm:$0x1]
      %v1690 = vunpack.c.l.s4 1983009808
      %v1691 = vunpack.c.0.s8 %v1690
      %v1692 = vlaneseq
      %v1693 = vshrl.u32 %v1692, 7
      %v1694 = vsub.s32 %v1691, %v1693
      %v1695 = vrot.slane %v1673, %v1694
      %v1696 = vcombine.high %v1695, %v1695
      %v1698 = vunpack.c.l.s4 1983009808
      %v1699 = vunpack.c.0.s8 %v1698
      %v1700 = vlaneseq
      %v1701 = vshrl.u32 %v1700, 7
      %v1702 = vsub.s32 %v1699, %v1701
      %v1703 = vrot.slane %v1674, %v1702
      %v1705 = vunpack.c.l.s4 1983009808
      %v1706 = vunpack.c.0.s8 %v1705
      %v1707 = vlaneseq
      %v1708 = vshrl.u32 %v1707, 7
      %v1709 = vsub.s32 %v1706, %v1708
      %v1710 = vrot.slane %v1675, %v1709
      %v1711 = vcombine.high %v1710, %v1710
      %v1713 = vunpack.c.l.s4 1983009808
      %v1714 = vunpack.c.0.s8 %v1713
      %v1715 = vlaneseq
      %v1716 = vshrl.u32 %v1715, 7
      %v1717 = vsub.s32 %v1714, %v1716
      %v1718 = vrot.slane %v1676, %v1717
      %v1720 = vunpack.c.l.s4 1983009808
      %v1721 = vunpack.c.0.s8 %v1720
      %v1722 = vlaneseq
      %v1723 = vshrl.u32 %v1722, 7
      %v1724 = vsub.s32 %v1721, %v1723
      %v1725 = vrot.slane %v1677, %v1724
      %v1726 = vcombine.high %v1725, %v1725
      %v1728 = vunpack.c.l.s4 1983009808
      %v1729 = vunpack.c.0.s8 %v1728
      %v1730 = vlaneseq
      %v1731 = vshrl.u32 %v1730, 7
      %v1732 = vsub.s32 %v1729, %v1731
      %v1733 = vrot.slane %v1678, %v1732
      %v1735 = vunpack.c.l.s4 1983009808
      %v1736 = vunpack.c.0.s8 %v1735
      %v1737 = vlaneseq
      %v1738 = vshrl.u32 %v1737, 7
      %v1739 = vsub.s32 %v1736, %v1738
      %v1740 = vrot.slane %v1679, %v1739
      %v1741 = vcombine.high %v1740, %v1740
      %v1743 = vunpack.c.l.s4 1983009808
      %v1744 = vunpack.c.0.s8 %v1743
      %v1745 = vlaneseq
      %v1746 = vshrl.u32 %v1745, 7
      %v1747 = vsub.s32 %v1744, %v1746
      %v1748 = vrot.slane %v1680, %v1747
      %v1750 = vshrl.u32 %v1696, 16
      %v1752 = vrot.slane %v1750, 6
      %v1753 = vshll.u32 %v1696, 16
      %v1755 = vrot.slane %v1753, 7
      %v1756 = vor.u32 %v1752, %v1755
      %v1757 = vrot.slane %v1756, 2
      %v1759 = vshll.u32 %v1703, 16
      %v1761 = vrot.slane %v1759, 7
      %v1762 = vsel %vm483, %v1757, %v1761
      %v1764 = vshrl.u32 %v1711, 16
      %v1766 = vrot.slane %v1764, 6
      %v1767 = vshll.u32 %v1711, 16
      %v1769 = vrot.slane %v1767, 7
      %v1770 = vor.u32 %v1766, %v1769
      %v1771 = vrot.slane %v1770, 2
      %v1773 = vshll.u32 %v1718, 16
      %v1775 = vrot.slane %v1773, 7
      %v1776 = vsel %vm483, %v1771, %v1775
      %v1778 = vshrl.u32 %v1726, 16
      %v1780 = vrot.slane %v1778, 6
      %v1781 = vshll.u32 %v1726, 16
      %v1783 = vrot.slane %v1781, 7
      %v1784 = vor.u32 %v1780, %v1783
      %v1785 = vrot.slane %v1784, 2
      %v1787 = vshll.u32 %v1733, 16
      %v1789 = vrot.slane %v1787, 7
      %v1790 = vsel %vm483, %v1785, %v1789
      %v1792 = vshrl.u32 %v1741, 16
      %v1794 = vrot.slane %v1792, 6
      %v1795 = vshll.u32 %v1741, 16
      %v1797 = vrot.slane %v1795, 7
      %v1798 = vor.u32 %v1794, %v1797
      %v1799 = vrot.slane %v1798, 2
      %v1801 = vshll.u32 %v1748, 16
      %v1803 = vrot.slane %v1801, 7
      %v1804 = vsel %vm483, %v1799, %v1803
      %s1805 = sadd.s32 %s321, 9
      %s1806 = smul.u32 %s1805, 2
      %s1807 = smul.addr %s1806, 4
      %s1808 = scalar_lea.vmem %s1, %s1807
      %v1809 = vld [vmem:[%s1808] sm:$0xf]
      %v1810 = vld [vmem:[%s1808 + $0x4] sm:$0xf]
      %v1811 = vcombine.low %v1762, %v1776
      %v1812 = vcombine.low %v1790, %v1804
      %v1814 = vunpack.c.l.s4 1983009808
      %v1815 = vunpack.c.0.s8 %v1814
      %v1816 = vlaneseq
      %v1817 = vshrl.u32 %v1816, 7
      %v1818 = vsub.s32 %v1815, %v1817
      %v1819 = vrot.slane %v1811, %v1818
      %v1821 = vunpack.c.l.s4 1983009808
      %v1822 = vunpack.c.0.s8 %v1821
      %v1823 = vlaneseq
      %v1824 = vshrl.u32 %v1823, 7
      %v1825 = vsub.s32 %v1822, %v1824
      %v1826 = vrot.slane %v1812, %v1825
      %v1827 = vcombine.low %v1819, %v1826
      %v1830 = vunpack.c.l.b16 %v1809
      %v1831 = vunpack.c.l.b16 %v1810
      %v1832 = vpack.c.b16 %v1831, %v1830
      %v1835 = vsel %vm354, %v1827, 0
      %1837 = vmatprep.subr.bf16.mxu0 0
      %1838 = vmatpush1.bf16.msra.mxu0 0
      %1839 = vmatprep.subr.bf16.mxu0 0
      %1840 = vmatpush1.bf16.msra.mxu0 0
      %1841 = vmatprep.subr.bf16.mxu0 0
      %1842 = vmatpush1.bf16.msra.mxu0 0
      %1843 = vmatprep.subr.bf16.mxu0 0
      %1844 = vmatpush1.bf16.msra.mxu0 0
      %1845 = vmatprep.subr.bf16.mxu0 0
      %1846 = vmatpush1.bf16.msra.mxu0 0
      %1847 = vmatprep.subr.bf16.mxu0 0
      %1848 = vmatpush1.bf16.msra.mxu0 0
      %1849 = vmatprep.subr.bf16.mxu0 0
      %1850 = vmatpush1.bf16.msra.mxu0 0
      %1851 = vmatprep.subr.bf16.mxu0 0
      %1852 = vmatpush1.bf16.msra.mxu0 %v1832
      %1853 = vmatprep.subr.bf16.mxu0 0
      %1854 = vmatpush2.bf16.msra.mxu0 0
      %1855 = vmatprep.subr.bf16.mxu0 0
      %1856 = vmatpush2.bf16.msra.mxu0 0
      %1857 = vmatprep.subr.bf16.mxu0 0
      %1858 = vmatpush2.bf16.msra.mxu0 0
      %1859 = vmatprep.subr.bf16.mxu0 0
      %1860 = vmatpush2.bf16.msra.mxu0 0
      %1861 = vmatprep.subr.bf16.mxu0 0
      %1862 = vmatpush2.bf16.msra.mxu0 0
      %1863 = vmatprep.subr.bf16.mxu0 0
      %1864 = vmatpush2.bf16.msra.mxu0 0
      %1865 = vmatprep.subr.bf16.mxu0 0
      %1866 = vmatpush2.bf16.msra.mxu0 0
      %1867 = vmatprep.subr.bf16.mxu0 0
      %1868 = vmatpush2.bf16.msra.mxu0 0
      %1869 = vmatprep.mubr.bf16.mxu0 0
      %1870 = vmatmul.mubr.bf16.gmra.mxu0 %v1835
      %v1871 = vpop.f32.mrf.mxu0
      %v1872 = vadd.f32 0.0, %v1871
      %v1873 = vpop.f32.mrf.mxu0
      %v1874 = vpop.f32.mrf.mxu0
      %v1875 = vadd.f32 0.0, %v1874
      %v1876 = vpop.f32.mrf.mxu0
      %1877 = vdwg.mxu0
      %v1878 = vadd.f32 %v1671, %v1872
      %v1879 = vadd.f32 %v1672, %v1875
      %v1880 = vld [vmem:[%s1589] sm:$0x7]
      %v1881 = vld [vmem:[%s1589 + $0x8] sm:$0x7]
      %v1882 = vld [vmem:[%s1589 + $0x10] sm:$0x7]
      %v1883 = vld [vmem:[%s1589 + $0x18] sm:$0x7]
      %v1889 = vunpack.c.l.s4 1983009808
      %v1890 = vunpack.c.0.s8 %v1889
      %v1891 = vlaneseq
      %v1892 = vshrl.u32 %v1891, 7
      %v1893 = vsub.s32 %v1890, %v1892
      %v1894 = vrot.slane %v1880, %v1893
      %v1895 = vcombine.high %v1894, %v1894
      %v1897 = vunpack.c.l.s4 1983009808
      %v1898 = vunpack.c.0.s8 %v1897
      %v1899 = vlaneseq
      %v1900 = vshrl.u32 %v1899, 7
      %v1901 = vsub.s32 %v1898, %v1900
      %v1902 = vrot.slane %v1881, %v1901
      %v1903 = vcombine.high %v1902, %v1902
      %v1905 = vunpack.c.l.s4 1983009808
      %v1906 = vunpack.c.0.s8 %v1905
      %v1907 = vlaneseq
      %v1908 = vshrl.u32 %v1907, 7
      %v1909 = vsub.s32 %v1906, %v1908
      %v1910 = vrot.slane %v1882, %v1909
      %v1911 = vcombine.high %v1910, %v1910
      %v1913 = vunpack.c.l.s4 1983009808
      %v1914 = vunpack.c.0.s8 %v1913
      %v1915 = vlaneseq
      %v1916 = vshrl.u32 %v1915, 7
      %v1917 = vsub.s32 %v1914, %v1916
      %v1918 = vrot.slane %v1883, %v1917
      %v1919 = vcombine.high %v1918, %v1918
      %v1921 = vshrl.u32 %v1894, 16
      %v1923 = vrot.slane %v1921, 6
      %v1924 = vshll.u32 %v1894, 16
      %v1926 = vrot.slane %v1924, 7
      %v1927 = vor.u32 %v1923, %v1926
      %v1928 = vrot.slane %v1927, 2
      %v1930 = vshll.u32 %v1895, 16
      %v1932 = vrot.slane %v1930, 7
      %v1933 = vsel %vm483, %v1928, %v1932
      %v1935 = vshrl.u32 %v1902, 16
      %v1937 = vrot.slane %v1935, 6
      %v1938 = vshll.u32 %v1902, 16
      %v1940 = vrot.slane %v1938, 7
      %v1941 = vor.u32 %v1937, %v1940
      %v1942 = vrot.slane %v1941, 2
      %v1944 = vshll.u32 %v1903, 16
      %v1946 = vrot.slane %v1944, 7
      %v1947 = vsel %vm483, %v1942, %v1946
      %v1949 = vshrl.u32 %v1910, 16
      %v1951 = vrot.slane %v1949, 6
      %v1952 = vshll.u32 %v1910, 16
      %v1954 = vrot.slane %v1952, 7
      %v1955 = vor.u32 %v1951, %v1954
      %v1956 = vrot.slane %v1955, 2
      %v1958 = vshll.u32 %v1911, 16
      %v1960 = vrot.slane %v1958, 7
      %v1961 = vsel %vm483, %v1956, %v1960
      %v1963 = vshrl.u32 %v1918, 16
      %v1965 = vrot.slane %v1963, 6
      %v1966 = vshll.u32 %v1918, 16
      %v1968 = vrot.slane %v1966, 7
      %v1969 = vor.u32 %v1965, %v1968
      %v1970 = vrot.slane %v1969, 2
      %v1972 = vshll.u32 %v1919, 16
      %v1974 = vrot.slane %v1972, 7
      %v1975 = vsel %vm483, %v1970, %v1974
      %s1976 = sadd.s32 %s321, 10
      %s1977 = smul.u32 %s1976, 2
      %s1978 = smul.addr %s1977, 4
      %s1979 = scalar_lea.vmem %s1, %s1978
      %v1980 = vld [vmem:[%s1979] sm:$0xf]
      %v1981 = vld [vmem:[%s1979 + $0x4] sm:$0xf]
      %v1982 = vcombine.low %v1933, %v1947
      %v1983 = vcombine.low %v1961, %v1975
      %v1985 = vunpack.c.l.s4 1983009808
      %v1986 = vunpack.c.0.s8 %v1985
      %v1987 = vlaneseq
      %v1988 = vshrl.u32 %v1987, 7
      %v1989 = vsub.s32 %v1986, %v1988
      %v1990 = vrot.slane %v1982, %v1989
      %v1992 = vunpack.c.l.s4 1983009808
      %v1993 = vunpack.c.0.s8 %v1992
      %v1994 = vlaneseq
      %v1995 = vshrl.u32 %v1994, 7
      %v1996 = vsub.s32 %v1993, %v1995
      %v1997 = vrot.slane %v1983, %v1996
      %v1998 = vcombine.low %v1990, %v1997
      %v2001 = vunpack.c.l.b16 %v1980
      %v2002 = vunpack.c.l.b16 %v1981
      %v2003 = vpack.c.b16 %v2002, %v2001
      %v2006 = vsel %vm354, %v1998, 0
      %2008 = vmatprep.subr.bf16.mxu0 0
      %2009 = vmatpush1.bf16.msra.mxu0 0
      %2010 = vmatprep.subr.bf16.mxu0 0
      %2011 = vmatpush1.bf16.msra.mxu0 0
      %2012 = vmatprep.subr.bf16.mxu0 0
      %2013 = vmatpush1.bf16.msra.mxu0 0
      %2014 = vmatprep.subr.bf16.mxu0 0
      %2015 = vmatpush1.bf16.msra.mxu0 0
      %2016 = vmatprep.subr.bf16.mxu0 0
      %2017 = vmatpush1.bf16.msra.mxu0 0
      %2018 = vmatprep.subr.bf16.mxu0 0
      %2019 = vmatpush1.bf16.msra.mxu0 0
      %2020 = vmatprep.subr.bf16.mxu0 0
      %2021 = vmatpush1.bf16.msra.mxu0 0
      %2022 = vmatprep.subr.bf16.mxu0 0
      %2023 = vmatpush1.bf16.msra.mxu0 %v2003
      %2024 = vmatprep.subr.bf16.mxu0 0
      %2025 = vmatpush2.bf16.msra.mxu0 0
      %2026 = vmatprep.subr.bf16.mxu0 0
      %2027 = vmatpush2.bf16.msra.mxu0 0
      %2028 = vmatprep.subr.bf16.mxu0 0
      %2029 = vmatpush2.bf16.msra.mxu0 0
      %2030 = vmatprep.subr.bf16.mxu0 0
      %2031 = vmatpush2.bf16.msra.mxu0 0
      %2032 = vmatprep.subr.bf16.mxu0 0
      %2033 = vmatpush2.bf16.msra.mxu0 0
      %2034 = vmatprep.subr.bf16.mxu0 0
      %2035 = vmatpush2.bf16.msra.mxu0 0
      %2036 = vmatprep.subr.bf16.mxu0 0
      %2037 = vmatpush2.bf16.msra.mxu0 0
      %2038 = vmatprep.subr.bf16.mxu0 0
      %2039 = vmatpush2.bf16.msra.mxu0 0
      %2040 = vmatprep.mubr.bf16.mxu0 0
      %2041 = vmatmul.mubr.bf16.gmra.mxu0 %v2006
      %v2042 = vpop.f32.mrf.mxu0
      %v2043 = vadd.f32 0.0, %v2042
      %v2044 = vpop.f32.mrf.mxu0
      %v2045 = vpop.f32.mrf.mxu0
      %v2046 = vadd.f32 0.0, %v2045
      %v2047 = vpop.f32.mrf.mxu0
      %2048 = vdwg.mxu0
      %v2049 = vadd.f32 %v1878, %v2043
      %v2050 = vadd.f32 %v1879, %v2046
      %v2051 = vld [vmem:[%s1589] sm:$0x8]
      %v2052 = vld [vmem:[%s1589 + $0x4] sm:$0x1]
      %v2053 = vld [vmem:[%s1589 + $0x8] sm:$0x8]
      %v2054 = vld [vmem:[%s1589 + $0xc] sm:$0x1]
      %v2055 = vld [vmem:[%s1589 + $0x10] sm:$0x8]
      %v2056 = vld [vmem:[%s1589 + $0x14] sm:$0x1]
      %v2057 = vld [vmem:[%s1589 + $0x18] sm:$0x8]
      %v2058 = vld [vmem:[%s1589 + $0x1c] sm:$0x1]
      %v2068 = vunpack.c.l.s4 1983009808
      %v2069 = vunpack.c.0.s8 %v2068
      %v2070 = vlaneseq
      %v2071 = vshrl.u32 %v2070, 7
      %v2072 = vsub.s32 %v2069, %v2071
      %v2073 = vrot.slane %v2051, %v2072
      %v2074 = vcombine.high %v2073, %v2073
      %v2076 = vunpack.c.l.s4 1983009808
      %v2077 = vunpack.c.0.s8 %v2076
      %v2078 = vlaneseq
      %v2079 = vshrl.u32 %v2078, 7
      %v2080 = vsub.s32 %v2077, %v2079
      %v2081 = vrot.slane %v2052, %v2080
      %v2083 = vunpack.c.l.s4 1983009808
      %v2084 = vunpack.c.0.s8 %v2083
      %v2085 = vlaneseq
      %v2086 = vshrl.u32 %v2085, 7
      %v2087 = vsub.s32 %v2084, %v2086
      %v2088 = vrot.slane %v2053, %v2087
      %v2089 = vcombine.high %v2088, %v2088
      %v2091 = vunpack.c.l.s4 1983009808
      %v2092 = vunpack.c.0.s8 %v2091
      %v2093 = vlaneseq
      %v2094 = vshrl.u32 %v2093, 7
      %v2095 = vsub.s32 %v2092, %v2094
      %v2096 = vrot.slane %v2054, %v2095
      %v2098 = vunpack.c.l.s4 1983009808
      %v2099 = vunpack.c.0.s8 %v2098
      %v2100 = vlaneseq
      %v2101 = vshrl.u32 %v2100, 7
      %v2102 = vsub.s32 %v2099, %v2101
      %v2103 = vrot.slane %v2055, %v2102
      %v2104 = vcombine.high %v2103, %v2103
      %v2106 = vunpack.c.l.s4 1983009808
      %v2107 = vunpack.c.0.s8 %v2106
      %v2108 = vlaneseq
      %v2109 = vshrl.u32 %v2108, 7
      %v2110 = vsub.s32 %v2107, %v2109
      %v2111 = vrot.slane %v2056, %v2110
      %v2113 = vunpack.c.l.s4 1983009808
      %v2114 = vunpack.c.0.s8 %v2113
      %v2115 = vlaneseq
      %v2116 = vshrl.u32 %v2115, 7
      %v2117 = vsub.s32 %v2114, %v2116
      %v2118 = vrot.slane %v2057, %v2117
      %v2119 = vcombine.high %v2118, %v2118
      %v2121 = vunpack.c.l.s4 1983009808
      %v2122 = vunpack.c.0.s8 %v2121
      %v2123 = vlaneseq
      %v2124 = vshrl.u32 %v2123, 7
      %v2125 = vsub.s32 %v2122, %v2124
      %v2126 = vrot.slane %v2058, %v2125
      %v2127 = vrot.slane %v2074, 7
      %v2128 = vrot.slane %v2127, 2
      %v2129 = vrot.slane %v2081, 7
      %v2130 = vsel %vm868, %v2128, %v2129
      %v2131 = vrot.slane %v2089, 7
      %v2132 = vrot.slane %v2131, 2
      %v2133 = vrot.slane %v2096, 7
      %v2134 = vsel %vm868, %v2132, %v2133
      %v2135 = vrot.slane %v2104, 7
      %v2136 = vrot.slane %v2135, 2
      %v2137 = vrot.slane %v2111, 7
      %v2138 = vsel %vm868, %v2136, %v2137
      %v2139 = vrot.slane %v2119, 7
      %v2140 = vrot.slane %v2139, 2
      %v2141 = vrot.slane %v2126, 7
      %v2142 = vsel %vm868, %v2140, %v2141
      %s2143 = sadd.s32 %s321, 11
      %s2144 = smul.u32 %s2143, 2
      %s2145 = smul.addr %s2144, 4
      %s2146 = scalar_lea.vmem %s1, %s2145
      %v2147 = vld [vmem:[%s2146] sm:$0xf]
      %v2148 = vld [vmem:[%s2146 + $0x4] sm:$0xf]
      %v2149 = vcombine.low %v2130, %v2134
      %v2150 = vcombine.low %v2138, %v2142
      %v2152 = vunpack.c.l.s4 1983009808
      %v2153 = vunpack.c.0.s8 %v2152
      %v2154 = vlaneseq
      %v2155 = vshrl.u32 %v2154, 7
      %v2156 = vsub.s32 %v2153, %v2155
      %v2157 = vrot.slane %v2149, %v2156
      %v2159 = vunpack.c.l.s4 1983009808
      %v2160 = vunpack.c.0.s8 %v2159
      %v2161 = vlaneseq
      %v2162 = vshrl.u32 %v2161, 7
      %v2163 = vsub.s32 %v2160, %v2162
      %v2164 = vrot.slane %v2150, %v2163
      %v2165 = vcombine.low %v2157, %v2164
      %v2168 = vunpack.c.l.b16 %v2147
      %v2169 = vunpack.c.l.b16 %v2148
      %v2170 = vpack.c.b16 %v2169, %v2168
      %v2173 = vsel %vm354, %v2165, 0
      %2175 = vmatprep.subr.bf16.mxu0 0
      %2176 = vmatpush1.bf16.msra.mxu0 0
      %2177 = vmatprep.subr.bf16.mxu0 0
      %2178 = vmatpush1.bf16.msra.mxu0 0
      %2179 = vmatprep.subr.bf16.mxu0 0
      %2180 = vmatpush1.bf16.msra.mxu0 0
      %2181 = vmatprep.subr.bf16.mxu0 0
      %2182 = vmatpush1.bf16.msra.mxu0 0
      %2183 = vmatprep.subr.bf16.mxu0 0
      %2184 = vmatpush1.bf16.msra.mxu0 0
      %2185 = vmatprep.subr.bf16.mxu0 0
      %2186 = vmatpush1.bf16.msra.mxu0 0
      %2187 = vmatprep.subr.bf16.mxu0 0
      %2188 = vmatpush1.bf16.msra.mxu0 0
      %2189 = vmatprep.subr.bf16.mxu0 0
      %2190 = vmatpush1.bf16.msra.mxu0 %v2170
      %2191 = vmatprep.subr.bf16.mxu0 0
      %2192 = vmatpush2.bf16.msra.mxu0 0
      %2193 = vmatprep.subr.bf16.mxu0 0
      %2194 = vmatpush2.bf16.msra.mxu0 0
      %2195 = vmatprep.subr.bf16.mxu0 0
      %2196 = vmatpush2.bf16.msra.mxu0 0
      %2197 = vmatprep.subr.bf16.mxu0 0
      %2198 = vmatpush2.bf16.msra.mxu0 0
      %2199 = vmatprep.subr.bf16.mxu0 0
      %2200 = vmatpush2.bf16.msra.mxu0 0
      %2201 = vmatprep.subr.bf16.mxu0 0
      %2202 = vmatpush2.bf16.msra.mxu0 0
      %2203 = vmatprep.subr.bf16.mxu0 0
      %2204 = vmatpush2.bf16.msra.mxu0 0
      %2205 = vmatprep.subr.bf16.mxu0 0
      %2206 = vmatpush2.bf16.msra.mxu0 0
      %2207 = vmatprep.mubr.bf16.mxu0 0
      %2208 = vmatmul.mubr.bf16.gmra.mxu0 %v2173
      %v2209 = vpop.f32.mrf.mxu0
      %v2210 = vadd.f32 0.0, %v2209
      %v2211 = vpop.f32.mrf.mxu0
      %v2212 = vpop.f32.mrf.mxu0
      %v2213 = vadd.f32 0.0, %v2212
      %v2214 = vpop.f32.mrf.mxu0
      %2215 = vdwg.mxu0
      %v2216 = vadd.f32 %v2049, %v2210
      %v2217 = vadd.f32 %v2050, %v2213
      %s2218 = scalar_lea.vmem %s281, 48
      %v2219 = vld [vmem:[%s2218] sm:$0x3]
      %v2220 = vld [vmem:[%s2218 + $0x8] sm:$0x3]
      %v2221 = vld [vmem:[%s2218 + $0x10] sm:$0x3]
      %v2222 = vld [vmem:[%s2218 + $0x18] sm:$0x3]
      %s2223 = sadd.s32 %s321, 12
      %s2224 = smul.u32 %s2223, 2
      %s2225 = smul.addr %s2224, 4
      %s2226 = scalar_lea.vmem %s1, %s2225
      %v2227 = vld [vmem:[%s2226] sm:$0xf]
      %v2228 = vld [vmem:[%s2226 + $0x4] sm:$0xf]
      %v2233 = vcombine.low %v2219, %v2220
      %v2234 = vcombine.low %v2221, %v2222
      %v2236 = vunpack.c.l.s4 1983009808
      %v2237 = vunpack.c.0.s8 %v2236
      %v2238 = vlaneseq
      %v2239 = vshrl.u32 %v2238, 7
      %v2240 = vsub.s32 %v2237, %v2239
      %v2241 = vrot.slane %v2233, %v2240
      %v2243 = vunpack.c.l.s4 1983009808
      %v2244 = vunpack.c.0.s8 %v2243
      %v2245 = vlaneseq
      %v2246 = vshrl.u32 %v2245, 7
      %v2247 = vsub.s32 %v2244, %v2246
      %v2248 = vrot.slane %v2234, %v2247
      %v2249 = vcombine.low %v2241, %v2248
      %v2252 = vunpack.c.l.b16 %v2227
      %v2253 = vunpack.c.l.b16 %v2228
      %v2254 = vpack.c.b16 %v2253, %v2252
      %v2257 = vsel %vm354, %v2249, 0
      %2259 = vmatprep.subr.bf16.mxu0 0
      %2260 = vmatpush1.bf16.msra.mxu0 0
      %2261 = vmatprep.subr.bf16.mxu0 0
      %2262 = vmatpush1.bf16.msra.mxu0 0
      %2263 = vmatprep.subr.bf16.mxu0 0
      %2264 = vmatpush1.bf16.msra.mxu0 0
      %2265 = vmatprep.subr.bf16.mxu0 0
      %2266 = vmatpush1.bf16.msra.mxu0 0
      %2267 = vmatprep.subr.bf16.mxu0 0
      %2268 = vmatpush1.bf16.msra.mxu0 0
      %2269 = vmatprep.subr.bf16.mxu0 0
      %2270 = vmatpush1.bf16.msra.mxu0 0
      %2271 = vmatprep.subr.bf16.mxu0 0
      %2272 = vmatpush1.bf16.msra.mxu0 0
      %2273 = vmatprep.subr.bf16.mxu0 0
      %2274 = vmatpush1.bf16.msra.mxu0 %v2254
      %2275 = vmatprep.subr.bf16.mxu0 0
      %2276 = vmatpush2.bf16.msra.mxu0 0
      %2277 = vmatprep.subr.bf16.mxu0 0
      %2278 = vmatpush2.bf16.msra.mxu0 0
      %2279 = vmatprep.subr.bf16.mxu0 0
      %2280 = vmatpush2.bf16.msra.mxu0 0
      %2281 = vmatprep.subr.bf16.mxu0 0
      %2282 = vmatpush2.bf16.msra.mxu0 0
      %2283 = vmatprep.subr.bf16.mxu0 0
      %2284 = vmatpush2.bf16.msra.mxu0 0
      %2285 = vmatprep.subr.bf16.mxu0 0
      %2286 = vmatpush2.bf16.msra.mxu0 0
      %2287 = vmatprep.subr.bf16.mxu0 0
      %2288 = vmatpush2.bf16.msra.mxu0 0
      %2289 = vmatprep.subr.bf16.mxu0 0
      %2290 = vmatpush2.bf16.msra.mxu0 0
      %2291 = vmatprep.mubr.bf16.mxu0 0
      %2292 = vmatmul.mubr.bf16.gmra.mxu0 %v2257
      %v2293 = vpop.f32.mrf.mxu0
      %v2294 = vadd.f32 0.0, %v2293
      %v2295 = vpop.f32.mrf.mxu0
      %v2296 = vpop.f32.mrf.mxu0
      %v2297 = vadd.f32 0.0, %v2296
      %v2298 = vpop.f32.mrf.mxu0
      %2299 = vdwg.mxu0
      %v2300 = vadd.f32 %v2216, %v2294
      %v2301 = vadd.f32 %v2217, %v2297
      %v2302 = vld [vmem:[%s2218] sm:$0xc]
      %v2303 = vld [vmem:[%s2218 + $0x4] sm:$0x1]
      %v2304 = vld [vmem:[%s2218 + $0x8] sm:$0xc]
      %v2305 = vld [vmem:[%s2218 + $0xc] sm:$0x1]
      %v2306 = vld [vmem:[%s2218 + $0x10] sm:$0xc]
      %v2307 = vld [vmem:[%s2218 + $0x14] sm:$0x1]
      %v2308 = vld [vmem:[%s2218 + $0x18] sm:$0xc]
      %v2309 = vld [vmem:[%s2218 + $0x1c] sm:$0x1]
      %v2319 = vunpack.c.l.s4 1983009808
      %v2320 = vunpack.c.0.s8 %v2319
      %v2321 = vlaneseq
      %v2322 = vshrl.u32 %v2321, 7
      %v2323 = vsub.s32 %v2320, %v2322
      %v2324 = vrot.slane %v2302, %v2323
      %v2325 = vcombine.high %v2324, %v2324
      %v2327 = vunpack.c.l.s4 1983009808
      %v2328 = vunpack.c.0.s8 %v2327
      %v2329 = vlaneseq
      %v2330 = vshrl.u32 %v2329, 7
      %v2331 = vsub.s32 %v2328, %v2330
      %v2332 = vrot.slane %v2303, %v2331
      %v2334 = vunpack.c.l.s4 1983009808
      %v2335 = vunpack.c.0.s8 %v2334
      %v2336 = vlaneseq
      %v2337 = vshrl.u32 %v2336, 7
      %v2338 = vsub.s32 %v2335, %v2337
      %v2339 = vrot.slane %v2304, %v2338
      %v2340 = vcombine.high %v2339, %v2339
      %v2342 = vunpack.c.l.s4 1983009808
      %v2343 = vunpack.c.0.s8 %v2342
      %v2344 = vlaneseq
      %v2345 = vshrl.u32 %v2344, 7
      %v2346 = vsub.s32 %v2343, %v2345
      %v2347 = vrot.slane %v2305, %v2346
      %v2349 = vunpack.c.l.s4 1983009808
      %v2350 = vunpack.c.0.s8 %v2349
      %v2351 = vlaneseq
      %v2352 = vshrl.u32 %v2351, 7
      %v2353 = vsub.s32 %v2350, %v2352
      %v2354 = vrot.slane %v2306, %v2353
      %v2355 = vcombine.high %v2354, %v2354
      %v2357 = vunpack.c.l.s4 1983009808
      %v2358 = vunpack.c.0.s8 %v2357
      %v2359 = vlaneseq
      %v2360 = vshrl.u32 %v2359, 7
      %v2361 = vsub.s32 %v2358, %v2360
      %v2362 = vrot.slane %v2307, %v2361
      %v2364 = vunpack.c.l.s4 1983009808
      %v2365 = vunpack.c.0.s8 %v2364
      %v2366 = vlaneseq
      %v2367 = vshrl.u32 %v2366, 7
      %v2368 = vsub.s32 %v2365, %v2367
      %v2369 = vrot.slane %v2308, %v2368
      %v2370 = vcombine.high %v2369, %v2369
      %v2372 = vunpack.c.l.s4 1983009808
      %v2373 = vunpack.c.0.s8 %v2372
      %v2374 = vlaneseq
      %v2375 = vshrl.u32 %v2374, 7
      %v2376 = vsub.s32 %v2373, %v2375
      %v2377 = vrot.slane %v2309, %v2376
      %v2379 = vshrl.u32 %v2325, 16
      %v2381 = vrot.slane %v2379, 6
      %v2382 = vshll.u32 %v2325, 16
      %v2384 = vrot.slane %v2382, 7
      %v2385 = vor.u32 %v2381, %v2384
      %v2386 = vrot.slane %v2385, 2
      %v2388 = vshll.u32 %v2332, 16
      %v2390 = vrot.slane %v2388, 7
      %v2391 = vsel %vm483, %v2386, %v2390
      %v2393 = vshrl.u32 %v2340, 16
      %v2395 = vrot.slane %v2393, 6
      %v2396 = vshll.u32 %v2340, 16
      %v2398 = vrot.slane %v2396, 7
      %v2399 = vor.u32 %v2395, %v2398
      %v2400 = vrot.slane %v2399, 2
      %v2402 = vshll.u32 %v2347, 16
      %v2404 = vrot.slane %v2402, 7
      %v2405 = vsel %vm483, %v2400, %v2404
      %v2407 = vshrl.u32 %v2355, 16
      %v2409 = vrot.slane %v2407, 6
      %v2410 = vshll.u32 %v2355, 16
      %v2412 = vrot.slane %v2410, 7
      %v2413 = vor.u32 %v2409, %v2412
      %v2414 = vrot.slane %v2413, 2
      %v2416 = vshll.u32 %v2362, 16
      %v2418 = vrot.slane %v2416, 7
      %v2419 = vsel %vm483, %v2414, %v2418
      %v2421 = vshrl.u32 %v2370, 16
      %v2423 = vrot.slane %v2421, 6
      %v2424 = vshll.u32 %v2370, 16
      %v2426 = vrot.slane %v2424, 7
      %v2427 = vor.u32 %v2423, %v2426
      %v2428 = vrot.slane %v2427, 2
      %v2430 = vshll.u32 %v2377, 16
      %v2432 = vrot.slane %v2430, 7
      %v2433 = vsel %vm483, %v2428, %v2432
      %s2434 = sadd.s32 %s321, 13
      %s2435 = smul.u32 %s2434, 2
      %s2436 = smul.addr %s2435, 4
      %s2437 = scalar_lea.vmem %s1, %s2436
      %v2438 = vld [vmem:[%s2437] sm:$0xf]
      %v2439 = vld [vmem:[%s2437 + $0x4] sm:$0xf]
      %v2440 = vcombine.low %v2391, %v2405
      %v2441 = vcombine.low %v2419, %v2433
      %v2443 = vunpack.c.l.s4 1983009808
      %v2444 = vunpack.c.0.s8 %v2443
      %v2445 = vlaneseq
      %v2446 = vshrl.u32 %v2445, 7
      %v2447 = vsub.s32 %v2444, %v2446
      %v2448 = vrot.slane %v2440, %v2447
      %v2450 = vunpack.c.l.s4 1983009808
      %v2451 = vunpack.c.0.s8 %v2450
      %v2452 = vlaneseq
      %v2453 = vshrl.u32 %v2452, 7
      %v2454 = vsub.s32 %v2451, %v2453
      %v2455 = vrot.slane %v2441, %v2454
      %v2456 = vcombine.low %v2448, %v2455
      %v2459 = vunpack.c.l.b16 %v2438
      %v2460 = vunpack.c.l.b16 %v2439
      %v2461 = vpack.c.b16 %v2460, %v2459
      %v2464 = vsel %vm354, %v2456, 0
      %2466 = vmatprep.subr.bf16.mxu0 0
      %2467 = vmatpush1.bf16.msra.mxu0 0
      %2468 = vmatprep.subr.bf16.mxu0 0
      %2469 = vmatpush1.bf16.msra.mxu0 0
      %2470 = vmatprep.subr.bf16.mxu0 0
      %2471 = vmatpush1.bf16.msra.mxu0 0
      %2472 = vmatprep.subr.bf16.mxu0 0
      %2473 = vmatpush1.bf16.msra.mxu0 0
      %2474 = vmatprep.subr.bf16.mxu0 0
      %2475 = vmatpush1.bf16.msra.mxu0 0
      %2476 = vmatprep.subr.bf16.mxu0 0
      %2477 = vmatpush1.bf16.msra.mxu0 0
      %2478 = vmatprep.subr.bf16.mxu0 0
      %2479 = vmatpush1.bf16.msra.mxu0 0
      %2480 = vmatprep.subr.bf16.mxu0 0
      %2481 = vmatpush1.bf16.msra.mxu0 %v2461
      %2482 = vmatprep.subr.bf16.mxu0 0
      %2483 = vmatpush2.bf16.msra.mxu0 0
      %2484 = vmatprep.subr.bf16.mxu0 0
      %2485 = vmatpush2.bf16.msra.mxu0 0
      %2486 = vmatprep.subr.bf16.mxu0 0
      %2487 = vmatpush2.bf16.msra.mxu0 0
      %2488 = vmatprep.subr.bf16.mxu0 0
      %2489 = vmatpush2.bf16.msra.mxu0 0
      %2490 = vmatprep.subr.bf16.mxu0 0
      %2491 = vmatpush2.bf16.msra.mxu0 0
      %2492 = vmatprep.subr.bf16.mxu0 0
      %2493 = vmatpush2.bf16.msra.mxu0 0
      %2494 = vmatprep.subr.bf16.mxu0 0
      %2495 = vmatpush2.bf16.msra.mxu0 0
      %2496 = vmatprep.subr.bf16.mxu0 0
      %2497 = vmatpush2.bf16.msra.mxu0 0
      %2498 = vmatprep.mubr.bf16.mxu0 0
      %2499 = vmatmul.mubr.bf16.gmra.mxu0 %v2464
      %v2500 = vpop.f32.mrf.mxu0
      %v2501 = vadd.f32 0.0, %v2500
      %v2502 = vpop.f32.mrf.mxu0
      %v2503 = vpop.f32.mrf.mxu0
      %v2504 = vadd.f32 0.0, %v2503
      %v2505 = vpop.f32.mrf.mxu0
      %2506 = vdwg.mxu0
      %v2507 = vadd.f32 %v2300, %v2501
      %v2508 = vadd.f32 %v2301, %v2504
      %v2509 = vld [vmem:[%s2218] sm:$0x7]
      %v2510 = vld [vmem:[%s2218 + $0x8] sm:$0x7]
      %v2511 = vld [vmem:[%s2218 + $0x10] sm:$0x7]
      %v2512 = vld [vmem:[%s2218 + $0x18] sm:$0x7]
      %v2518 = vunpack.c.l.s4 1983009808
      %v2519 = vunpack.c.0.s8 %v2518
      %v2520 = vlaneseq
      %v2521 = vshrl.u32 %v2520, 7
      %v2522 = vsub.s32 %v2519, %v2521
      %v2523 = vrot.slane %v2509, %v2522
      %v2524 = vcombine.high %v2523, %v2523
      %v2526 = vunpack.c.l.s4 1983009808
      %v2527 = vunpack.c.0.s8 %v2526
      %v2528 = vlaneseq
      %v2529 = vshrl.u32 %v2528, 7
      %v2530 = vsub.s32 %v2527, %v2529
      %v2531 = vrot.slane %v2510, %v2530
      %v2532 = vcombine.high %v2531, %v2531
      %v2534 = vunpack.c.l.s4 1983009808
      %v2535 = vunpack.c.0.s8 %v2534
      %v2536 = vlaneseq
      %v2537 = vshrl.u32 %v2536, 7
      %v2538 = vsub.s32 %v2535, %v2537
      %v2539 = vrot.slane %v2511, %v2538
      %v2540 = vcombine.high %v2539, %v2539
      %v2542 = vunpack.c.l.s4 1983009808
      %v2543 = vunpack.c.0.s8 %v2542
      %v2544 = vlaneseq
      %v2545 = vshrl.u32 %v2544, 7
      %v2546 = vsub.s32 %v2543, %v2545
      %v2547 = vrot.slane %v2512, %v2546
      %v2548 = vcombine.high %v2547, %v2547
      %v2550 = vshrl.u32 %v2523, 16
      %v2552 = vrot.slane %v2550, 6
      %v2553 = vshll.u32 %v2523, 16
      %v2555 = vrot.slane %v2553, 7
      %v2556 = vor.u32 %v2552, %v2555
      %v2557 = vrot.slane %v2556, 2
      %v2559 = vshll.u32 %v2524, 16
      %v2561 = vrot.slane %v2559, 7
      %v2562 = vsel %vm483, %v2557, %v2561
      %v2564 = vshrl.u32 %v2531, 16
      %v2566 = vrot.slane %v2564, 6
      %v2567 = vshll.u32 %v2531, 16
      %v2569 = vrot.slane %v2567, 7
      %v2570 = vor.u32 %v2566, %v2569
      %v2571 = vrot.slane %v2570, 2
      %v2573 = vshll.u32 %v2532, 16
      %v2575 = vrot.slane %v2573, 7
      %v2576 = vsel %vm483, %v2571, %v2575
      %v2578 = vshrl.u32 %v2539, 16
      %v2580 = vrot.slane %v2578, 6
      %v2581 = vshll.u32 %v2539, 16
      %v2583 = vrot.slane %v2581, 7
      %v2584 = vor.u32 %v2580, %v2583
      %v2585 = vrot.slane %v2584, 2
      %v2587 = vshll.u32 %v2540, 16
      %v2589 = vrot.slane %v2587, 7
      %v2590 = vsel %vm483, %v2585, %v2589
      %v2592 = vshrl.u32 %v2547, 16
      %v2594 = vrot.slane %v2592, 6
      %v2595 = vshll.u32 %v2547, 16
      %v2597 = vrot.slane %v2595, 7
      %v2598 = vor.u32 %v2594, %v2597
      %v2599 = vrot.slane %v2598, 2
      %v2601 = vshll.u32 %v2548, 16
      %v2603 = vrot.slane %v2601, 7
      %v2604 = vsel %vm483, %v2599, %v2603
      %s2605 = sadd.s32 %s321, 14
      %s2606 = smul.u32 %s2605, 2
      %s2607 = smul.addr %s2606, 4
      %s2608 = scalar_lea.vmem %s1, %s2607
      %v2609 = vld [vmem:[%s2608] sm:$0xf]
      %v2610 = vld [vmem:[%s2608 + $0x4] sm:$0xf]
      %v2611 = vcombine.low %v2562, %v2576
      %v2612 = vcombine.low %v2590, %v2604
      %v2614 = vunpack.c.l.s4 1983009808
      %v2615 = vunpack.c.0.s8 %v2614
      %v2616 = vlaneseq
      %v2617 = vshrl.u32 %v2616, 7
      %v2618 = vsub.s32 %v2615, %v2617
      %v2619 = vrot.slane %v2611, %v2618
      %v2621 = vunpack.c.l.s4 1983009808
      %v2622 = vunpack.c.0.s8 %v2621
      %v2623 = vlaneseq
      %v2624 = vshrl.u32 %v2623, 7
      %v2625 = vsub.s32 %v2622, %v2624
      %v2626 = vrot.slane %v2612, %v2625
      %v2627 = vcombine.low %v2619, %v2626
      %v2630 = vunpack.c.l.b16 %v2609
      %v2631 = vunpack.c.l.b16 %v2610
      %v2632 = vpack.c.b16 %v2631, %v2630
      %v2635 = vsel %vm354, %v2627, 0
      %2637 = vmatprep.subr.bf16.mxu0 0
      %2638 = vmatpush1.bf16.msra.mxu0 0
      %2639 = vmatprep.subr.bf16.mxu0 0
      %2640 = vmatpush1.bf16.msra.mxu0 0
      %2641 = vmatprep.subr.bf16.mxu0 0
      %2642 = vmatpush1.bf16.msra.mxu0 0
      %2643 = vmatprep.subr.bf16.mxu0 0
      %2644 = vmatpush1.bf16.msra.mxu0 0
      %2645 = vmatprep.subr.bf16.mxu0 0
      %2646 = vmatpush1.bf16.msra.mxu0 0
      %2647 = vmatprep.subr.bf16.mxu0 0
      %2648 = vmatpush1.bf16.msra.mxu0 0
      %2649 = vmatprep.subr.bf16.mxu0 0
      %2650 = vmatpush1.bf16.msra.mxu0 0
      %2651 = vmatprep.subr.bf16.mxu0 0
      %2652 = vmatpush1.bf16.msra.mxu0 %v2632
      %2653 = vmatprep.subr.bf16.mxu0 0
      %2654 = vmatpush2.bf16.msra.mxu0 0
      %2655 = vmatprep.subr.bf16.mxu0 0
      %2656 = vmatpush2.bf16.msra.mxu0 0
      %2657 = vmatprep.subr.bf16.mxu0 0
      %2658 = vmatpush2.bf16.msra.mxu0 0
      %2659 = vmatprep.subr.bf16.mxu0 0
      %2660 = vmatpush2.bf16.msra.mxu0 0
      %2661 = vmatprep.subr.bf16.mxu0 0
      %2662 = vmatpush2.bf16.msra.mxu0 0
      %2663 = vmatprep.subr.bf16.mxu0 0
      %2664 = vmatpush2.bf16.msra.mxu0 0
      %2665 = vmatprep.subr.bf16.mxu0 0
      %2666 = vmatpush2.bf16.msra.mxu0 0
      %2667 = vmatprep.subr.bf16.mxu0 0
      %2668 = vmatpush2.bf16.msra.mxu0 0
      %2669 = vmatprep.mubr.bf16.mxu0 0
      %2670 = vmatmul.mubr.bf16.gmra.mxu0 %v2635
      %v2671 = vpop.f32.mrf.mxu0
      %v2672 = vadd.f32 0.0, %v2671
      %v2673 = vpop.f32.mrf.mxu0
      %v2674 = vpop.f32.mrf.mxu0
      %v2675 = vadd.f32 0.0, %v2674
      %v2676 = vpop.f32.mrf.mxu0
      %2677 = vdwg.mxu0
      %v2678 = vadd.f32 %v2507, %v2672
      %v2679 = vadd.f32 %v2508, %v2675
      %v2680 = vld [vmem:[%s2218] sm:$0x8]
      %v2681 = vld [vmem:[%s2218 + $0x4] sm:$0x1]
      %v2682 = vld [vmem:[%s2218 + $0x8] sm:$0x8]
      %v2683 = vld [vmem:[%s2218 + $0xc] sm:$0x1]
      %v2684 = vld [vmem:[%s2218 + $0x10] sm:$0x8]
      %v2685 = vld [vmem:[%s2218 + $0x14] sm:$0x1]
      %v2686 = vld [vmem:[%s2218 + $0x18] sm:$0x8]
      %v2687 = vld [vmem:[%s2218 + $0x1c] sm:$0x1]
      %v2697 = vunpack.c.l.s4 1983009808
      %v2698 = vunpack.c.0.s8 %v2697
      %v2699 = vlaneseq
      %v2700 = vshrl.u32 %v2699, 7
      %v2701 = vsub.s32 %v2698, %v2700
      %v2702 = vrot.slane %v2680, %v2701
      %v2703 = vcombine.high %v2702, %v2702
      %v2705 = vunpack.c.l.s4 1983009808
      %v2706 = vunpack.c.0.s8 %v2705
      %v2707 = vlaneseq
      %v2708 = vshrl.u32 %v2707, 7
      %v2709 = vsub.s32 %v2706, %v2708
      %v2710 = vrot.slane %v2681, %v2709
      %v2712 = vunpack.c.l.s4 1983009808
      %v2713 = vunpack.c.0.s8 %v2712
      %v2714 = vlaneseq
      %v2715 = vshrl.u32 %v2714, 7
      %v2716 = vsub.s32 %v2713, %v2715
      %v2717 = vrot.slane %v2682, %v2716
      %v2718 = vcombine.high %v2717, %v2717
      %v2720 = vunpack.c.l.s4 1983009808
      %v2721 = vunpack.c.0.s8 %v2720
      %v2722 = vlaneseq
      %v2723 = vshrl.u32 %v2722, 7
      %v2724 = vsub.s32 %v2721, %v2723
      %v2725 = vrot.slane %v2683, %v2724
      %v2727 = vunpack.c.l.s4 1983009808
      %v2728 = vunpack.c.0.s8 %v2727
      %v2729 = vlaneseq
      %v2730 = vshrl.u32 %v2729, 7
      %v2731 = vsub.s32 %v2728, %v2730
      %v2732 = vrot.slane %v2684, %v2731
      %v2733 = vcombine.high %v2732, %v2732
      %v2735 = vunpack.c.l.s4 1983009808
      %v2736 = vunpack.c.0.s8 %v2735
      %v2737 = vlaneseq
      %v2738 = vshrl.u32 %v2737, 7
      %v2739 = vsub.s32 %v2736, %v2738
      %v2740 = vrot.slane %v2685, %v2739
      %v2742 = vunpack.c.l.s4 1983009808
      %v2743 = vunpack.c.0.s8 %v2742
      %v2744 = vlaneseq
      %v2745 = vshrl.u32 %v2744, 7
      %v2746 = vsub.s32 %v2743, %v2745
      %v2747 = vrot.slane %v2686, %v2746
      %v2748 = vcombine.high %v2747, %v2747
      %v2750 = vunpack.c.l.s4 1983009808
      %v2751 = vunpack.c.0.s8 %v2750
      %v2752 = vlaneseq
      %v2753 = vshrl.u32 %v2752, 7
      %v2754 = vsub.s32 %v2751, %v2753
      %v2755 = vrot.slane %v2687, %v2754
      %v2756 = vrot.slane %v2703, 7
      %v2757 = vrot.slane %v2756, 2
      %v2758 = vrot.slane %v2710, 7
      %v2759 = vsel %vm868, %v2757, %v2758
      %v2760 = vrot.slane %v2718, 7
      %v2761 = vrot.slane %v2760, 2
      %v2762 = vrot.slane %v2725, 7
      %v2763 = vsel %vm868, %v2761, %v2762
      %v2764 = vrot.slane %v2733, 7
      %v2765 = vrot.slane %v2764, 2
      %v2766 = vrot.slane %v2740, 7
      %v2767 = vsel %vm868, %v2765, %v2766
      %v2768 = vrot.slane %v2748, 7
      %v2769 = vrot.slane %v2768, 2
      %v2770 = vrot.slane %v2755, 7
      %v2771 = vsel %vm868, %v2769, %v2770
      %s2772 = sadd.s32 %s321, 15
      %s2773 = smul.u32 %s2772, 2
      %s2774 = smul.addr %s2773, 4
      %s2775 = scalar_lea.vmem %s1, %s2774
      %v2776 = vld [vmem:[%s2775] sm:$0xf]
      %v2777 = vld [vmem:[%s2775 + $0x4] sm:$0xf]
      %v2778 = vcombine.low %v2759, %v2763
      %v2779 = vcombine.low %v2767, %v2771
      %v2781 = vunpack.c.l.s4 1983009808
      %v2782 = vunpack.c.0.s8 %v2781
      %v2783 = vlaneseq
      %v2784 = vshrl.u32 %v2783, 7
      %v2785 = vsub.s32 %v2782, %v2784
      %v2786 = vrot.slane %v2778, %v2785
      %v2788 = vunpack.c.l.s4 1983009808
      %v2789 = vunpack.c.0.s8 %v2788
      %v2790 = vlaneseq
      %v2791 = vshrl.u32 %v2790, 7
      %v2792 = vsub.s32 %v2789, %v2791
      %v2793 = vrot.slane %v2779, %v2792
      %v2794 = vcombine.low %v2786, %v2793
      %v2797 = vunpack.c.l.b16 %v2776
      %v2798 = vunpack.c.l.b16 %v2777
      %v2799 = vpack.c.b16 %v2798, %v2797
      %v2802 = vsel %vm354, %v2794, 0
      %2804 = vmatprep.subr.bf16.mxu0 0
      %2805 = vmatpush1.bf16.msra.mxu0 0
      %2806 = vmatprep.subr.bf16.mxu0 0
      %2807 = vmatpush1.bf16.msra.mxu0 0
      %2808 = vmatprep.subr.bf16.mxu0 0
      %2809 = vmatpush1.bf16.msra.mxu0 0
      %2810 = vmatprep.subr.bf16.mxu0 0
      %2811 = vmatpush1.bf16.msra.mxu0 0
      %2812 = vmatprep.subr.bf16.mxu0 0
      %2813 = vmatpush1.bf16.msra.mxu0 0
      %2814 = vmatprep.subr.bf16.mxu0 0
      %2815 = vmatpush1.bf16.msra.mxu0 0
      %2816 = vmatprep.subr.bf16.mxu0 0
      %2817 = vmatpush1.bf16.msra.mxu0 0
      %2818 = vmatprep.subr.bf16.mxu0 0
      %2819 = vmatpush1.bf16.msra.mxu0 %v2799
      %2820 = vmatprep.subr.bf16.mxu0 0
      %2821 = vmatpush2.bf16.msra.mxu0 0
      %2822 = vmatprep.subr.bf16.mxu0 0
      %2823 = vmatpush2.bf16.msra.mxu0 0
      %2824 = vmatprep.subr.bf16.mxu0 0
      %2825 = vmatpush2.bf16.msra.mxu0 0
      %2826 = vmatprep.subr.bf16.mxu0 0
      %2827 = vmatpush2.bf16.msra.mxu0 0
      %2828 = vmatprep.subr.bf16.mxu0 0
      %2829 = vmatpush2.bf16.msra.mxu0 0
      %2830 = vmatprep.subr.bf16.mxu0 0
      %2831 = vmatpush2.bf16.msra.mxu0 0
      %2832 = vmatprep.subr.bf16.mxu0 0
      %2833 = vmatpush2.bf16.msra.mxu0 0
      %2834 = vmatprep.subr.bf16.mxu0 0
      %2835 = vmatpush2.bf16.msra.mxu0 0
      %2836 = vmatprep.mubr.bf16.mxu0 0
      %2837 = vmatmul.mubr.bf16.gmra.mxu0 %v2802
      %v2838 = vpop.f32.mrf.mxu0
      %v2839 = vadd.f32 0.0, %v2838
      %v2840 = vpop.f32.mrf.mxu0
      %v2841 = vpop.f32.mrf.mxu0
      %v2842 = vadd.f32 0.0, %v2841
      %v2843 = vpop.f32.mrf.mxu0
      %2844 = vdwg.mxu0
      %v2845 = vadd.f32 %v2678, %v2839
      %v2846 = vadd.f32 %v2679, %v2842
      %vm2847 = vcmask 261120
      %2848 = vst.msk [vmem:[#allocation2] sm:$0xff] %vm2847, %v2845
      %2849 = vst.msk [vmem:[#allocation2 + $0x8] sm:$0xff] %vm2847, %v2846
      %p2850 = scmp.eq.s32.totalorder %s24, 3
      // Predicated region
      $region41: #{encoder_forward.6} parent=31 // pred_check
        %p2851 = pneg %p2850
      $region42: #{encoder_forward.6} parent=31 // pred_check_branch
        %2853 = sbr.rel (%p2851) target = $region44
      $region43: #{encoder_forward.6} parent=31 // pred_region
        %v2854 = vld [vmem:[#allocation2] sm:$0xff]
        %v2855 = vld [vmem:[#allocation2 + $0x8] sm:$0xff]
        %v2856 = vld [vmem:[%s2] sm:$0x1]
        %v2858 = vlaneseq
        %v2859 = vshrl.u32 %v2858, 7
        %v2860 = vsub.s32 0, %v2859
        %v2861 = vrot.slane %v2856, %v2860
        %v2863 = vadd.f32 %v2854, %v2861
        %v2864 = vadd.f32 %v2855, %v2861
        %v2865 = vpack.c.bf16 %v2864, %v2863
        %v2867 = vunpack.c.l.b16 %v2865
        %v2868 = vunpack.c.h.b16 %v2865
        %v2869 = vpack.c.b16 %v2867, %v2867
        %v2870 = vpack.c.b16 %v2868, %v2868
        %vm2873 = vcmask 257024
        %2874 = vst.msk [vmem:[%s292] sm:$0xf] %vm2873, %v2869
        %2875 = vst.msk [vmem:[%s292 + $0x4] sm:$0xf] %vm2873, %v2870
        %v2876 = vld [vmem:[%s295] sm:$0x1]
        %v2877 = vsel %vm2847, %v2863, 0.0
        %v2878 = vsel %vm2847, %v2864, 0.0
        %v2879 = vadd.f32 %v2877, %v2878
        %v2880 = vrot.slane %v2879, 4
        %v2881 = vadd.f32 %v2879, %v2880
        %v2882 = vrot.slane %v2881, 2
        %v2883 = vadd.f32 %v2881, %v2882
        %v2884 = vrot.slane %v2883, 1
        %v2885 = vadd.f32 %v2883, %v2884
        %v2886 = vadd.f32 %v2876, %v2885
        %vm2887 = vcmask 253952
        %2888 = vst.msk [vmem:[%s295] sm:$0x1] %vm2887, %v2886
        %v2889 = vld [vmem:[%s298] sm:$0x1]
        %v2890 = vmul.f32 %v2863, %v2863
        %v2891 = vmul.f32 %v2864, %v2864
        %v2892 = vsel %vm2847, %v2890, 0.0
        %v2893 = vsel %vm2847, %v2891, 0.0
        %v2894 = vadd.f32 %v2892, %v2893
        %v2895 = vrot.slane %v2894, 4
        %v2896 = vadd.f32 %v2894, %v2895
        %v2897 = vrot.slane %v2896, 2
        %v2898 = vadd.f32 %v2896, %v2897
        %v2899 = vrot.slane %v2898, 1
        %v2900 = vadd.f32 %v2898, %v2899
        %v2901 = vadd.f32 %v2889, %v2900
        %2902 = vst.msk [vmem:[%s298] sm:$0x1] %vm2887, %v2901
      $region44: #{encoder_forward.6} parent=31 // pred_fallthru
        _
      %p2903 = scmp.lt.s32.totalorder %s22, 1
      %s2904 = scalar_select %p2903, %s22, 1
      %p2905 = scmp.lt.s32.totalorder %s23, 1
      %s2906 = scalar_select %p2905, %s23, 1
      %s2907 = smul.addr %s2906, 2
      %s2908 = smul.addr %s2904, 4
      %s2909 = sadd.s32 %s2907, %s2908
      %s2910 = smul.addr %s2909, 4
      %s2911 = scalar_lea.vmem %s3, %s2910
      %p2912 = scmp.lt.s32.totalorder %s22, 1
      %s2913 = scalar_select %p2912, %s22, 1
      %s2914 = scalar_lea.vmem %s4, %s2913
      %p2915 = scmp.lt.s32.totalorder %s22, 1
      %s2916 = scalar_select %p2915, %s22, 1
      %s2917 = scalar_lea.vmem %s5, %s2916
      // Predicated region
      $region45: #{encoder_forward.6} parent=31 // pred_check
        %p2918 = pneg %p130
      $region46: #{encoder_forward.6} parent=31 // pred_check_branch
        %2920 = sbr.rel (%p2918) target = $region48
      $region47: #{encoder_forward.6} parent=31 // pred_region
        _
      $region48: #{encoder_forward.6} parent=31 // pred_fallthru
        _
      // Predicated region
      $region49: #{encoder_forward.6} parent=31 // pred_check
        %p2921 = pneg %p156
      $region50: #{encoder_forward.6} parent=31 // pred_check_branch
        %2923 = sbr.rel (%p2921) target = $region52
      $region51: #{encoder_forward.6} parent=31 // pred_region
        _
      $region52: #{encoder_forward.6} parent=31 // pred_fallthru
        _
      // Predicated region
      $region53: #{encoder_forward.6} parent=31 // pred_check
        %p2924 = pneg %p182
      $region54: #{encoder_forward.6} parent=31 // pred_check_branch
        %2926 = sbr.rel (%p2924) target = $region56
      $region55: #{encoder_forward.6} parent=31 // pred_region
        _
      $region56: #{encoder_forward.6} parent=31 // pred_fallthru
        _
    $region32: #{encoder_forward.6} parent=5 // pred_fallthru
      _
    %p2927 = scmp.le.s32.totalorder 2, %s12
    // Predicated region
    $region57: #{encoder_forward.6} parent=5 // pred_check
      %p2928 = pneg %p2927
    $region58: #{encoder_forward.6} parent=5 // pred_check_branch
      %2930 = sbr.rel (%p2928) target = $region60
    $region59: #{encoder_forward.6} parent=5 // pred_region
      %s2931 = ssub.s32 %s12, 2
      // Predicated region
      $region61: #{encoder_forward.6} parent=59 // pred_check
        %p2932 = pneg %p136
      $region62: #{encoder_forward.6} parent=59 // pred_check_branch
        %2934 = sbr.rel (%p2932) target = $region64
      $region63: #{encoder_forward.6} parent=59 // pred_region
        %p2935 = scmp.lt.s32.totalorder %s25, 1
        %s2936 = scalar_select %p2935, %s25, 1
        %p2937 = scmp.lt.s32.totalorder %s26, 1
        %s2938 = scalar_select %p2937, %s26, 1
        %s2939 = smul.addr %s2938, 2
        %s2940 = smul.addr %s2936, 4
        %s2941 = sadd.s32 %s2939, %s2940
        %s2942 = smul.addr %s2941, 4
        %s2943 = scalar_lea.vmem %s3, %s2942
      $region64: #{encoder_forward.6} parent=59 // pred_fallthru
        _
      // Predicated region
      $region65: #{encoder_forward.6} parent=59 // pred_check
        %p2944 = pneg %p162
      $region66: #{encoder_forward.6} parent=59 // pred_check_branch
        %2946 = sbr.rel (%p2944) target = $region68
      $region67: #{encoder_forward.6} parent=59 // pred_region
        %p2947 = scmp.lt.s32.totalorder %s25, 1
        %s2948 = scalar_select %p2947, %s25, 1
        %s2949 = scalar_lea.vmem %s4, %s2948
      $region68: #{encoder_forward.6} parent=59 // pred_fallthru
        _
      // Predicated region
      $region69: #{encoder_forward.6} parent=59 // pred_check
        %p2950 = pneg %p188
      $region70: #{encoder_forward.6} parent=59 // pred_check_branch
        %2952 = sbr.rel (%p2950) target = $region72
      $region71: #{encoder_forward.6} parent=59 // pred_region
        %p2953 = scmp.lt.s32.totalorder %s25, 1
        %s2954 = scalar_select %p2953, %s25, 1
        %s2955 = scalar_lea.vmem %s5, %s2954
      $region72: #{encoder_forward.6} parent=59 // pred_fallthru
        _
    $region60: #{encoder_forward.6} parent=5 // pred_fallthru
      _
  $region6: #{encoder_forward.6} parent=0 // loop_footer
    %s16 = sadd.s32 1, %s12
  $region7: #{encoder_forward.6} parent=0 // loop_footer_branch
    %11 = sbr.rel target = $region3
  $region8: #{encoder_forward.6} parent=0 // loop_exit
    _

// kernel: encoder_forward.9
$region0: #{encoder_forward.9}
  #allocation0 [shape = 'u32[]', space=smem, size = 0x4, offset = 0x4, fixed_abs, tag = 'smem constant byte address 0x4 - core index']
  #allocation1 [shape = 'u32[144,128]{1,0:T(1,128)}', space=vmem, size = 0x12000, scoped, tag = 'internal scratch']
  %s0 = inlined_call_operand.vmem [shape: bf16[2,32,32], index: 0, kind: input, shape index: {}]
  %s1 = inlined_call_operand.vmem [shape: f32[2,1,32], index: 1, kind: input, shape index: {}]
  %s2 = inlined_call_operand.vmem [shape: f32[2,1,32], index: 2, kind: input, shape index: {}]
  %s3 = inlined_call_operand.hbm [shape: f32[2,32,32], index: 3, kind: output, shape index: {}]
  %s4 = sld [smem:[#allocation0]]
  $region45: #{encoder_forward.9} parent=0
    _
  %s6 = ssub.s32 1, %s4
  %s7 = scalar_select 0, %s6, %s4
  $region1: #{encoder_forward.9} parent=0
    #allocation2 [shape = 'u8[32768]{0}', space=vmem, size = 0x8000, scoped, tag = 'output window, operand 0']
    #allocation3 [shape = 's32[2]{0}', space=sflag, size = 0x8, scoped, tag = 'scoped memory for encoder_forward.9']
    %8 = vsyncpa [#allocation3], 0
    %s9 = scalar_lea.sflag [#allocation3], 1
    %10 = vsyncpa %s9, 0
    loop: start=0, step=1, limit=4
    $region2: #{encoder_forward.9} parent=1 // loop_pre_header
      _
    $region3: #{encoder_forward.9} parent=1 // loop_header
      %s12 = sphi 0, %s16
      %p13 = scmp.ge.s32.totalorder %s12, 4
      %s19 = sphi 0, %s31
      %s20 = sphi 0, %s27
      %s21 = sphi 0, %s19
      %s22 = sphi 0, %s20
      %s23 = sphi 0, %s21
      %s24 = sphi 0, %s22
      %s36 = sphi 0, %s38
      %s39 = sphi 0, %s36
      %s40 = sphi 0, %s39
      %s56 = sphi 0, %s40
      %s62 = sphi 0, %s64
      %s65 = sphi 0, %s62
      %s66 = sphi 0, %s65
      %s82 = sphi 0, %s66
      %s88 = sphi 0, %s90
      %s91 = sphi 0, %s88
      %s92 = sphi 0, %s91
      %s108 = sphi 0, %s92
      %s116 = sphi 0, %s118
      %s119 = sphi 0, %s116
      %s120 = sphi 0, %s119
      %s136 = sphi 0, %s120
    $region4: #{encoder_forward.9} parent=1 // loop_header_branch
      %15 = sbr.rel (%p13) target = $region8
    $region5: #{encoder_forward.9} parent=1 // loop_body
      %s17 = ssub.s32 %s12, 1
      %s18 = ssub.s32 %s12, 2
      %s25 = sadd.s32 1, %s20
      %p26 = scmp.ge.s32.totalorder %s25, 1
      %s27 = scalar_select %p26, 0, %s25
      %s28 = sadd.s32 1, %s19
      %s29 = scalar_select %p26, %s28, %s19
      %p30 = scmp.ge.s32.totalorder %s29, 2
      %s31 = scalar_select %p30, 0, %s29
      %s32 = ssub.s32 %s19, %s31
      %s33 = ssub.s32 %s20, %s27
      %s34 = sor.u32 %s32, %s33
      %p35 = scmp.eq.s32.totalorder %s34, 0
      %s37 = sadd.s32 %s36, 1
      %s38 = scalar_select %p35, %s36, %s37
      %p41 = pneg %p35
      %p42 = scmp.eq.s32.totalorder %s12, 1
      %p43 = por %p41, %p42
      %p44 = scmp.ne.s32.totalorder %s36, %s39
      %p45 = scmp.eq.s32.totalorder %s12, 0
      %p46 = por %p44, %p45
      %p47 = scmp.ne.s32.totalorder %s36, %s39
      %p48 = scmp.eq.s32.totalorder %s17, 1
      %p49 = por %p47, %p48
      %p50 = scmp.ne.s32.totalorder %s39, %s40
      %p51 = scmp.eq.s32.totalorder %s17, 0
      %p52 = por %p50, %p51
      %p53 = scmp.ne.s32.totalorder %s39, %s40
      %p54 = scmp.eq.s32.totalorder %s18, 1
      %p55 = por %p53, %p54
      %p57 = scmp.ne.s32.totalorder %s40, %s56
      %p58 = scmp.eq.s32.totalorder %s18, 0
      %p59 = por %p57, %p58
      %s60 = ssub.s32 %s19, %s31
      %p61 = scmp.eq.s32.totalorder %s60, 0
      %s63 = sadd.s32 %s62, 1
      %s64 = scalar_select %p61, %s62, %s63
      %p67 = pneg %p61
      %p68 = scmp.eq.s32.totalorder %s12, 1
      %p69 = por %p67, %p68
      %p70 = scmp.ne.s32.totalorder %s62, %s65
      %p71 = scmp.eq.s32.totalorder %s12, 0
      %p72 = por %p70, %p71
      %p73 = scmp.ne.s32.totalorder %s62, %s65
      %p74 = scmp.eq.s32.totalorder %s17, 1
      %p75 = por %p73, %p74
      %p76 = scmp.ne.s32.totalorder %s65, %s66
      %p77 = scmp.eq.s32.totalorder %s17, 0
      %p78 = por %p76, %p77
      %p79 = scmp.ne.s32.totalorder %s65, %s66
      %p80 = scmp.eq.s32.totalorder %s18, 1
      %p81 = por %p79, %p80
      %p83 = scmp.ne.s32.totalorder %s66, %s82
      %p84 = scmp.eq.s32.totalorder %s18, 0
      %p85 = por %p83, %p84
      %s86 = ssub.s32 %s19, %s31
      %p87 = scmp.eq.s32.totalorder %s86, 0
      %s89 = sadd.s32 %s88, 1
      %s90 = scalar_select %p87, %s88, %s89
      %p93 = pneg %p87
      %p94 = scmp.eq.s32.totalorder %s12, 1
      %p95 = por %p93, %p94
      %p96 = scmp.ne.s32.totalorder %s88, %s91
      %p97 = scmp.eq.s32.totalorder %s12, 0
      %p98 = por %p96, %p97
      %p99 = scmp.ne.s32.totalorder %s88, %s91
      %p100 = scmp.eq.s32.totalorder %s17, 1
      %p101 = por %p99, %p100
      %p102 = scmp.ne.s32.totalorder %s91, %s92
      %p103 = scmp.eq.s32.totalorder %s17, 0
      %p104 = por %p102, %p103
      %p105 = scmp.ne.s32.totalorder %s91, %s92
      %p106 = scmp.eq.s32.totalorder %s18, 1
      %p107 = por %p105, %p106
      %p109 = scmp.ne.s32.totalorder %s92, %s108
      %p110 = scmp.eq.s32.totalorder %s18, 0
      %p111 = por %p109, %p110
      %s112 = ssub.s32 %s19, %s31
      %s113 = ssub.s32 %s20, %s27
      %s114 = sor.u32 %s112, %s113
      %p115 = scmp.eq.s32.totalorder %s114, 0
      %s117 = sadd.s32 %s116, 1
      %s118 = scalar_select %p115, %s116, %s117
      %p121 = pneg %p115
      %p122 = scmp.eq.s32.totalorder %s12, 1
      %p123 = por %p121, %p122
      %p124 = scmp.ne.s32.totalorder %s116, %s119
      %p125 = scmp.eq.s32.totalorder %s12, 0
      %p126 = por %p124, %p125
      %p127 = scmp.ne.s32.totalorder %s116, %s119
      %p128 = scmp.eq.s32.totalorder %s17, 1
      %p129 = por %p127, %p128
      %p130 = scmp.ne.s32.totalorder %s119, %s120
      %p131 = scmp.eq.s32.totalorder %s17, 0
      %p132 = por %p130, %p131
      %p133 = scmp.ne.s32.totalorder %s119, %s120
      %p134 = scmp.eq.s32.totalorder %s18, 1
      %p135 = por %p133, %p134
      %p137 = scmp.ne.s32.totalorder %s120, %s136
      %p138 = scmp.eq.s32.totalorder %s18, 0
      %p139 = por %p137, %p138
      %p140 = scmp.le.s32.totalorder 1, %s12
      %p141 = scmp.lt.s32.totalorder %s12, 3
      %p142 = pnand %p140, %p141
      %p143 = pneg %p142
      // Predicated region
      $region9: #{encoder_forward.9} parent=5 // pred_check
        _
      $region10: #{encoder_forward.9} parent=5 // pred_check_branch
        %145 = sbr.rel (%p142) target = $region12
      $region11: #{encoder_forward.9} parent=5 // pred_region
        %s146 = ssub.s32 %s12, 1
      $region12: #{encoder_forward.9} parent=5 // pred_fallthru
        _
      %p147 = scmp.lt.s32.totalorder %s12, 2
      // Predicated region
      $region13: #{encoder_forward.9} parent=5 // pred_check
        %p148 = pneg %p147
      $region14: #{encoder_forward.9} parent=5 // pred_check_branch
        %150 = sbr.rel (%p148) target = $region16
      $region15: #{encoder_forward.9} parent=5 // pred_region
        // Predicated region
        $region17: #{encoder_forward.9} parent=15 // pred_check
          %p151 = pneg %p46
        $region18: #{encoder_forward.9} parent=15 // pred_check_branch
          %153 = sbr.rel (%p151) target = $region20
        $region19: #{encoder_forward.9} parent=15 // pred_region
          %s154 = smul.u32 4, %s20
          %p155 = scmp.lt.s32.totalorder %s19, 1
          %s156 = scalar_select %p155, %s19, 1
          %p157 = scmp.lt.s32.totalorder %s154, 3
          %s158 = scalar_select %p157, %s154, 3
          %s159 = smul.addr %s156, 4
          %s160 = sadd.s32 %s158, %s159
          %s161 = smul.addr %s160, 4
          %s162 = scalar_lea.vmem %s0, %s161
          %s163 = smul.u32 4, %s20
        $region20: #{encoder_forward.9} parent=15 // pred_fallthru
          _
        // Predicated region
        $region21: #{encoder_forward.9} parent=15 // pred_check
          %p164 = pneg %p72
        $region22: #{encoder_forward.9} parent=15 // pred_check_branch
          %166 = sbr.rel (%p164) target = $region24
        $region23: #{encoder_forward.9} parent=15 // pred_region
          %p167 = scmp.lt.s32.totalorder %s19, 1
          %s168 = scalar_select %p167, %s19, 1
          %s169 = scalar_lea.vmem %s1, %s168
        $region24: #{encoder_forward.9} parent=15 // pred_fallthru
          _
        // Predicated region
        $region25: #{encoder_forward.9} parent=15 // pred_check
          %p170 = pneg %p98
        $region26: #{encoder_forward.9} parent=15 // pred_check_branch
          %172 = sbr.rel (%p170) target = $region28
        $region27: #{encoder_forward.9} parent=15 // pred_region
          %p173 = scmp.lt.s32.totalorder %s19, 1
          %s174 = scalar_select %p173, %s19, 1
          %s175 = scalar_lea.vmem %s2, %s174
        $region28: #{encoder_forward.9} parent=15 // pred_fallthru
          _
      $region16: #{encoder_forward.9} parent=5 // pred_fallthru
        _
      %p176 = scmp.le.s32.totalorder 1, %s12
      %p177 = scmp.lt.s32.totalorder %s12, 3
      %p178 = pnand %p176, %p177
      %p179 = pneg %p178
      // Predicated region
      $region29: #{encoder_forward.9} parent=5 // pred_check
        _
      $region30: #{encoder_forward.9} parent=5 // pred_check_branch
        %181 = sbr.rel (%p178) target = $region32
      $region31: #{encoder_forward.9} parent=5 // pred_region
        %s182 = ssub.s32 %s12, 1
        %s183 = smul.u32 4, %s22
        %p184 = scmp.lt.s32.totalorder %s21, 1
        %s185 = scalar_select %p184, %s21, 1
        %p186 = scmp.lt.s32.totalorder %s183, 3
        %s187 = scalar_select %p186, %s183, 3
        %s188 = smul.addr %s185, 4
        %s189 = sadd.s32 %s187, %s188
        %s190 = smul.addr %s189, 4
        %s191 = scalar_lea.vmem %s0, %s190
        %p192 = pneg %p52
        %p193 = pneg %p49
        %p194 = scmp.lt.s32.totalorder %s21, 1
        %s195 = scalar_select %p194, %s21, 1
        %s196 = scalar_lea.vmem %s1, %s195
        %p197 = pneg %p78
        %p198 = pneg %p75
        %p199 = scmp.lt.s32.totalorder %s21, 1
        %s200 = scalar_select %p199, %s21, 1
        %s201 = scalar_lea.vmem %s2, %s200
        %p202 = pneg %p104
        %p203 = pneg %p101
        %p204 = pneg %p132
        %p205 = pneg %p129
        %s206 = sand.u32 %s119, 1
        %s207 = scalar_lea.sflag [#allocation3], %s206
        %s208 = sand.u32 %s119, 1
        %s209 = smul.addr %s208, 32
        %s210 = scalar_lea.vmem [#allocation2], %s209
        %s211 = smul.u32 4, %s22
        %p212 = scmp.lt.s32.totalorder %s21, 1
        %s213 = scalar_select %p212, %s21, 1
        %p214 = scmp.lt.s32.totalorder %s211, 3
        %s215 = scalar_select %p214, %s211, 3
        %s216 = smul.addr %s213, 4
        %s217 = sadd.s32 %s215, %s216
        %s218 = smul.addr %s217, 4
        %s219 = scalar_lea.vmem %s0, %s218
        %s220 = smul.u32 4, %s22
        %p221 = scmp.lt.s32.totalorder %s21, 1
        %s222 = scalar_select %p221, %s21, 1
        %s223 = scalar_lea.vmem %s1, %s222
        %p224 = scmp.lt.s32.totalorder %s21, 1
        %s225 = scalar_select %p224, %s21, 1
        %s226 = scalar_lea.vmem %s2, %s225
        %s227 = smul.u32 4, %s22
        %v228 = vld [vmem:[%s219] sm:$0xf]
        %v229 = vld [vmem:[%s219 + $0x4] sm:$0xf]
        %v230 = vld [vmem:[%s219 + $0x8] sm:$0xf]
        %v231 = vld [vmem:[%s219 + $0xc] sm:$0xf]
        %v232 = vunpack.c.l.bf16 %v228
        %v233 = vunpack.c.l.bf16 %v229
        %v234 = vunpack.c.l.bf16 %v230
        %v235 = vunpack.c.l.bf16 %v231
        %v236 = vld [vmem:[%s223] sm:$0x1]
        %v238 = vlaneseq
        %v239 = vshrl.u32 %v238, 7
        %v240 = vsub.s32 0, %v239
        %v241 = vrot.slane %v236, %v240
        %v243 = vmul.f32 %v232, %v241
        %v244 = vmul.f32 %v233, %v241
        %v245 = vmul.f32 %v234, %v241
        %v246 = vmul.f32 %v235, %v241
        %v247 = vld [vmem:[%s226] sm:$0x1]
        %v249 = vlaneseq
        %v250 = vshrl.u32 %v249, 7
        %v251 = vsub.s32 0, %v250
        %v252 = vrot.slane %v247, %v251
        %v254 = vadd.f32 %v243, %v252
        %v255 = vadd.f32 %v244, %v252
        %v256 = vadd.f32 %v245, %v252
        %v257 = vadd.f32 %v246, %v252
        %v258 = vxor.u32 %v254, 2147483648
        %v259 = vxor.u32 %v255, 2147483648
        %v260 = vxor.u32 %v256, 2147483648
        %v261 = vxor.u32 %v257, 2147483648
        %v262 = vmul.f32 %v258, 1.442695
        %v263 = vpow.pop %v262
        %v264 = vmul.f32 %v259, 1.442695
        %v265 = vpow.pop %v264
        %v266 = vmul.f32 %v260, 1.442695
        %v267 = vpow.pop %v266
        %v268 = vmul.f32 %v261, 1.442695
        %v269 = vpow.pop %v268
        %v270 = vadd.f32 %v263, 1.0
        %v271 = vadd.f32 %v265, 1.0
        %v272 = vadd.f32 %v267, 1.0
        %v273 = vadd.f32 %v269, 1.0
        %v274 = vrcp.pop %v270
        %v275 = vmul.f32 1.0, %v274
        %v276 = vrcp.pop %v271
        %v277 = vmul.f32 1.0, %v276
        %v278 = vrcp.pop %v272
        %v279 = vmul.f32 1.0, %v278
        %v280 = vrcp.pop %v273
        %v281 = vmul.f32 1.0, %v280
        %v282 = vmul.f32 %v254, %v275
        %v283 = vmul.f32 %v255, %v277
        %v284 = vmul.f32 %v256, %v279
        %v285 = vmul.f32 %v257, %v281
        %vm286 = vcmask 261120
        %287 = vst.msk [vmem:[%s210] sm:$0xff] %vm286, %v282
        %288 = vst.msk [vmem:[%s210 + $0x8] sm:$0xff] %vm286, %v283
        %289 = vst.msk [vmem:[%s210 + $0x10] sm:$0xff] %vm286, %v284
        %290 = vst.msk [vmem:[%s210 + $0x18] sm:$0xff] %vm286, %v285
        %s291 = sand.u32 %s119, 1
        %s292 = scalar_lea.sflag [#allocation3], %s291
        %s293 = sand.u32 %s119, 1
        %s294 = smul.addr %s293, 32
        %s295 = scalar_lea.vmem [#allocation2], %s294
        // Predicated region
        $region33: #{encoder_forward.9} parent=31 // pred_check
          %p296 = pneg %p129
        $region34: #{encoder_forward.9} parent=31 // pred_check_branch
          %298 = sbr.rel (%p296) target = $region36
        $region35: #{encoder_forward.9} parent=31 // pred_region
          %s299 = smul.u32 4, %s22
          %s301 = ssub.s32 512, 512
          %302 = vsyncadd %s292, %s301
          %s303 = smul.addr %s21, 4
          %s304 = sadd.s32 %s299, %s303
          %s305 = smul.addr %s304, 128
          %s306 = scalar_lea.hbm %s3, %s305
          %s307 = sshll.u32 %s295, 4
          %s308 = int_to_ptr.vmem [resolvable:$true] %s307
          %313 = dma.vmem_to_hbm [thread:$0]  %s308, 512, %s306, %s292, 128, 128, 8
        $region36: #{encoder_forward.9} parent=31 // pred_fallthru
          _
      $region32: #{encoder_forward.9} parent=5 // pred_fallthru
        _
      %p314 = scmp.le.s32.totalorder 2, %s12
      // Predicated region
      $region37: #{encoder_forward.9} parent=5 // pred_check
        %p315 = pneg %p314
      $region38: #{encoder_forward.9} parent=5 // pred_check_branch
        %317 = sbr.rel (%p315) target = $region40
      $region39: #{encoder_forward.9} parent=5 // pred_region
        %s318 = ssub.s32 %s12, 2
        // Predicated region
        $region41: #{encoder_forward.9} parent=39 // pred_check
          %p319 = pneg %p135
        $region42: #{encoder_forward.9} parent=39 // pred_check_branch
          %321 = sbr.rel (%p319) target = $region44
        $region43: #{encoder_forward.9} parent=39 // pred_region
          %s322 = sand.u32 %s120, 1
          %s323 = scalar_lea.sflag [#allocation3], %s322
          %s324 = sand.u32 %s120, 1
          %s325 = smul.addr %s324, 32
          %s326 = scalar_lea.vmem [#allocation2], %s325
          %327 = dma.done %s323, 512
        $region44: #{encoder_forward.9} parent=39 // pred_fallthru
          _
      $region40: #{encoder_forward.9} parent=5 // pred_fallthru
        _
    $region6: #{encoder_forward.9} parent=1 // loop_footer
      %s16 = sadd.s32 1, %s12
    $region7: #{encoder_forward.9} parent=1 // loop_footer_branch
      %11 = sbr.rel target = $region3
    $region8: #{encoder_forward.9} parent=1 // loop_exit
      _
    %328 = vsyncpa [#allocation3], 1
    %s329 = scalar_lea.sflag [#allocation3], 1
    %330 = vsyncpa %s329, 1

// kernel: encoder_forward.8
$region0: #{encoder_forward.8}
  #allocation0 [shape = 'u32[]', space=smem, size = 0x4, offset = 0x4, fixed_abs, tag = 'smem constant byte address 0x4 - core index']
  #allocation1 [shape = 'u32[144,128]{1,0:T(1,128)}', space=vmem, size = 0x12000, scoped, tag = 'internal scratch']
  #allocation2 [shape = 'f32[16,32]{1,0:T(8,128)}', space=vmem, size = 0x2000, scoped, tag = 'scratch operand']
  #allocation3 [shape = 'bf16[6,6,32]{2,1,0:T(8,128)(2,1)}', space=vmem, size = 0x3000, scoped, tag = 'scratch operand']
  %s0 = inlined_call_operand.vmem [shape: bf16[2,4,6,6,32], index: 0, kind: input, shape index: {}]
  %s1 = inlined_call_operand.vmem [shape: bf16[27,32,32], index: 1, kind: input, shape index: {}]
  %s2 = inlined_call_operand.vmem [shape: f32[1,32], index: 2, kind: input, shape index: {}]
  %s3 = inlined_call_operand.vmem [shape: f32[2,1,32], index: 3, kind: input, shape index: {}]
  %s4 = inlined_call_operand.vmem [shape: f32[2,1,32], index: 4, kind: input, shape index: {}]
  %s5 = inlined_call_operand.vmem [shape: bf16[2,2,16,32], index: 5, kind: input, shape index: {}]
  %s6 = inlined_call_operand.vmem [shape: bf16[2,2,16,32], index: 6, kind: output, shape index: {0}]
  %s7 = inlined_call_operand.vmem [shape: f32[2,1,32], index: 7, kind: output, shape index: {1}]
  %s8 = inlined_call_operand.vmem [shape: f32[2,1,32], index: 8, kind: output, shape index: {2}]
  %9 = xla_tuple %s6, %s7, %s8
  %s10 = sld [smem:[#allocation0]]
  $region85: #{encoder_forward.8} parent=0
    _
  %s12 = ssub.s32 1, %s10
  %s13 = scalar_select 0, %s12, %s10
  loop: start=0, step=1, limit=14
  $region2: #{encoder_forward.8} parent=0 // loop_pre_header
    _
  $region3: #{encoder_forward.8} parent=0 // loop_header
    %s15 = sphi 0, %s19
    %p16 = scmp.ge.s32.totalorder %s15, 14
    %s22 = sphi 0, %s41
    %s23 = sphi 0, %s37
    %s24 = sphi 0, %s33
    %s25 = sphi 0, %s22
    %s26 = sphi 0, %s23
    %s27 = sphi 0, %s24
    %s28 = sphi 0, %s25
    %s29 = sphi 0, %s26
    %s30 = sphi 0, %s27
    %s48 = sphi 0, %s50
    %s51 = sphi 0, %s48
    %s52 = sphi 0, %s51
    %s68 = sphi 0, %s52
    %s72 = sphi 0, %s72
    %s74 = sphi 0, %s72
    %s75 = sphi 0, %s74
    %s89 = sphi 0, %s75
    %s93 = sphi 0, %s93
    %s95 = sphi 0, %s93
    %s96 = sphi 0, %s95
    %s110 = sphi 0, %s96
    %s116 = sphi 0, %s118
    %s119 = sphi 0, %s116
    %s120 = sphi 0, %s119
    %s136 = sphi 0, %s120
    %s142 = sphi 0, %s144
    %s145 = sphi 0, %s142
    %s146 = sphi 0, %s145
    %s162 = sphi 0, %s146
    %s170 = sphi 0, %s172
    %s173 = sphi 0, %s170
    %s174 = sphi 0, %s173
    %s190 = sphi 0, %s174
    %s198 = sphi 0, %s200
    %s201 = sphi 0, %s198
    %s202 = sphi 0, %s201
    %s218 = sphi 0, %s202
    %s224 = sphi 0, %s226
    %s227 = sphi 0, %s224
    %s228 = sphi 0, %s227
    %s244 = sphi 0, %s228
    %s250 = sphi 0, %s252
    %s253 = sphi 0, %s250
    %s254 = sphi 0, %s253
    %s270 = sphi 0, %s254
  $region4: #{encoder_forward.8} parent=0 // loop_header_branch
    %18 = sbr.rel (%p16) target = $region8
  $region5: #{encoder_forward.8} parent=0 // loop_body
    %s20 = ssub.s32 %s15, 1
    %s21 = ssub.s32 %s15, 2
    %s31 = sadd.s32 1, %s24
    %p32 = scmp.ge.s32.totalorder %s31, 3
    %s33 = scalar_select %p32, 0, %s31
    %s34 = sadd.s32 1, %s23
    %s35 = scalar_select %p32, %s34, %s23
    %p36 = scmp.ge.s32.totalorder %s35, 2
    %s37 = scalar_select %p36, 0, %s35
    %s38 = sadd.s32 1, %s22
    %s39 = scalar_select %p36, %s38, %s22
    %p40 = scmp.ge.s32.totalorder %s39, 2
    %s41 = scalar_select %p40, 0, %s39
    %s42 = sadd.s32 %s23, %s24
    %s43 = sadd.s32 %s37, %s33
    %s44 = ssub.s32 %s22, %s41
    %s45 = ssub.s32 %s42, %s43
    %s46 = sor.u32 %s44, %s45
    %p47 = scmp.eq.s32.totalorder %s46, 0
    %s49 = sadd.s32 %s48, 1
    %s50 = scalar_select %p47, %s48, %s49
    %p53 = pneg %p47
    %p54 = scmp.eq.s32.totalorder %s15, 11
    %p55 = por %p53, %p54
    %p56 = scmp.ne.s32.totalorder %s48, %s51
    %p57 = scmp.eq.s32.totalorder %s15, 0
    %p58 = por %p56, %p57
    %p59 = scmp.ne.s32.totalorder %s48, %s51
    %p60 = scmp.eq.s32.totalorder %s20, 11
    %p61 = por %p59, %p60
    %p62 = scmp.ne.s32.totalorder %s51, %s52
    %p63 = scmp.eq.s32.totalorder %s20, 0
    %p64 = por %p62, %p63
    %p65 = scmp.ne.s32.totalorder %s51, %s52
    %p66 = scmp.eq.s32.totalorder %s21, 11
    %p67 = por %p65, %p66
    %p69 = scmp.ne.s32.totalorder %s52, %s68
    %p70 = scmp.eq.s32.totalorder %s21, 0
    %p71 = por %p69, %p70
    %s73 = sadd.s32 %s72, 1
    %p76 = scmp.eq.s32.totalorder %s15, 11
    %p77 = scmp.ne.s32.totalorder %s72, %s74
    %p78 = scmp.eq.s32.totalorder %s15, 0
    %p79 = por %p77, %p78
    %p80 = scmp.ne.s32.totalorder %s72, %s74
    %p81 = scmp.eq.s32.totalorder %s20, 11
    %p82 = por %p80, %p81
    %p83 = scmp.ne.s32.totalorder %s74, %s75
    %p84 = scmp.eq.s32.totalorder %s20, 0
    %p85 = por %p83, %p84
    %p86 = scmp.ne.s32.totalorder %s74, %s75
    %p87 = scmp.eq.s32.totalorder %s21, 11
    %p88 = por %p86, %p87
    %p90 = scmp.ne.s32.totalorder %s75, %s89
    %p91 = scmp.eq.s32.totalorder %s21, 0
    %p92 = por %p90, %p91
    %s94 = sadd.s32 %s93, 1
    %p97 = scmp.eq.s32.totalorder %s15, 11
    %p98 = scmp.ne.s32.totalorder %s93, %s95
    %p99 = scmp.eq.s32.totalorder %s15, 0
    %p100 = por %p98, %p99
    %p101 = scmp.ne.s32.totalorder %s93, %s95
    %p102 = scmp.eq.s32.totalorder %s20, 11
    %p103 = por %p101, %p102
    %p104 = scmp.ne.s32.totalorder %s95, %s96
    %p105 = scmp.eq.s32.totalorder %s20, 0
    %p106 = por %p104, %p105
    %p107 = scmp.ne.s32.totalorder %s95, %s96
    %p108 = scmp.eq.s32.totalorder %s21, 11
    %p109 = por %p107, %p108
    %p111 = scmp.ne.s32.totalorder %s96, %s110
    %p112 = scmp.eq.s32.totalorder %s21, 0
    %p113 = por %p111, %p112
    %s114 = ssub.s32 %s22, %s41
    %p115 = scmp.eq.s32.totalorder %s114, 0
    %s117 = sadd.s32 %s116, 1
    %s118 = scalar_select %p115, %s116, %s117
    %p121 = pneg %p115
    %p122 = scmp.eq.s32.totalorder %s15, 11
    %p123 = por %p121, %p122
    %p124 = scmp.ne.s32.totalorder %s116, %s119
    %p125 = scmp.eq.s32.totalorder %s15, 0
    %p126 = por %p124, %p125
    %p127 = scmp.ne.s32.totalorder %s116, %s119
    %p128 = scmp.eq.s32.totalorder %s20, 11
    %p129 = por %p127, %p128
    %p130 = scmp.ne.s32.totalorder %s119, %s120
    %p131 = scmp.eq.s32.totalorder %s20, 0
    %p132 = por %p130, %p131
    %p133 = scmp.ne.s32.totalorder %s119, %s120
    %p134 = scmp.eq.s32.totalorder %s21, 11
    %p135 = por %p133, %p134
    %p137 = scmp.ne.s32.totalorder %s120, %s136
    %p138 = scmp.eq.s32.totalorder %s21, 0
    %p139 = por %p137, %p138
    %s140 = ssub.s32 %s22, %s41
    %p141 = scmp.eq.s32.totalorder %s140, 0
    %s143 = sadd.s32 %s142, 1
    %s144 = scalar_select %p141, %s142, %s143
    %p147 = pneg %p141
    %p148 = scmp.eq.s32.totalorder %s15, 11
    %p149 = por %p147, %p148
    %p150 = scmp.ne.s32.totalorder %s142, %s145
    %p151 = scmp.eq.s32.totalorder %s15, 0
    %p152 = por %p150, %p151
    %p153 = scmp.ne.s32.totalorder %s142, %s145
    %p154 = scmp.eq.s32.totalorder %s20, 11
    %p155 = por %p153, %p154
    %p156 = scmp.ne.s32.totalorder %s145, %s146
    %p157 = scmp.eq.s32.totalorder %s20, 0
    %p158 = por %p156, %p157
    %p159 = scmp.ne.s32.totalorder %s145, %s146
    %p160 = scmp.eq.s32.totalorder %s21, 11
    %p161 = por %p159, %p160
    %p163 = scmp.ne.s32.totalorder %s146, %s162
    %p164 = scmp.eq.s32.totalorder %s21, 0
    %p165 = por %p163, %p164
    %s166 = ssub.s32 %s22, %s41
    %s167 = ssub.s32 %s23, %s37
    %s168 = sor.u32 %s166, %s167
    %p169 = scmp.eq.s32.totalorder %s168, 0
    %s171 = sadd.s32 %s170, 1
    %s172 = scalar_select %p169, %s170, %s171
    %p175 = pneg %p169
    %p176 = scmp.eq.s32.totalorder %s15, 11
    %p177 = por %p175, %p176
    %p178 = scmp.ne.s32.totalorder %s170, %s173
    %p179 = scmp.eq.s32.totalorder %s15, 0
    %p180 = por %p178, %p179
    %p181 = scmp.ne.s32.totalorder %s170, %s173
    %p182 = scmp.eq.s32.totalorder %s20, 11
    %p183 = por %p181, %p182
    %p184 = scmp.ne.s32.totalorder %s173, %s174
    %p185 = scmp.eq.s32.totalorder %s20, 0
    %p186 = por %p184, %p185
    %p187 = scmp.ne.s32.totalorder %s173, %s174
    %p188 = scmp.eq.s32.totalorder %s21, 11
    %p189 = por %p187, %p188
    %p191 = scmp.ne.s32.totalorder %s174, %s190
    %p192 = scmp.eq.s32.totalorder %s21, 0
    %p193 = por %p191, %p192
    %s194 = ssub.s32 %s22, %s41
    %s195 = ssub.s32 %s23, %s37
    %s196 = sor.u32 %s194, %s195
    %p197 = scmp.eq.s32.totalorder %s196, 0
    %s199 = sadd.s32 %s198, 1
    %s200 = scalar_select %p197, %s198, %s199
    %p203 = pneg %p197
    %p204 = scmp.eq.s32.totalorder %s15, 11
    %p205 = por %p203, %p204
    %p206 = scmp.ne.s32.totalorder %s198, %s201
    %p207 = scmp.eq.s32.totalorder %s15, 0
    %p208 = por %p206, %p207
    %p209 = scmp.ne.s32.totalorder %s198, %s201
    %p210 = scmp.eq.s32.totalorder %s20, 11
    %p211 = por %p209, %p210
    %p212 = scmp.ne.s32.totalorder %s201, %s202
    %p213 = scmp.eq.s32.totalorder %s20, 0
    %p214 = por %p212, %p213
    %p215 = scmp.ne.s32.totalorder %s201, %s202
    %p216 = scmp.eq.s32.totalorder %s21, 11
    %p217 = por %p215, %p216
    %p219 = scmp.ne.s32.totalorder %s202, %s218
    %p220 = scmp.eq.s32.totalorder %s21, 0
    %p221 = por %p219, %p220
    %s222 = ssub.s32 %s22, %s41
    %p223 = scmp.eq.s32.totalorder %s222, 0
    %s225 = sadd.s32 %s224, 1
    %s226 = scalar_select %p223, %s224, %s225
    %p229 = pneg %p223
    %p230 = scmp.eq.s32.totalorder %s15, 11
    %p231 = por %p229, %p230
    %p232 = scmp.ne.s32.totalorder %s224, %s227
    %p233 = scmp.eq.s32.totalorder %s15, 0
    %p234 = por %p232, %p233
    %p235 = scmp.ne.s32.totalorder %s224, %s227
    %p236 = scmp.eq.s32.totalorder %s20, 11
    %p237 = por %p235, %p236
    %p238 = scmp.ne.s32.totalorder %s227, %s228
    %p239 = scmp.eq.s32.totalorder %s20, 0
    %p240 = por %p238, %p239
    %p241 = scmp.ne.s32.totalorder %s227, %s228
    %p242 = scmp.eq.s32.totalorder %s21, 11
    %p243 = por %p241, %p242
    %p245 = scmp.ne.s32.totalorder %s228, %s244
    %p246 = scmp.eq.s32.totalorder %s21, 0
    %p247 = por %p245, %p246
    %s248 = ssub.s32 %s22, %s41
    %p249 = scmp.eq.s32.totalorder %s248, 0
    %s251 = sadd.s32 %s250, 1
    %s252 = scalar_select %p249, %s250, %s251
    %p255 = pneg %p249
    %p256 = scmp.eq.s32.totalorder %s15, 11
    %p257 = por %p255, %p256
    %p258 = scmp.ne.s32.totalorder %s250, %s253
    %p259 = scmp.eq.s32.totalorder %s15, 0
    %p260 = por %p258, %p259
    %p261 = scmp.ne.s32.totalorder %s250, %s253
    %p262 = scmp.eq.s32.totalorder %s20, 11
    %p263 = por %p261, %p262
    %p264 = scmp.ne.s32.totalorder %s253, %s254
    %p265 = scmp.eq.s32.totalorder %s20, 0
    %p266 = por %p264, %p265
    %p267 = scmp.ne.s32.totalorder %s253, %s254
    %p268 = scmp.eq.s32.totalorder %s21, 11
    %p269 = por %p267, %p268
    %p271 = scmp.ne.s32.totalorder %s254, %s270
    %p272 = scmp.eq.s32.totalorder %s21, 0
    %p273 = por %p271, %p272
    %p274 = scmp.le.s32.totalorder 1, %s15
    %p275 = scmp.lt.s32.totalorder %s15, 13
    %p276 = pnand %p274, %p275
    %p277 = pneg %p276
    // Predicated region
    $region9: #{encoder_forward.8} parent=5 // pred_check
      _
    $region10: #{encoder_forward.8} parent=5 // pred_check_branch
      %279 = sbr.rel (%p276) target = $region12
    $region11: #{encoder_forward.8} parent=5 // pred_region
      %s280 = ssub.s32 %s15, 1
      // Predicated region
      $region13: #{encoder_forward.8} parent=11 // pred_check
        %p281 = pneg %p85
      $region14: #{encoder_forward.8} parent=11 // pred_check_branch
        %283 = sbr.rel (%p281) target = $region16
      $region15: #{encoder_forward.8} parent=11 // pred_region
        _
      $region16: #{encoder_forward.8} parent=11 // pred_fallthru
        _
      // Predicated region
      $region17: #{encoder_forward.8} parent=11 // pred_check
        %p284 = pneg %p106
      $region18: #{encoder_forward.8} parent=11 // pred_check_branch
        %286 = sbr.rel (%p284) target = $region20
      $region19: #{encoder_forward.8} parent=11 // pred_region
        _
      $region20: #{encoder_forward.8} parent=11 // pred_fallthru
        _
    $region12: #{encoder_forward.8} parent=5 // pred_fallthru
      _
    %p287 = scmp.lt.s32.totalorder %s15, 12
    // Predicated region
    $region21: #{encoder_forward.8} parent=5 // pred_check
      %p288 = pneg %p287
    $region22: #{encoder_forward.8} parent=5 // pred_check_branch
      %290 = sbr.rel (%p288) target = $region24
    $region23: #{encoder_forward.8} parent=5 // pred_region
      // Predicated region
      $region25: #{encoder_forward.8} parent=23 // pred_check
        %p291 = pneg %p58
      $region26: #{encoder_forward.8} parent=23 // pred_check_branch
        %293 = sbr.rel (%p291) target = $region28
      $region27: #{encoder_forward.8} parent=23 // pred_region
        %s294 = sadd.s32 %s23, %s24
        %p295 = scmp.lt.s32.totalorder %s22, 1
        %s296 = scalar_select %p295, %s22, 1
        %p297 = scmp.lt.s32.totalorder %s294, 3
        %s298 = scalar_select %p297, %s294, 3
        %s299 = smul.addr %s298, 6
        %s300 = smul.addr %s296, 24
        %s301 = sadd.s32 %s299, %s300
        %s302 = smul.addr %s301, 4
        %s303 = scalar_lea.vmem %s0, %s302
        %s304 = sadd.s32 %s23, %s24
      $region28: #{encoder_forward.8} parent=23 // pred_fallthru
        _
      // Predicated region
      $region29: #{encoder_forward.8} parent=23 // pred_check
        %p305 = pneg %p126
      $region30: #{encoder_forward.8} parent=23 // pred_check_branch
        %307 = sbr.rel (%p305) target = $region32
      $region31: #{encoder_forward.8} parent=23 // pred_region
        %p308 = scmp.lt.s32.totalorder %s22, 1
        %s309 = scalar_select %p308, %s22, 1
        %s310 = scalar_lea.vmem %s3, %s309
      $region32: #{encoder_forward.8} parent=23 // pred_fallthru
        _
      // Predicated region
      $region33: #{encoder_forward.8} parent=23 // pred_check
        %p311 = pneg %p152
      $region34: #{encoder_forward.8} parent=23 // pred_check_branch
        %313 = sbr.rel (%p311) target = $region36
      $region35: #{encoder_forward.8} parent=23 // pred_region
        %p314 = scmp.lt.s32.totalorder %s22, 1
        %s315 = scalar_select %p314, %s22, 1
        %s316 = scalar_lea.vmem %s4, %s315
      $region36: #{encoder_forward.8} parent=23 // pred_fallthru
        _
      // Predicated region
      $region37: #{encoder_forward.8} parent=23 // pred_check
        %p317 = pneg %p180
      $region38: #{encoder_forward.8} parent=23 // pred_check_branch
        %319 = sbr.rel (%p317) target = $region40
      $region39: #{encoder_forward.8} parent=23 // pred_region
        %p320 = scmp.lt.s32.totalorder %s22, 1
        %s321 = scalar_select %p320, %s22, 1
        %p322 = scmp.lt.s32.totalorder %s23, 1
        %s323 = scalar_select %p322, %s23, 1
        %s324 = smul.addr %s323, 2
        %s325 = smul.addr %s321, 4
        %s326 = sadd.s32 %s324, %s325
        %s327 = smul.addr %s326, 4
        %s328 = scalar_lea.vmem %s5, %s327
      $region40: #{encoder_forward.8} parent=23 // pred_fallthru
        _
    $region24: #{encoder_forward.8} parent=5 // pred_fallthru
      _
    %p329 = scmp.le.s32.totalorder 1, %s15
    %p330 = scmp.lt.s32.totalorder %s15, 13
    %p331 = pnand %p329, %p330
    %p332 = pneg %p331
    // Predicated region
    $region41: #{encoder_forward.8} parent=5 // pred_check
      _
    $region42: #{encoder_forward.8} parent=5 // pred_check_branch
      %334 = sbr.rel (%p331) target = $region44
    $region43: #{encoder_forward.8} parent=5 // pred_region
      %s335 = ssub.s32 %s15, 1
      %s336 = sadd.s32 %s26, %s27
      %p337 = scmp.lt.s32.totalorder %s25, 1
      %s338 = scalar_select %p337, %s25, 1
      %p339 = scmp.lt.s32.totalorder %s336, 3
      %s340 = scalar_select %p339, %s336, 3
      %s341 = smul.addr %s340, 6
      %s342 = smul.addr %s338, 24
      %s343 = sadd.s32 %s341, %s342
      %s344 = smul.addr %s343, 4
      %s345 = scalar_lea.vmem %s0, %s344
      %p346 = pneg %p64
      %p347 = pneg %p61
      %p348 = pneg %p85
      %p349 = pneg %p82
      %p350 = pneg %p106
      %p351 = pneg %p103
      %p352 = scmp.lt.s32.totalorder %s25, 1
      %s353 = scalar_select %p352, %s25, 1
      %s354 = scalar_lea.vmem %s3, %s353
      %p355 = pneg %p132
      %p356 = pneg %p129
      %p357 = scmp.lt.s32.totalorder %s25, 1
      %s358 = scalar_select %p357, %s25, 1
      %s359 = scalar_lea.vmem %s4, %s358
      %p360 = pneg %p158
      %p361 = pneg %p155
      %p362 = scmp.lt.s32.totalorder %s25, 1
      %s363 = scalar_select %p362, %s25, 1
      %p364 = scmp.lt.s32.totalorder %s26, 1
      %s365 = scalar_select %p364, %s26, 1
      %s366 = smul.addr %s365, 2
      %s367 = smul.addr %s363, 4
      %s368 = sadd.s32 %s366, %s367
      %s369 = smul.addr %s368, 4
      %s370 = scalar_lea.vmem %s5, %s369
      %p371 = pneg %p186
      %p372 = pneg %p183
      %p373 = pneg %p214
      %p374 = pneg %p211
      %p375 = scmp.lt.s32.totalorder %s25, 1
      %s376 = scalar_select %p375, %s25, 1
      %p377 = scmp.lt.s32.totalorder %s26, 1
      %s378 = scalar_select %p377, %s26, 1
      %s379 = smul.addr %s378, 2
      %s380 = smul.addr %s376, 4
      %s381 = sadd.s32 %s379, %s380
      %s382 = smul.addr %s381, 4
      %s383 = scalar_lea.vmem %s6, %s382
      %p384 = pneg %p240
      %p385 = pneg %p237
      %p386 = scmp.lt.s32.totalorder %s25, 1
      %s387 = scalar_select %p386, %s25, 1
      %s388 = scalar_lea.vmem %s7, %s387
      %p389 = pneg %p266
      %p390 = pneg %p263
      %p391 = scmp.lt.s32.totalorder %s25, 1
      %s392 = scalar_select %p391, %s25, 1
      %s393 = scalar_lea.vmem %s8, %s392
      %s394 = sadd.s32 %s26, %s27
      %p395 = scmp.lt.s32.totalorder %s25, 1
      %s396 = scalar_select %p395, %s25, 1
      %p397 = scmp.lt.s32.totalorder %s394, 3
      %s398 = scalar_select %p397, %s394, 3
      %s399 = smul.addr %s398, 6
      %s400 = smul.addr %s396, 24
      %s401 = sadd.s32 %s399, %s400
      %s402 = smul.addr %s401, 4
      %s403 = scalar_lea.vmem %s0, %s402
      %s404 = sadd.s32 %s26, %s27
      %p405 = scmp.lt.s32.totalorder %s25, 1
      %s406 = scalar_select %p405, %s25, 1
      %s407 = scalar_lea.vmem %s3, %s406
      %p408 = scmp.lt.s32.totalorder %s25, 1
      %s409 = scalar_select %p408, %s25, 1
      %s410 = scalar_lea.vmem %s4, %s409
      %p411 = scmp.lt.s32.totalorder %s25, 1
      %s412 = scalar_select %p411, %s25, 1
      %p413 = scmp.lt.s32.totalorder %s26, 1
      %s414 = scalar_select %p413, %s26, 1
      %s415 = smul.addr %s414, 2
      %s416 = smul.addr %s412, 4
      %s417 = sadd.s32 %s415, %s416
      %s418 = smul.addr %s417, 4
      %s419 = scalar_lea.vmem %s5, %s418
      %p420 = scmp.lt.s32.totalorder %s25, 1
      %s421 = scalar_select %p420, %s25, 1
      %p422 = scmp.lt.s32.totalorder %s26, 1
      %s423 = scalar_select %p422, %s26, 1
      %s424 = smul.addr %s423, 2
      %s425 = smul.addr %s421, 4
      %s426 = sadd.s32 %s424, %s425
      %s427 = smul.addr %s426, 4
      %s428 = scalar_lea.vmem %s6, %s427
      %p429 = scmp.lt.s32.totalorder %s25, 1
      %s430 = scalar_select %p429, %s25, 1
      %s431 = scalar_lea.vmem %s7, %s430
      %p432 = scmp.lt.s32.totalorder %s25, 1
      %s433 = scalar_select %p432, %s25, 1
      %s434 = scalar_lea.vmem %s8, %s433
      %p436 = scmp.eq.s32.totalorder %s27, 0
      // Predicated region
      $region45: #{encoder_forward.8} parent=43 // pred_check
        %p437 = pneg %p436
      $region46: #{encoder_forward.8} parent=43 // pred_check_branch
        %439 = sbr.rel (%p437) target = $region48
      $region47: #{encoder_forward.8} parent=43 // pred_region
        %vm440 = vcmask 261120
        %441 = vst.msk [vmem:[#allocation2] sm:$0xff] %vm440, 0.0
        %442 = vst.msk [vmem:[#allocation2 + $0x8] sm:$0xff] %vm440, 0.0
      $region48: #{encoder_forward.8} parent=43 // pred_fallthru
        _
      %p443 = scmp.eq.s32.totalorder %s26, 0
      %p444 = pnand %p443, %p436
      %p445 = pneg %p444
      // Predicated region
      $region49: #{encoder_forward.8} parent=43 // pred_check
        _
      $region50: #{encoder_forward.8} parent=43 // pred_check_branch
        %447 = sbr.rel (%p444) target = $region52
      $region51: #{encoder_forward.8} parent=43 // pred_region
        %vm448 = vcmask 253952
        %449 = vst.msk [vmem:[%s431] sm:$0x1] %vm448, 0.0
        %450 = vst.msk [vmem:[%s434] sm:$0x1] %vm448, 0.0
      $region52: #{encoder_forward.8} parent=43 // pred_fallthru
        _
      %v451 = vld [vmem:[%s403] sm:$0x7]
      %v452 = vld [vmem:[%s403 + $0x4] sm:$0x7]
      %v453 = vld [vmem:[%s403 + $0x8] sm:$0x7]
      %v454 = vld [vmem:[%s403 + $0xc] sm:$0x7]
      %v455 = vld [vmem:[%s403 + $0x10] sm:$0x7]
      %v456 = vld [vmem:[%s403 + $0x14] sm:$0x7]
      %v457 = vunpack.c.l.bf16 %v451
      %v458 = vunpack.c.l.bf16 %v452
      %v459 = vunpack.c.l.bf16 %v453
      %v460 = vunpack.c.l.bf16 %v454
      %v461 = vunpack.c.l.bf16 %v455
      %v462 = vunpack.c.l.bf16 %v456
      %v463 = vld [vmem:[%s407] sm:$0x1]
      %v465 = vlaneseq
      %v466 = vshrl.u32 %v465, 7
      %v467 = vsub.s32 0, %v466
      %v468 = vrot.slane %v463, %v467
      %v470 = vmul.f32 %v457, %v468
      %v471 = vmul.f32 %v458, %v468
      %v472 = vmul.f32 %v459, %v468
      %v473 = vmul.f32 %v460, %v468
      %v474 = vmul.f32 %v461, %v468
      %v475 = vmul.f32 %v462, %v468
      %v476 = vld [vmem:[%s410] sm:$0x1]
      %v478 = vlaneseq
      %v479 = vshrl.u32 %v478, 7
      %v480 = vsub.s32 0, %v479
      %v481 = vrot.slane %v476, %v480
      %v483 = vadd.f32 %v470, %v481
      %v484 = vadd.f32 %v471, %v481
      %v485 = vadd.f32 %v472, %v481
      %v486 = vadd.f32 %v473, %v481
      %v487 = vadd.f32 %v474, %v481
      %v488 = vadd.f32 %v475, %v481
      %v489 = vxor.u32 %v483, 2147483648
      %v490 = vxor.u32 %v484, 2147483648
      %v491 = vxor.u32 %v485, 2147483648
      %v492 = vxor.u32 %v486, 2147483648
      %v493 = vxor.u32 %v487, 2147483648
      %v494 = vxor.u32 %v488, 2147483648
      %v495 = vmul.f32 %v489, 1.442695
      %v496 = vpow.pop %v495
      %v497 = vmul.f32 %v490, 1.442695
      %v498 = vpow.pop %v497
      %v499 = vmul.f32 %v491, 1.442695
      %v500 = vpow.pop %v499
      %v501 = vmul.f32 %v492, 1.442695
      %v502 = vpow.pop %v501
      %v503 = vmul.f32 %v493, 1.442695
      %v504 = vpow.pop %v503
      %v505 = vmul.f32 %v494, 1.442695
      %v506 = vpow.pop %v505
      %v507 = vadd.f32 %v496, 1.0
      %v508 = vadd.f32 %v498, 1.0
      %v509 = vadd.f32 %v500, 1.0
      %v510 = vadd.f32 %v502, 1.0
      %v511 = vadd.f32 %v504, 1.0
      %v512 = vadd.f32 %v506, 1.0
      %v513 = vrcp.pop %v507
      %v514 = vmul.f32 1.0, %v513
      %v515 = vrcp.pop %v508
      %v516 = vmul.f32 1.0, %v515
      %v517 = vrcp.pop %v509
      %v518 = vmul.f32 1.0, %v517
      %v519 = vrcp.pop %v510
      %v520 = vmul.f32 1.0, %v519
      %v521 = vrcp.pop %v511
      %v522 = vmul.f32 1.0, %v521
      %v523 = vrcp.pop %v512
      %v524 = vmul.f32 1.0, %v523
      %v525 = vmul.f32 %v483, %v514
      %v526 = vmul.f32 %v484, %v516
      %v527 = vmul.f32 %v485, %v518
      %v528 = vmul.f32 %v486, %v520
      %v529 = vmul.f32 %v487, %v522
      %v530 = vmul.f32 %v488, %v524
      %v531 = vpack.c.bf16 %v525, %v525
      %v532 = vpack.c.bf16 %v526, %v526
      %v533 = vpack.c.bf16 %v527, %v527
      %v534 = vpack.c.bf16 %v528, %v528
      %v535 = vpack.c.bf16 %v529, %v529
      %v536 = vpack.c.bf16 %v530, %v530
      %vm537 = vcmask 256000
      %538 = vst.msk [vmem:[#allocation3] sm:$0x7] %vm537, %v531
      %539 = vst.msk [vmem:[#allocation3 + $0x4] sm:$0x7] %vm537, %v532
      %540 = vst.msk [vmem:[#allocation3 + $0x8] sm:$0x7] %vm537, %v533
      %541 = vst.msk [vmem:[#allocation3 + $0xc] sm:$0x7] %vm537, %v534
      %542 = vst.msk [vmem:[#allocation3 + $0x10] sm:$0x7] %vm537, %v535
      %543 = vst.msk [vmem:[#allocation3 + $0x14] sm:$0x7] %vm537, %v536
      %v544 = vld [vmem:[#allocation2] sm:$0xff]
      %v545 = vld [vmem:[#allocation2 + $0x8] sm:$0xff]
      %v546 = vld [vmem:[#allocation3] sm:$0x3]
      %v547 = vld [vmem:[#allocation3 + $0x4] sm:$0x3]
      %v548 = vld [vmem:[#allocation3 + $0x8] sm:$0x3]
      %v549 = vld [vmem:[#allocation3 + $0xc] sm:$0x3]
      %s550 = smul.u32 %s27, 9
      %s551 = smul.u32 %s550, 4
      %s552 = smul.addr %s551, 4
      %s553 = scalar_lea.vmem %s1, %s552
      %v554 = vld [vmem:[%s553] sm:$0xf]
      %v555 = vld [vmem:[%s553 + $0x4] sm:$0xf]
      %v556 = vld [vmem:[%s553 + $0x8] sm:$0xf]
      %v557 = vld [vmem:[%s553 + $0xc] sm:$0xf]
      %v562 = vcombine.low %v546, %v547
      %v563 = vcombine.low %v548, %v549
      %v565 = vunpack.c.l.s4 1983009808
      %v566 = vunpack.c.0.s8 %v565
      %v567 = vlaneseq
      %v568 = vshrl.u32 %v567, 7
      %v569 = vsub.s32 %v566, %v568
      %v570 = vrot.slane %v562, %v569
      %v572 = vunpack.c.l.s4 1983009808
      %v573 = vunpack.c.0.s8 %v572
      %v574 = vlaneseq
      %v575 = vshrl.u32 %v574, 7
      %v576 = vsub.s32 %v573, %v575
      %v577 = vrot.slane %v563, %v576
      %v578 = vcombine.low %v570, %v577
      %v583 = vunpack.c.l.b16 %v554
      %v584 = vunpack.c.l.b16 %v555
      %v585 = vunpack.c.l.b16 %v556
      %v586 = vunpack.c.l.b16 %v557
      %v587 = vpack.c.b16 %v584, %v583
      %v588 = vpack.c.b16 %v586, %v585
      %vm591 = vcmask 261120
      %v593 = vsel %vm591, %v578, 0
      %595 = vmatprep.subr.bf16.mxu0 0
      %596 = vmatpush1.bf16.msra.mxu0 0
      %597 = vmatprep.subr.bf16.mxu0 0
      %598 = vmatpush1.bf16.msra.mxu0 0
      %599 = vmatprep.subr.bf16.mxu0 0
      %600 = vmatpush1.bf16.msra.mxu0 0
      %601 = vmatprep.subr.bf16.mxu0 0
      %602 = vmatpush1.bf16.msra.mxu0 0
      %603 = vmatprep.subr.bf16.mxu0 0
      %604 = vmatpush1.bf16.msra.mxu0 0
      %605 = vmatprep.subr.bf16.mxu0 0
      %606 = vmatpush1.bf16.msra.mxu0 0
      %607 = vmatprep.subr.bf16.mxu0 0
      %608 = vmatpush1.bf16.msra.mxu0 %v588
      %609 = vmatprep.subr.bf16.mxu0 0
      %610 = vmatpush1.bf16.msra.mxu0 %v587
      %611 = vmatprep.subr.bf16.mxu0 0
      %612 = vmatpush2.bf16.msra.mxu0 0
      %613 = vmatprep.subr.bf16.mxu0 0
      %614 = vmatpush2.bf16.msra.mxu0 0
      %615 = vmatprep.subr.bf16.mxu0 0
      %616 = vmatpush2.bf16.msra.mxu0 0
      %617 = vmatprep.subr.bf16.mxu0 0
      %618 = vmatpush2.bf16.msra.mxu0 0
      %619 = vmatprep.subr.bf16.mxu0 0
      %620 = vmatpush2.bf16.msra.mxu0 0
      %621 = vmatprep.subr.bf16.mxu0 0
      %622 = vmatpush2.bf16.msra.mxu0 0
      %623 = vmatprep.subr.bf16.mxu0 0
      %624 = vmatpush2.bf16.msra.mxu0 0
      %625 = vmatprep.subr.bf16.mxu0 0
      %626 = vmatpush2.bf16.msra.mxu0 0
      %627 = vmatprep.mubr.bf16.mxu0 0
      %628 = vmatmul.mubr.bf16.gmra.mxu0 %v593
      %v629 = vpop.f32.mrf.mxu0
      %v630 = vadd.f32 0.0, %v629
      %v631 = vpop.f32.mrf.mxu0
      %v632 = vpop.f32.mrf.mxu0
      %v633 = vadd.f32 0.0, %v632
      %v634 = vpop.f32.mrf.mxu0
      %635 = vdwg.mxu0
      %v636 = vadd.f32 %v544, %v630
      %v637 = vadd.f32 %v545, %v633
      %v638 = vld [vmem:[#allocation3] sm:$0x7]
      %v639 = vld [vmem:[#allocation3 + $0x4] sm:$0x7]
      %v640 = vld [vmem:[#allocation3 + $0x8] sm:$0x7]
      %v641 = vld [vmem:[#allocation3 + $0xc] sm:$0x7]
      %v647 = vunpack.c.l.s4 1983009808
      %v648 = vunpack.c.0.s8 %v647
      %v649 = vlaneseq
      %v650 = vshrl.u32 %v649, 7
      %v651 = vsub.s32 %v648, %v650
      %v652 = vrot.slane %v638, %v651
      %v653 = vcombine.high %v652, %v652
      %v655 = vunpack.c.l.s4 1983009808
      %v656 = vunpack.c.0.s8 %v655
      %v657 = vlaneseq
      %v658 = vshrl.u32 %v657, 7
      %v659 = vsub.s32 %v656, %v658
      %v660 = vrot.slane %v639, %v659
      %v661 = vcombine.high %v660, %v660
      %v663 = vunpack.c.l.s4 1983009808
      %v664 = vunpack.c.0.s8 %v663
      %v665 = vlaneseq
      %v666 = vshrl.u32 %v665, 7
      %v667 = vsub.s32 %v664, %v666
      %v668 = vrot.slane %v640, %v667
      %v669 = vcombine.high %v668, %v668
      %v671 = vunpack.c.l.s4 1983009808
      %v672 = vunpack.c.0.s8 %v671
      %v673 = vlaneseq
      %v674 = vshrl.u32 %v673, 7
      %v675 = vsub.s32 %v672, %v674
      %v676 = vrot.slane %v641, %v675
      %v677 = vcombine.high %v676, %v676
      %vm678 = vsmask.f32 1280
      %vm679 = vsmask.f32 3336
      %vm680 = vmor %vm678, %vm679
      %vm681 = vsmask.f32 5392
      %vm682 = vmor %vm680, %vm681
      %vm683 = vsmask.f32 7448
      %vm684 = vmor %vm682, %vm683
      %v686 = vshrl.u32 %v652, 16
      %v688 = vrot.slane %v686, 6
      %v689 = vshll.u32 %v652, 16
      %v691 = vrot.slane %v689, 7
      %v692 = vor.u32 %v688, %v691
      %v693 = vrot.slane %v692, 2
      %v695 = vshll.u32 %v653, 16
      %v697 = vrot.slane %v695, 7
      %v698 = vsel %vm684, %v693, %v697
      %v700 = vshrl.u32 %v660, 16
      %v702 = vrot.slane %v700, 6
      %v703 = vshll.u32 %v660, 16
      %v705 = vrot.slane %v703, 7
      %v706 = vor.u32 %v702, %v705
      %v707 = vrot.slane %v706, 2
      %v709 = vshll.u32 %v661, 16
      %v711 = vrot.slane %v709, 7
      %v712 = vsel %vm684, %v707, %v711
      %v714 = vshrl.u32 %v668, 16
      %v716 = vrot.slane %v714, 6
      %v717 = vshll.u32 %v668, 16
      %v719 = vrot.slane %v717, 7
      %v720 = vor.u32 %v716, %v719
      %v721 = vrot.slane %v720, 2
      %v723 = vshll.u32 %v669, 16
      %v725 = vrot.slane %v723, 7
      %v726 = vsel %vm684, %v721, %v725
      %v728 = vshrl.u32 %v676, 16
      %v730 = vrot.slane %v728, 6
      %v731 = vshll.u32 %v676, 16
      %v733 = vrot.slane %v731, 7
      %v734 = vor.u32 %v730, %v733
      %v735 = vrot.slane %v734, 2
      %v737 = vshll.u32 %v677, 16
      %v739 = vrot.slane %v737, 7
      %v740 = vsel %vm684, %v735, %v739
      %s741 = sadd.s32 %s550, 1
      %s742 = smul.u32 %s741, 4
      %s743 = smul.addr %s742, 4
      %s744 = scalar_lea.vmem %s1, %s743
      %v745 = vld [vmem:[%s744] sm:$0xf]
      %v746 = vld [vmem:[%s744 + $0x4] sm:$0xf]
      %v747 = vld [vmem:[%s744 + $0x8] sm:$0xf]
      %v748 = vld [vmem:[%s744 + $0xc] sm:$0xf]
      %v749 = vcombine.low %v698, %v712
      %v750 = vcombine.low %v726, %v740
      %v752 = vunpack.c.l.s4 1983009808
      %v753 = vunpack.c.0.s8 %v752
      %v754 = vlaneseq
      %v755 = vshrl.u32 %v754, 7
      %v756 = vsub.s32 %v753, %v755
      %v757 = vrot.slane %v749, %v756
      %v759 = vunpack.c.l.s4 1983009808
      %v760 = vunpack.c.0.s8 %v759
      %v761 = vlaneseq
      %v762 = vshrl.u32 %v761, 7
      %v763 = vsub.s32 %v760, %v762
      %v764 = vrot.slane %v750, %v763
      %v765 = vcombine.low %v757, %v764
      %v770 = vunpack.c.l.b16 %v745
      %v771 = vunpack.c.l.b16 %v746
      %v772 = vunpack.c.l.b16 %v747
      %v773 = vunpack.c.l.b16 %v748
      %v774 = vpack.c.b16 %v771, %v770
      %v775 = vpack.c.b16 %v773, %v772
      %v779 = vsel %vm591, %v765, 0
      %781 = vmatprep.subr.bf16.mxu0 0
      %782 = vmatpush1.bf16.msra.mxu0 0
      %783 = vmatprep.subr.bf16.mxu0 0
      %784 = vmatpush1.bf16.msra.mxu0 0
      %785 = vmatprep.subr.bf16.mxu0 0
      %786 = vmatpush1.bf16.msra.mxu0 0
      %787 = vmatprep.subr.bf16.mxu0 0
      %788 = vmatpush1.bf16.msra.mxu0 0
      %789 = vmatprep.subr.bf16.mxu0 0
      %790 = vmatpush1.bf16.msra.mxu0 0
      %791 = vmatprep.subr.bf16.mxu0 0
      %792 = vmatpush1.bf16.msra.mxu0 0
      %793 = vmatprep.subr.bf16.mxu0 0
      %794 = vmatpush1.bf16.msra.mxu0 %v775
      %795 = vmatprep.subr.bf16.mxu0 0
      %796 = vmatpush1.bf16.msra.mxu0 %v774
      %797 = vmatprep.subr.bf16.mxu0 0
      %798 = vmatpush2.bf16.msra.mxu0 0
      %799 = vmatprep.subr.bf16.mxu0 0
      %800 = vmatpush2.bf16.msra.mxu0 0
      %801 = vmatprep.subr.bf16.mxu0 0
      %802 = vmatpush2.bf16.msra.mxu0 0
      %803 = vmatprep.subr.bf16.mxu0 0
      %804 = vmatpush2.bf16.msra.mxu0 0
      %805 = vmatprep.subr.bf16.mxu0 0
      %806 = vmatpush2.bf16.msra.mxu0 0
      %807 = vmatprep.subr.bf16.mxu0 0
      %808 = vmatpush2.bf16.msra.mxu0 0
      %809 = vmatprep.subr.bf16.mxu0 0
      %810 = vmatpush2.bf16.msra.mxu0 0
      %811 = vmatprep.subr.bf16.mxu0 0
      %812 = vmatpush2.bf16.msra.mxu0 0
      %813 = vmatprep.mubr.bf16.mxu0 0
      %814 = vmatmul.mubr.bf16.gmra.mxu0 %v779
      %v815 = vpop.f32.mrf.mxu0
      %v816 = vadd.f32 0.0, %v815
      %v817 = vpop.f32.mrf.mxu0
      %v818 = vpop.f32.mrf.mxu0
      %v819 = vadd.f32 0.0, %v818
      %v820 = vpop.f32.mrf.mxu0
      %821 = vdwg.mxu0
      %v822 = vadd.f32 %v636, %v816
      %v823 = vadd.f32 %v637, %v819
      %v824 = vld [vmem:[#allocation3] sm:$0x6]
      %v825 = vld [vmem:[#allocation3 + $0x4] sm:$0x6]
      %v826 = vld [vmem:[#allocation3 + $0x8] sm:$0x6]
      %v827 = vld [vmem:[#allocation3 + $0xc] sm:$0x6]
      %v833 = vunpack.c.l.s4 1983009808
      %v834 = vunpack.c.0.s8 %v833
      %v835 = vlaneseq
      %v836 = vshrl.u32 %v835, 7
      %v837 = vsub.s32 %v834, %v836
      %v838 = vrot.slane %v824, %v837
      %v839 = vcombine.high %v838, %v838
      %v841 = vunpack.c.l.s4 1983009808
      %v842 = vunpack.c.0.s8 %v841
      %v843 = vlaneseq
      %v844 = vshrl.u32 %v843, 7
      %v845 = vsub.s32 %v842, %v844
      %v846 = vrot.slane %v825, %v845
      %v847 = vcombine.high %v846, %v846
      %v849 = vunpack.c.l.s4 1983009808
      %v850 = vunpack.c.0.s8 %v849
      %v851 = vlaneseq
      %v852 = vshrl.u32 %v851, 7
      %v853 = vsub.s32 %v850, %v852
      %v854 = vrot.slane %v826, %v853
      %v855 = vcombine.high %v854, %v854
      %v857 = vunpack.c.l.s4 1983009808
      %v858 = vunpack.c.0.s8 %v857
      %v859 = vlaneseq
      %v860 = vshrl.u32 %v859, 7
      %v861 = vsub.s32 %v858, %v860
      %v862 = vrot.slane %v827, %v861
      %v863 = vcombine.high %v862, %v862
      %vm864 = vcmask 1040384
      %vm865 = vcmask 1042434
      %vm866 = vmor %vm864, %vm865
      %vm867 = vcmask 1044484
      %vm868 = vmor %vm866, %vm867
      %vm869 = vcmask 1046534
      %vm870 = vmor %vm868, %vm869
      %v871 = vrot.slane %v838, 7
      %v872 = vrot.slane %v871, 2
      %v873 = vrot.slane %v839, 7
      %v874 = vsel %vm870, %v872, %v873
      %v875 = vrot.slane %v846, 7
      %v876 = vrot.slane %v875, 2
      %v877 = vrot.slane %v847, 7
      %v878 = vsel %vm870, %v876, %v877
      %v879 = vrot.slane %v854, 7
      %v880 = vrot.slane %v879, 2
      %v881 = vrot.slane %v855, 7
      %v882 = vsel %vm870, %v880, %v881
      %v883 = vrot.slane %v862, 7
      %v884 = vrot.slane %v883, 2
      %v885 = vrot.slane %v863, 7
      %v886 = vsel %vm870, %v884, %v885
      %s887 = sadd.s32 %s550, 2
      %s888 = smul.u32 %s887, 4
      %s889 = smul.addr %s888, 4
      %s890 = scalar_lea.vmem %s1, %s889
      %v891 = vld [vmem:[%s890] sm:$0xf]
      %v892 = vld [vmem:[%s890 + $0x4] sm:$0xf]
      %v893 = vld [vmem:[%s890 + $0x8] sm:$0xf]
      %v894 = vld [vmem:[%s890 + $0xc] sm:$0xf]
      %v895 = vcombine.low %v874, %v878
      %v896 = vcombine.low %v882, %v886
      %v898 = vunpack.c.l.s4 1983009808
      %v899 = vunpack.c.0.s8 %v898
      %v900 = vlaneseq
      %v901 = vshrl.u32 %v900, 7
      %v902 = vsub.s32 %v899, %v901
      %v903 = vrot.slane %v895, %v902
      %v905 = vunpack.c.l.s4 1983009808
      %v906 = vunpack.c.0.s8 %v905
      %v907 = vlaneseq
      %v908 = vshrl.u32 %v907, 7
      %v909 = vsub.s32 %v906, %v908
      %v910 = vrot.slane %v896, %v909
      %v911 = vcombine.low %v903, %v910
      %v916 = vunpack.c.l.b16 %v891
      %v917 = vunpack.c.l.b16 %v892
      %v918 = vunpack.c.l.b16 %v893
      %v919 = vunpack.c.l.b16 %v894
      %v920 = vpack.c.b16 %v917, %v916
      %v921 = vpack.c.b16 %v919, %v918
      %v925 = vsel %vm591, %v911, 0
      %927 = vmatprep.subr.bf16.mxu0 0
      %928 = vmatpush1.bf16.msra.mxu0 0
      %929 = vmatprep.subr.bf16.mxu0 0
      %930 = vmatpush1.bf16.msra.mxu0 0
      %931 = vmatprep.subr.bf16.mxu0 0
      %932 = vmatpush1.bf16.msra.mxu0 0
      %933 = vmatprep.subr.bf16.mxu0 0
      %934 = vmatpush1.bf16.msra.mxu0 0
      %935 = vmatprep.subr.bf16.mxu0 0
      %936 = vmatpush1.bf16.msra.mxu0 0
      %937 = vmatprep.subr.bf16.mxu0 0
      %938 = vmatpush1.bf16.msra.mxu0 0
      %939 = vmatprep.subr.bf16.mxu0 0
      %940 = vmatpush1.bf16.msra.mxu0 %v921
      %941 = vmatprep.subr.bf16.mxu0 0
      %942 = vmatpush1.bf16.msra.mxu0 %v920
      %943 = vmatprep.subr.bf16.mxu0 0
      %944 = vmatpush2.bf16.msra.mxu0 0
      %945 = vmatprep.subr.bf16.mxu0 0
      %946 = vmatpush2.bf16.msra.mxu0 0
      %947 = vmatprep.subr.bf16.mxu0 0
      %948 = vmatpush2.bf16.msra.mxu0 0
      %949 = vmatprep.subr.bf16.mxu0 0
      %950 = vmatpush2.bf16.msra.mxu0 0
      %951 = vmatprep.subr.bf16.mxu0 0
      %952 = vmatpush2.bf16.msra.mxu0 0
      %953 = vmatprep.subr.bf16.mxu0 0
      %954 = vmatpush2.bf16.msra.mxu0 0
      %955 = vmatprep.subr.bf16.mxu0 0
      %956 = vmatpush2.bf16.msra.mxu0 0
      %957 = vmatprep.subr.bf16.mxu0 0
      %958 = vmatpush2.bf16.msra.mxu0 0
      %959 = vmatprep.mubr.bf16.mxu0 0
      %960 = vmatmul.mubr.bf16.gmra.mxu0 %v925
      %v961 = vpop.f32.mrf.mxu0
      %v962 = vadd.f32 0.0, %v961
      %v963 = vpop.f32.mrf.mxu0
      %v964 = vpop.f32.mrf.mxu0
      %v965 = vadd.f32 0.0, %v964
      %v966 = vpop.f32.mrf.mxu0
      %967 = vdwg.mxu0
      %v968 = vadd.f32 %v822, %v962
      %v969 = vadd.f32 %v823, %v965
      %s970 = scalar_lea.vmem [#allocation3], 4
      %v971 = vld [vmem:[%s970] sm:$0x3]
      %v972 = vld [vmem:[%s970 + $0x4] sm:$0x3]
      %v973 = vld [vmem:[%s970 + $0x8] sm:$0x3]
      %v974 = vld [vmem:[%s970 + $0xc] sm:$0x3]
      %s975 = sadd.s32 %s550, 3
      %s976 = smul.u32 %s975, 4
      %s977 = smul.addr %s976, 4
      %s978 = scalar_lea.vmem %s1, %s977
      %v979 = vld [vmem:[%s978] sm:$0xf]
      %v980 = vld [vmem:[%s978 + $0x4] sm:$0xf]
      %v981 = vld [vmem:[%s978 + $0x8] sm:$0xf]
      %v982 = vld [vmem:[%s978 + $0xc] sm:$0xf]
      %v987 = vcombine.low %v971, %v972
      %v988 = vcombine.low %v973, %v974
      %v990 = vunpack.c.l.s4 1983009808
      %v991 = vunpack.c.0.s8 %v990
      %v992 = vlaneseq
      %v993 = vshrl.u32 %v992, 7
      %v994 = vsub.s32 %v991, %v993
      %v995 = vrot.slane %v987, %v994
      %v997 = vunpack.c.l.s4 1983009808
      %v998 = vunpack.c.0.s8 %v997
      %v999 = vlaneseq
      %v1000 = vshrl.u32 %v999, 7
      %v1001 = vsub.s32 %v998, %v1000
      %v1002 = vrot.slane %v988, %v1001
      %v1003 = vcombine.low %v995, %v1002
      %v1008 = vunpack.c.l.b16 %v979
      %v1009 = vunpack.c.l.b16 %v980
      %v1010 = vunpack.c.l.b16 %v981
      %v1011 = vunpack.c.l.b16 %v982
      %v1012 = vpack.c.b16 %v1009, %v1008
      %v1013 = vpack.c.b16 %v1011, %v1010
      %v1017 = vsel %vm591, %v1003, 0
      %1019 = vmatprep.subr.bf16.mxu0 0
      %1020 = vmatpush1.bf16.msra.mxu0 0
      %1021 = vmatprep.subr.bf16.mxu0 0
      %1022 = vmatpush1.bf16.msra.mxu0 0
      %1023 = vmatprep.subr.bf16.mxu0 0
      %1024 = vmatpush1.bf16.msra.mxu0 0
      %1025 = vmatprep.subr.bf16.mxu0 0
      %1026 = vmatpush1.bf16.msra.mxu0 0
      %1027 = vmatprep.subr.bf16.mxu0 0
      %1028 = vmatpush1.bf16.msra.mxu0 0
      %1029 = vmatprep.subr.bf16.mxu0 0
      %1030 = vmatpush1.bf16.msra.mxu0 0
      %1031 = vmatprep.subr.bf16.mxu0 0
      %1032 = vmatpush1.bf16.msra.mxu0 %v1013
      %1033 = vmatprep.subr.bf16.mxu0 0
      %1034 = vmatpush1.bf16.msra.mxu0 %v1012
      %1035 = vmatprep.subr.bf16.mxu0 0
      %1036 = vmatpush2.bf16.msra.mxu0 0
      %1037 = vmatprep.subr.bf16.mxu0 0
      %1038 = vmatpush2.bf16.msra.mxu0 0
      %1039 = vmatprep.subr.bf16.mxu0 0
      %1040 = vmatpush2.bf16.msra.mxu0 0
      %1041 = vmatprep.subr.bf16.mxu0 0
      %1042 = vmatpush2.bf16.msra.mxu0 0
      %1043 = vmatprep.subr.bf16.mxu0 0
      %1044 = vmatpush2.bf16.msra.mxu0 0
      %1045 = vmatprep.subr.bf16.mxu0 0
      %1046 = vmatpush2.bf16.msra.mxu0 0
      %1047 = vmatprep.subr.bf16.mxu0 0
      %1048 = vmatpush2.bf16.msra.mxu0 0
      %1049 = vmatprep.subr.bf16.mxu0 0
      %1050 = vmatpush2.bf16.msra.mxu0 0
      %1051 = vmatprep.mubr.bf16.mxu0 0
      %1052 = vmatmul.mubr.bf16.gmra.mxu0 %v1017
      %v1053 = vpop.f32.mrf.mxu0
      %v1054 = vadd.f32 0.0, %v1053
      %v1055 = vpop.f32.mrf.mxu0
      %v1056 = vpop.f32.mrf.mxu0
      %v1057 = vadd.f32 0.0, %v1056
      %v1058 = vpop.f32.mrf.mxu0
      %1059 = vdwg.mxu0
      %v1060 = vadd.f32 %v968, %v1054
      %v1061 = vadd.f32 %v969, %v1057
      %v1062 = vld [vmem:[%s970] sm:$0x7]
      %v1063 = vld [vmem:[%s970 + $0x4] sm:$0x7]
      %v1064 = vld [vmem:[%s970 + $0x8] sm:$0x7]
      %v1065 = vld [vmem:[%s970 + $0xc] sm:$0x7]
      %v1071 = vunpack.c.l.s4 1983009808
      %v1072 = vunpack.c.0.s8 %v1071
      %v1073 = vlaneseq
      %v1074 = vshrl.u32 %v1073, 7
      %v1075 = vsub.s32 %v1072, %v1074
      %v1076 = vrot.slane %v1062, %v1075
      %v1077 = vcombine.high %v1076, %v1076
      %v1079 = vunpack.c.l.s4 1983009808
      %v1080 = vunpack.c.0.s8 %v1079
      %v1081 = vlaneseq
      %v1082 = vshrl.u32 %v1081, 7
      %v1083 = vsub.s32 %v1080, %v1082
      %v1084 = vrot.slane %v1063, %v1083
      %v1085 = vcombine.high %v1084, %v1084
      %v1087 = vunpack.c.l.s4 1983009808
      %v1088 = vunpack.c.0.s8 %v1087
      %v1089 = vlaneseq
      %v1090 = vshrl.u32 %v1089, 7
      %v1091 = vsub.s32 %v1088, %v1090
      %v1092 = vrot.slane %v1064, %v1091
      %v1093 = vcombine.high %v1092, %v1092
      %v1095 = vunpack.c.l.s4 1983009808
      %v1096 = vunpack.c.0.s8 %v1095
      %v1097 = vlaneseq
      %v1098 = vshrl.u32 %v1097, 7
      %v1099 = vsub.s32 %v1096, %v1098
      %v1100 = vrot.slane %v1065, %v1099
      %v1101 = vcombine.high %v1100, %v1100
      %v1103 = vshrl.u32 %v1076, 16
      %v1105 = vrot.slane %v1103, 6
      %v1106 = vshll.u32 %v1076, 16
      %v1108 = vrot.slane %v1106, 7
      %v1109 = vor.u32 %v1105, %v1108
      %v1110 = vrot.slane %v1109, 2
      %v1112 = vshll.u32 %v1077, 16
      %v1114 = vrot.slane %v1112, 7
      %v1115 = vsel %vm684, %v1110, %v1114
      %v1117 = vshrl.u32 %v1084, 16
      %v1119 = vrot.slane %v1117, 6
      %v1120 = vshll.u32 %v1084, 16
      %v1122 = vrot.slane %v1120, 7
      %v1123 = vor.u32 %v1119, %v1122
      %v1124 = vrot.slane %v1123, 2
      %v1126 = vshll.u32 %v1085, 16
      %v1128 = vrot.slane %v1126, 7
      %v1129 = vsel %vm684, %v1124, %v1128
      %v1131 = vshrl.u32 %v1092, 16
      %v1133 = vrot.slane %v1131, 6
      %v1134 = vshll.u32 %v1092, 16
      %v1136 = vrot.slane %v1134, 7
      %v1137 = vor.u32 %v1133, %v1136
      %v1138 = vrot.slane %v1137, 2
      %v1140 = vshll.u32 %v1093, 16
      %v1142 = vrot.slane %v1140, 7
      %v1143 = vsel %vm684, %v1138, %v1142
      %v1145 = vshrl.u32 %v1100, 16
      %v1147 = vrot.slane %v1145, 6
      %v1148 = vshll.u32 %v1100, 16
      %v1150 = vrot.slane %v1148, 7
      %v1151 = vor.u32 %v1147, %v1150
      %v1152 = vrot.slane %v1151, 2
      %v1154 = vshll.u32 %v1101, 16
      %v1156 = vrot.slane %v1154, 7
      %v1157 = vsel %vm684, %v1152, %v1156
      %s1158 = sadd.s32 %s550, 4
      %s1159 = smul.u32 %s1158, 4
      %s1160 = smul.addr %s1159, 4
      %s1161 = scalar_lea.vmem %s1, %s1160
      %v1162 = vld [vmem:[%s1161] sm:$0xf]
      %v1163 = vld [vmem:[%s1161 + $0x4] sm:$0xf]
      %v1164 = vld [vmem:[%s1161 + $0x8] sm:$0xf]
      %v1165 = vld [vmem:[%s1161 + $0xc] sm:$0xf]
      %v1166 = vcombine.low %v1115, %v1129
      %v1167 = vcombine.low %v1143, %v1157
      %v1169 = vunpack.c.l.s4 1983009808
      %v1170 = vunpack.c.0.s8 %v1169
      %v1171 = vlaneseq
      %v1172 = vshrl.u32 %v1171, 7
      %v1173 = vsub.s32 %v1170, %v1172
      %v1174 = vrot.slane %v1166, %v1173
      %v1176 = vunpack.c.l.s4 1983009808
      %v1177 = vunpack.c.0.s8 %v1176
      %v1178 = vlaneseq
      %v1179 = vshrl.u32 %v1178, 7
      %v1180 = vsub.s32 %v1177, %v1179
      %v1181 = vrot.slane %v1167, %v1180
      %v1182 = vcombine.low %v1174, %v1181
      %v1187 = vunpack.c.l.b16 %v1162
      %v1188 = vunpack.c.l.b16 %v1163
      %v1189 = vunpack.c.l.b16 %v1164
      %v1190 = vunpack.c.l.b16 %v1165
      %v1191 = vpack.c.b16 %v1188, %v1187
      %v1192 = vpack.c.b16 %v1190, %v1189
      %v1196 = vsel %vm591, %v1182, 0
      %1198 = vmatprep.subr.bf16.mxu0 0
      %1199 = vmatpush1.bf16.msra.mxu0 0
      %1200 = vmatprep.subr.bf16.mxu0 0
      %1201 = vmatpush1.bf16.msra.mxu0 0
      %1202 = vmatprep.subr.bf16.mxu0 0
      %1203 = vmatpush1.bf16.msra.mxu0 0
      %1204 = vmatprep.subr.bf16.mxu0 0
      %1205 = vmatpush1.bf16.msra.mxu0 0
      %1206 = vmatprep.subr.bf16.mxu0 0
      %1207 = vmatpush1.bf16.msra.mxu0 0
      %1208 = vmatprep.subr.bf16.mxu0 0
      %1209 = vmatpush1.bf16.msra.mxu0 0
      %1210 = vmatprep.subr.bf16.mxu0 0
      %1211 = vmatpush1.bf16.msra.mxu0 %v1192
      %1212 = vmatprep.subr.bf16.mxu0 0
      %1213 = vmatpush1.bf16.msra.mxu0 %v1191
      %1214 = vmatprep.subr.bf16.mxu0 0
      %1215 = vmatpush2.bf16.msra.mxu0 0
      %1216 = vmatprep.subr.bf16.mxu0 0
      %1217 = vmatpush2.bf16.msra.mxu0 0
      %1218 = vmatprep.subr.bf16.mxu0 0
      %1219 = vmatpush2.bf16.msra.mxu0 0
      %1220 = vmatprep.subr.bf16.mxu0 0
      %1221 = vmatpush2.bf16.msra.mxu0 0
      %1222 = vmatprep.subr.bf16.mxu0 0
      %1223 = vmatpush2.bf16.msra.mxu0 0
      %1224 = vmatprep.subr.bf16.mxu0 0
      %1225 = vmatpush2.bf16.msra.mxu0 0
      %1226 = vmatprep.subr.bf16.mxu0 0
      %1227 = vmatpush2.bf16.msra.mxu0 0
      %1228 = vmatprep.subr.bf16.mxu0 0
      %1229 = vmatpush2.bf16.msra.mxu0 0
      %1230 = vmatprep.mubr.bf16.mxu0 0
      %1231 = vmatmul.mubr.bf16.gmra.mxu0 %v1196
      %v1232 = vpop.f32.mrf.mxu0
      %v1233 = vadd.f32 0.0, %v1232
      %v1234 = vpop.f32.mrf.mxu0
      %v1235 = vpop.f32.mrf.mxu0
      %v1236 = vadd.f32 0.0, %v1235
      %v1237 = vpop.f32.mrf.mxu0
      %1238 = vdwg.mxu0
      %v1239 = vadd.f32 %v1060, %v1233
      %v1240 = vadd.f32 %v1061, %v1236
      %v1241 = vld [vmem:[%s970] sm:$0x6]
      %v1242 = vld [vmem:[%s970 + $0x4] sm:$0x6]
      %v1243 = vld [vmem:[%s970 + $0x8] sm:$0x6]
      %v1244 = vld [vmem:[%s970 + $0xc] sm:$0x6]
      %v1250 = vunpack.c.l.s4 1983009808
      %v1251 = vunpack.c.0.s8 %v1250
      %v1252 = vlaneseq
      %v1253 = vshrl.u32 %v1252, 7
      %v1254 = vsub.s32 %v1251, %v1253
      %v1255 = vrot.slane %v1241, %v1254
      %v1256 = vcombine.high %v1255, %v1255
      %v1258 = vunpack.c.l.s4 1983009808
      %v1259 = vunpack.c.0.s8 %v1258
      %v1260 = vlaneseq
      %v1261 = vshrl.u32 %v1260, 7
      %v1262 = vsub.s32 %v1259, %v1261
      %v1263 = vrot.slane %v1242, %v1262
      %v1264 = vcombine.high %v1263, %v1263
      %v1266 = vunpack.c.l.s4 1983009808
      %v1267 = vunpack.c.0.s8 %v1266
      %v1268 = vlaneseq
      %v1269 = vshrl.u32 %v1268, 7
      %v1270 = vsub.s32 %v1267, %v1269
      %v1271 = vrot.slane %v1243, %v1270
      %v1272 = vcombine.high %v1271, %v1271
      %v1274 = vunpack.c.l.s4 1983009808
      %v1275 = vunpack.c.0.s8 %v1274
      %v1276 = vlaneseq
      %v1277 = vshrl.u32 %v1276, 7
      %v1278 = vsub.s32 %v1275, %v1277
      %v1279 = vrot.slane %v1244, %v1278
      %v1280 = vcombine.high %v1279, %v1279
      %v1281 = vrot.slane %v1255, 7
      %v1282 = vrot.slane %v1281, 2
      %v1283 = vrot.slane %v1256, 7
      %v1284 = vsel %vm870, %v1282, %v1283
      %v1285 = vrot.slane %v1263, 7
      %v1286 = vrot.slane %v1285, 2
      %v1287 = vrot.slane %v1264, 7
      %v1288 = vsel %vm870, %v1286, %v1287
      %v1289 = vrot.slane %v1271, 7
      %v1290 = vrot.slane %v1289, 2
      %v1291 = vrot.slane %v1272, 7
      %v1292 = vsel %vm870, %v1290, %v1291
      %v1293 = vrot.slane %v1279, 7
      %v1294 = vrot.slane %v1293, 2
      %v1295 = vrot.slane %v1280, 7
      %v1296 = vsel %vm870, %v1294, %v1295
      %s1297 = sadd.s32 %s550, 5
      %s1298 = smul.u32 %s1297, 4
      %s1299 = smul.addr %s1298, 4
      %s1300 = scalar_lea.vmem %s1, %s1299
      %v1301 = vld [vmem:[%s1300] sm:$0xf]
      %v1302 = vld [vmem:[%s1300 + $0x4] sm:$0xf]
      %v1303 = vld [vmem:[%s1300 + $0x8] sm:$0xf]
      %v1304 = vld [vmem:[%s1300 + $0xc] sm:$0xf]
      %v1305 = vcombine.low %v1284, %v1288
      %v1306 = vcombine.low %v1292, %v1296
      %v1308 = vunpack.c.l.s4 1983009808
      %v1309 = vunpack.c.0.s8 %v1308
      %v1310 = vlaneseq
      %v1311 = vshrl.u32 %v1310, 7
      %v1312 = vsub.s32 %v1309, %v1311
      %v1313 = vrot.slane %v1305, %v1312
      %v1315 = vunpack.c.l.s4 1983009808
      %v1316 = vunpack.c.0.s8 %v1315
      %v1317 = vlaneseq
      %v1318 = vshrl.u32 %v1317, 7
      %v1319 = vsub.s32 %v1316, %v1318
      %v1320 = vrot.slane %v1306, %v1319
      %v1321 = vcombine.low %v1313, %v1320
      %v1326 = vunpack.c.l.b16 %v1301
      %v1327 = vunpack.c.l.b16 %v1302
      %v1328 = vunpack.c.l.b16 %v1303
      %v1329 = vunpack.c.l.b16 %v1304
      %v1330 = vpack.c.b16 %v1327, %v1326
      %v1331 = vpack.c.b16 %v1329, %v1328
      %v1335 = vsel %vm591, %v1321, 0
      %1337 = vmatprep.subr.bf16.mxu0 0
      %1338 = vmatpush1.bf16.msra.mxu0 0
      %1339 = vmatprep.subr.bf16.mxu0 0
      %1340 = vmatpush1.bf16.msra.mxu0 0
      %1341 = vmatprep.subr.bf16.mxu0 0
      %1342 = vmatpush1.bf16.msra.mxu0 0
      %1343 = vmatprep.subr.bf16.mxu0 0
      %1344 = vmatpush1.bf16.msra.mxu0 0
      %1345 = vmatprep.subr.bf16.mxu0 0
      %1346 = vmatpush1.bf16.msra.mxu0 0
      %1347 = vmatprep.subr.bf16.mxu0 0
      %1348 = vmatpush1.bf16.msra.mxu0 0
      %1349 = vmatprep.subr.bf16.mxu0 0
      %1350 = vmatpush1.bf16.msra.mxu0 %v1331
      %1351 = vmatprep.subr.bf16.mxu0 0
      %1352 = vmatpush1.bf16.msra.mxu0 %v1330
      %1353 = vmatprep.subr.bf16.mxu0 0
      %1354 = vmatpush2.bf16.msra.mxu0 0
      %1355 = vmatprep.subr.bf16.mxu0 0
      %1356 = vmatpush2.bf16.msra.mxu0 0
      %1357 = vmatprep.subr.bf16.mxu0 0
      %1358 = vmatpush2.bf16.msra.mxu0 0
      %1359 = vmatprep.subr.bf16.mxu0 0
      %1360 = vmatpush2.bf16.msra.mxu0 0
      %1361 = vmatprep.subr.bf16.mxu0 0
      %1362 = vmatpush2.bf16.msra.mxu0 0
      %1363 = vmatprep.subr.bf16.mxu0 0
      %1364 = vmatpush2.bf16.msra.mxu0 0
      %1365 = vmatprep.subr.bf16.mxu0 0
      %1366 = vmatpush2.bf16.msra.mxu0 0
      %1367 = vmatprep.subr.bf16.mxu0 0
      %1368 = vmatpush2.bf16.msra.mxu0 0
      %1369 = vmatprep.mubr.bf16.mxu0 0
      %1370 = vmatmul.mubr.bf16.gmra.mxu0 %v1335
      %v1371 = vpop.f32.mrf.mxu0
      %v1372 = vadd.f32 0.0, %v1371
      %v1373 = vpop.f32.mrf.mxu0
      %v1374 = vpop.f32.mrf.mxu0
      %v1375 = vadd.f32 0.0, %v1374
      %v1376 = vpop.f32.mrf.mxu0
      %1377 = vdwg.mxu0
      %v1378 = vadd.f32 %v1239, %v1372
      %v1379 = vadd.f32 %v1240, %v1375
      %s1380 = scalar_lea.vmem [#allocation3], 8
      %v1381 = vld [vmem:[%s1380] sm:$0x3]
      %v1382 = vld [vmem:[%s1380 + $0x4] sm:$0x3]
      %v1383 = vld [vmem:[%s1380 + $0x8] sm:$0x3]
      %v1384 = vld [vmem:[%s1380 + $0xc] sm:$0x3]
      %s1385 = sadd.s32 %s550, 6
      %s1386 = smul.u32 %s1385, 4
      %s1387 = smul.addr %s1386, 4
      %s1388 = scalar_lea.vmem %s1, %s1387
      %v1389 = vld [vmem:[%s1388] sm:$0xf]
      %v1390 = vld [vmem:[%s1388 + $0x4] sm:$0xf]
      %v1391 = vld [vmem:[%s1388 + $0x8] sm:$0xf]
      %v1392 = vld [vmem:[%s1388 + $0xc] sm:$0xf]
      %v1397 = vcombine.low %v1381, %v1382
      %v1398 = vcombine.low %v1383, %v1384
      %v1400 = vunpack.c.l.s4 1983009808
      %v1401 = vunpack.c.0.s8 %v1400
      %v1402 = vlaneseq
      %v1403 = vshrl.u32 %v1402, 7
      %v1404 = vsub.s32 %v1401, %v1403
      %v1405 = vrot.slane %v1397, %v1404
      %v1407 = vunpack.c.l.s4 1983009808
      %v1408 = vunpack.c.0.s8 %v1407
      %v1409 = vlaneseq
      %v1410 = vshrl.u32 %v1409, 7
      %v1411 = vsub.s32 %v1408, %v1410
      %v1412 = vrot.slane %v1398, %v1411
      %v1413 = vcombine.low %v1405, %v1412
      %v1418 = vunpack.c.l.b16 %v1389
      %v1419 = vunpack.c.l.b16 %v1390
      %v1420 = vunpack.c.l.b16 %v1391
      %v1421 = vunpack.c.l.b16 %v1392
      %v1422 = vpack.c.b16 %v1419, %v1418
      %v1423 = vpack.c.b16 %v1421, %v1420
      %v1427 = vsel %vm591, %v1413, 0
      %1429 = vmatprep.subr.bf16.mxu0 0
      %1430 = vmatpush1.bf16.msra.mxu0 0
      %1431 = vmatprep.subr.bf16.mxu0 0
      %1432 = vmatpush1.bf16.msra.mxu0 0
      %1433 = vmatprep.subr.bf16.mxu0 0
      %1434 = vmatpush1.bf16.msra.mxu0 0
      %1435 = vmatprep.subr.bf16.mxu0 0
      %1436 = vmatpush1.bf16.msra.mxu0 0
      %1437 = vmatprep.subr.bf16.mxu0 0
      %1438 = vmatpush1.bf16.msra.mxu0 0
      %1439 = vmatprep.subr.bf16.mxu0 0
      %1440 = vmatpush1.bf16.msra.mxu0 0
      %1441 = vmatprep.subr.bf16.mxu0 0
      %1442 = vmatpush1.bf16.msra.mxu0 %v1423
      %1443 = vmatprep.subr.bf16.mxu0 0
      %1444 = vmatpush1.bf16.msra.mxu0 %v1422
      %1445 = vmatprep.subr.bf16.mxu0 0
      %1446 = vmatpush2.bf16.msra.mxu0 0
      %1447 = vmatprep.subr.bf16.mxu0 0
      %1448 = vmatpush2.bf16.msra.mxu0 0
      %1449 = vmatprep.subr.bf16.mxu0 0
      %1450 = vmatpush2.bf16.msra.mxu0 0
      %1451 = vmatprep.subr.bf16.mxu0 0
      %1452 = vmatpush2.bf16.msra.mxu0 0
      %1453 = vmatprep.subr.bf16.mxu0 0
      %1454 = vmatpush2.bf16.msra.mxu0 0
      %1455 = vmatprep.subr.bf16.mxu0 0
      %1456 = vmatpush2.bf16.msra.mxu0 0
      %1457 = vmatprep.subr.bf16.mxu0 0
      %1458 = vmatpush2.bf16.msra.mxu0 0
      %1459 = vmatprep.subr.bf16.mxu0 0
      %1460 = vmatpush2.bf16.msra.mxu0 0
      %1461 = vmatprep.mubr.bf16.mxu0 0
      %1462 = vmatmul.mubr.bf16.gmra.mxu0 %v1427
      %v1463 = vpop.f32.mrf.mxu0
      %v1464 = vadd.f32 0.0, %v1463
      %v1465 = vpop.f32.mrf.mxu0
      %v1466 = vpop.f32.mrf.mxu0
      %v1467 = vadd.f32 0.0, %v1466
      %v1468 = vpop.f32.mrf.mxu0
      %1469 = vdwg.mxu0
      %v1470 = vadd.f32 %v1378, %v1464
      %v1471 = vadd.f32 %v1379, %v1467
      %v1472 = vld [vmem:[%s1380] sm:$0x7]
      %v1473 = vld [vmem:[%s1380 + $0x4] sm:$0x7]
      %v1474 = vld [vmem:[%s1380 + $0x8] sm:$0x7]
      %v1475 = vld [vmem:[%s1380 + $0xc] sm:$0x7]
      %v1481 = vunpack.c.l.s4 1983009808
      %v1482 = vunpack.c.0.s8 %v1481
      %v1483 = vlaneseq
      %v1484 = vshrl.u32 %v1483, 7
      %v1485 = vsub.s32 %v1482, %v1484
      %v1486 = vrot.slane %v1472, %v1485
      %v1487 = vcombine.high %v1486, %v1486
      %v1489 = vunpack.c.l.s4 1983009808
      %v1490 = vunpack.c.0.s8 %v1489
      %v1491 = vlaneseq
      %v1492 = vshrl.u32 %v1491, 7
      %v1493 = vsub.s32 %v1490, %v1492
      %v1494 = vrot.slane %v1473, %v1493
      %v1495 = vcombine.high %v1494, %v1494
      %v1497 = vunpack.c.l.s4 1983009808
      %v1498 = vunpack.c.0.s8 %v1497
      %v1499 = vlaneseq
      %v1500 = vshrl.u32 %v1499, 7
      %v1501 = vsub.s32 %v1498, %v1500
      %v1502 = vrot.slane %v1474, %v1501
      %v1503 = vcombine.high %v1502, %v1502
      %v1505 = vunpack.c.l.s4 1983009808
      %v1506 = vunpack.c.0.s8 %v1505
      %v1507 = vlaneseq
      %v1508 = vshrl.u32 %v1507, 7
      %v1509 = vsub.s32 %v1506, %v1508
      %v1510 = vrot.slane %v1475, %v1509
      %v1511 = vcombine.high %v1510, %v1510
      %v1513 = vshrl.u32 %v1486, 16
      %v1515 = vrot.slane %v1513, 6
      %v1516 = vshll.u32 %v1486, 16
      %v1518 = vrot.slane %v1516, 7
      %v1519 = vor.u32 %v1515, %v1518
      %v1520 = vrot.slane %v1519, 2
      %v1522 = vshll.u32 %v1487, 16
      %v1524 = vrot.slane %v1522, 7
      %v1525 = vsel %vm684, %v1520, %v1524
      %v1527 = vshrl.u32 %v1494, 16
      %v1529 = vrot.slane %v1527, 6
      %v1530 = vshll.u32 %v1494, 16
      %v1532 = vrot.slane %v1530, 7
      %v1533 = vor.u32 %v1529, %v1532
      %v1534 = vrot.slane %v1533, 2
      %v1536 = vshll.u32 %v1495, 16
      %v1538 = vrot.slane %v1536, 7
      %v1539 = vsel %vm684, %v1534, %v1538
      %v1541 = vshrl.u32 %v1502, 16
      %v1543 = vrot.slane %v1541, 6
      %v1544 = vshll.u32 %v1502, 16
      %v1546 = vrot.slane %v1544, 7
      %v1547 = vor.u32 %v1543, %v1546
      %v1548 = vrot.slane %v1547, 2
      %v1550 = vshll.u32 %v1503, 16
      %v1552 = vrot.slane %v1550, 7
      %v1553 = vsel %vm684, %v1548, %v1552
      %v1555 = vshrl.u32 %v1510, 16
      %v1557 = vrot.slane %v1555, 6
      %v1558 = vshll.u32 %v1510, 16
      %v1560 = vrot.slane %v1558, 7
      %v1561 = vor.u32 %v1557, %v1560
      %v1562 = vrot.slane %v1561, 2
      %v1564 = vshll.u32 %v1511, 16
      %v1566 = vrot.slane %v1564, 7
      %v1567 = vsel %vm684, %v1562, %v1566
      %s1568 = sadd.s32 %s550, 7
      %s1569 = smul.u32 %s1568, 4
      %s1570 = smul.addr %s1569, 4
      %s1571 = scalar_lea.vmem %s1, %s1570
      %v1572 = vld [vmem:[%s1571] sm:$0xf]
      %v1573 = vld [vmem:[%s1571 + $0x4] sm:$0xf]
      %v1574 = vld [vmem:[%s1571 + $0x8] sm:$0xf]
      %v1575 = vld [vmem:[%s1571 + $0xc] sm:$0xf]
      %v1576 = vcombine.low %v1525, %v1539
      %v1577 = vcombine.low %v1553, %v1567
      %v1579 = vunpack.c.l.s4 1983009808
      %v1580 = vunpack.c.0.s8 %v1579
      %v1581 = vlaneseq
      %v1582 = vshrl.u32 %v1581, 7
      %v1583 = vsub.s32 %v1580, %v1582
      %v1584 = vrot.slane %v1576, %v1583
      %v1586 = vunpack.c.l.s4 1983009808
      %v1587 = vunpack.c.0.s8 %v1586
      %v1588 = vlaneseq
      %v1589 = vshrl.u32 %v1588, 7
      %v1590 = vsub.s32 %v1587, %v1589
      %v1591 = vrot.slane %v1577, %v1590
      %v1592 = vcombine.low %v1584, %v1591
      %v1597 = vunpack.c.l.b16 %v1572
      %v1598 = vunpack.c.l.b16 %v1573
      %v1599 = vunpack.c.l.b16 %v1574
      %v1600 = vunpack.c.l.b16 %v1575
      %v1601 = vpack.c.b16 %v1598, %v1597
      %v1602 = vpack.c.b16 %v1600, %v1599
      %v1606 = vsel %vm591, %v1592, 0
      %1608 = vmatprep.subr.bf16.mxu0 0
      %1609 = vmatpush1.bf16.msra.mxu0 0
      %1610 = vmatprep.subr.bf16.mxu0 0
      %1611 = vmatpush1.bf16.msra.mxu0 0
      %1612 = vmatprep.subr.bf16.mxu0 0
      %1613 = vmatpush1.bf16.msra.mxu0 0
      %1614 = vmatprep.subr.bf16.mxu0 0
      %1615 = vmatpush1.bf16.msra.mxu0 0
      %1616 = vmatprep.subr.bf16.mxu0 0
      %1617 = vmatpush1.bf16.msra.mxu0 0
      %1618 = vmatprep.subr.bf16.mxu0 0
      %1619 = vmatpush1.bf16.msra.mxu0 0
      %1620 = vmatprep.subr.bf16.mxu0 0
      %1621 = vmatpush1.bf16.msra.mxu0 %v1602
      %1622 = vmatprep.subr.bf16.mxu0 0
      %1623 = vmatpush1.bf16.msra.mxu0 %v1601
      %1624 = vmatprep.subr.bf16.mxu0 0
      %1625 = vmatpush2.bf16.msra.mxu0 0
      %1626 = vmatprep.subr.bf16.mxu0 0
      %1627 = vmatpush2.bf16.msra.mxu0 0
      %1628 = vmatprep.subr.bf16.mxu0 0
      %1629 = vmatpush2.bf16.msra.mxu0 0
      %1630 = vmatprep.subr.bf16.mxu0 0
      %1631 = vmatpush2.bf16.msra.mxu0 0
      %1632 = vmatprep.subr.bf16.mxu0 0
      %1633 = vmatpush2.bf16.msra.mxu0 0
      %1634 = vmatprep.subr.bf16.mxu0 0
      %1635 = vmatpush2.bf16.msra.mxu0 0
      %1636 = vmatprep.subr.bf16.mxu0 0
      %1637 = vmatpush2.bf16.msra.mxu0 0
      %1638 = vmatprep.subr.bf16.mxu0 0
      %1639 = vmatpush2.bf16.msra.mxu0 0
      %1640 = vmatprep.mubr.bf16.mxu0 0
      %1641 = vmatmul.mubr.bf16.gmra.mxu0 %v1606
      %v1642 = vpop.f32.mrf.mxu0
      %v1643 = vadd.f32 0.0, %v1642
      %v1644 = vpop.f32.mrf.mxu0
      %v1645 = vpop.f32.mrf.mxu0
      %v1646 = vadd.f32 0.0, %v1645
      %v1647 = vpop.f32.mrf.mxu0
      %1648 = vdwg.mxu0
      %v1649 = vadd.f32 %v1470, %v1643
      %v1650 = vadd.f32 %v1471, %v1646
      %v1651 = vld [vmem:[%s1380] sm:$0x6]
      %v1652 = vld [vmem:[%s1380 + $0x4] sm:$0x6]
      %v1653 = vld [vmem:[%s1380 + $0x8] sm:$0x6]
      %v1654 = vld [vmem:[%s1380 + $0xc] sm:$0x6]
      %v1660 = vunpack.c.l.s4 1983009808
      %v1661 = vunpack.c.0.s8 %v1660
      %v1662 = vlaneseq
      %v1663 = vshrl.u32 %v1662, 7
      %v1664 = vsub.s32 %v1661, %v1663
      %v1665 = vrot.slane %v1651, %v1664
      %v1666 = vcombine.high %v1665, %v1665
      %v1668 = vunpack.c.l.s4 1983009808
      %v1669 = vunpack.c.0.s8 %v1668
      %v1670 = vlaneseq
      %v1671 = vshrl.u32 %v1670, 7
      %v1672 = vsub.s32 %v1669, %v1671
      %v1673 = vrot.slane %v1652, %v1672
      %v1674 = vcombine.high %v1673, %v1673
      %v1676 = vunpack.c.l.s4 1983009808
      %v1677 = vunpack.c.0.s8 %v1676
      %v1678 = vlaneseq
      %v1679 = vshrl.u32 %v1678, 7
      %v1680 = vsub.s32 %v1677, %v1679
      %v1681 = vrot.slane %v1653, %v1680
      %v1682 = vcombine.high %v1681, %v1681
      %v1684 = vunpack.c.l.s4 1983009808
      %v1685 = vunpack.c.0.s8 %v1684
      %v1686 = vlaneseq
      %v1687 = vshrl.u32 %v1686, 7
      %v1688 = vsub.s32 %v1685, %v1687
      %v1689 = vrot.slane %v1654, %v1688
      %v1690 = vcombine.high %v1689, %v1689
      %v1691 = vrot.slane %v1665, 7
      %v1692 = vrot.slane %v1691, 2
      %v1693 = vrot.slane %v1666, 7
      %v1694 = vsel %vm870, %v1692, %v1693
      %v1695 = vrot.slane %v1673, 7
      %v1696 = vrot.slane %v1695, 2
      %v1697 = vrot.slane %v1674, 7
      %v1698 = vsel %vm870, %v1696, %v1697
      %v1699 = vrot.slane %v1681, 7
      %v1700 = vrot.slane %v1699, 2
      %v1701 = vrot.slane %v1682, 7
      %v1702 = vsel %vm870, %v1700, %v1701
      %v1703 = vrot.slane %v1689, 7
      %v1704 = vrot.slane %v1703, 2
      %v1705 = vrot.slane %v1690, 7
      %v1706 = vsel %vm870, %v1704, %v1705
      %s1707 = sadd.s32 %s550, 8
      %s1708 = smul.u32 %s1707, 4
      %s1709 = smul.addr %s1708, 4
      %s1710 = scalar_lea.vmem %s1, %s1709
      %v1711 = vld [vmem:[%s1710] sm:$0xf]
      %v1712 = vld [vmem:[%s1710 + $0x4] sm:$0xf]
      %v1713 = vld [vmem:[%s1710 + $0x8] sm:$0xf]
      %v1714 = vld [vmem:[%s1710 + $0xc] sm:$0xf]
      %v1715 = vcombine.low %v1694, %v1698
      %v1716 = vcombine.low %v1702, %v1706
      %v1718 = vunpack.c.l.s4 1983009808
      %v1719 = vunpack.c.0.s8 %v1718
      %v1720 = vlaneseq
      %v1721 = vshrl.u32 %v1720, 7
      %v1722 = vsub.s32 %v1719, %v1721
      %v1723 = vrot.slane %v1715, %v1722
      %v1725 = vunpack.c.l.s4 1983009808
      %v1726 = vunpack.c.0.s8 %v1725
      %v1727 = vlaneseq
      %v1728 = vshrl.u32 %v1727, 7
      %v1729 = vsub.s32 %v1726, %v1728
      %v1730 = vrot.slane %v1716, %v1729
      %v1731 = vcombine.low %v1723, %v1730
      %v1736 = vunpack.c.l.b16 %v1711
      %v1737 = vunpack.c.l.b16 %v1712
      %v1738 = vunpack.c.l.b16 %v1713
      %v1739 = vunpack.c.l.b16 %v1714
      %v1740 = vpack.c.b16 %v1737, %v1736
      %v1741 = vpack.c.b16 %v1739, %v1738
      %v1745 = vsel %vm591, %v1731, 0
      %1747 = vmatprep.subr.bf16.mxu0 0
      %1748 = vmatpush1.bf16.msra.mxu0 0
      %1749 = vmatprep.subr.bf16.mxu0 0
      %1750 = vmatpush1.bf16.msra.mxu0 0
      %1751 = vmatprep.subr.bf16.mxu0 0
      %1752 = vmatpush1.bf16.msra.mxu0 0
      %1753 = vmatprep.subr.bf16.mxu0 0
      %1754 = vmatpush1.bf16.msra.mxu0 0
      %1755 = vmatprep.subr.bf16.mxu0 0
      %1756 = vmatpush1.bf16.msra.mxu0 0
      %1757 = vmatprep.subr.bf16.mxu0 0
      %1758 = vmatpush1.bf16.msra.mxu0 0
      %1759 = vmatprep.subr.bf16.mxu0 0
      %1760 = vmatpush1.bf16.msra.mxu0 %v1741
      %1761 = vmatprep.subr.bf16.mxu0 0
      %1762 = vmatpush1.bf16.msra.mxu0 %v1740
      %1763 = vmatprep.subr.bf16.mxu0 0
      %1764 = vmatpush2.bf16.msra.mxu0 0
      %1765 = vmatprep.subr.bf16.mxu0 0
      %1766 = vmatpush2.bf16.msra.mxu0 0
      %1767 = vmatprep.subr.bf16.mxu0 0
      %1768 = vmatpush2.bf16.msra.mxu0 0
      %1769 = vmatprep.subr.bf16.mxu0 0
      %1770 = vmatpush2.bf16.msra.mxu0 0
      %1771 = vmatprep.subr.bf16.mxu0 0
      %1772 = vmatpush2.bf16.msra.mxu0 0
      %1773 = vmatprep.subr.bf16.mxu0 0
      %1774 = vmatpush2.bf16.msra.mxu0 0
      %1775 = vmatprep.subr.bf16.mxu0 0
      %1776 = vmatpush2.bf16.msra.mxu0 0
      %1777 = vmatprep.subr.bf16.mxu0 0
      %1778 = vmatpush2.bf16.msra.mxu0 0
      %1779 = vmatprep.mubr.bf16.mxu0 0
      %1780 = vmatmul.mubr.bf16.gmra.mxu0 %v1745
      %v1781 = vpop.f32.mrf.mxu0
      %v1782 = vadd.f32 0.0, %v1781
      %v1783 = vpop.f32.mrf.mxu0
      %v1784 = vpop.f32.mrf.mxu0
      %v1785 = vadd.f32 0.0, %v1784
      %v1786 = vpop.f32.mrf.mxu0
      %1787 = vdwg.mxu0
      %v1788 = vadd.f32 %v1649, %v1782
      %v1789 = vadd.f32 %v1650, %v1785
      %1790 = vst.msk [vmem:[#allocation2] sm:$0xff] %vm591, %v1788
      %1791 = vst.msk [vmem:[#allocation2 + $0x8] sm:$0xff] %vm591, %v1789
      %p1792 = scmp.eq.s32.totalorder %s27, 2
      // Predicated region
      $region53: #{encoder_forward.8} parent=43 // pred_check
        %p1793 = pneg %p1792
      $region54: #{encoder_forward.8} parent=43 // pred_check_branch
        %1795 = sbr.rel (%p1793) target = $region56
      $region55: #{encoder_forward.8} parent=43 // pred_region
        %v1796 = vld [vmem:[#allocation2] sm:$0xff]
        %v1797 = vld [vmem:[#allocation2 + $0x8] sm:$0xff]
        %v1798 = vld [vmem:[%s2] sm:$0x1]
        %v1800 = vlaneseq
        %v1801 = vshrl.u32 %v1800, 7
        %v1802 = vsub.s32 0, %v1801
        %v1803 = vrot.slane %v1798, %v1802
        %v1805 = vadd.f32 %v1796, %v1803
        %v1806 = vadd.f32 %v1797, %v1803
        %v1807 = vld [vmem:[%s419] sm:$0xf]
        %v1808 = vld [vmem:[%s419 + $0x4] sm:$0xf]
        %v1809 = vunpack.c.l.bf16 %v1807
        %v1810 = vunpack.c.l.bf16 %v1808
        %v1811 = vadd.f32 %v1805, %v1809
        %v1812 = vadd.f32 %v1806, %v1810
        %v1813 = vpack.c.bf16 %v1812, %v1811
        %v1815 = vunpack.c.l.b16 %v1813
        %v1816 = vunpack.c.h.b16 %v1813
        %v1817 = vpack.c.b16 %v1815, %v1815
        %v1818 = vpack.c.b16 %v1816, %v1816
        %vm1821 = vcmask 257024
        %1822 = vst.msk [vmem:[%s428] sm:$0xf] %vm1821, %v1817
        %1823 = vst.msk [vmem:[%s428 + $0x4] sm:$0xf] %vm1821, %v1818
        %v1824 = vld [vmem:[%s431] sm:$0x1]
        %v1825 = vsel %vm591, %v1811, 0.0
        %v1826 = vsel %vm591, %v1812, 0.0
        %v1827 = vadd.f32 %v1825, %v1826
        %v1828 = vrot.slane %v1827, 4
        %v1829 = vadd.f32 %v1827, %v1828
        %v1830 = vrot.slane %v1829, 2
        %v1831 = vadd.f32 %v1829, %v1830
        %v1832 = vrot.slane %v1831, 1
        %v1833 = vadd.f32 %v1831, %v1832
        %v1834 = vadd.f32 %v1824, %v1833
        %vm1835 = vcmask 253952
        %1836 = vst.msk [vmem:[%s431] sm:$0x1] %vm1835, %v1834
        %v1837 = vld [vmem:[%s434] sm:$0x1]
        %v1838 = vmul.f32 %v1811, %v1811
        %v1839 = vmul.f32 %v1812, %v1812
        %v1840 = vsel %vm591, %v1838, 0.0
        %v1841 = vsel %vm591, %v1839, 0.0
        %v1842 = vadd.f32 %v1840, %v1841
        %v1843 = vrot.slane %v1842, 4
        %v1844 = vadd.f32 %v1842, %v1843
        %v1845 = vrot.slane %v1844, 2
        %v1846 = vadd.f32 %v1844, %v1845
        %v1847 = vrot.slane %v1846, 1
        %v1848 = vadd.f32 %v1846, %v1847
        %v1849 = vadd.f32 %v1837, %v1848
        %1850 = vst.msk [vmem:[%s434] sm:$0x1] %vm1835, %v1849
      $region56: #{encoder_forward.8} parent=43 // pred_fallthru
        _
      %p1851 = scmp.lt.s32.totalorder %s25, 1
      %s1852 = scalar_select %p1851, %s25, 1
      %p1853 = scmp.lt.s32.totalorder %s26, 1
      %s1854 = scalar_select %p1853, %s26, 1
      %s1855 = smul.addr %s1854, 2
      %s1856 = smul.addr %s1852, 4
      %s1857 = sadd.s32 %s1855, %s1856
      %s1858 = smul.addr %s1857, 4
      %s1859 = scalar_lea.vmem %s6, %s1858
      %p1860 = scmp.lt.s32.totalorder %s25, 1
      %s1861 = scalar_select %p1860, %s25, 1
      %s1862 = scalar_lea.vmem %s7, %s1861
      %p1863 = scmp.lt.s32.totalorder %s25, 1
      %s1864 = scalar_select %p1863, %s25, 1
      %s1865 = scalar_lea.vmem %s8, %s1864
      // Predicated region
      $region57: #{encoder_forward.8} parent=43 // pred_check
        %p1866 = pneg %p211
      $region58: #{encoder_forward.8} parent=43 // pred_check_branch
        %1868 = sbr.rel (%p1866) target = $region60
      $region59: #{encoder_forward.8} parent=43 // pred_region
        _
      $region60: #{encoder_forward.8} parent=43 // pred_fallthru
        _
      // Predicated region
      $region61: #{encoder_forward.8} parent=43 // pred_check
        %p1869 = pneg %p237
      $region62: #{encoder_forward.8} parent=43 // pred_check_branch
        %1871 = sbr.rel (%p1869) target = $region64
      $region63: #{encoder_forward.8} parent=43 // pred_region
        _
      $region64: #{encoder_forward.8} parent=43 // pred_fallthru
        _
      // Predicated region
      $region65: #{encoder_forward.8} parent=43 // pred_check
        %p1872 = pneg %p263
      $region66: #{encoder_forward.8} parent=43 // pred_check_branch
        %1874 = sbr.rel (%p1872) target = $region68
      $region67: #{encoder_forward.8} parent=43 // pred_region
        _
      $region68: #{encoder_forward.8} parent=43 // pred_fallthru
        _
    $region44: #{encoder_forward.8} parent=5 // pred_fallthru
      _
    %p1875 = scmp.le.s32.totalorder 2, %s15
    // Predicated region
    $region69: #{encoder_forward.8} parent=5 // pred_check
      %p1876 = pneg %p1875
    $region70: #{encoder_forward.8} parent=5 // pred_check_branch
      %1878 = sbr.rel (%p1876) target = $region72
    $region71: #{encoder_forward.8} parent=5 // pred_region
      %s1879 = ssub.s32 %s15, 2
      // Predicated region
      $region73: #{encoder_forward.8} parent=71 // pred_check
        %p1880 = pneg %p217
      $region74: #{encoder_forward.8} parent=71 // pred_check_branch
        %1882 = sbr.rel (%p1880) target = $region76
      $region75: #{encoder_forward.8} parent=71 // pred_region
        %p1883 = scmp.lt.s32.totalorder %s28, 1
        %s1884 = scalar_select %p1883, %s28, 1
        %p1885 = scmp.lt.s32.totalorder %s29, 1
        %s1886 = scalar_select %p1885, %s29, 1
        %s1887 = smul.addr %s1886, 2
        %s1888 = smul.addr %s1884, 4
        %s1889 = sadd.s32 %s1887, %s1888
        %s1890 = smul.addr %s1889, 4
        %s1891 = scalar_lea.vmem %s6, %s1890
      $region76: #{encoder_forward.8} parent=71 // pred_fallthru
        _
      // Predicated region
      $region77: #{encoder_forward.8} parent=71 // pred_check
        %p1892 = pneg %p243
      $region78: #{encoder_forward.8} parent=71 // pred_check_branch
        %1894 = sbr.rel (%p1892) target = $region80
      $region79: #{encoder_forward.8} parent=71 // pred_region
        %p1895 = scmp.lt.s32.totalorder %s28, 1
        %s1896 = scalar_select %p1895, %s28, 1
        %s1897 = scalar_lea.vmem %s7, %s1896
      $region80: #{encoder_forward.8} parent=71 // pred_fallthru
        _
      // Predicated region
      $region81: #{encoder_forward.8} parent=71 // pred_check
        %p1898 = pneg %p269
      $region82: #{encoder_forward.8} parent=71 // pred_check_branch
        %1900 = sbr.rel (%p1898) target = $region84
      $region83: #{encoder_forward.8} parent=71 // pred_region
        %p1901 = scmp.lt.s32.totalorder %s28, 1
        %s1902 = scalar_select %p1901, %s28, 1
        %s1903 = scalar_lea.vmem %s8, %s1902
      $region84: #{encoder_forward.8} parent=71 // pred_fallthru
        _
    $region72: #{encoder_forward.8} parent=5 // pred_fallthru
      _
  $region6: #{encoder_forward.8} parent=0 // loop_footer
    %s19 = sadd.s32 1, %s15
  $region7: #{encoder_forward.8} parent=0 // loop_footer_branch
    %14 = sbr.rel target = $region3
  $region8: #{encoder_forward.8} parent=0 // loop_exit
    _

// kernel: encoder_forward.7
$region0: #{encoder_forward.7}
  #allocation0 [shape = 'u32[]', space=smem, size = 0x4, offset = 0x4, fixed_abs, tag = 'smem constant byte address 0x4 - core index']
  #allocation1 [shape = 'u32[144,128]{1,0:T(1,128)}', space=vmem, size = 0x12000, scoped, tag = 'internal scratch']
  #allocation2 [shape = 'f32[16,32]{1,0:T(8,128)}', space=vmem, size = 0x2000, scoped, tag = 'scratch operand']
  #allocation3 [shape = 'bf16[6,6,32]{2,1,0:T(8,128)(2,1)}', space=vmem, size = 0x3000, scoped, tag = 'scratch operand']
  %s0 = inlined_call_operand.vmem [shape: bf16[2,4,6,6,32], index: 0, kind: input, shape index: {}]
  %s1 = inlined_call_operand.vmem [shape: bf16[27,32,32], index: 1, kind: input, shape index: {}]
  %s2 = inlined_call_operand.vmem [shape: f32[1,32], index: 2, kind: input, shape index: {}]
  %s3 = inlined_call_operand.vmem [shape: f32[2,1,32], index: 3, kind: input, shape index: {}]
  %s4 = inlined_call_operand.vmem [shape: f32[2,1,32], index: 4, kind: input, shape index: {}]
  %s5 = inlined_call_operand.vmem [shape: bf16[2,2,16,32], index: 5, kind: output, shape index: {0}]
  %s6 = inlined_call_operand.vmem [shape: f32[2,1,32], index: 6, kind: output, shape index: {1}]
  %s7 = inlined_call_operand.vmem [shape: f32[2,1,32], index: 7, kind: output, shape index: {2}]
  %8 = xla_tuple %s5, %s6, %s7
  %s9 = sld [smem:[#allocation0]]
  $region81: #{encoder_forward.7} parent=0
    _
  %s11 = ssub.s32 1, %s9
  %s12 = scalar_select 0, %s11, %s9
  loop: start=0, step=1, limit=14
  $region2: #{encoder_forward.7} parent=0 // loop_pre_header
    _
  $region3: #{encoder_forward.7} parent=0 // loop_header
    %s14 = sphi 0, %s18
    %p15 = scmp.ge.s32.totalorder %s14, 14
    %s21 = sphi 0, %s40
    %s22 = sphi 0, %s36
    %s23 = sphi 0, %s32
    %s24 = sphi 0, %s21
    %s25 = sphi 0, %s22
    %s26 = sphi 0, %s23
    %s27 = sphi 0, %s24
    %s28 = sphi 0, %s25
    %s29 = sphi 0, %s26
    %s47 = sphi 0, %s49
    %s50 = sphi 0, %s47
    %s51 = sphi 0, %s50
    %s67 = sphi 0, %s51
    %s71 = sphi 0, %s71
    %s73 = sphi 0, %s71
    %s74 = sphi 0, %s73
    %s88 = sphi 0, %s74
    %s92 = sphi 0, %s92
    %s94 = sphi 0, %s92
    %s95 = sphi 0, %s94
    %s109 = sphi 0, %s95
    %s115 = sphi 0, %s117
    %s118 = sphi 0, %s115
    %s119 = sphi 0, %s118
    %s135 = sphi 0, %s119
    %s141 = sphi 0, %s143
    %s144 = sphi 0, %s141
    %s145 = sphi 0, %s144
    %s161 = sphi 0, %s145
    %s169 = sphi 0, %s171
    %s172 = sphi 0, %s169
    %s173 = sphi 0, %s172
    %s189 = sphi 0, %s173
    %s195 = sphi 0, %s197
    %s198 = sphi 0, %s195
    %s199 = sphi 0, %s198
    %s215 = sphi 0, %s199
    %s221 = sphi 0, %s223
    %s224 = sphi 0, %s221
    %s225 = sphi 0, %s224
    %s241 = sphi 0, %s225
  $region4: #{encoder_forward.7} parent=0 // loop_header_branch
    %17 = sbr.rel (%p15) target = $region8
  $region5: #{encoder_forward.7} parent=0 // loop_body
    %s19 = ssub.s32 %s14, 1
    %s20 = ssub.s32 %s14, 2
    %s30 = sadd.s32 1, %s23
    %p31 = scmp.ge.s32.totalorder %s30, 3
    %s32 = scalar_select %p31, 0, %s30
    %s33 = sadd.s32 1, %s22
    %s34 = scalar_select %p31, %s33, %s22
    %p35 = scmp.ge.s32.totalorder %s34, 2
    %s36 = scalar_select %p35, 0, %s34
    %s37 = sadd.s32 1, %s21
    %s38 = scalar_select %p35, %s37, %s21
    %p39 = scmp.ge.s32.totalorder %s38, 2
    %s40 = scalar_select %p39, 0, %s38
    %s41 = sadd.s32 %s22, %s23
    %s42 = sadd.s32 %s36, %s32
    %s43 = ssub.s32 %s21, %s40
    %s44 = ssub.s32 %s41, %s42
    %s45 = sor.u32 %s43, %s44
    %p46 = scmp.eq.s32.totalorder %s45, 0
    %s48 = sadd.s32 %s47, 1
    %s49 = scalar_select %p46, %s47, %s48
    %p52 = pneg %p46
    %p53 = scmp.eq.s32.totalorder %s14, 11
    %p54 = por %p52, %p53
    %p55 = scmp.ne.s32.totalorder %s47, %s50
    %p56 = scmp.eq.s32.totalorder %s14, 0
    %p57 = por %p55, %p56
    %p58 = scmp.ne.s32.totalorder %s47, %s50
    %p59 = scmp.eq.s32.totalorder %s19, 11
    %p60 = por %p58, %p59
    %p61 = scmp.ne.s32.totalorder %s50, %s51
    %p62 = scmp.eq.s32.totalorder %s19, 0
    %p63 = por %p61, %p62
    %p64 = scmp.ne.s32.totalorder %s50, %s51
    %p65 = scmp.eq.s32.totalorder %s20, 11
    %p66 = por %p64, %p65
    %p68 = scmp.ne.s32.totalorder %s51, %s67
    %p69 = scmp.eq.s32.totalorder %s20, 0
    %p70 = por %p68, %p69
    %s72 = sadd.s32 %s71, 1
    %p75 = scmp.eq.s32.totalorder %s14, 11
    %p76 = scmp.ne.s32.totalorder %s71, %s73
    %p77 = scmp.eq.s32.totalorder %s14, 0
    %p78 = por %p76, %p77
    %p79 = scmp.ne.s32.totalorder %s71, %s73
    %p80 = scmp.eq.s32.totalorder %s19, 11
    %p81 = por %p79, %p80
    %p82 = scmp.ne.s32.totalorder %s73, %s74
    %p83 = scmp.eq.s32.totalorder %s19, 0
    %p84 = por %p82, %p83
    %p85 = scmp.ne.s32.totalorder %s73, %s74
    %p86 = scmp.eq.s32.totalorder %s20, 11
    %p87 = por %p85, %p86
    %p89 = scmp.ne.s32.totalorder %s74, %s88
    %p90 = scmp.eq.s32.totalorder %s20, 0
    %p91 = por %p89, %p90
    %s93 = sadd.s32 %s92, 1
    %p96 = scmp.eq.s32.totalorder %s14, 11
    %p97 = scmp.ne.s32.totalorder %s92, %s94
    %p98 = scmp.eq.s32.totalorder %s14, 0
    %p99 = por %p97, %p98
    %p100 = scmp.ne.s32.totalorder %s92, %s94
    %p101 = scmp.eq.s32.totalorder %s19, 11
    %p102 = por %p100, %p101
    %p103 = scmp.ne.s32.totalorder %s94, %s95
    %p104 = scmp.eq.s32.totalorder %s19, 0
    %p105 = por %p103, %p104
    %p106 = scmp.ne.s32.totalorder %s94, %s95
    %p107 = scmp.eq.s32.totalorder %s20, 11
    %p108 = por %p106, %p107
    %p110 = scmp.ne.s32.totalorder %s95, %s109
    %p111 = scmp.eq.s32.totalorder %s20, 0
    %p112 = por %p110, %p111
    %s113 = ssub.s32 %s21, %s40
    %p114 = scmp.eq.s32.totalorder %s113, 0
    %s116 = sadd.s32 %s115, 1
    %s117 = scalar_select %p114, %s115, %s116
    %p120 = pneg %p114
    %p121 = scmp.eq.s32.totalorder %s14, 11
    %p122 = por %p120, %p121
    %p123 = scmp.ne.s32.totalorder %s115, %s118
    %p124 = scmp.eq.s32.totalorder %s14, 0
    %p125 = por %p123, %p124
    %p126 = scmp.ne.s32.totalorder %s115, %s118
    %p127 = scmp.eq.s32.totalorder %s19, 11
    %p128 = por %p126, %p127
    %p129 = scmp.ne.s32.totalorder %s118, %s119
    %p130 = scmp.eq.s32.totalorder %s19, 0
    %p131 = por %p129, %p130
    %p132 = scmp.ne.s32.totalorder %s118, %s119
    %p133 = scmp.eq.s32.totalorder %s20, 11
    %p134 = por %p132, %p133
    %p136 = scmp.ne.s32.totalorder %s119, %s135
    %p137 = scmp.eq.s32.totalorder %s20, 0
    %p138 = por %p136, %p137
    %s139 = ssub.s32 %s21, %s40
    %p140 = scmp.eq.s32.totalorder %s139, 0
    %s142 = sadd.s32 %s141, 1
    %s143 = scalar_select %p140, %s141, %s142
    %p146 = pneg %p140
    %p147 = scmp.eq.s32.totalorder %s14, 11
    %p148 = por %p146, %p147
    %p149 = scmp.ne.s32.totalorder %s141, %s144
    %p150 = scmp.eq.s32.totalorder %s14, 0
    %p151 = por %p149, %p150
    %p152 = scmp.ne.s32.totalorder %s141, %s144
    %p153 = scmp.eq.s32.totalorder %s19, 11
    %p154 = por %p152, %p153
    %p155 = scmp.ne.s32.totalorder %s144, %s145
    %p156 = scmp.eq.s32.totalorder %s19, 0
    %p157 = por %p155, %p156
    %p158 = scmp.ne.s32.totalorder %s144, %s145
    %p159 = scmp.eq.s32.totalorder %s20, 11
    %p160 = por %p158, %p159
    %p162 = scmp.ne.s32.totalorder %s145, %s161
    %p163 = scmp.eq.s32.totalorder %s20, 0
    %p164 = por %p162, %p163
    %s165 = ssub.s32 %s21, %s40
    %s166 = ssub.s32 %s22, %s36
    %s167 = sor.u32 %s165, %s166
    %p168 = scmp.eq.s32.totalorder %s167, 0
    %s170 = sadd.s32 %s169, 1
    %s171 = scalar_select %p168, %s169, %s170
    %p174 = pneg %p168
    %p175 = scmp.eq.s32.totalorder %s14, 11
    %p176 = por %p174, %p175
    %p177 = scmp.ne.s32.totalorder %s169, %s172
    %p178 = scmp.eq.s32.totalorder %s14, 0
    %p179 = por %p177, %p178
    %p180 = scmp.ne.s32.totalorder %s169, %s172
    %p181 = scmp.eq.s32.totalorder %s19, 11
    %p182 = por %p180, %p181
    %p183 = scmp.ne.s32.totalorder %s172, %s173
    %p184 = scmp.eq.s32.totalorder %s19, 0
    %p185 = por %p183, %p184
    %p186 = scmp.ne.s32.totalorder %s172, %s173
    %p187 = scmp.eq.s32.totalorder %s20, 11
    %p188 = por %p186, %p187
    %p190 = scmp.ne.s32.totalorder %s173, %s189
    %p191 = scmp.eq.s32.totalorder %s20, 0
    %p192 = por %p190, %p191
    %s193 = ssub.s32 %s21, %s40
    %p194 = scmp.eq.s32.totalorder %s193, 0
    %s196 = sadd.s32 %s195, 1
    %s197 = scalar_select %p194, %s195, %s196
    %p200 = pneg %p194
    %p201 = scmp.eq.s32.totalorder %s14, 11
    %p202 = por %p200, %p201
    %p203 = scmp.ne.s32.totalorder %s195, %s198
    %p204 = scmp.eq.s32.totalorder %s14, 0
    %p205 = por %p203, %p204
    %p206 = scmp.ne.s32.totalorder %s195, %s198
    %p207 = scmp.eq.s32.totalorder %s19, 11
    %p208 = por %p206, %p207
    %p209 = scmp.ne.s32.totalorder %s198, %s199
    %p210 = scmp.eq.s32.totalorder %s19, 0
    %p211 = por %p209, %p210
    %p212 = scmp.ne.s32.totalorder %s198, %s199
    %p213 = scmp.eq.s32.totalorder %s20, 11
    %p214 = por %p212, %p213
    %p216 = scmp.ne.s32.totalorder %s199, %s215
    %p217 = scmp.eq.s32.totalorder %s20, 0
    %p218 = por %p216, %p217
    %s219 = ssub.s32 %s21, %s40
    %p220 = scmp.eq.s32.totalorder %s219, 0
    %s222 = sadd.s32 %s221, 1
    %s223 = scalar_select %p220, %s221, %s222
    %p226 = pneg %p220
    %p227 = scmp.eq.s32.totalorder %s14, 11
    %p228 = por %p226, %p227
    %p229 = scmp.ne.s32.totalorder %s221, %s224
    %p230 = scmp.eq.s32.totalorder %s14, 0
    %p231 = por %p229, %p230
    %p232 = scmp.ne.s32.totalorder %s221, %s224
    %p233 = scmp.eq.s32.totalorder %s19, 11
    %p234 = por %p232, %p233
    %p235 = scmp.ne.s32.totalorder %s224, %s225
    %p236 = scmp.eq.s32.totalorder %s19, 0
    %p237 = por %p235, %p236
    %p238 = scmp.ne.s32.totalorder %s224, %s225
    %p239 = scmp.eq.s32.totalorder %s20, 11
    %p240 = por %p238, %p239
    %p242 = scmp.ne.s32.totalorder %s225, %s241
    %p243 = scmp.eq.s32.totalorder %s20, 0
    %p244 = por %p242, %p243
    %p245 = scmp.le.s32.totalorder 1, %s14
    %p246 = scmp.lt.s32.totalorder %s14, 13
    %p247 = pnand %p245, %p246
    %p248 = pneg %p247
    // Predicated region
    $region9: #{encoder_forward.7} parent=5 // pred_check
      _
    $region10: #{encoder_forward.7} parent=5 // pred_check_branch
      %250 = sbr.rel (%p247) target = $region12
    $region11: #{encoder_forward.7} parent=5 // pred_region
      %s251 = ssub.s32 %s14, 1
      // Predicated region
      $region13: #{encoder_forward.7} parent=11 // pred_check
        %p252 = pneg %p84
      $region14: #{encoder_forward.7} parent=11 // pred_check_branch
        %254 = sbr.rel (%p252) target = $region16
      $region15: #{encoder_forward.7} parent=11 // pred_region
        _
      $region16: #{encoder_forward.7} parent=11 // pred_fallthru
        _
      // Predicated region
      $region17: #{encoder_forward.7} parent=11 // pred_check
        %p255 = pneg %p105
      $region18: #{encoder_forward.7} parent=11 // pred_check_branch
        %257 = sbr.rel (%p255) target = $region20
      $region19: #{encoder_forward.7} parent=11 // pred_region
        _
      $region20: #{encoder_forward.7} parent=11 // pred_fallthru
        _
    $region12: #{encoder_forward.7} parent=5 // pred_fallthru
      _
    %p258 = scmp.lt.s32.totalorder %s14, 12
    // Predicated region
    $region21: #{encoder_forward.7} parent=5 // pred_check
      %p259 = pneg %p258
    $region22: #{encoder_forward.7} parent=5 // pred_check_branch
      %261 = sbr.rel (%p259) target = $region24
    $region23: #{encoder_forward.7} parent=5 // pred_region
      // Predicated region
      $region25: #{encoder_forward.7} parent=23 // pred_check
        %p262 = pneg %p57
      $region26: #{encoder_forward.7} parent=23 // pred_check_branch
        %264 = sbr.rel (%p262) target = $region28
      $region27: #{encoder_forward.7} parent=23 // pred_region
        %s265 = sadd.s32 %s22, %s23
        %p266 = scmp.lt.s32.totalorder %s21, 1
        %s267 = scalar_select %p266, %s21, 1
        %p268 = scmp.lt.s32.totalorder %s265, 3
        %s269 = scalar_select %p268, %s265, 3
        %s270 = smul.addr %s269, 6
        %s271 = smul.addr %s267, 24
        %s272 = sadd.s32 %s270, %s271
        %s273 = smul.addr %s272, 4
        %s274 = scalar_lea.vmem %s0, %s273
        %s275 = sadd.s32 %s22, %s23
      $region28: #{encoder_forward.7} parent=23 // pred_fallthru
        _
      // Predicated region
      $region29: #{encoder_forward.7} parent=23 // pred_check
        %p276 = pneg %p125
      $region30: #{encoder_forward.7} parent=23 // pred_check_branch
        %278 = sbr.rel (%p276) target = $region32
      $region31: #{encoder_forward.7} parent=23 // pred_region
        %p279 = scmp.lt.s32.totalorder %s21, 1
        %s280 = scalar_select %p279, %s21, 1
        %s281 = scalar_lea.vmem %s3, %s280
      $region32: #{encoder_forward.7} parent=23 // pred_fallthru
        _
      // Predicated region
      $region33: #{encoder_forward.7} parent=23 // pred_check
        %p282 = pneg %p151
      $region34: #{encoder_forward.7} parent=23 // pred_check_branch
        %284 = sbr.rel (%p282) target = $region36
      $region35: #{encoder_forward.7} parent=23 // pred_region
        %p285 = scmp.lt.s32.totalorder %s21, 1
        %s286 = scalar_select %p285, %s21, 1
        %s287 = scalar_lea.vmem %s4, %s286
      $region36: #{encoder_forward.7} parent=23 // pred_fallthru
        _
    $region24: #{encoder_forward.7} parent=5 // pred_fallthru
      _
    %p288 = scmp.le.s32.totalorder 1, %s14
    %p289 = scmp.lt.s32.totalorder %s14, 13
    %p290 = pnand %p288, %p289
    %p291 = pneg %p290
    // Predicated region
    $region37: #{encoder_forward.7} parent=5 // pred_check
      _
    $region38: #{encoder_forward.7} parent=5 // pred_check_branch
      %293 = sbr.rel (%p290) target = $region40
    $region39: #{encoder_forward.7} parent=5 // pred_region
      %s294 = ssub.s32 %s14, 1
      %s295 = sadd.s32 %s25, %s26
      %p296 = scmp.lt.s32.totalorder %s24, 1
      %s297 = scalar_select %p296, %s24, 1
      %p298 = scmp.lt.s32.totalorder %s295, 3
      %s299 = scalar_select %p298, %s295, 3
      %s300 = smul.addr %s299, 6
      %s301 = smul.addr %s297, 24
      %s302 = sadd.s32 %s300, %s301
      %s303 = smul.addr %s302, 4
      %s304 = scalar_lea.vmem %s0, %s303
      %p305 = pneg %p63
      %p306 = pneg %p60
      %p307 = pneg %p84
      %p308 = pneg %p81
      %p309 = pneg %p105
      %p310 = pneg %p102
      %p311 = scmp.lt.s32.totalorder %s24, 1
      %s312 = scalar_select %p311, %s24, 1
      %s313 = scalar_lea.vmem %s3, %s312
      %p314 = pneg %p131
      %p315 = pneg %p128
      %p316 = scmp.lt.s32.totalorder %s24, 1
      %s317 = scalar_select %p316, %s24, 1
      %s318 = scalar_lea.vmem %s4, %s317
      %p319 = pneg %p157
      %p320 = pneg %p154
      %p321 = pneg %p185
      %p322 = pneg %p182
      %p323 = scmp.lt.s32.totalorder %s24, 1
      %s324 = scalar_select %p323, %s24, 1
      %p325 = scmp.lt.s32.totalorder %s25, 1
      %s326 = scalar_select %p325, %s25, 1
      %s327 = smul.addr %s326, 2
      %s328 = smul.addr %s324, 4
      %s329 = sadd.s32 %s327, %s328
      %s330 = smul.addr %s329, 4
      %s331 = scalar_lea.vmem %s5, %s330
      %p332 = pneg %p211
      %p333 = pneg %p208
      %p334 = scmp.lt.s32.totalorder %s24, 1
      %s335 = scalar_select %p334, %s24, 1
      %s336 = scalar_lea.vmem %s6, %s335
      %p337 = pneg %p237
      %p338 = pneg %p234
      %p339 = scmp.lt.s32.totalorder %s24, 1
      %s340 = scalar_select %p339, %s24, 1
      %s341 = scalar_lea.vmem %s7, %s340
      %s342 = sadd.s32 %s25, %s26
      %p343 = scmp.lt.s32.totalorder %s24, 1
      %s344 = scalar_select %p343, %s24, 1
      %p345 = scmp.lt.s32.totalorder %s342, 3
      %s346 = scalar_select %p345, %s342, 3
      %s347 = smul.addr %s346, 6
      %s348 = smul.addr %s344, 24
      %s349 = sadd.s32 %s347, %s348
      %s350 = smul.addr %s349, 4
      %s351 = scalar_lea.vmem %s0, %s350
      %s352 = sadd.s32 %s25, %s26
      %p353 = scmp.lt.s32.totalorder %s24, 1
      %s354 = scalar_select %p353, %s24, 1
      %s355 = scalar_lea.vmem %s3, %s354
      %p356 = scmp.lt.s32.totalorder %s24, 1
      %s357 = scalar_select %p356, %s24, 1
      %s358 = scalar_lea.vmem %s4, %s357
      %p359 = scmp.lt.s32.totalorder %s24, 1
      %s360 = scalar_select %p359, %s24, 1
      %p361 = scmp.lt.s32.totalorder %s25, 1
      %s362 = scalar_select %p361, %s25, 1
      %s363 = smul.addr %s362, 2
      %s364 = smul.addr %s360, 4
      %s365 = sadd.s32 %s363, %s364
      %s366 = smul.addr %s365, 4
      %s367 = scalar_lea.vmem %s5, %s366
      %p368 = scmp.lt.s32.totalorder %s24, 1
      %s369 = scalar_select %p368, %s24, 1
      %s370 = scalar_lea.vmem %s6, %s369
      %p371 = scmp.lt.s32.totalorder %s24, 1
      %s372 = scalar_select %p371, %s24, 1
      %s373 = scalar_lea.vmem %s7, %s372
      %p375 = scmp.eq.s32.totalorder %s26, 0
      // Predicated region
      $region41: #{encoder_forward.7} parent=39 // pred_check
        %p376 = pneg %p375
      $region42: #{encoder_forward.7} parent=39 // pred_check_branch
        %378 = sbr.rel (%p376) target = $region44
      $region43: #{encoder_forward.7} parent=39 // pred_region
        %vm379 = vcmask 261120
        %380 = vst.msk [vmem:[#allocation2] sm:$0xff] %vm379, 0.0
        %381 = vst.msk [vmem:[#allocation2 + $0x8] sm:$0xff] %vm379, 0.0
      $region44: #{encoder_forward.7} parent=39 // pred_fallthru
        _
      %p382 = scmp.eq.s32.totalorder %s25, 0
      %p383 = pnand %p382, %p375
      %p384 = pneg %p383
      // Predicated region
      $region45: #{encoder_forward.7} parent=39 // pred_check
        _
      $region46: #{encoder_forward.7} parent=39 // pred_check_branch
        %386 = sbr.rel (%p383) target = $region48
      $region47: #{encoder_forward.7} parent=39 // pred_region
        %vm387 = vcmask 253952
        %388 = vst.msk [vmem:[%s370] sm:$0x1] %vm387, 0.0
        %389 = vst.msk [vmem:[%s373] sm:$0x1] %vm387, 0.0
      $region48: #{encoder_forward.7} parent=39 // pred_fallthru
        _
      %v390 = vld [vmem:[%s351] sm:$0x7]
      %v391 = vld [vmem:[%s351 + $0x4] sm:$0x7]
      %v392 = vld [vmem:[%s351 + $0x8] sm:$0x7]
      %v393 = vld [vmem:[%s351 + $0xc] sm:$0x7]
      %v394 = vld [vmem:[%s351 + $0x10] sm:$0x7]
      %v395 = vld [vmem:[%s351 + $0x14] sm:$0x7]
      %v396 = vunpack.c.l.bf16 %v390
      %v397 = vunpack.c.l.bf16 %v391
      %v398 = vunpack.c.l.bf16 %v392
      %v399 = vunpack.c.l.bf16 %v393
      %v400 = vunpack.c.l.bf16 %v394
      %v401 = vunpack.c.l.bf16 %v395
      %v402 = vld [vmem:[%s355] sm:$0x1]
      %v404 = vlaneseq
      %v405 = vshrl.u32 %v404, 7
      %v406 = vsub.s32 0, %v405
      %v407 = vrot.slane %v402, %v406
      %v409 = vmul.f32 %v396, %v407
      %v410 = vmul.f32 %v397, %v407
      %v411 = vmul.f32 %v398, %v407
      %v412 = vmul.f32 %v399, %v407
      %v413 = vmul.f32 %v400, %v407
      %v414 = vmul.f32 %v401, %v407
      %v415 = vld [vmem:[%s358] sm:$0x1]
      %v417 = vlaneseq
      %v418 = vshrl.u32 %v417, 7
      %v419 = vsub.s32 0, %v418
      %v420 = vrot.slane %v415, %v419
      %v422 = vadd.f32 %v409, %v420
      %v423 = vadd.f32 %v410, %v420
      %v424 = vadd.f32 %v411, %v420
      %v425 = vadd.f32 %v412, %v420
      %v426 = vadd.f32 %v413, %v420
      %v427 = vadd.f32 %v414, %v420
      %v428 = vxor.u32 %v422, 2147483648
      %v429 = vxor.u32 %v423, 2147483648
      %v430 = vxor.u32 %v424, 2147483648
      %v431 = vxor.u32 %v425, 2147483648
      %v432 = vxor.u32 %v426, 2147483648
      %v433 = vxor.u32 %v427, 2147483648
      %v434 = vmul.f32 %v428, 1.442695
      %v435 = vpow.pop %v434
      %v436 = vmul.f32 %v429, 1.442695
      %v437 = vpow.pop %v436
      %v438 = vmul.f32 %v430, 1.442695
      %v439 = vpow.pop %v438
      %v440 = vmul.f32 %v431, 1.442695
      %v441 = vpow.pop %v440
      %v442 = vmul.f32 %v432, 1.442695
      %v443 = vpow.pop %v442
      %v444 = vmul.f32 %v433, 1.442695
      %v445 = vpow.pop %v444
      %v446 = vadd.f32 %v435, 1.0
      %v447 = vadd.f32 %v437, 1.0
      %v448 = vadd.f32 %v439, 1.0
      %v449 = vadd.f32 %v441, 1.0
      %v450 = vadd.f32 %v443, 1.0
      %v451 = vadd.f32 %v445, 1.0
      %v452 = vrcp.pop %v446
      %v453 = vmul.f32 1.0, %v452
      %v454 = vrcp.pop %v447
      %v455 = vmul.f32 1.0, %v454
      %v456 = vrcp.pop %v448
      %v457 = vmul.f32 1.0, %v456
      %v458 = vrcp.pop %v449
      %v459 = vmul.f32 1.0, %v458
      %v460 = vrcp.pop %v450
      %v461 = vmul.f32 1.0, %v460
      %v462 = vrcp.pop %v451
      %v463 = vmul.f32 1.0, %v462
      %v464 = vmul.f32 %v422, %v453
      %v465 = vmul.f32 %v423, %v455
      %v466 = vmul.f32 %v424, %v457
      %v467 = vmul.f32 %v425, %v459
      %v468 = vmul.f32 %v426, %v461
      %v469 = vmul.f32 %v427, %v463
      %v470 = vpack.c.bf16 %v464, %v464
      %v471 = vpack.c.bf16 %v465, %v465
      %v472 = vpack.c.bf16 %v466, %v466
      %v473 = vpack.c.bf16 %v467, %v467
      %v474 = vpack.c.bf16 %v468, %v468
      %v475 = vpack.c.bf16 %v469, %v469
      %vm476 = vcmask 256000
      %477 = vst.msk [vmem:[#allocation3] sm:$0x7] %vm476, %v470
      %478 = vst.msk [vmem:[#allocation3 + $0x4] sm:$0x7] %vm476, %v471
      %479 = vst.msk [vmem:[#allocation3 + $0x8] sm:$0x7] %vm476, %v472
      %480 = vst.msk [vmem:[#allocation3 + $0xc] sm:$0x7] %vm476, %v473
      %481 = vst.msk [vmem:[#allocation3 + $0x10] sm:$0x7] %vm476, %v474
      %482 = vst.msk [vmem:[#allocation3 + $0x14] sm:$0x7] %vm476, %v475
      %v483 = vld [vmem:[#allocation2] sm:$0xff]
      %v484 = vld [vmem:[#allocation2 + $0x8] sm:$0xff]
      %v485 = vld [vmem:[#allocation3] sm:$0x3]
      %v486 = vld [vmem:[#allocation3 + $0x4] sm:$0x3]
      %v487 = vld [vmem:[#allocation3 + $0x8] sm:$0x3]
      %v488 = vld [vmem:[#allocation3 + $0xc] sm:$0x3]
      %s489 = smul.u32 %s26, 9
      %s490 = smul.u32 %s489, 4
      %s491 = smul.addr %s490, 4
      %s492 = scalar_lea.vmem %s1, %s491
      %v493 = vld [vmem:[%s492] sm:$0xf]
      %v494 = vld [vmem:[%s492 + $0x4] sm:$0xf]
      %v495 = vld [vmem:[%s492 + $0x8] sm:$0xf]
      %v496 = vld [vmem:[%s492 + $0xc] sm:$0xf]
      %v501 = vcombine.low %v485, %v486
      %v502 = vcombine.low %v487, %v488
      %v504 = vunpack.c.l.s4 1983009808
      %v505 = vunpack.c.0.s8 %v504
      %v506 = vlaneseq
      %v507 = vshrl.u32 %v506, 7
      %v508 = vsub.s32 %v505, %v507
      %v509 = vrot.slane %v501, %v508
      %v511 = vunpack.c.l.s4 1983009808
      %v512 = vunpack.c.0.s8 %v511
      %v513 = vlaneseq
      %v514 = vshrl.u32 %v513, 7
      %v515 = vsub.s32 %v512, %v514
      %v516 = vrot.slane %v502, %v515
      %v517 = vcombine.low %v509, %v516
      %v522 = vunpack.c.l.b16 %v493
      %v523 = vunpack.c.l.b16 %v494
      %v524 = vunpack.c.l.b16 %v495
      %v525 = vunpack.c.l.b16 %v496
      %v526 = vpack.c.b16 %v523, %v522
      %v527 = vpack.c.b16 %v525, %v524
      %vm530 = vcmask 261120
      %v532 = vsel %vm530, %v517, 0
      %534 = vmatprep.subr.bf16.mxu0 0
      %535 = vmatpush1.bf16.msra.mxu0 0
      %536 = vmatprep.subr.bf16.mxu0 0
      %537 = vmatpush1.bf16.msra.mxu0 0
      %538 = vmatprep.subr.bf16.mxu0 0
      %539 = vmatpush1.bf16.msra.mxu0 0
      %540 = vmatprep.subr.bf16.mxu0 0
      %541 = vmatpush1.bf16.msra.mxu0 0
      %542 = vmatprep.subr.bf16.mxu0 0
      %543 = vmatpush1.bf16.msra.mxu0 0
      %544 = vmatprep.subr.bf16.mxu0 0
      %545 = vmatpush1.bf16.msra.mxu0 0
      %546 = vmatprep.subr.bf16.mxu0 0
      %547 = vmatpush1.bf16.msra.mxu0 %v527
      %548 = vmatprep.subr.bf16.mxu0 0
      %549 = vmatpush1.bf16.msra.mxu0 %v526
      %550 = vmatprep.subr.bf16.mxu0 0
      %551 = vmatpush2.bf16.msra.mxu0 0
      %552 = vmatprep.subr.bf16.mxu0 0
      %553 = vmatpush2.bf16.msra.mxu0 0
      %554 = vmatprep.subr.bf16.mxu0 0
      %555 = vmatpush2.bf16.msra.mxu0 0
      %556 = vmatprep.subr.bf16.mxu0 0
      %557 = vmatpush2.bf16.msra.mxu0 0
      %558 = vmatprep.subr.bf16.mxu0 0
      %559 = vmatpush2.bf16.msra.mxu0 0
      %560 = vmatprep.subr.bf16.mxu0 0
      %561 = vmatpush2.bf16.msra.mxu0 0
      %562 = vmatprep.subr.bf16.mxu0 0
      %563 = vmatpush2.bf16.msra.mxu0 0
      %564 = vmatprep.subr.bf16.mxu0 0
      %565 = vmatpush2.bf16.msra.mxu0 0
      %566 = vmatprep.mubr.bf16.mxu0 0
      %567 = vmatmul.mubr.bf16.gmra.mxu0 %v532
      %v568 = vpop.f32.mrf.mxu0
      %v569 = vadd.f32 0.0, %v568
      %v570 = vpop.f32.mrf.mxu0
      %v571 = vpop.f32.mrf.mxu0
      %v572 = vadd.f32 0.0, %v571
      %v573 = vpop.f32.mrf.mxu0
      %574 = vdwg.mxu0
      %v575 = vadd.f32 %v483, %v569
      %v576 = vadd.f32 %v484, %v572
      %v577 = vld [vmem:[#allocation3] sm:$0x7]
      %v578 = vld [vmem:[#allocation3 + $0x4] sm:$0x7]
      %v579 = vld [vmem:[#allocation3 + $0x8] sm:$0x7]
      %v580 = vld [vmem:[#allocation3 + $0xc] sm:$0x7]
      %v586 = vunpack.c.l.s4 1983009808
      %v587 = vunpack.c.0.s8 %v586
      %v588 = vlaneseq
      %v589 = vshrl.u32 %v588, 7
      %v590 = vsub.s32 %v587, %v589
      %v591 = vrot.slane %v577, %v590
      %v592 = vcombine.high %v591, %v591
      %v594 = vunpack.c.l.s4 1983009808
      %v595 = vunpack.c.0.s8 %v594
      %v596 = vlaneseq
      %v597 = vshrl.u32 %v596, 7
      %v598 = vsub.s32 %v595, %v597
      %v599 = vrot.slane %v578, %v598
      %v600 = vcombine.high %v599, %v599
      %v602 = vunpack.c.l.s4 1983009808
      %v603 = vunpack.c.0.s8 %v602
      %v604 = vlaneseq
      %v605 = vshrl.u32 %v604, 7
      %v606 = vsub.s32 %v603, %v605
      %v607 = vrot.slane %v579, %v606
      %v608 = vcombine.high %v607, %v607
      %v610 = vunpack.c.l.s4 1983009808
      %v611 = vunpack.c.0.s8 %v610
      %v612 = vlaneseq
      %v613 = vshrl.u32 %v612, 7
      %v614 = vsub.s32 %v611, %v613
      %v615 = vrot.slane %v580, %v614
      %v616 = vcombine.high %v615, %v615
      %vm617 = vsmask.f32 1280
      %vm618 = vsmask.f32 3336
      %vm619 = vmor %vm617, %vm618
      %vm620 = vsmask.f32 5392
      %vm621 = vmor %vm619, %vm620
      %vm622 = vsmask.f32 7448
      %vm623 = vmor %vm621, %vm622
      %v625 = vshrl.u32 %v591, 16
      %v627 = vrot.slane %v625, 6
      %v628 = vshll.u32 %v591, 16
      %v630 = vrot.slane %v628, 7
      %v631 = vor.u32 %v627, %v630
      %v632 = vrot.slane %v631, 2
      %v634 = vshll.u32 %v592, 16
      %v636 = vrot.slane %v634, 7
      %v637 = vsel %vm623, %v632, %v636
      %v639 = vshrl.u32 %v599, 16
      %v641 = vrot.slane %v639, 6
      %v642 = vshll.u32 %v599, 16
      %v644 = vrot.slane %v642, 7
      %v645 = vor.u32 %v641, %v644
      %v646 = vrot.slane %v645, 2
      %v648 = vshll.u32 %v600, 16
      %v650 = vrot.slane %v648, 7
      %v651 = vsel %vm623, %v646, %v650
      %v653 = vshrl.u32 %v607, 16
      %v655 = vrot.slane %v653, 6
      %v656 = vshll.u32 %v607, 16
      %v658 = vrot.slane %v656, 7
      %v659 = vor.u32 %v655, %v658
      %v660 = vrot.slane %v659, 2
      %v662 = vshll.u32 %v608, 16
      %v664 = vrot.slane %v662, 7
      %v665 = vsel %vm623, %v660, %v664
      %v667 = vshrl.u32 %v615, 16
      %v669 = vrot.slane %v667, 6
      %v670 = vshll.u32 %v615, 16
      %v672 = vrot.slane %v670, 7
      %v673 = vor.u32 %v669, %v672
      %v674 = vrot.slane %v673, 2
      %v676 = vshll.u32 %v616, 16
      %v678 = vrot.slane %v676, 7
      %v679 = vsel %vm623, %v674, %v678
      %s680 = sadd.s32 %s489, 1
      %s681 = smul.u32 %s680, 4
      %s682 = smul.addr %s681, 4
      %s683 = scalar_lea.vmem %s1, %s682
      %v684 = vld [vmem:[%s683] sm:$0xf]
      %v685 = vld [vmem:[%s683 + $0x4] sm:$0xf]
      %v686 = vld [vmem:[%s683 + $0x8] sm:$0xf]
      %v687 = vld [vmem:[%s683 + $0xc] sm:$0xf]
      %v688 = vcombine.low %v637, %v651
      %v689 = vcombine.low %v665, %v679
      %v691 = vunpack.c.l.s4 1983009808
      %v692 = vunpack.c.0.s8 %v691
      %v693 = vlaneseq
      %v694 = vshrl.u32 %v693, 7
      %v695 = vsub.s32 %v692, %v694
      %v696 = vrot.slane %v688, %v695
      %v698 = vunpack.c.l.s4 1983009808
      %v699 = vunpack.c.0.s8 %v698
      %v700 = vlaneseq
      %v701 = vshrl.u32 %v700, 7
      %v702 = vsub.s32 %v699, %v701
      %v703 = vrot.slane %v689, %v702
      %v704 = vcombine.low %v696, %v703
      %v709 = vunpack.c.l.b16 %v684
      %v710 = vunpack.c.l.b16 %v685
      %v711 = vunpack.c.l.b16 %v686
      %v712 = vunpack.c.l.b16 %v687
      %v713 = vpack.c.b16 %v710, %v709
      %v714 = vpack.c.b16 %v712, %v711
      %v718 = vsel %vm530, %v704, 0
      %720 = vmatprep.subr.bf16.mxu0 0
      %721 = vmatpush1.bf16.msra.mxu0 0
      %722 = vmatprep.subr.bf16.mxu0 0
      %723 = vmatpush1.bf16.msra.mxu0 0
      %724 = vmatprep.subr.bf16.mxu0 0
      %725 = vmatpush1.bf16.msra.mxu0 0
      %726 = vmatprep.subr.bf16.mxu0 0
      %727 = vmatpush1.bf16.msra.mxu0 0
      %728 = vmatprep.subr.bf16.mxu0 0
      %729 = vmatpush1.bf16.msra.mxu0 0
      %730 = vmatprep.subr.bf16.mxu0 0
      %731 = vmatpush1.bf16.msra.mxu0 0
      %732 = vmatprep.subr.bf16.mxu0 0
      %733 = vmatpush1.bf16.msra.mxu0 %v714
      %734 = vmatprep.subr.bf16.mxu0 0
      %735 = vmatpush1.bf16.msra.mxu0 %v713
      %736 = vmatprep.subr.bf16.mxu0 0
      %737 = vmatpush2.bf16.msra.mxu0 0
      %738 = vmatprep.subr.bf16.mxu0 0
      %739 = vmatpush2.bf16.msra.mxu0 0
      %740 = vmatprep.subr.bf16.mxu0 0
      %741 = vmatpush2.bf16.msra.mxu0 0
      %742 = vmatprep.subr.bf16.mxu0 0
      %743 = vmatpush2.bf16.msra.mxu0 0
      %744 = vmatprep.subr.bf16.mxu0 0
      %745 = vmatpush2.bf16.msra.mxu0 0
      %746 = vmatprep.subr.bf16.mxu0 0
      %747 = vmatpush2.bf16.msra.mxu0 0
      %748 = vmatprep.subr.bf16.mxu0 0
      %749 = vmatpush2.bf16.msra.mxu0 0
      %750 = vmatprep.subr.bf16.mxu0 0
      %751 = vmatpush2.bf16.msra.mxu0 0
      %752 = vmatprep.mubr.bf16.mxu0 0
      %753 = vmatmul.mubr.bf16.gmra.mxu0 %v718
      %v754 = vpop.f32.mrf.mxu0
      %v755 = vadd.f32 0.0, %v754
      %v756 = vpop.f32.mrf.mxu0
      %v757 = vpop.f32.mrf.mxu0
      %v758 = vadd.f32 0.0, %v757
      %v759 = vpop.f32.mrf.mxu0
      %760 = vdwg.mxu0
      %v761 = vadd.f32 %v575, %v755
      %v762 = vadd.f32 %v576, %v758
      %v763 = vld [vmem:[#allocation3] sm:$0x6]
      %v764 = vld [vmem:[#allocation3 + $0x4] sm:$0x6]
      %v765 = vld [vmem:[#allocation3 + $0x8] sm:$0x6]
      %v766 = vld [vmem:[#allocation3 + $0xc] sm:$0x6]
      %v772 = vunpack.c.l.s4 1983009808
      %v773 = vunpack.c.0.s8 %v772
      %v774 = vlaneseq
      %v775 = vshrl.u32 %v774, 7
      %v776 = vsub.s32 %v773, %v775
      %v777 = vrot.slane %v763, %v776
      %v778 = vcombine.high %v777, %v777
      %v780 = vunpack.c.l.s4 1983009808
      %v781 = vunpack.c.0.s8 %v780
      %v782 = vlaneseq
      %v783 = vshrl.u32 %v782, 7
      %v784 = vsub.s32 %v781, %v783
      %v785 = vrot.slane %v764, %v784
      %v786 = vcombine.high %v785, %v785
      %v788 = vunpack.c.l.s4 1983009808
      %v789 = vunpack.c.0.s8 %v788
      %v790 = vlaneseq
      %v791 = vshrl.u32 %v790, 7
      %v792 = vsub.s32 %v789, %v791
      %v793 = vrot.slane %v765, %v792
      %v794 = vcombine.high %v793, %v793
      %v796 = vunpack.c.l.s4 1983009808
      %v797 = vunpack.c.0.s8 %v796
      %v798 = vlaneseq
      %v799 = vshrl.u32 %v798, 7
      %v800 = vsub.s32 %v797, %v799
      %v801 = vrot.slane %v766, %v800
      %v802 = vcombine.high %v801, %v801
      %vm803 = vcmask 1040384
      %vm804 = vcmask 1042434
      %vm805 = vmor %vm803, %vm804
      %vm806 = vcmask 1044484
      %vm807 = vmor %vm805, %vm806
      %vm808 = vcmask 1046534
      %vm809 = vmor %vm807, %vm808
      %v810 = vrot.slane %v777, 7
      %v811 = vrot.slane %v810, 2
      %v812 = vrot.slane %v778, 7
      %v813 = vsel %vm809, %v811, %v812
      %v814 = vrot.slane %v785, 7
      %v815 = vrot.slane %v814, 2
      %v816 = vrot.slane %v786, 7
      %v817 = vsel %vm809, %v815, %v816
      %v818 = vrot.slane %v793, 7
      %v819 = vrot.slane %v818, 2
      %v820 = vrot.slane %v794, 7
      %v821 = vsel %vm809, %v819, %v820
      %v822 = vrot.slane %v801, 7
      %v823 = vrot.slane %v822, 2
      %v824 = vrot.slane %v802, 7
      %v825 = vsel %vm809, %v823, %v824
      %s826 = sadd.s32 %s489, 2
      %s827 = smul.u32 %s826, 4
      %s828 = smul.addr %s827, 4
      %s829 = scalar_lea.vmem %s1, %s828
      %v830 = vld [vmem:[%s829] sm:$0xf]
      %v831 = vld [vmem:[%s829 + $0x4] sm:$0xf]
      %v832 = vld [vmem:[%s829 + $0x8] sm:$0xf]
      %v833 = vld [vmem:[%s829 + $0xc] sm:$0xf]
      %v834 = vcombine.low %v813, %v817
      %v835 = vcombine.low %v821, %v825
      %v837 = vunpack.c.l.s4 1983009808
      %v838 = vunpack.c.0.s8 %v837
      %v839 = vlaneseq
      %v840 = vshrl.u32 %v839, 7
      %v841 = vsub.s32 %v838, %v840
      %v842 = vrot.slane %v834, %v841
      %v844 = vunpack.c.l.s4 1983009808
      %v845 = vunpack.c.0.s8 %v844
      %v846 = vlaneseq
      %v847 = vshrl.u32 %v846, 7
      %v848 = vsub.s32 %v845, %v847
      %v849 = vrot.slane %v835, %v848
      %v850 = vcombine.low %v842, %v849
      %v855 = vunpack.c.l.b16 %v830
      %v856 = vunpack.c.l.b16 %v831
      %v857 = vunpack.c.l.b16 %v832
      %v858 = vunpack.c.l.b16 %v833
      %v859 = vpack.c.b16 %v856, %v855
      %v860 = vpack.c.b16 %v858, %v857
      %v864 = vsel %vm530, %v850, 0
      %866 = vmatprep.subr.bf16.mxu0 0
      %867 = vmatpush1.bf16.msra.mxu0 0
      %868 = vmatprep.subr.bf16.mxu0 0
      %869 = vmatpush1.bf16.msra.mxu0 0
      %870 = vmatprep.subr.bf16.mxu0 0
      %871 = vmatpush1.bf16.msra.mxu0 0
      %872 = vmatprep.subr.bf16.mxu0 0
      %873 = vmatpush1.bf16.msra.mxu0 0
      %874 = vmatprep.subr.bf16.mxu0 0
      %875 = vmatpush1.bf16.msra.mxu0 0
      %876 = vmatprep.subr.bf16.mxu0 0
      %877 = vmatpush1.bf16.msra.mxu0 0
      %878 = vmatprep.subr.bf16.mxu0 0
      %879 = vmatpush1.bf16.msra.mxu0 %v860
      %880 = vmatprep.subr.bf16.mxu0 0
      %881 = vmatpush1.bf16.msra.mxu0 %v859
      %882 = vmatprep.subr.bf16.mxu0 0
      %883 = vmatpush2.bf16.msra.mxu0 0
      %884 = vmatprep.subr.bf16.mxu0 0
      %885 = vmatpush2.bf16.msra.mxu0 0
      %886 = vmatprep.subr.bf16.mxu0 0
      %887 = vmatpush2.bf16.msra.mxu0 0
      %888 = vmatprep.subr.bf16.mxu0 0
      %889 = vmatpush2.bf16.msra.mxu0 0
      %890 = vmatprep.subr.bf16.mxu0 0
      %891 = vmatpush2.bf16.msra.mxu0 0
      %892 = vmatprep.subr.bf16.mxu0 0
      %893 = vmatpush2.bf16.msra.mxu0 0
      %894 = vmatprep.subr.bf16.mxu0 0
      %895 = vmatpush2.bf16.msra.mxu0 0
      %896 = vmatprep.subr.bf16.mxu0 0
      %897 = vmatpush2.bf16.msra.mxu0 0
      %898 = vmatprep.mubr.bf16.mxu0 0
      %899 = vmatmul.mubr.bf16.gmra.mxu0 %v864
      %v900 = vpop.f32.mrf.mxu0
      %v901 = vadd.f32 0.0, %v900
      %v902 = vpop.f32.mrf.mxu0
      %v903 = vpop.f32.mrf.mxu0
      %v904 = vadd.f32 0.0, %v903
      %v905 = vpop.f32.mrf.mxu0
      %906 = vdwg.mxu0
      %v907 = vadd.f32 %v761, %v901
      %v908 = vadd.f32 %v762, %v904
      %s909 = scalar_lea.vmem [#allocation3], 4
      %v910 = vld [vmem:[%s909] sm:$0x3]
      %v911 = vld [vmem:[%s909 + $0x4] sm:$0x3]
      %v912 = vld [vmem:[%s909 + $0x8] sm:$0x3]
      %v913 = vld [vmem:[%s909 + $0xc] sm:$0x3]
      %s914 = sadd.s32 %s489, 3
      %s915 = smul.u32 %s914, 4
      %s916 = smul.addr %s915, 4
      %s917 = scalar_lea.vmem %s1, %s916
      %v918 = vld [vmem:[%s917] sm:$0xf]
      %v919 = vld [vmem:[%s917 + $0x4] sm:$0xf]
      %v920 = vld [vmem:[%s917 + $0x8] sm:$0xf]
      %v921 = vld [vmem:[%s917 + $0xc] sm:$0xf]
      %v926 = vcombine.low %v910, %v911
      %v927 = vcombine.low %v912, %v913
      %v929 = vunpack.c.l.s4 1983009808
      %v930 = vunpack.c.0.s8 %v929
      %v931 = vlaneseq
      %v932 = vshrl.u32 %v931, 7
      %v933 = vsub.s32 %v930, %v932
      %v934 = vrot.slane %v926, %v933
      %v936 = vunpack.c.l.s4 1983009808
      %v937 = vunpack.c.0.s8 %v936
      %v938 = vlaneseq
      %v939 = vshrl.u32 %v938, 7
      %v940 = vsub.s32 %v937, %v939
      %v941 = vrot.slane %v927, %v940
      %v942 = vcombine.low %v934, %v941
      %v947 = vunpack.c.l.b16 %v918
      %v948 = vunpack.c.l.b16 %v919
      %v949 = vunpack.c.l.b16 %v920
      %v950 = vunpack.c.l.b16 %v921
      %v951 = vpack.c.b16 %v948, %v947
      %v952 = vpack.c.b16 %v950, %v949
      %v956 = vsel %vm530, %v942, 0
      %958 = vmatprep.subr.bf16.mxu0 0
      %959 = vmatpush1.bf16.msra.mxu0 0
      %960 = vmatprep.subr.bf16.mxu0 0
      %961 = vmatpush1.bf16.msra.mxu0 0
      %962 = vmatprep.subr.bf16.mxu0 0
      %963 = vmatpush1.bf16.msra.mxu0 0
      %964 = vmatprep.subr.bf16.mxu0 0
      %965 = vmatpush1.bf16.msra.mxu0 0
      %966 = vmatprep.subr.bf16.mxu0 0
      %967 = vmatpush1.bf16.msra.mxu0 0
      %968 = vmatprep.subr.bf16.mxu0 0
      %969 = vmatpush1.bf16.msra.mxu0 0
      %970 = vmatprep.subr.bf16.mxu0 0
      %971 = vmatpush1.bf16.msra.mxu0 %v952
      %972 = vmatprep.subr.bf16.mxu0 0
      %973 = vmatpush1.bf16.msra.mxu0 %v951
      %974 = vmatprep.subr.bf16.mxu0 0
      %975 = vmatpush2.bf16.msra.mxu0 0
      %976 = vmatprep.subr.bf16.mxu0 0
      %977 = vmatpush2.bf16.msra.mxu0 0
      %978 = vmatprep.subr.bf16.mxu0 0
      %979 = vmatpush2.bf16.msra.mxu0 0
      %980 = vmatprep.subr.bf16.mxu0 0
      %981 = vmatpush2.bf16.msra.mxu0 0
      %982 = vmatprep.subr.bf16.mxu0 0
      %983 = vmatpush2.bf16.msra.mxu0 0
      %984 = vmatprep.subr.bf16.mxu0 0
      %985 = vmatpush2.bf16.msra.mxu0 0
      %986 = vmatprep.subr.bf16.mxu0 0
      %987 = vmatpush2.bf16.msra.mxu0 0
      %988 = vmatprep.subr.bf16.mxu0 0
      %989 = vmatpush2.bf16.msra.mxu0 0
      %990 = vmatprep.mubr.bf16.mxu0 0
      %991 = vmatmul.mubr.bf16.gmra.mxu0 %v956
      %v992 = vpop.f32.mrf.mxu0
      %v993 = vadd.f32 0.0, %v992
      %v994 = vpop.f32.mrf.mxu0
      %v995 = vpop.f32.mrf.mxu0
      %v996 = vadd.f32 0.0, %v995
      %v997 = vpop.f32.mrf.mxu0
      %998 = vdwg.mxu0
      %v999 = vadd.f32 %v907, %v993
      %v1000 = vadd.f32 %v908, %v996
      %v1001 = vld [vmem:[%s909] sm:$0x7]
      %v1002 = vld [vmem:[%s909 + $0x4] sm:$0x7]
      %v1003 = vld [vmem:[%s909 + $0x8] sm:$0x7]
      %v1004 = vld [vmem:[%s909 + $0xc] sm:$0x7]
      %v1010 = vunpack.c.l.s4 1983009808
      %v1011 = vunpack.c.0.s8 %v1010
      %v1012 = vlaneseq
      %v1013 = vshrl.u32 %v1012, 7
      %v1014 = vsub.s32 %v1011, %v1013
      %v1015 = vrot.slane %v1001, %v1014
      %v1016 = vcombine.high %v1015, %v1015
      %v1018 = vunpack.c.l.s4 1983009808
      %v1019 = vunpack.c.0.s8 %v1018
      %v1020 = vlaneseq
      %v1021 = vshrl.u32 %v1020, 7
      %v1022 = vsub.s32 %v1019, %v1021
      %v1023 = vrot.slane %v1002, %v1022
      %v1024 = vcombine.high %v1023, %v1023
      %v1026 = vunpack.c.l.s4 1983009808
      %v1027 = vunpack.c.0.s8 %v1026
      %v1028 = vlaneseq
      %v1029 = vshrl.u32 %v1028, 7
      %v1030 = vsub.s32 %v1027, %v1029
      %v1031 = vrot.slane %v1003, %v1030
      %v1032 = vcombine.high %v1031, %v1031
      %v1034 = vunpack.c.l.s4 1983009808
      %v1035 = vunpack.c.0.s8 %v1034
      %v1036 = vlaneseq
      %v1037 = vshrl.u32 %v1036, 7
      %v1038 = vsub.s32 %v1035, %v1037
      %v1039 = vrot.slane %v1004, %v1038
      %v1040 = vcombine.high %v1039, %v1039
      %v1042 = vshrl.u32 %v1015, 16
      %v1044 = vrot.slane %v1042, 6
      %v1045 = vshll.u32 %v1015, 16
      %v1047 = vrot.slane %v1045, 7
      %v1048 = vor.u32 %v1044, %v1047
      %v1049 = vrot.slane %v1048, 2
      %v1051 = vshll.u32 %v1016, 16
      %v1053 = vrot.slane %v1051, 7
      %v1054 = vsel %vm623, %v1049, %v1053
      %v1056 = vshrl.u32 %v1023, 16
      %v1058 = vrot.slane %v1056, 6
      %v1059 = vshll.u32 %v1023, 16
      %v1061 = vrot.slane %v1059, 7
      %v1062 = vor.u32 %v1058, %v1061
      %v1063 = vrot.slane %v1062, 2
      %v1065 = vshll.u32 %v1024, 16
      %v1067 = vrot.slane %v1065, 7
      %v1068 = vsel %vm623, %v1063, %v1067
      %v1070 = vshrl.u32 %v1031, 16
      %v1072 = vrot.slane %v1070, 6
      %v1073 = vshll.u32 %v1031, 16
      %v1075 = vrot.slane %v1073, 7
      %v1076 = vor.u32 %v1072, %v1075
      %v1077 = vrot.slane %v1076, 2
      %v1079 = vshll.u32 %v1032, 16
      %v1081 = vrot.slane %v1079, 7
      %v1082 = vsel %vm623, %v1077, %v1081
      %v1084 = vshrl.u32 %v1039, 16
      %v1086 = vrot.slane %v1084, 6
      %v1087 = vshll.u32 %v1039, 16
      %v1089 = vrot.slane %v1087, 7
      %v1090 = vor.u32 %v1086, %v1089
      %v1091 = vrot.slane %v1090, 2
      %v1093 = vshll.u32 %v1040, 16
      %v1095 = vrot.slane %v1093, 7
      %v1096 = vsel %vm623, %v1091, %v1095
      %s1097 = sadd.s32 %s489, 4
      %s1098 = smul.u32 %s1097, 4
      %s1099 = smul.addr %s1098, 4
      %s1100 = scalar_lea.vmem %s1, %s1099
      %v1101 = vld [vmem:[%s1100] sm:$0xf]
      %v1102 = vld [vmem:[%s1100 + $0x4] sm:$0xf]
      %v1103 = vld [vmem:[%s1100 + $0x8] sm:$0xf]
      %v1104 = vld [vmem:[%s1100 + $0xc] sm:$0xf]
      %v1105 = vcombine.low %v1054, %v1068
      %v1106 = vcombine.low %v1082, %v1096
      %v1108 = vunpack.c.l.s4 1983009808
      %v1109 = vunpack.c.0.s8 %v1108
      %v1110 = vlaneseq
      %v1111 = vshrl.u32 %v1110, 7
      %v1112 = vsub.s32 %v1109, %v1111
      %v1113 = vrot.slane %v1105, %v1112
      %v1115 = vunpack.c.l.s4 1983009808
      %v1116 = vunpack.c.0.s8 %v1115
      %v1117 = vlaneseq
      %v1118 = vshrl.u32 %v1117, 7
      %v1119 = vsub.s32 %v1116, %v1118
      %v1120 = vrot.slane %v1106, %v1119
      %v1121 = vcombine.low %v1113, %v1120
      %v1126 = vunpack.c.l.b16 %v1101
      %v1127 = vunpack.c.l.b16 %v1102
      %v1128 = vunpack.c.l.b16 %v1103
      %v1129 = vunpack.c.l.b16 %v1104
      %v1130 = vpack.c.b16 %v1127, %v1126
      %v1131 = vpack.c.b16 %v1129, %v1128
      %v1135 = vsel %vm530, %v1121, 0
      %1137 = vmatprep.subr.bf16.mxu0 0
      %1138 = vmatpush1.bf16.msra.mxu0 0
      %1139 = vmatprep.subr.bf16.mxu0 0
      %1140 = vmatpush1.bf16.msra.mxu0 0
      %1141 = vmatprep.subr.bf16.mxu0 0
      %1142 = vmatpush1.bf16.msra.mxu0 0
      %1143 = vmatprep.subr.bf16.mxu0 0
      %1144 = vmatpush1.bf16.msra.mxu0 0
      %1145 = vmatprep.subr.bf16.mxu0 0
      %1146 = vmatpush1.bf16.msra.mxu0 0
      %1147 = vmatprep.subr.bf16.mxu0 0
      %1148 = vmatpush1.bf16.msra.mxu0 0
      %1149 = vmatprep.subr.bf16.mxu0 0
      %1150 = vmatpush1.bf16.msra.mxu0 %v1131
      %1151 = vmatprep.subr.bf16.mxu0 0
      %1152 = vmatpush1.bf16.msra.mxu0 %v1130
      %1153 = vmatprep.subr.bf16.mxu0 0
      %1154 = vmatpush2.bf16.msra.mxu0 0
      %1155 = vmatprep.subr.bf16.mxu0 0
      %1156 = vmatpush2.bf16.msra.mxu0 0
      %1157 = vmatprep.subr.bf16.mxu0 0
      %1158 = vmatpush2.bf16.msra.mxu0 0
      %1159 = vmatprep.subr.bf16.mxu0 0
      %1160 = vmatpush2.bf16.msra.mxu0 0
      %1161 = vmatprep.subr.bf16.mxu0 0
      %1162 = vmatpush2.bf16.msra.mxu0 0
      %1163 = vmatprep.subr.bf16.mxu0 0
      %1164 = vmatpush2.bf16.msra.mxu0 0
      %1165 = vmatprep.subr.bf16.mxu0 0
      %1166 = vmatpush2.bf16.msra.mxu0 0
      %1167 = vmatprep.subr.bf16.mxu0 0
      %1168 = vmatpush2.bf16.msra.mxu0 0
      %1169 = vmatprep.mubr.bf16.mxu0 0
      %1170 = vmatmul.mubr.bf16.gmra.mxu0 %v1135
      %v1171 = vpop.f32.mrf.mxu0
      %v1172 = vadd.f32 0.0, %v1171
      %v1173 = vpop.f32.mrf.mxu0
      %v1174 = vpop.f32.mrf.mxu0
      %v1175 = vadd.f32 0.0, %v1174
      %v1176 = vpop.f32.mrf.mxu0
      %1177 = vdwg.mxu0
      %v1178 = vadd.f32 %v999, %v1172
      %v1179 = vadd.f32 %v1000, %v1175
      %v1180 = vld [vmem:[%s909] sm:$0x6]
      %v1181 = vld [vmem:[%s909 + $0x4] sm:$0x6]
      %v1182 = vld [vmem:[%s909 + $0x8] sm:$0x6]
      %v1183 = vld [vmem:[%s909 + $0xc] sm:$0x6]
      %v1189 = vunpack.c.l.s4 1983009808
      %v1190 = vunpack.c.0.s8 %v1189
      %v1191 = vlaneseq
      %v1192 = vshrl.u32 %v1191, 7
      %v1193 = vsub.s32 %v1190, %v1192
      %v1194 = vrot.slane %v1180, %v1193
      %v1195 = vcombine.high %v1194, %v1194
      %v1197 = vunpack.c.l.s4 1983009808
      %v1198 = vunpack.c.0.s8 %v1197
      %v1199 = vlaneseq
      %v1200 = vshrl.u32 %v1199, 7
      %v1201 = vsub.s32 %v1198, %v1200
      %v1202 = vrot.slane %v1181, %v1201
      %v1203 = vcombine.high %v1202, %v1202
      %v1205 = vunpack.c.l.s4 1983009808
      %v1206 = vunpack.c.0.s8 %v1205
      %v1207 = vlaneseq
      %v1208 = vshrl.u32 %v1207, 7
      %v1209 = vsub.s32 %v1206, %v1208
      %v1210 = vrot.slane %v1182, %v1209
      %v1211 = vcombine.high %v1210, %v1210
      %v1213 = vunpack.c.l.s4 1983009808
      %v1214 = vunpack.c.0.s8 %v1213
      %v1215 = vlaneseq
      %v1216 = vshrl.u32 %v1215, 7
      %v1217 = vsub.s32 %v1214, %v1216
      %v1218 = vrot.slane %v1183, %v1217
      %v1219 = vcombine.high %v1218, %v1218
      %v1220 = vrot.slane %v1194, 7
      %v1221 = vrot.slane %v1220, 2
      %v1222 = vrot.slane %v1195, 7
      %v1223 = vsel %vm809, %v1221, %v1222
      %v1224 = vrot.slane %v1202, 7
      %v1225 = vrot.slane %v1224, 2
      %v1226 = vrot.slane %v1203, 7
      %v1227 = vsel %vm809, %v1225, %v1226
      %v1228 = vrot.slane %v1210, 7
      %v1229 = vrot.slane %v1228, 2
      %v1230 = vrot.slane %v1211, 7
      %v1231 = vsel %vm809, %v1229, %v1230
      %v1232 = vrot.slane %v1218, 7
      %v1233 = vrot.slane %v1232, 2
      %v1234 = vrot.slane %v1219, 7
      %v1235 = vsel %vm809, %v1233, %v1234
      %s1236 = sadd.s32 %s489, 5
      %s1237 = smul.u32 %s1236, 4
      %s1238 = smul.addr %s1237, 4
      %s1239 = scalar_lea.vmem %s1, %s1238
      %v1240 = vld [vmem:[%s1239] sm:$0xf]
      %v1241 = vld [vmem:[%s1239 + $0x4] sm:$0xf]
      %v1242 = vld [vmem:[%s1239 + $0x8] sm:$0xf]
      %v1243 = vld [vmem:[%s1239 + $0xc] sm:$0xf]
      %v1244 = vcombine.low %v1223, %v1227
      %v1245 = vcombine.low %v1231, %v1235
      %v1247 = vunpack.c.l.s4 1983009808
      %v1248 = vunpack.c.0.s8 %v1247
      %v1249 = vlaneseq
      %v1250 = vshrl.u32 %v1249, 7
      %v1251 = vsub.s32 %v1248, %v1250
      %v1252 = vrot.slane %v1244, %v1251
      %v1254 = vunpack.c.l.s4 1983009808
      %v1255 = vunpack.c.0.s8 %v1254
      %v1256 = vlaneseq
      %v1257 = vshrl.u32 %v1256, 7
      %v1258 = vsub.s32 %v1255, %v1257
      %v1259 = vrot.slane %v1245, %v1258
      %v1260 = vcombine.low %v1252, %v1259
      %v1265 = vunpack.c.l.b16 %v1240
      %v1266 = vunpack.c.l.b16 %v1241
      %v1267 = vunpack.c.l.b16 %v1242
      %v1268 = vunpack.c.l.b16 %v1243
      %v1269 = vpack.c.b16 %v1266, %v1265
      %v1270 = vpack.c.b16 %v1268, %v1267
      %v1274 = vsel %vm530, %v1260, 0
      %1276 = vmatprep.subr.bf16.mxu0 0
      %1277 = vmatpush1.bf16.msra.mxu0 0
      %1278 = vmatprep.subr.bf16.mxu0 0
      %1279 = vmatpush1.bf16.msra.mxu0 0
      %1280 = vmatprep.subr.bf16.mxu0 0
      %1281 = vmatpush1.bf16.msra.mxu0 0
      %1282 = vmatprep.subr.bf16.mxu0 0
      %1283 = vmatpush1.bf16.msra.mxu0 0
      %1284 = vmatprep.subr.bf16.mxu0 0
      %1285 = vmatpush1.bf16.msra.mxu0 0
      %1286 = vmatprep.subr.bf16.mxu0 0
      %1287 = vmatpush1.bf16.msra.mxu0 0
      %1288 = vmatprep.subr.bf16.mxu0 0
      %1289 = vmatpush1.bf16.msra.mxu0 %v1270
      %1290 = vmatprep.subr.bf16.mxu0 0
      %1291 = vmatpush1.bf16.msra.mxu0 %v1269
      %1292 = vmatprep.subr.bf16.mxu0 0
      %1293 = vmatpush2.bf16.msra.mxu0 0
      %1294 = vmatprep.subr.bf16.mxu0 0
      %1295 = vmatpush2.bf16.msra.mxu0 0
      %1296 = vmatprep.subr.bf16.mxu0 0
      %1297 = vmatpush2.bf16.msra.mxu0 0
      %1298 = vmatprep.subr.bf16.mxu0 0
      %1299 = vmatpush2.bf16.msra.mxu0 0
      %1300 = vmatprep.subr.bf16.mxu0 0
      %1301 = vmatpush2.bf16.msra.mxu0 0
      %1302 = vmatprep.subr.bf16.mxu0 0
      %1303 = vmatpush2.bf16.msra.mxu0 0
      %1304 = vmatprep.subr.bf16.mxu0 0
      %1305 = vmatpush2.bf16.msra.mxu0 0
      %1306 = vmatprep.subr.bf16.mxu0 0
      %1307 = vmatpush2.bf16.msra.mxu0 0
      %1308 = vmatprep.mubr.bf16.mxu0 0
      %1309 = vmatmul.mubr.bf16.gmra.mxu0 %v1274
      %v1310 = vpop.f32.mrf.mxu0
      %v1311 = vadd.f32 0.0, %v1310
      %v1312 = vpop.f32.mrf.mxu0
      %v1313 = vpop.f32.mrf.mxu0
      %v1314 = vadd.f32 0.0, %v1313
      %v1315 = vpop.f32.mrf.mxu0
      %1316 = vdwg.mxu0
      %v1317 = vadd.f32 %v1178, %v1311
      %v1318 = vadd.f32 %v1179, %v1314
      %s1319 = scalar_lea.vmem [#allocation3], 8
      %v1320 = vld [vmem:[%s1319] sm:$0x3]
      %v1321 = vld [vmem:[%s1319 + $0x4] sm:$0x3]
      %v1322 = vld [vmem:[%s1319 + $0x8] sm:$0x3]
      %v1323 = vld [vmem:[%s1319 + $0xc] sm:$0x3]
      %s1324 = sadd.s32 %s489, 6
      %s1325 = smul.u32 %s1324, 4
      %s1326 = smul.addr %s1325, 4
      %s1327 = scalar_lea.vmem %s1, %s1326
      %v1328 = vld [vmem:[%s1327] sm:$0xf]
      %v1329 = vld [vmem:[%s1327 + $0x4] sm:$0xf]
      %v1330 = vld [vmem:[%s1327 + $0x8] sm:$0xf]
      %v1331 = vld [vmem:[%s1327 + $0xc] sm:$0xf]
      %v1336 = vcombine.low %v1320, %v1321
      %v1337 = vcombine.low %v1322, %v1323
      %v1339 = vunpack.c.l.s4 1983009808
      %v1340 = vunpack.c.0.s8 %v1339
      %v1341 = vlaneseq
      %v1342 = vshrl.u32 %v1341, 7
      %v1343 = vsub.s32 %v1340, %v1342
      %v1344 = vrot.slane %v1336, %v1343
      %v1346 = vunpack.c.l.s4 1983009808
      %v1347 = vunpack.c.0.s8 %v1346
      %v1348 = vlaneseq
      %v1349 = vshrl.u32 %v1348, 7
      %v1350 = vsub.s32 %v1347, %v1349
      %v1351 = vrot.slane %v1337, %v1350
      %v1352 = vcombine.low %v1344, %v1351
      %v1357 = vunpack.c.l.b16 %v1328
      %v1358 = vunpack.c.l.b16 %v1329
      %v1359 = vunpack.c.l.b16 %v1330
      %v1360 = vunpack.c.l.b16 %v1331
      %v1361 = vpack.c.b16 %v1358, %v1357
      %v1362 = vpack.c.b16 %v1360, %v1359
      %v1366 = vsel %vm530, %v1352, 0
      %1368 = vmatprep.subr.bf16.mxu0 0
      %1369 = vmatpush1.bf16.msra.mxu0 0
      %1370 = vmatprep.subr.bf16.mxu0 0
      %1371 = vmatpush1.bf16.msra.mxu0 0
      %1372 = vmatprep.subr.bf16.mxu0 0
      %1373 = vmatpush1.bf16.msra.mxu0 0
      %1374 = vmatprep.subr.bf16.mxu0 0
      %1375 = vmatpush1.bf16.msra.mxu0 0
      %1376 = vmatprep.subr.bf16.mxu0 0
      %1377 = vmatpush1.bf16.msra.mxu0 0
      %1378 = vmatprep.subr.bf16.mxu0 0
      %1379 = vmatpush1.bf16.msra.mxu0 0
      %1380 = vmatprep.subr.bf16.mxu0 0
      %1381 = vmatpush1.bf16.msra.mxu0 %v1362
      %1382 = vmatprep.subr.bf16.mxu0 0
      %1383 = vmatpush1.bf16.msra.mxu0 %v1361
      %1384 = vmatprep.subr.bf16.mxu0 0
      %1385 = vmatpush2.bf16.msra.mxu0 0
      %1386 = vmatprep.subr.bf16.mxu0 0
      %1387 = vmatpush2.bf16.msra.mxu0 0
      %1388 = vmatprep.subr.bf16.mxu0 0
      %1389 = vmatpush2.bf16.msra.mxu0 0
      %1390 = vmatprep.subr.bf16.mxu0 0
      %1391 = vmatpush2.bf16.msra.mxu0 0
      %1392 = vmatprep.subr.bf16.mxu0 0
      %1393 = vmatpush2.bf16.msra.mxu0 0
      %1394 = vmatprep.subr.bf16.mxu0 0
      %1395 = vmatpush2.bf16.msra.mxu0 0
      %1396 = vmatprep.subr.bf16.mxu0 0
      %1397 = vmatpush2.bf16.msra.mxu0 0
      %1398 = vmatprep.subr.bf16.mxu0 0
      %1399 = vmatpush2.bf16.msra.mxu0 0
      %1400 = vmatprep.mubr.bf16.mxu0 0
      %1401 = vmatmul.mubr.bf16.gmra.mxu0 %v1366
      %v1402 = vpop.f32.mrf.mxu0
      %v1403 = vadd.f32 0.0, %v1402
      %v1404 = vpop.f32.mrf.mxu0
      %v1405 = vpop.f32.mrf.mxu0
      %v1406 = vadd.f32 0.0, %v1405
      %v1407 = vpop.f32.mrf.mxu0
      %1408 = vdwg.mxu0
      %v1409 = vadd.f32 %v1317, %v1403
      %v1410 = vadd.f32 %v1318, %v1406
      %v1411 = vld [vmem:[%s1319] sm:$0x7]
      %v1412 = vld [vmem:[%s1319 + $0x4] sm:$0x7]
      %v1413 = vld [vmem:[%s1319 + $0x8] sm:$0x7]
      %v1414 = vld [vmem:[%s1319 + $0xc] sm:$0x7]
      %v1420 = vunpack.c.l.s4 1983009808
      %v1421 = vunpack.c.0.s8 %v1420
      %v1422 = vlaneseq
      %v1423 = vshrl.u32 %v1422, 7
      %v1424 = vsub.s32 %v1421, %v1423
      %v1425 = vrot.slane %v1411, %v1424
      %v1426 = vcombine.high %v1425, %v1425
      %v1428 = vunpack.c.l.s4 1983009808
      %v1429 = vunpack.c.0.s8 %v1428
      %v1430 = vlaneseq
      %v1431 = vshrl.u32 %v1430, 7
      %v1432 = vsub.s32 %v1429, %v1431
      %v1433 = vrot.slane %v1412, %v1432
      %v1434 = vcombine.high %v1433, %v1433
      %v1436 = vunpack.c.l.s4 1983009808
      %v1437 = vunpack.c.0.s8 %v1436
      %v1438 = vlaneseq
      %v1439 = vshrl.u32 %v1438, 7
      %v1440 = vsub.s32 %v1437, %v1439
      %v1441 = vrot.slane %v1413, %v1440
      %v1442 = vcombine.high %v1441, %v1441
      %v1444 = vunpack.c.l.s4 1983009808
      %v1445 = vunpack.c.0.s8 %v1444
      %v1446 = vlaneseq
      %v1447 = vshrl.u32 %v1446, 7
      %v1448 = vsub.s32 %v1445, %v1447
      %v1449 = vrot.slane %v1414, %v1448
      %v1450 = vcombine.high %v1449, %v1449
      %v1452 = vshrl.u32 %v1425, 16
      %v1454 = vrot.slane %v1452, 6
      %v1455 = vshll.u32 %v1425, 16
      %v1457 = vrot.slane %v1455, 7
      %v1458 = vor.u32 %v1454, %v1457
      %v1459 = vrot.slane %v1458, 2
      %v1461 = vshll.u32 %v1426, 16
      %v1463 = vrot.slane %v1461, 7
      %v1464 = vsel %vm623, %v1459, %v1463
      %v1466 = vshrl.u32 %v1433, 16
      %v1468 = vrot.slane %v1466, 6
      %v1469 = vshll.u32 %v1433, 16
      %v1471 = vrot.slane %v1469, 7
      %v1472 = vor.u32 %v1468, %v1471
      %v1473 = vrot.slane %v1472, 2
      %v1475 = vshll.u32 %v1434, 16
      %v1477 = vrot.slane %v1475, 7
      %v1478 = vsel %vm623, %v1473, %v1477
      %v1480 = vshrl.u32 %v1441, 16
      %v1482 = vrot.slane %v1480, 6
      %v1483 = vshll.u32 %v1441, 16
      %v1485 = vrot.slane %v1483, 7
      %v1486 = vor.u32 %v1482, %v1485
      %v1487 = vrot.slane %v1486, 2
      %v1489 = vshll.u32 %v1442, 16
      %v1491 = vrot.slane %v1489, 7
      %v1492 = vsel %vm623, %v1487, %v1491
      %v1494 = vshrl.u32 %v1449, 16
      %v1496 = vrot.slane %v1494, 6
      %v1497 = vshll.u32 %v1449, 16
      %v1499 = vrot.slane %v1497, 7
      %v1500 = vor.u32 %v1496, %v1499
      %v1501 = vrot.slane %v1500, 2
      %v1503 = vshll.u32 %v1450, 16
      %v1505 = vrot.slane %v1503, 7
      %v1506 = vsel %vm623, %v1501, %v1505
      %s1507 = sadd.s32 %s489, 7
      %s1508 = smul.u32 %s1507, 4
      %s1509 = smul.addr %s1508, 4
      %s1510 = scalar_lea.vmem %s1, %s1509
      %v1511 = vld [vmem:[%s1510] sm:$0xf]
      %v1512 = vld [vmem:[%s1510 + $0x4] sm:$0xf]
      %v1513 = vld [vmem:[%s1510 + $0x8] sm:$0xf]
      %v1514 = vld [vmem:[%s1510 + $0xc] sm:$0xf]
      %v1515 = vcombine.low %v1464, %v1478
      %v1516 = vcombine.low %v1492, %v1506
      %v1518 = vunpack.c.l.s4 1983009808
      %v1519 = vunpack.c.0.s8 %v1518
      %v1520 = vlaneseq
      %v1521 = vshrl.u32 %v1520, 7
      %v1522 = vsub.s32 %v1519, %v1521
      %v1523 = vrot.slane %v1515, %v1522
      %v1525 = vunpack.c.l.s4 1983009808
      %v1526 = vunpack.c.0.s8 %v1525
      %v1527 = vlaneseq
      %v1528 = vshrl.u32 %v1527, 7
      %v1529 = vsub.s32 %v1526, %v1528
      %v1530 = vrot.slane %v1516, %v1529
      %v1531 = vcombine.low %v1523, %v1530
      %v1536 = vunpack.c.l.b16 %v1511
      %v1537 = vunpack.c.l.b16 %v1512
      %v1538 = vunpack.c.l.b16 %v1513
      %v1539 = vunpack.c.l.b16 %v1514
      %v1540 = vpack.c.b16 %v1537, %v1536
      %v1541 = vpack.c.b16 %v1539, %v1538
      %v1545 = vsel %vm530, %v1531, 0
      %1547 = vmatprep.subr.bf16.mxu0 0
      %1548 = vmatpush1.bf16.msra.mxu0 0
      %1549 = vmatprep.subr.bf16.mxu0 0
      %1550 = vmatpush1.bf16.msra.mxu0 0
      %1551 = vmatprep.subr.bf16.mxu0 0
      %1552 = vmatpush1.bf16.msra.mxu0 0
      %1553 = vmatprep.subr.bf16.mxu0 0
      %1554 = vmatpush1.bf16.msra.mxu0 0
      %1555 = vmatprep.subr.bf16.mxu0 0
      %1556 = vmatpush1.bf16.msra.mxu0 0
      %1557 = vmatprep.subr.bf16.mxu0 0
      %1558 = vmatpush1.bf16.msra.mxu0 0
      %1559 = vmatprep.subr.bf16.mxu0 0
      %1560 = vmatpush1.bf16.msra.mxu0 %v1541
      %1561 = vmatprep.subr.bf16.mxu0 0
      %1562 = vmatpush1.bf16.msra.mxu0 %v1540
      %1563 = vmatprep.subr.bf16.mxu0 0
      %1564 = vmatpush2.bf16.msra.mxu0 0
      %1565 = vmatprep.subr.bf16.mxu0 0
      %1566 = vmatpush2.bf16.msra.mxu0 0
      %1567 = vmatprep.subr.bf16.mxu0 0
      %1568 = vmatpush2.bf16.msra.mxu0 0
      %1569 = vmatprep.subr.bf16.mxu0 0
      %1570 = vmatpush2.bf16.msra.mxu0 0
      %1571 = vmatprep.subr.bf16.mxu0 0
      %1572 = vmatpush2.bf16.msra.mxu0 0
      %1573 = vmatprep.subr.bf16.mxu0 0
      %1574 = vmatpush2.bf16.msra.mxu0 0
      %1575 = vmatprep.subr.bf16.mxu0 0
      %1576 = vmatpush2.bf16.msra.mxu0 0
      %1577 = vmatprep.subr.bf16.mxu0 0
      %1578 = vmatpush2.bf16.msra.mxu0 0
      %1579 = vmatprep.mubr.bf16.mxu0 0
      %1580 = vmatmul.mubr.bf16.gmra.mxu0 %v1545
      %v1581 = vpop.f32.mrf.mxu0
      %v1582 = vadd.f32 0.0, %v1581
      %v1583 = vpop.f32.mrf.mxu0
      %v1584 = vpop.f32.mrf.mxu0
      %v1585 = vadd.f32 0.0, %v1584
      %v1586 = vpop.f32.mrf.mxu0
      %1587 = vdwg.mxu0
      %v1588 = vadd.f32 %v1409, %v1582
      %v1589 = vadd.f32 %v1410, %v1585
      %v1590 = vld [vmem:[%s1319] sm:$0x6]
      %v1591 = vld [vmem:[%s1319 + $0x4] sm:$0x6]
      %v1592 = vld [vmem:[%s1319 + $0x8] sm:$0x6]
      %v1593 = vld [vmem:[%s1319 + $0xc] sm:$0x6]
      %v1599 = vunpack.c.l.s4 1983009808
      %v1600 = vunpack.c.0.s8 %v1599
      %v1601 = vlaneseq
      %v1602 = vshrl.u32 %v1601, 7
      %v1603 = vsub.s32 %v1600, %v1602
      %v1604 = vrot.slane %v1590, %v1603
      %v1605 = vcombine.high %v1604, %v1604
      %v1607 = vunpack.c.l.s4 1983009808
      %v1608 = vunpack.c.0.s8 %v1607
      %v1609 = vlaneseq
      %v1610 = vshrl.u32 %v1609, 7
      %v1611 = vsub.s32 %v1608, %v1610
      %v1612 = vrot.slane %v1591, %v1611
      %v1613 = vcombine.high %v1612, %v1612
      %v1615 = vunpack.c.l.s4 1983009808
      %v1616 = vunpack.c.0.s8 %v1615
      %v1617 = vlaneseq
      %v1618 = vshrl.u32 %v1617, 7
      %v1619 = vsub.s32 %v1616, %v1618
      %v1620 = vrot.slane %v1592, %v1619
      %v1621 = vcombine.high %v1620, %v1620
      %v1623 = vunpack.c.l.s4 1983009808
      %v1624 = vunpack.c.0.s8 %v1623
      %v1625 = vlaneseq
      %v1626 = vshrl.u32 %v1625, 7
      %v1627 = vsub.s32 %v1624, %v1626
      %v1628 = vrot.slane %v1593, %v1627
      %v1629 = vcombine.high %v1628, %v1628
      %v1630 = vrot.slane %v1604, 7
      %v1631 = vrot.slane %v1630, 2
      %v1632 = vrot.slane %v1605, 7
      %v1633 = vsel %vm809, %v1631, %v1632
      %v1634 = vrot.slane %v1612, 7
      %v1635 = vrot.slane %v1634, 2
      %v1636 = vrot.slane %v1613, 7
      %v1637 = vsel %vm809, %v1635, %v1636
      %v1638 = vrot.slane %v1620, 7
      %v1639 = vrot.slane %v1638, 2
      %v1640 = vrot.slane %v1621, 7
      %v1641 = vsel %vm809, %v1639, %v1640
      %v1642 = vrot.slane %v1628, 7
      %v1643 = vrot.slane %v1642, 2
      %v1644 = vrot.slane %v1629, 7
      %v1645 = vsel %vm809, %v1643, %v1644
      %s1646 = sadd.s32 %s489, 8
      %s1647 = smul.u32 %s1646, 4
      %s1648 = smul.addr %s1647, 4
      %s1649 = scalar_lea.vmem %s1, %s1648
      %v1650 = vld [vmem:[%s1649] sm:$0xf]
      %v1651 = vld [vmem:[%s1649 + $0x4] sm:$0xf]
      %v1652 = vld [vmem:[%s1649 + $0x8] sm:$0xf]
      %v1653 = vld [vmem:[%s1649 + $0xc] sm:$0xf]
      %v1654 = vcombine.low %v1633, %v1637
      %v1655 = vcombine.low %v1641, %v1645
      %v1657 = vunpack.c.l.s4 1983009808
      %v1658 = vunpack.c.0.s8 %v1657
      %v1659 = vlaneseq
      %v1660 = vshrl.u32 %v1659, 7
      %v1661 = vsub.s32 %v1658, %v1660
      %v1662 = vrot.slane %v1654, %v1661
      %v1664 = vunpack.c.l.s4 1983009808
      %v1665 = vunpack.c.0.s8 %v1664
      %v1666 = vlaneseq
      %v1667 = vshrl.u32 %v1666, 7
      %v1668 = vsub.s32 %v1665, %v1667
      %v1669 = vrot.slane %v1655, %v1668
      %v1670 = vcombine.low %v1662, %v1669
      %v1675 = vunpack.c.l.b16 %v1650
      %v1676 = vunpack.c.l.b16 %v1651
      %v1677 = vunpack.c.l.b16 %v1652
      %v1678 = vunpack.c.l.b16 %v1653
      %v1679 = vpack.c.b16 %v1676, %v1675
      %v1680 = vpack.c.b16 %v1678, %v1677
      %v1684 = vsel %vm530, %v1670, 0
      %1686 = vmatprep.subr.bf16.mxu0 0
      %1687 = vmatpush1.bf16.msra.mxu0 0
      %1688 = vmatprep.subr.bf16.mxu0 0
      %1689 = vmatpush1.bf16.msra.mxu0 0
      %1690 = vmatprep.subr.bf16.mxu0 0
      %1691 = vmatpush1.bf16.msra.mxu0 0
      %1692 = vmatprep.subr.bf16.mxu0 0
      %1693 = vmatpush1.bf16.msra.mxu0 0
      %1694 = vmatprep.subr.bf16.mxu0 0
      %1695 = vmatpush1.bf16.msra.mxu0 0
      %1696 = vmatprep.subr.bf16.mxu0 0
      %1697 = vmatpush1.bf16.msra.mxu0 0
      %1698 = vmatprep.subr.bf16.mxu0 0
      %1699 = vmatpush1.bf16.msra.mxu0 %v1680
      %1700 = vmatprep.subr.bf16.mxu0 0
      %1701 = vmatpush1.bf16.msra.mxu0 %v1679
      %1702 = vmatprep.subr.bf16.mxu0 0
      %1703 = vmatpush2.bf16.msra.mxu0 0
      %1704 = vmatprep.subr.bf16.mxu0 0
      %1705 = vmatpush2.bf16.msra.mxu0 0
      %1706 = vmatprep.subr.bf16.mxu0 0
      %1707 = vmatpush2.bf16.msra.mxu0 0
      %1708 = vmatprep.subr.bf16.mxu0 0
      %1709 = vmatpush2.bf16.msra.mxu0 0
      %1710 = vmatprep.subr.bf16.mxu0 0
      %1711 = vmatpush2.bf16.msra.mxu0 0
      %1712 = vmatprep.subr.bf16.mxu0 0
      %1713 = vmatpush2.bf16.msra.mxu0 0
      %1714 = vmatprep.subr.bf16.mxu0 0
      %1715 = vmatpush2.bf16.msra.mxu0 0
      %1716 = vmatprep.subr.bf16.mxu0 0
      %1717 = vmatpush2.bf16.msra.mxu0 0
      %1718 = vmatprep.mubr.bf16.mxu0 0
      %1719 = vmatmul.mubr.bf16.gmra.mxu0 %v1684
      %v1720 = vpop.f32.mrf.mxu0
      %v1721 = vadd.f32 0.0, %v1720
      %v1722 = vpop.f32.mrf.mxu0
      %v1723 = vpop.f32.mrf.mxu0
      %v1724 = vadd.f32 0.0, %v1723
      %v1725 = vpop.f32.mrf.mxu0
      %1726 = vdwg.mxu0
      %v1727 = vadd.f32 %v1588, %v1721
      %v1728 = vadd.f32 %v1589, %v1724
      %1729 = vst.msk [vmem:[#allocation2] sm:$0xff] %vm530, %v1727
      %1730 = vst.msk [vmem:[#allocation2 + $0x8] sm:$0xff] %vm530, %v1728
      %p1731 = scmp.eq.s32.totalorder %s26, 2
      // Predicated region
      $region49: #{encoder_forward.7} parent=39 // pred_check
        %p1732 = pneg %p1731
      $region50: #{encoder_forward.7} parent=39 // pred_check_branch
        %1734 = sbr.rel (%p1732) target = $region52
      $region51: #{encoder_forward.7} parent=39 // pred_region
        %v1735 = vld [vmem:[#allocation2] sm:$0xff]
        %v1736 = vld [vmem:[#allocation2 + $0x8] sm:$0xff]
        %v1737 = vld [vmem:[%s2] sm:$0x1]
        %v1739 = vlaneseq
        %v1740 = vshrl.u32 %v1739, 7
        %v1741 = vsub.s32 0, %v1740
        %v1742 = vrot.slane %v1737, %v1741
        %v1744 = vadd.f32 %v1735, %v1742
        %v1745 = vadd.f32 %v1736, %v1742
        %v1746 = vpack.c.bf16 %v1745, %v1744
        %v1748 = vunpack.c.l.b16 %v1746
        %v1749 = vunpack.c.h.b16 %v1746
        %v1750 = vpack.c.b16 %v1748, %v1748
        %v1751 = vpack.c.b16 %v1749, %v1749
        %vm1754 = vcmask 257024
        %1755 = vst.msk [vmem:[%s367] sm:$0xf] %vm1754, %v1750
        %1756 = vst.msk [vmem:[%s367 + $0x4] sm:$0xf] %vm1754, %v1751
        %v1757 = vld [vmem:[%s370] sm:$0x1]
        %v1758 = vsel %vm530, %v1744, 0.0
        %v1759 = vsel %vm530, %v1745, 0.0
        %v1760 = vadd.f32 %v1758, %v1759
        %v1761 = vrot.slane %v1760, 4
        %v1762 = vadd.f32 %v1760, %v1761
        %v1763 = vrot.slane %v1762, 2
        %v1764 = vadd.f32 %v1762, %v1763
        %v1765 = vrot.slane %v1764, 1
        %v1766 = vadd.f32 %v1764, %v1765
        %v1767 = vadd.f32 %v1757, %v1766
        %vm1768 = vcmask 253952
        %1769 = vst.msk [vmem:[%s370] sm:$0x1] %vm1768, %v1767
        %v1770 = vld [vmem:[%s373] sm:$0x1]
        %v1771 = vmul.f32 %v1744, %v1744
        %v1772 = vmul.f32 %v1745, %v1745
        %v1773 = vsel %vm530, %v1771, 0.0
        %v1774 = vsel %vm530, %v1772, 0.0
        %v1775 = vadd.f32 %v1773, %v1774
        %v1776 = vrot.slane %v1775, 4
        %v1777 = vadd.f32 %v1775, %v1776
        %v1778 = vrot.slane %v1777, 2
        %v1779 = vadd.f32 %v1777, %v1778
        %v1780 = vrot.slane %v1779, 1
        %v1781 = vadd.f32 %v1779, %v1780
        %v1782 = vadd.f32 %v1770, %v1781
        %1783 = vst.msk [vmem:[%s373] sm:$0x1] %vm1768, %v1782
      $region52: #{encoder_forward.7} parent=39 // pred_fallthru
        _
      %p1784 = scmp.lt.s32.totalorder %s24, 1
      %s1785 = scalar_select %p1784, %s24, 1
      %p1786 = scmp.lt.s32.totalorder %s25, 1
      %s1787 = scalar_select %p1786, %s25, 1
      %s1788 = smul.addr %s1787, 2
      %s1789 = smul.addr %s1785, 4
      %s1790 = sadd.s32 %s1788, %s1789
      %s1791 = smul.addr %s1790, 4
      %s1792 = scalar_lea.vmem %s5, %s1791
      %p1793 = scmp.lt.s32.totalorder %s24, 1
      %s1794 = scalar_select %p1793, %s24, 1
      %s1795 = scalar_lea.vmem %s6, %s1794
      %p1796 = scmp.lt.s32.totalorder %s24, 1
      %s1797 = scalar_select %p1796, %s24, 1
      %s1798 = scalar_lea.vmem %s7, %s1797
      // Predicated region
      $region53: #{encoder_forward.7} parent=39 // pred_check
        %p1799 = pneg %p182
      $region54: #{encoder_forward.7} parent=39 // pred_check_branch
        %1801 = sbr.rel (%p1799) target = $region56
      $region55: #{encoder_forward.7} parent=39 // pred_region
        _
      $region56: #{encoder_forward.7} parent=39 // pred_fallthru
        _
      // Predicated region
      $region57: #{encoder_forward.7} parent=39 // pred_check
        %p1802 = pneg %p208
      $region58: #{encoder_forward.7} parent=39 // pred_check_branch
        %1804 = sbr.rel (%p1802) target = $region60
      $region59: #{encoder_forward.7} parent=39 // pred_region
        _
      $region60: #{encoder_forward.7} parent=39 // pred_fallthru
        _
      // Predicated region
      $region61: #{encoder_forward.7} parent=39 // pred_check
        %p1805 = pneg %p234
      $region62: #{encoder_forward.7} parent=39 // pred_check_branch
        %1807 = sbr.rel (%p1805) target = $region64
      $region63: #{encoder_forward.7} parent=39 // pred_region
        _
      $region64: #{encoder_forward.7} parent=39 // pred_fallthru
        _
    $region40: #{encoder_forward.7} parent=5 // pred_fallthru
      _
    %p1808 = scmp.le.s32.totalorder 2, %s14
    // Predicated region
    $region65: #{encoder_forward.7} parent=5 // pred_check
      %p1809 = pneg %p1808
    $region66: #{encoder_forward.7} parent=5 // pred_check_branch
      %1811 = sbr.rel (%p1809) target = $region68
    $region67: #{encoder_forward.7} parent=5 // pred_region
      %s1812 = ssub.s32 %s14, 2
      // Predicated region
      $region69: #{encoder_forward.7} parent=67 // pred_check
        %p1813 = pneg %p188
      $region70: #{encoder_forward.7} parent=67 // pred_check_branch
        %1815 = sbr.rel (%p1813) target = $region72
      $region71: #{encoder_forward.7} parent=67 // pred_region
        %p1816 = scmp.lt.s32.totalorder %s27, 1
        %s1817 = scalar_select %p1816, %s27, 1
        %p1818 = scmp.lt.s32.totalorder %s28, 1
        %s1819 = scalar_select %p1818, %s28, 1
        %s1820 = smul.addr %s1819, 2
        %s1821 = smul.addr %s1817, 4
        %s1822 = sadd.s32 %s1820, %s1821
        %s1823 = smul.addr %s1822, 4
        %s1824 = scalar_lea.vmem %s5, %s1823
      $region72: #{encoder_forward.7} parent=67 // pred_fallthru
        _
      // Predicated region
      $region73: #{encoder_forward.7} parent=67 // pred_check
        %p1825 = pneg %p214
      $region74: #{encoder_forward.7} parent=67 // pred_check_branch
        %1827 = sbr.rel (%p1825) target = $region76
      $region75: #{encoder_forward.7} parent=67 // pred_region
        %p1828 = scmp.lt.s32.totalorder %s27, 1
        %s1829 = scalar_select %p1828, %s27, 1
        %s1830 = scalar_lea.vmem %s6, %s1829
      $region76: #{encoder_forward.7} parent=67 // pred_fallthru
        _
      // Predicated region
      $region77: #{encoder_forward.7} parent=67 // pred_check
        %p1831 = pneg %p240
      $region78: #{encoder_forward.7} parent=67 // pred_check_branch
        %1833 = sbr.rel (%p1831) target = $region80
      $region79: #{encoder_forward.7} parent=67 // pred_region
        %p1834 = scmp.lt.s32.totalorder %s27, 1
        %s1835 = scalar_select %p1834, %s27, 1
        %s1836 = scalar_lea.vmem %s7, %s1835
      $region80: #{encoder_forward.7} parent=67 // pred_fallthru
        _
    $region68: #{encoder_forward.7} parent=5 // pred_fallthru
      _
  $region6: #{encoder_forward.7} parent=0 // loop_footer
    %s18 = sadd.s32 1, %s14
  $region7: #{encoder_forward.7} parent=0 // loop_footer_branch
    %13 = sbr.rel target = $region3
  $region8: #{encoder_forward.7} parent=0 // loop_exit
    _

</llo_original>
